<compile_context>
chip_gen: v7x
topology: tpu7x:2x2x1
jax: 0.10.0
libtpu: 0.0.40
codegen_flags: <defaults>
</compile_context>

<pallas_src>
import functools

import jax
import jax.numpy as jnp
from jax import lax
from jax.experimental import pallas as pl
from jax.experimental.pallas import tpu as pltpu


# -----------------------------------------------------------------------------------
# Static geometry (input must be 1x32x32 so that flatten yields 16*6*6 = 576 features).
# -----------------------------------------------------------------------------------
_IMG = 32                        # conv1 input spatial size
_XW = _IMG * _IMG + 32           # padded flat input width (max read = 66 + 959 = 1025)
_L1 = 960                        # conv1 flat output width, output (i,j) at col 32*i + j
_A1W = 512                       # pool1 scratch width, pooled1[r,c] at col 32*r + 2*c
_L2 = 416                        # conv2 flat output width, output (i,j) at col 32*i + 2*j
_FEATW = 144                     # pool2 scratch width, pooled2[r2,c2] at col 24*r2 + 4*c2
_TAPS = tuple((kh, kw) for kh in range(3) for kw in range(3))   # t = kh*3 + kw


# -----------------------------------------------------------------------------------
# The single fused kernel.
# -----------------------------------------------------------------------------------
def _net_kernel(x_ref, w1t_ref, b1_ref, w2t_ref, b2_ref, sel_ref,
                fc1w_ref, fc1b_ref, fc2w_ref, fc2b_ref, fc3w_ref, fc3b_ref,
                o_ref, a1_ref, feat_ref, *, batch):
    f32 = jnp.float32

    # Zero-init scratch: padding columns only ever feed "garbage" lanes that later hit
    # zero weight rows, but they must be finite (NaN/Inf * 0 = NaN would poison fc1).
    a1_ref[...] = jnp.zeros_like(a1_ref)
    feat_ref[...] = jnp.zeros_like(feat_ref)

    for n in range(batch):
        # -------- conv1 (1->6, 3x3, valid) + ReLU, flat row-stride-32 layout ---------
        acc1 = jnp.zeros((6, _L1), f32)
        for t, (kh, kw) in enumerate(_TAPS):
            d = kh * _IMG + kw
            xs = x_ref[n:n + 1, d:d + _L1]                  # (1, 960) contiguous slice
            acc1 = acc1 + w1t_ref[t] * xs                   # (6,1)*(1,960) -> (6,960)
        y1 = jnp.maximum(acc1 + b1_ref[...], 0.0)           # (6, 960)

        # -------- maxpool 2x2 -> a1 scratch (sparse: pooled1[r,c] at 32*r + 2*c) -----
        for r in range(15):
            top = y1[:, (2 * r) * 32:(2 * r) * 32 + 31]
            bot = y1[:, (2 * r + 1) * 32:(2 * r + 1) * 32 + 31]
            hmax = jnp.maximum(top, bot)                    # (6, 31) row-pair max
            m4 = jnp.maximum(hmax[:, 0:30], hmax[:, 1:31])  # (6, 30) 2x2-window max
            a1_ref[n, :, r * 32:r * 32 + 30] = m4

        # -------- conv2 (6->16, 3x3, valid) + ReLU: 9 MXU matmuls over C_in ----------
        acc2 = jnp.zeros((16, _L2), f32)
        for t, (kh, kw) in enumerate(_TAPS):
            d = 32 * kh + 2 * kw
            rhs = a1_ref[n, :, d:d + _L2]                   # (6, 416) contiguous slice
            acc2 = acc2 + jnp.dot(w2t_ref[t], rhs, preferred_element_type=f32)
        y2 = jnp.maximum(acc2 + b2_ref[...], 0.0)           # (16, 416)

        # -------- maxpool 2x2 -> feat scratch (sparse: pooled2 at 24*r2 + 4*c2) ------
        for r2 in range(6):
            top = y2[:, 64 * r2:64 * r2 + 26]
            bot = y2[:, 64 * r2 + 32:64 * r2 + 58]
            hmax = jnp.maximum(top, bot)                    # (16, 26)
            m4 = jnp.maximum(hmax[:, 0:24], hmax[:, 2:26])  # (16, 24)
            feat_ref[n, :, 24 * r2:24 * r2 + 24] = m4

        # -------- flatten: compact sparse features with one selection matmul ---------
        featd = jnp.dot(feat_ref[n], sel_ref[...],
                        preferred_element_type=f32)         # (16, 36) = (co, r2*6+c2)

        # -------- fc1 (576->120) + ReLU, decomposed over the 16 channels -------------
        h1 = fc1b_ref[...]                                  # (1, 120)
        for co in range(16):
            h1 = h1 + jnp.dot(featd[co:co + 1, :], fc1w_ref[co],
                              preferred_element_type=f32)
        h1 = jnp.maximum(h1, 0.0)

        # -------- fc2 (120->84) + ReLU, fc3 (84->10) ---------------------------------
        h2 = jnp.maximum(
            jnp.dot(h1, fc2w_ref[...], preferred_element_type=f32) + fc2b_ref[...], 0.0)
        out_n = jnp.dot(h2, fc3w_ref[...], preferred_element_type=f32) + fc3b_ref[...]
        o_ref[n:n + 1, :] = out_n


# -----------------------------------------------------------------------------------
# Weight re-layout (pure jnp, outside the kernel) + the Pallas wrapper.
# -----------------------------------------------------------------------------------
def _pool2_selection_matrix():
    # sel[24*r2 + 4*c2, r2*6 + c2] = 1, zeros elsewhere.
    sel = jnp.zeros((_FEATW, 36), jnp.float32)
    r2 = jnp.arange(6)
    c2 = jnp.arange(6)
    rows = (24 * r2[:, None] + 4 * c2[None, :]).reshape(-1)
    cols = jnp.arange(36)
    return sel.at[rows, cols].set(1.0)


def _prepare_kernel_params(params):
    w1 = params["conv1_w"]                                    # (6, 1, 3, 3)
    w2 = params["conv2_w"]                                    # (16, 6, 3, 3)
    return {
        "w1t": w1.reshape(6, 9).T.reshape(9, 6, 1),           # per-tap (6,1), t = kh*3+kw
        "b1": params["conv1_b"].reshape(6, 1),
        "w2t": jnp.transpose(w2, (2, 3, 0, 1)).reshape(9, 16, 6),   # per-tap (16,6)
        "b2": params["conv2_b"].reshape(16, 1),
        "sel": _pool2_selection_matrix(),                     # (144, 36)
        "fc1w": params["fc1_w"].reshape(16, 36, 120),         # per-channel chunks
        "fc1b": params["fc1_b"].reshape(1, 120),
        "fc2w": params["fc2_w"],
        "fc2b": params["fc2_b"].reshape(1, 84),
        "fc3w": params["fc3_w"],
        "fc3b": params["fc3_b"].reshape(1, 10),
    }


def net_forward(params, x):
    """Pallas forward pass. x: (N, 1, 32, 32) float32 -> (N, 10)."""
    n, c, h, w = x.shape
    assert (c, h, w) == (1, _IMG, _IMG), "Net expects 1x32x32 inputs"
    kp = _prepare_kernel_params(params)

    x_flat = x.reshape(n, _IMG * _IMG)
    x_pad = jnp.pad(x_flat, ((0, 0), (0, _XW - _IMG * _IMG)))   # zero pad (finite)

    kernel = functools.partial(_net_kernel, batch=n)
    return pl.pallas_call(
        kernel,
        out_shape=jax.ShapeDtypeStruct((n, 10), jnp.float32),
        scratch_shapes=[
            pltpu.VMEM((n, 6, _A1W), jnp.float32),     # pool1 output, sparse flat layout
            pltpu.VMEM((n, 16, _FEATW), jnp.float32),  # pool2 output, sparse flat layout
        ],
    )(x_pad, kp["w1t"], kp["b1"], kp["w2t"], kp["b2"], kp["sel"],
      kp["fc1w"], kp["fc1b"], kp["fc2w"], kp["fc2b"], kp["fc3w"], kp["fc3b"])


# -----------------------------------------------------------------------------------
# Parameters (deterministic, PyTorch-default-style uniform init) + pure-JAX reference.
# -----------------------------------------------------------------------------------
def init_params(key):
    def uconv(k, c_out, c_in, kh, kw):
        fan_in = c_in * kh * kw
        bound = 1.0 / jnp.sqrt(fan_in)
        kw_, kb_ = jax.random.split(k)
        w = jax.random.uniform(kw_, (c_out, c_in, kh, kw), jnp.float32, -bound, bound)
        b = jax.random.uniform(kb_, (c_out,), jnp.float32, -bound, bound)
        return w, b

    def ulin(k, in_f, out_f):
        bound = 1.0 / jnp.sqrt(in_f)
        kw_, kb_ = jax.random.split(k)
        # stored already transposed: (in_f, out_f) so y = x @ W + b
        w = jax.random.uniform(kw_, (in_f, out_f), jnp.float32, -bound, bound)
        b = jax.random.uniform(kb_, (out_f,), jnp.float32, -bound, bound)
        return w, b

    k1, k2, k3, k4, k5 = jax.random.split(key, 5)
    params = {}
    params["conv1_w"], params["conv1_b"] = uconv(k1, 6, 1, 3, 3)
    params["conv2_w"], params["conv2_b"] = uconv(k2, 16, 6, 3, 3)
    params["fc1_w"], params["fc1_b"] = ulin(k3, 16 * 6 * 6, 120)
    params["fc2_w"], params["fc2_b"] = ulin(k4, 120, 84)
    params["fc3_w"], params["fc3_b"] = ulin(k5, 84, 10)
    return params


def net_forward_ref(params, x):
    dn = lax.conv_dimension_numbers(x.shape, params["conv1_w"].shape,
                                    ("NCHW", "OIHW", "NCHW"))

    def conv(x, w, b):
        y = lax.conv_general_dilated(x, w, (1, 1), "VALID", dimension_numbers=dn)
        return jnp.maximum(y + b[None, :, None, None], 0.0)

    def pool(x):
        return lax.reduce_window(x, -jnp.inf, lax.max, (1, 1, 2, 2), (1, 1, 2, 2), "VALID")

    x = pool(conv(x, params["conv1_w"], params["conv1_b"]))
    x = pool(conv(x, params["conv2_w"], params["conv2_b"]))
    x = x.reshape(x.shape[0], -1)
    x = jnp.maximum(x @ params["fc1_w"] + params["fc1_b"], 0.0)
    x = jnp.maximum(x @ params["fc2_w"] + params["fc2_b"], 0.0)
    return x @ params["fc3_w"] + params["fc3_b"]


if __name__ == "__main__":
    key = jax.random.PRNGKey(0)
    k_in, k_params = jax.random.split(key)

    # Input must be 32x32 spatially so that the flatten yields 16*6*6 = 576 features.
    x = jax.random.normal(k_in, (2, 1, 32, 32), dtype=jnp.float32)
    params = init_params(k_params)

    fwd = jax.jit(net_forward)
    out = jax.block_until_ready(fwd(params, x))
    ref = jax.block_until_ready(net_forward_ref(params, x))

    assert out.shape == (2, 10), out.shape
    assert jnp.allclose(out, ref, atol=1e-2, rtol=1e-2), "mismatch vs JAX reference"

    print("KERNEL_OK")
</pallas_src>

<mosaic_0001>
module attributes {stable_mosaic.version = 11 : i64} {
  func.func @_net_kernel(%arg0: memref<2x1056xf32, #tpu.memory_space<vmem>>, %arg1: memref<9x6x1xf32, #tpu.memory_space<vmem>>, %arg2: memref<6x1xf32, #tpu.memory_space<vmem>>, %arg3: memref<9x16x6xf32, #tpu.memory_space<vmem>>, %arg4: memref<16x1xf32, #tpu.memory_space<vmem>>, %arg5: memref<144x36xf32, #tpu.memory_space<vmem>>, %arg6: memref<16x36x120xf32, #tpu.memory_space<vmem>>, %arg7: memref<1x120xf32, #tpu.memory_space<vmem>>, %arg8: memref<120x84xf32, #tpu.memory_space<vmem>>, %arg9: memref<1x84xf32, #tpu.memory_space<vmem>>, %arg10: memref<84x10xf32, #tpu.memory_space<vmem>>, %arg11: memref<1x10xf32, #tpu.memory_space<vmem>>, %arg12: memref<2x10xf32, #tpu.memory_space<vmem>>, %arg13: memref<2x6x512xf32, #tpu.memory_space<vmem>>, %arg14: memref<2x16x144xf32, #tpu.memory_space<vmem>>) attributes {dimension_semantics = [], scalar_prefetch = 0 : i64, scratch_operands = 2 : i64, tpu.core_type = #tpu.core_type<tc>} {
    %cst = arith.constant 0.000000e+00 : f32
    %0 = vector.broadcast %cst : f32 to vector<2x6x512xf32>
    %c0 = arith.constant 0 : index
    %c0_0 = arith.constant 0 : index
    %c0_1 = arith.constant 0 : index
    %1 = vector.load %arg13[%c0, %c0_0, %c0_1] : memref<2x6x512xf32, #tpu.memory_space<vmem>>, vector<2x6x512xf32>
    tpu.vector_store %arg13[%c0, %c0_0, %c0_1], %0 {strides = array<i32>} : memref<2x6x512xf32, #tpu.memory_space<vmem>>, vector<2x6x512xf32>,
    %cst_2 = arith.constant 0.000000e+00 : f32
    %2 = vector.broadcast %cst_2 : f32 to vector<2x16x144xf32>
    %c0_3 = arith.constant 0 : index
    %c0_4 = arith.constant 0 : index
    %c0_5 = arith.constant 0 : index
    %3 = vector.load %arg14[%c0_3, %c0_4, %c0_5] : memref<2x16x144xf32, #tpu.memory_space<vmem>>, vector<2x16x144xf32>
    tpu.vector_store %arg14[%c0_3, %c0_4, %c0_5], %2 {strides = array<i32>} : memref<2x16x144xf32, #tpu.memory_space<vmem>>, vector<2x16x144xf32>,
    %cst_6 = arith.constant 0.000000e+00 : f32
    %4 = vector.broadcast %cst_6 : f32 to vector<6x960xf32>
    %c0_7 = arith.constant 0 : index
    %c0_8 = arith.constant 0 : index
    %5 = vector.load %arg0[%c0_7, %c0_8] : memref<2x1056xf32, #tpu.memory_space<vmem>>, vector<1x960xf32>
    %c0_9 = arith.constant 0 : index
    %c0_10 = arith.constant 0 : index
    %c0_11 = arith.constant 0 : index
    %6 = vector.load %arg1[%c0_9, %c0_10, %c0_11] : memref<9x6x1xf32, #tpu.memory_space<vmem>>, vector<1x6x1xf32>
    %7 = vector.shape_cast %6 : vector<1x6x1xf32> to vector<6x1xf32>
    %8 = vector.broadcast %7 : vector<6x1xf32> to vector<6x960xf32>
    %9 = vector.broadcast %5 : vector<1x960xf32> to vector<6x960xf32>
    %10 = arith.mulf %8, %9 : vector<6x960xf32>
    %11 = arith.addf %4, %10 : vector<6x960xf32>
    %c0_12 = arith.constant 0 : index
    %c1 = arith.constant 1 : index
    %12 = vector.load %arg0[%c0_12, %c1] : memref<2x1056xf32, #tpu.memory_space<vmem>>, vector<1x960xf32>
    %c1_13 = arith.constant 1 : index
    %c0_14 = arith.constant 0 : index
    %c0_15 = arith.constant 0 : index
    %13 = vector.load %arg1[%c1_13, %c0_14, %c0_15] : memref<9x6x1xf32, #tpu.memory_space<vmem>>, vector<1x6x1xf32>
    %14 = vector.shape_cast %13 : vector<1x6x1xf32> to vector<6x1xf32>
    %15 = vector.broadcast %14 : vector<6x1xf32> to vector<6x960xf32>
    %16 = vector.broadcast %12 : vector<1x960xf32> to vector<6x960xf32>
    %17 = arith.mulf %15, %16 : vector<6x960xf32>
    %18 = arith.addf %11, %17 : vector<6x960xf32>
    %c0_16 = arith.constant 0 : index
    %c2 = arith.constant 2 : index
    %19 = vector.load %arg0[%c0_16, %c2] : memref<2x1056xf32, #tpu.memory_space<vmem>>, vector<1x960xf32>
    %c2_17 = arith.constant 2 : index
    %c0_18 = arith.constant 0 : index
    %c0_19 = arith.constant 0 : index
    %20 = vector.load %arg1[%c2_17, %c0_18, %c0_19] : memref<9x6x1xf32, #tpu.memory_space<vmem>>, vector<1x6x1xf32>
    %21 = vector.shape_cast %20 : vector<1x6x1xf32> to vector<6x1xf32>
    %22 = vector.broadcast %21 : vector<6x1xf32> to vector<6x960xf32>
    %23 = vector.broadcast %19 : vector<1x960xf32> to vector<6x960xf32>
    %24 = arith.mulf %22, %23 : vector<6x960xf32>
    %25 = arith.addf %18, %24 : vector<6x960xf32>
    %c0_20 = arith.constant 0 : index
    %c32 = arith.constant 32 : index
    %26 = vector.load %arg0[%c0_20, %c32] : memref<2x1056xf32, #tpu.memory_space<vmem>>, vector<1x960xf32>
    %c3 = arith.constant 3 : index
    %c0_21 = arith.constant 0 : index
    %c0_22 = arith.constant 0 : index
    %27 = vector.load %arg1[%c3, %c0_21, %c0_22] : memref<9x6x1xf32, #tpu.memory_space<vmem>>, vector<1x6x1xf32>
    %28 = vector.shape_cast %27 : vector<1x6x1xf32> to vector<6x1xf32>
    %29 = vector.broadcast %28 : vector<6x1xf32> to vector<6x960xf32>
    %30 = vector.broadcast %26 : vector<1x960xf32> to vector<6x960xf32>
    %31 = arith.mulf %29, %30 : vector<6x960xf32>
    %32 = arith.addf %25, %31 : vector<6x960xf32>
    %c0_23 = arith.constant 0 : index
    %c33 = arith.constant 33 : index
    %33 = vector.load %arg0[%c0_23, %c33] : memref<2x1056xf32, #tpu.memory_space<vmem>>, vector<1x960xf32>
    %c4 = arith.constant 4 : index
    %c0_24 = arith.constant 0 : index
    %c0_25 = arith.constant 0 : index
    %34 = vector.load %arg1[%c4, %c0_24, %c0_25] : memref<9x6x1xf32, #tpu.memory_space<vmem>>, vector<1x6x1xf32>
    %35 = vector.shape_cast %34 : vector<1x6x1xf32> to vector<6x1xf32>
    %36 = vector.broadcast %35 : vector<6x1xf32> to vector<6x960xf32>
    %37 = vector.broadcast %33 : vector<1x960xf32> to vector<6x960xf32>
    %38 = arith.mulf %36, %37 : vector<6x960xf32>
    %39 = arith.addf %32, %38 : vector<6x960xf32>
    %c0_26 = arith.constant 0 : index
    %c34 = arith.constant 34 : index
    %40 = vector.load %arg0[%c0_26, %c34] : memref<2x1056xf32, #tpu.memory_space<vmem>>, vector<1x960xf32>
    %c5 = arith.constant 5 : index
    %c0_27 = arith.constant 0 : index
    %c0_28 = arith.constant 0 : index
    %41 = vector.load %arg1[%c5, %c0_27, %c0_28] : memref<9x6x1xf32, #tpu.memory_space<vmem>>, vector<1x6x1xf32>
    %42 = vector.shape_cast %41 : vector<1x6x1xf32> to vector<6x1xf32>
    %43 = vector.broadcast %42 : vector<6x1xf32> to vector<6x960xf32>
    %44 = vector.broadcast %40 : vector<1x960xf32> to vector<6x960xf32>
    %45 = arith.mulf %43, %44 : vector<6x960xf32>
    %46 = arith.addf %39, %45 : vector<6x960xf32>
    %c0_29 = arith.constant 0 : index
    %c64 = arith.constant 64 : index
    %47 = vector.load %arg0[%c0_29, %c64] : memref<2x1056xf32, #tpu.memory_space<vmem>>, vector<1x960xf32>
    %c6 = arith.constant 6 : index
    %c0_30 = arith.constant 0 : index
    %c0_31 = arith.constant 0 : index
    %48 = vector.load %arg1[%c6, %c0_30, %c0_31] : memref<9x6x1xf32, #tpu.memory_space<vmem>>, vector<1x6x1xf32>
    %49 = vector.shape_cast %48 : vector<1x6x1xf32> to vector<6x1xf32>
    %50 = vector.broadcast %49 : vector<6x1xf32> to vector<6x960xf32>
    %51 = vector.broadcast %47 : vector<1x960xf32> to vector<6x960xf32>
    %52 = arith.mulf %50, %51 : vector<6x960xf32>
    %53 = arith.addf %46, %52 : vector<6x960xf32>
    %c0_32 = arith.constant 0 : index
    %c65 = arith.constant 65 : index
    %54 = vector.load %arg0[%c0_32, %c65] : memref<2x1056xf32, #tpu.memory_space<vmem>>, vector<1x960xf32>
    %c7 = arith.constant 7 : index
    %c0_33 = arith.constant 0 : index
    %c0_34 = arith.constant 0 : index
    %55 = vector.load %arg1[%c7, %c0_33, %c0_34] : memref<9x6x1xf32, #tpu.memory_space<vmem>>, vector<1x6x1xf32>
    %56 = vector.shape_cast %55 : vector<1x6x1xf32> to vector<6x1xf32>
    %57 = vector.broadcast %56 : vector<6x1xf32> to vector<6x960xf32>
    %58 = vector.broadcast %54 : vector<1x960xf32> to vector<6x960xf32>
    %59 = arith.mulf %57, %58 : vector<6x960xf32>
    %60 = arith.addf %53, %59 : vector<6x960xf32>
    %c0_35 = arith.constant 0 : index
    %c66 = arith.constant 66 : index
    %61 = vector.load %arg0[%c0_35, %c66] : memref<2x1056xf32, #tpu.memory_space<vmem>>, vector<1x960xf32>
    %c8 = arith.constant 8 : index
    %c0_36 = arith.constant 0 : index
    %c0_37 = arith.constant 0 : index
    %62 = vector.load %arg1[%c8, %c0_36, %c0_37] : memref<9x6x1xf32, #tpu.memory_space<vmem>>, vector<1x6x1xf32>
    %63 = vector.shape_cast %62 : vector<1x6x1xf32> to vector<6x1xf32>
    %64 = vector.broadcast %63 : vector<6x1xf32> to vector<6x960xf32>
    %65 = vector.broadcast %61 : vector<1x960xf32> to vector<6x960xf32>
    %66 = arith.mulf %64, %65 : vector<6x960xf32>
    %67 = arith.addf %60, %66 : vector<6x960xf32>
    %c0_38 = arith.constant 0 : index
    %c0_39 = arith.constant 0 : index
    %68 = vector.load %arg2[%c0_38, %c0_39] : memref<6x1xf32, #tpu.memory_space<vmem>>, vector<6x1xf32>
    %69 = vector.broadcast %68 : vector<6x1xf32> to vector<6x960xf32>
    %70 = arith.addf %67, %69 : vector<6x960xf32>
    %cst_40 = arith.constant 0.000000e+00 : f32
    %71 = vector.broadcast %cst_40 : f32 to vector<6x960xf32>
    %72 = arith.maximumf %70, %71 : vector<6x960xf32>
    %73 = vector.extract_strided_slice %72 {offsets = [0, 0], sizes = [6, 31], strides = [1, 1]} : vector<6x960xf32> to vector<6x31xf32>
    %74 = vector.extract_strided_slice %72 {offsets = [0, 32], sizes = [6, 31], strides = [1, 1]} : vector<6x960xf32> to vector<6x31xf32>
    %75 = arith.maximumf %73, %74 : vector<6x31xf32>
    %76 = vector.extract_strided_slice %75 {offsets = [0, 0], sizes = [6, 30], strides = [1, 1]} : vector<6x31xf32> to vector<6x30xf32>
    %77 = vector.extract_strided_slice %75 {offsets = [0, 1], sizes = [6, 30], strides = [1, 1]} : vector<6x31xf32> to vector<6x30xf32>
    %78 = arith.maximumf %76, %77 : vector<6x30xf32>
    %c0_41 = arith.constant 0 : index
    %c0_42 = arith.constant 0 : index
    %c0_43 = arith.constant 0 : index
    %79 = vector.load %arg13[%c0_41, %c0_42, %c0_43] : memref<2x6x512xf32, #tpu.memory_space<vmem>>, vector<1x6x30xf32>
    %80 = vector.shape_cast %79 : vector<1x6x30xf32> to vector<6x30xf32>
    %81 = vector.shape_cast %78 : vector<6x30xf32> to vector<1x6x30xf32>
    tpu.vector_store %arg13[%c0_41, %c0_42, %c0_43], %81 {strides = array<i32>} : memref<2x6x512xf32, #tpu.memory_space<vmem>>, vector<1x6x30xf32>,
    %82 = vector.extract_strided_slice %72 {offsets = [0, 64], sizes = [6, 31], strides = [1, 1]} : vector<6x960xf32> to vector<6x31xf32>
    %83 = vector.extract_strided_slice %72 {offsets = [0, 96], sizes = [6, 31], strides = [1, 1]} : vector<6x960xf32> to vector<6x31xf32>
    %84 = arith.maximumf %82, %83 : vector<6x31xf32>
    %85 = vector.extract_strided_slice %84 {offsets = [0, 0], sizes = [6, 30], strides = [1, 1]} : vector<6x31xf32> to vector<6x30xf32>
    %86 = vector.extract_strided_slice %84 {offsets = [0, 1], sizes = [6, 30], strides = [1, 1]} : vector<6x31xf32> to vector<6x30xf32>
    %87 = arith.maximumf %85, %86 : vector<6x30xf32>
    %c0_44 = arith.constant 0 : index
    %c0_45 = arith.constant 0 : index
    %c32_46 = arith.constant 32 : index
    %88 = vector.load %arg13[%c0_44, %c0_45, %c32_46] : memref<2x6x512xf32, #tpu.memory_space<vmem>>, vector<1x6x30xf32>
    %89 = vector.shape_cast %88 : vector<1x6x30xf32> to vector<6x30xf32>
    %90 = vector.shape_cast %87 : vector<6x30xf32> to vector<1x6x30xf32>
    tpu.vector_store %arg13[%c0_44, %c0_45, %c32_46], %90 {strides = array<i32>} : memref<2x6x512xf32, #tpu.memory_space<vmem>>, vector<1x6x30xf32>,
    %91 = vector.extract_strided_slice %72 {offsets = [0, 128], sizes = [6, 31], strides = [1, 1]} : vector<6x960xf32> to vector<6x31xf32>
    %92 = vector.extract_strided_slice %72 {offsets = [0, 160], sizes = [6, 31], strides = [1, 1]} : vector<6x960xf32> to vector<6x31xf32>
    %93 = arith.maximumf %91, %92 : vector<6x31xf32>
    %94 = vector.extract_strided_slice %93 {offsets = [0, 0], sizes = [6, 30], strides = [1, 1]} : vector<6x31xf32> to vector<6x30xf32>
    %95 = vector.extract_strided_slice %93 {offsets = [0, 1], sizes = [6, 30], strides = [1, 1]} : vector<6x31xf32> to vector<6x30xf32>
    %96 = arith.maximumf %94, %95 : vector<6x30xf32>
    %c0_47 = arith.constant 0 : index
    %c0_48 = arith.constant 0 : index
    %c64_49 = arith.constant 64 : index
    %97 = vector.load %arg13[%c0_47, %c0_48, %c64_49] : memref<2x6x512xf32, #tpu.memory_space<vmem>>, vector<1x6x30xf32>
    %98 = vector.shape_cast %97 : vector<1x6x30xf32> to vector<6x30xf32>
    %99 = vector.shape_cast %96 : vector<6x30xf32> to vector<1x6x30xf32>
    tpu.vector_store %arg13[%c0_47, %c0_48, %c64_49], %99 {strides = array<i32>} : memref<2x6x512xf32, #tpu.memory_space<vmem>>, vector<1x6x30xf32>,
    %100 = vector.extract_strided_slice %72 {offsets = [0, 192], sizes = [6, 31], strides = [1, 1]} : vector<6x960xf32> to vector<6x31xf32>
    %101 = vector.extract_strided_slice %72 {offsets = [0, 224], sizes = [6, 31], strides = [1, 1]} : vector<6x960xf32> to vector<6x31xf32>
    %102 = arith.maximumf %100, %101 : vector<6x31xf32>
    %103 = vector.extract_strided_slice %102 {offsets = [0, 0], sizes = [6, 30], strides = [1, 1]} : vector<6x31xf32> to vector<6x30xf32>
    %104 = vector.extract_strided_slice %102 {offsets = [0, 1], sizes = [6, 30], strides = [1, 1]} : vector<6x31xf32> to vector<6x30xf32>
    %105 = arith.maximumf %103, %104 : vector<6x30xf32>
    %c0_50 = arith.constant 0 : index
    %c0_51 = arith.constant 0 : index
    %c96 = arith.constant 96 : index
    %106 = vector.load %arg13[%c0_50, %c0_51, %c96] : memref<2x6x512xf32, #tpu.memory_space<vmem>>, vector<1x6x30xf32>
    %107 = vector.shape_cast %106 : vector<1x6x30xf32> to vector<6x30xf32>
    %108 = vector.shape_cast %105 : vector<6x30xf32> to vector<1x6x30xf32>
    tpu.vector_store %arg13[%c0_50, %c0_51, %c96], %108 {strides = array<i32>} : memref<2x6x512xf32, #tpu.memory_space<vmem>>, vector<1x6x30xf32>,
    %109 = vector.extract_strided_slice %72 {offsets = [0, 256], sizes = [6, 31], strides = [1, 1]} : vector<6x960xf32> to vector<6x31xf32>
    %110 = vector.extract_strided_slice %72 {offsets = [0, 288], sizes = [6, 31], strides = [1, 1]} : vector<6x960xf32> to vector<6x31xf32>
    %111 = arith.maximumf %109, %110 : vector<6x31xf32>
    %112 = vector.extract_strided_slice %111 {offsets = [0, 0], sizes = [6, 30], strides = [1, 1]} : vector<6x31xf32> to vector<6x30xf32>
    %113 = vector.extract_strided_slice %111 {offsets = [0, 1], sizes = [6, 30], strides = [1, 1]} : vector<6x31xf32> to vector<6x30xf32>
    %114 = arith.maximumf %112, %113 : vector<6x30xf32>
    %c0_52 = arith.constant 0 : index
    %c0_53 = arith.constant 0 : index
    %c128 = arith.constant 128 : index
    %115 = vector.load %arg13[%c0_52, %c0_53, %c128] : memref<2x6x512xf32, #tpu.memory_space<vmem>>, vector<1x6x30xf32>
    %116 = vector.shape_cast %115 : vector<1x6x30xf32> to vector<6x30xf32>
    %117 = vector.shape_cast %114 : vector<6x30xf32> to vector<1x6x30xf32>
    tpu.vector_store %arg13[%c0_52, %c0_53, %c128], %117 {strides = array<i32>} : memref<2x6x512xf32, #tpu.memory_space<vmem>>, vector<1x6x30xf32>,
    %118 = vector.extract_strided_slice %72 {offsets = [0, 320], sizes = [6, 31], strides = [1, 1]} : vector<6x960xf32> to vector<6x31xf32>
    %119 = vector.extract_strided_slice %72 {offsets = [0, 352], sizes = [6, 31], strides = [1, 1]} : vector<6x960xf32> to vector<6x31xf32>
    %120 = arith.maximumf %118, %119 : vector<6x31xf32>
    %121 = vector.extract_strided_slice %120 {offsets = [0, 0], sizes = [6, 30], strides = [1, 1]} : vector<6x31xf32> to vector<6x30xf32>
    %122 = vector.extract_strided_slice %120 {offsets = [0, 1], sizes = [6, 30], strides = [1, 1]} : vector<6x31xf32> to vector<6x30xf32>
    %123 = arith.maximumf %121, %122 : vector<6x30xf32>
    %c0_54 = arith.constant 0 : index
    %c0_55 = arith.constant 0 : index
    %c160 = arith.constant 160 : index
    %124 = vector.load %arg13[%c0_54, %c0_55, %c160] : memref<2x6x512xf32, #tpu.memory_space<vmem>>, vector<1x6x30xf32>
    %125 = vector.shape_cast %124 : vector<1x6x30xf32> to vector<6x30xf32>
    %126 = vector.shape_cast %123 : vector<6x30xf32> to vector<1x6x30xf32>
    tpu.vector_store %arg13[%c0_54, %c0_55, %c160], %126 {strides = array<i32>} : memref<2x6x512xf32, #tpu.memory_space<vmem>>, vector<1x6x30xf32>,
    %127 = vector.extract_strided_slice %72 {offsets = [0, 384], sizes = [6, 31], strides = [1, 1]} : vector<6x960xf32> to vector<6x31xf32>
    %128 = vector.extract_strided_slice %72 {offsets = [0, 416], sizes = [6, 31], strides = [1, 1]} : vector<6x960xf32> to vector<6x31xf32>
    %129 = arith.maximumf %127, %128 : vector<6x31xf32>
    %130 = vector.extract_strided_slice %129 {offsets = [0, 0], sizes = [6, 30], strides = [1, 1]} : vector<6x31xf32> to vector<6x30xf32>
    %131 = vector.extract_strided_slice %129 {offsets = [0, 1], sizes = [6, 30], strides = [1, 1]} : vector<6x31xf32> to vector<6x30xf32>
    %132 = arith.maximumf %130, %131 : vector<6x30xf32>
    %c0_56 = arith.constant 0 : index
    %c0_57 = arith.constant 0 : index
    %c192 = arith.constant 192 : index
    %133 = vector.load %arg13[%c0_56, %c0_57, %c192] : memref<2x6x512xf32, #tpu.memory_space<vmem>>, vector<1x6x30xf32>
    %134 = vector.shape_cast %133 : vector<1x6x30xf32> to vector<6x30xf32>
    %135 = vector.shape_cast %132 : vector<6x30xf32> to vector<1x6x30xf32>
    tpu.vector_store %arg13[%c0_56, %c0_57, %c192], %135 {strides = array<i32>} : memref<2x6x512xf32, #tpu.memory_space<vmem>>, vector<1x6x30xf32>,
    %136 = vector.extract_strided_slice %72 {offsets = [0, 448], sizes = [6, 31], strides = [1, 1]} : vector<6x960xf32> to vector<6x31xf32>
    %137 = vector.extract_strided_slice %72 {offsets = [0, 480], sizes = [6, 31], strides = [1, 1]} : vector<6x960xf32> to vector<6x31xf32>
    %138 = arith.maximumf %136, %137 : vector<6x31xf32>
    %139 = vector.extract_strided_slice %138 {offsets = [0, 0], sizes = [6, 30], strides = [1, 1]} : vector<6x31xf32> to vector<6x30xf32>
    %140 = vector.extract_strided_slice %138 {offsets = [0, 1], sizes = [6, 30], strides = [1, 1]} : vector<6x31xf32> to vector<6x30xf32>
    %141 = arith.maximumf %139, %140 : vector<6x30xf32>
    %c0_58 = arith.constant 0 : index
    %c0_59 = arith.constant 0 : index
    %c224 = arith.constant 224 : index
    %142 = vector.load %arg13[%c0_58, %c0_59, %c224] : memref<2x6x512xf32, #tpu.memory_space<vmem>>, vector<1x6x30xf32>
    %143 = vector.shape_cast %142 : vector<1x6x30xf32> to vector<6x30xf32>
    %144 = vector.shape_cast %141 : vector<6x30xf32> to vector<1x6x30xf32>
    tpu.vector_store %arg13[%c0_58, %c0_59, %c224], %144 {strides = array<i32>} : memref<2x6x512xf32, #tpu.memory_space<vmem>>, vector<1x6x30xf32>,
    %145 = vector.extract_strided_slice %72 {offsets = [0, 512], sizes = [6, 31], strides = [1, 1]} : vector<6x960xf32> to vector<6x31xf32>
    %146 = vector.extract_strided_slice %72 {offsets = [0, 544], sizes = [6, 31], strides = [1, 1]} : vector<6x960xf32> to vector<6x31xf32>
    %147 = arith.maximumf %145, %146 : vector<6x31xf32>
    %148 = vector.extract_strided_slice %147 {offsets = [0, 0], sizes = [6, 30], strides = [1, 1]} : vector<6x31xf32> to vector<6x30xf32>
    %149 = vector.extract_strided_slice %147 {offsets = [0, 1], sizes = [6, 30], strides = [1, 1]} : vector<6x31xf32> to vector<6x30xf32>
    %150 = arith.maximumf %148, %149 : vector<6x30xf32>
    %c0_60 = arith.constant 0 : index
    %c0_61 = arith.constant 0 : index
    %c256 = arith.constant 256 : index
    %151 = vector.load %arg13[%c0_60, %c0_61, %c256] : memref<2x6x512xf32, #tpu.memory_space<vmem>>, vector<1x6x30xf32>
    %152 = vector.shape_cast %151 : vector<1x6x30xf32> to vector<6x30xf32>
    %153 = vector.shape_cast %150 : vector<6x30xf32> to vector<1x6x30xf32>
    tpu.vector_store %arg13[%c0_60, %c0_61, %c256], %153 {strides = array<i32>} : memref<2x6x512xf32, #tpu.memory_space<vmem>>, vector<1x6x30xf32>,
    %154 = vector.extract_strided_slice %72 {offsets = [0, 576], sizes = [6, 31], strides = [1, 1]} : vector<6x960xf32> to vector<6x31xf32>
    %155 = vector.extract_strided_slice %72 {offsets = [0, 608], sizes = [6, 31], strides = [1, 1]} : vector<6x960xf32> to vector<6x31xf32>
    %156 = arith.maximumf %154, %155 : vector<6x31xf32>
    %157 = vector.extract_strided_slice %156 {offsets = [0, 0], sizes = [6, 30], strides = [1, 1]} : vector<6x31xf32> to vector<6x30xf32>
    %158 = vector.extract_strided_slice %156 {offsets = [0, 1], sizes = [6, 30], strides = [1, 1]} : vector<6x31xf32> to vector<6x30xf32>
    %159 = arith.maximumf %157, %158 : vector<6x30xf32>
    %c0_62 = arith.constant 0 : index
    %c0_63 = arith.constant 0 : index
    %c288 = arith.constant 288 : index
    %160 = vector.load %arg13[%c0_62, %c0_63, %c288] : memref<2x6x512xf32, #tpu.memory_space<vmem>>, vector<1x6x30xf32>
    %161 = vector.shape_cast %160 : vector<1x6x30xf32> to vector<6x30xf32>
    %162 = vector.shape_cast %159 : vector<6x30xf32> to vector<1x6x30xf32>
    tpu.vector_store %arg13[%c0_62, %c0_63, %c288], %162 {strides = array<i32>} : memref<2x6x512xf32, #tpu.memory_space<vmem>>, vector<1x6x30xf32>,
    %163 = vector.extract_strided_slice %72 {offsets = [0, 640], sizes = [6, 31], strides = [1, 1]} : vector<6x960xf32> to vector<6x31xf32>
    %164 = vector.extract_strided_slice %72 {offsets = [0, 672], sizes = [6, 31], strides = [1, 1]} : vector<6x960xf32> to vector<6x31xf32>
    %165 = arith.maximumf %163, %164 : vector<6x31xf32>
    %166 = vector.extract_strided_slice %165 {offsets = [0, 0], sizes = [6, 30], strides = [1, 1]} : vector<6x31xf32> to vector<6x30xf32>
    %167 = vector.extract_strided_slice %165 {offsets = [0, 1], sizes = [6, 30], strides = [1, 1]} : vector<6x31xf32> to vector<6x30xf32>
    %168 = arith.maximumf %166, %167 : vector<6x30xf32>
    %c0_64 = arith.constant 0 : index
    %c0_65 = arith.constant 0 : index
    %c320 = arith.constant 320 : index
    %169 = vector.load %arg13[%c0_64, %c0_65, %c320] : memref<2x6x512xf32, #tpu.memory_space<vmem>>, vector<1x6x30xf32>
    %170 = vector.shape_cast %169 : vector<1x6x30xf32> to vector<6x30xf32>
    %171 = vector.shape_cast %168 : vector<6x30xf32> to vector<1x6x30xf32>
    tpu.vector_store %arg13[%c0_64, %c0_65, %c320], %171 {strides = array<i32>} : memref<2x6x512xf32, #tpu.memory_space<vmem>>, vector<1x6x30xf32>,
    %172 = vector.extract_strided_slice %72 {offsets = [0, 704], sizes = [6, 31], strides = [1, 1]} : vector<6x960xf32> to vector<6x31xf32>
    %173 = vector.extract_strided_slice %72 {offsets = [0, 736], sizes = [6, 31], strides = [1, 1]} : vector<6x960xf32> to vector<6x31xf32>
    %174 = arith.maximumf %172, %173 : vector<6x31xf32>
    %175 = vector.extract_strided_slice %174 {offsets = [0, 0], sizes = [6, 30], strides = [1, 1]} : vector<6x31xf32> to vector<6x30xf32>
    %176 = vector.extract_strided_slice %174 {offsets = [0, 1], sizes = [6, 30], strides = [1, 1]} : vector<6x31xf32> to vector<6x30xf32>
    %177 = arith.maximumf %175, %176 : vector<6x30xf32>
    %c0_66 = arith.constant 0 : index
    %c0_67 = arith.constant 0 : index
    %c352 = arith.constant 352 : index
    %178 = vector.load %arg13[%c0_66, %c0_67, %c352] : memref<2x6x512xf32, #tpu.memory_space<vmem>>, vector<1x6x30xf32>
    %179 = vector.shape_cast %178 : vector<1x6x30xf32> to vector<6x30xf32>
    %180 = vector.shape_cast %177 : vector<6x30xf32> to vector<1x6x30xf32>
    tpu.vector_store %arg13[%c0_66, %c0_67, %c352], %180 {strides = array<i32>} : memref<2x6x512xf32, #tpu.memory_space<vmem>>, vector<1x6x30xf32>,
    %181 = vector.extract_strided_slice %72 {offsets = [0, 768], sizes = [6, 31], strides = [1, 1]} : vector<6x960xf32> to vector<6x31xf32>
    %182 = vector.extract_strided_slice %72 {offsets = [0, 800], sizes = [6, 31], strides = [1, 1]} : vector<6x960xf32> to vector<6x31xf32>
    %183 = arith.maximumf %181, %182 : vector<6x31xf32>
    %184 = vector.extract_strided_slice %183 {offsets = [0, 0], sizes = [6, 30], strides = [1, 1]} : vector<6x31xf32> to vector<6x30xf32>
    %185 = vector.extract_strided_slice %183 {offsets = [0, 1], sizes = [6, 30], strides = [1, 1]} : vector<6x31xf32> to vector<6x30xf32>
    %186 = arith.maximumf %184, %185 : vector<6x30xf32>
    %c0_68 = arith.constant 0 : index
    %c0_69 = arith.constant 0 : index
    %c384 = arith.constant 384 : index
    %187 = vector.load %arg13[%c0_68, %c0_69, %c384] : memref<2x6x512xf32, #tpu.memory_space<vmem>>, vector<1x6x30xf32>
    %188 = vector.shape_cast %187 : vector<1x6x30xf32> to vector<6x30xf32>
    %189 = vector.shape_cast %186 : vector<6x30xf32> to vector<1x6x30xf32>
    tpu.vector_store %arg13[%c0_68, %c0_69, %c384], %189 {strides = array<i32>} : memref<2x6x512xf32, #tpu.memory_space<vmem>>, vector<1x6x30xf32>,
    %190 = vector.extract_strided_slice %72 {offsets = [0, 832], sizes = [6, 31], strides = [1, 1]} : vector<6x960xf32> to vector<6x31xf32>
    %191 = vector.extract_strided_slice %72 {offsets = [0, 864], sizes = [6, 31], strides = [1, 1]} : vector<6x960xf32> to vector<6x31xf32>
    %192 = arith.maximumf %190, %191 : vector<6x31xf32>
    %193 = vector.extract_strided_slice %192 {offsets = [0, 0], sizes = [6, 30], strides = [1, 1]} : vector<6x31xf32> to vector<6x30xf32>
    %194 = vector.extract_strided_slice %192 {offsets = [0, 1], sizes = [6, 30], strides = [1, 1]} : vector<6x31xf32> to vector<6x30xf32>
    %195 = arith.maximumf %193, %194 : vector<6x30xf32>
    %c0_70 = arith.constant 0 : index
    %c0_71 = arith.constant 0 : index
    %c416 = arith.constant 416 : index
    %196 = vector.load %arg13[%c0_70, %c0_71, %c416] : memref<2x6x512xf32, #tpu.memory_space<vmem>>, vector<1x6x30xf32>
    %197 = vector.shape_cast %196 : vector<1x6x30xf32> to vector<6x30xf32>
    %198 = vector.shape_cast %195 : vector<6x30xf32> to vector<1x6x30xf32>
    tpu.vector_store %arg13[%c0_70, %c0_71, %c416], %198 {strides = array<i32>} : memref<2x6x512xf32, #tpu.memory_space<vmem>>, vector<1x6x30xf32>,
    %199 = vector.extract_strided_slice %72 {offsets = [0, 896], sizes = [6, 31], strides = [1, 1]} : vector<6x960xf32> to vector<6x31xf32>
    %200 = vector.extract_strided_slice %72 {offsets = [0, 928], sizes = [6, 31], strides = [1, 1]} : vector<6x960xf32> to vector<6x31xf32>
    %201 = arith.maximumf %199, %200 : vector<6x31xf32>
    %202 = vector.extract_strided_slice %201 {offsets = [0, 0], sizes = [6, 30], strides = [1, 1]} : vector<6x31xf32> to vector<6x30xf32>
    %203 = vector.extract_strided_slice %201 {offsets = [0, 1], sizes = [6, 30], strides = [1, 1]} : vector<6x31xf32> to vector<6x30xf32>
    %204 = arith.maximumf %202, %203 : vector<6x30xf32>
    %c0_72 = arith.constant 0 : index
    %c0_73 = arith.constant 0 : index
    %c448 = arith.constant 448 : index
    %205 = vector.load %arg13[%c0_72, %c0_73, %c448] : memref<2x6x512xf32, #tpu.memory_space<vmem>>, vector<1x6x30xf32>
    %206 = vector.shape_cast %205 : vector<1x6x30xf32> to vector<6x30xf32>
    %207 = vector.shape_cast %204 : vector<6x30xf32> to vector<1x6x30xf32>
    tpu.vector_store %arg13[%c0_72, %c0_73, %c448], %207 {strides = array<i32>} : memref<2x6x512xf32, #tpu.memory_space<vmem>>, vector<1x6x30xf32>,
    %cst_74 = arith.constant 0.000000e+00 : f32
    %208 = vector.broadcast %cst_74 : f32 to vector<16x416xf32>
    %c0_75 = arith.constant 0 : index
    %c0_76 = arith.constant 0 : index
    %c0_77 = arith.constant 0 : index
    %209 = vector.load %arg13[%c0_75, %c0_76, %c0_77] : memref<2x6x512xf32, #tpu.memory_space<vmem>>, vector<1x6x416xf32>
    %210 = vector.shape_cast %209 : vector<1x6x416xf32> to vector<6x416xf32>
    %c0_78 = arith.constant 0 : index
    %c0_79 = arith.constant 0 : index
    %c0_80 = arith.constant 0 : index
    %211 = vector.load %arg3[%c0_78, %c0_79, %c0_80] : memref<9x16x6xf32, #tpu.memory_space<vmem>>, vector<1x16x6xf32>
    %212 = vector.shape_cast %211 : vector<1x16x6xf32> to vector<16x6xf32>
    %cst_81 = arith.constant dense<0.000000e+00> : vector<16x416xf32>
    %213 = tpu.matmul %212, %210, %cst_81 {dimension_numbers = #tpu.dot_dimension_numbers<[1], [0], [0], [1], [0, 0, 1, 1], [], []>} : vector<16x6xf32>, vector<6x416xf32>, vector<16x416xf32> -> vector<16x416xf32>
    %214 = arith.addf %208, %213 : vector<16x416xf32>
    %c0_82 = arith.constant 0 : index
    %c0_83 = arith.constant 0 : index
    %c2_84 = arith.constant 2 : index
    %215 = vector.load %arg13[%c0_82, %c0_83, %c2_84] : memref<2x6x512xf32, #tpu.memory_space<vmem>>, vector<1x6x416xf32>
    %216 = vector.shape_cast %215 : vector<1x6x416xf32> to vector<6x416xf32>
    %c1_85 = arith.constant 1 : index
    %c0_86 = arith.constant 0 : index
    %c0_87 = arith.constant 0 : index
    %217 = vector.load %arg3[%c1_85, %c0_86, %c0_87] : memref<9x16x6xf32, #tpu.memory_space<vmem>>, vector<1x16x6xf32>
    %218 = vector.shape_cast %217 : vector<1x16x6xf32> to vector<16x6xf32>
    %cst_88 = arith.constant dense<0.000000e+00> : vector<16x416xf32>
    %219 = tpu.matmul %218, %216, %cst_88 {dimension_numbers = #tpu.dot_dimension_numbers<[1], [0], [0], [1], [0, 0, 1, 1], [], []>} : vector<16x6xf32>, vector<6x416xf32>, vector<16x416xf32> -> vector<16x416xf32>
    %220 = arith.addf %214, %219 : vector<16x416xf32>
    %c0_89 = arith.constant 0 : index
    %c0_90 = arith.constant 0 : index
    %c4_91 = arith.constant 4 : index
    %221 = vector.load %arg13[%c0_89, %c0_90, %c4_91] : memref<2x6x512xf32, #tpu.memory_space<vmem>>, vector<1x6x416xf32>
    %222 = vector.shape_cast %221 : vector<1x6x416xf32> to vector<6x416xf32>
    %c2_92 = arith.constant 2 : index
    %c0_93 = arith.constant 0 : index
    %c0_94 = arith.constant 0 : index
    %223 = vector.load %arg3[%c2_92, %c0_93, %c0_94] : memref<9x16x6xf32, #tpu.memory_space<vmem>>, vector<1x16x6xf32>
    %224 = vector.shape_cast %223 : vector<1x16x6xf32> to vector<16x6xf32>
    %cst_95 = arith.constant dense<0.000000e+00> : vector<16x416xf32>
    %225 = tpu.matmul %224, %222, %cst_95 {dimension_numbers = #tpu.dot_dimension_numbers<[1], [0], [0], [1], [0, 0, 1, 1], [], []>} : vector<16x6xf32>, vector<6x416xf32>, vector<16x416xf32> -> vector<16x416xf32>
    %226 = arith.addf %220, %225 : vector<16x416xf32>
    %c0_96 = arith.constant 0 : index
    %c0_97 = arith.constant 0 : index
    %c32_98 = arith.constant 32 : index
    %227 = vector.load %arg13[%c0_96, %c0_97, %c32_98] : memref<2x6x512xf32, #tpu.memory_space<vmem>>, vector<1x6x416xf32>
    %228 = vector.shape_cast %227 : vector<1x6x416xf32> to vector<6x416xf32>
    %c3_99 = arith.constant 3 : index
    %c0_100 = arith.constant 0 : index
    %c0_101 = arith.constant 0 : index
    %229 = vector.load %arg3[%c3_99, %c0_100, %c0_101] : memref<9x16x6xf32, #tpu.memory_space<vmem>>, vector<1x16x6xf32>
    %230 = vector.shape_cast %229 : vector<1x16x6xf32> to vector<16x6xf32>
    %cst_102 = arith.constant dense<0.000000e+00> : vector<16x416xf32>
    %231 = tpu.matmul %230, %228, %cst_102 {dimension_numbers = #tpu.dot_dimension_numbers<[1], [0], [0], [1], [0, 0, 1, 1], [], []>} : vector<16x6xf32>, vector<6x416xf32>, vector<16x416xf32> -> vector<16x416xf32>
    %232 = arith.addf %226, %231 : vector<16x416xf32>
    %c0_103 = arith.constant 0 : index
    %c0_104 = arith.constant 0 : index
    %c34_105 = arith.constant 34 : index
    %233 = vector.load %arg13[%c0_103, %c0_104, %c34_105] : memref<2x6x512xf32, #tpu.memory_space<vmem>>, vector<1x6x416xf32>
    %234 = vector.shape_cast %233 : vector<1x6x416xf32> to vector<6x416xf32>
    %c4_106 = arith.constant 4 : index
    %c0_107 = arith.constant 0 : index
    %c0_108 = arith.constant 0 : index
    %235 = vector.load %arg3[%c4_106, %c0_107, %c0_108] : memref<9x16x6xf32, #tpu.memory_space<vmem>>, vector<1x16x6xf32>
    %236 = vector.shape_cast %235 : vector<1x16x6xf32> to vector<16x6xf32>
    %cst_109 = arith.constant dense<0.000000e+00> : vector<16x416xf32>
    %237 = tpu.matmul %236, %234, %cst_109 {dimension_numbers = #tpu.dot_dimension_numbers<[1], [0], [0], [1], [0, 0, 1, 1], [], []>} : vector<16x6xf32>, vector<6x416xf32>, vector<16x416xf32> -> vector<16x416xf32>
    %238 = arith.addf %232, %237 : vector<16x416xf32>
    %c0_110 = arith.constant 0 : index
    %c0_111 = arith.constant 0 : index
    %c36 = arith.constant 36 : index
    %239 = vector.load %arg13[%c0_110, %c0_111, %c36] : memref<2x6x512xf32, #tpu.memory_space<vmem>>, vector<1x6x416xf32>
    %240 = vector.shape_cast %239 : vector<1x6x416xf32> to vector<6x416xf32>
    %c5_112 = arith.constant 5 : index
    %c0_113 = arith.constant 0 : index
    %c0_114 = arith.constant 0 : index
    %241 = vector.load %arg3[%c5_112, %c0_113, %c0_114] : memref<9x16x6xf32, #tpu.memory_space<vmem>>, vector<1x16x6xf32>
    %242 = vector.shape_cast %241 : vector<1x16x6xf32> to vector<16x6xf32>
    %cst_115 = arith.constant dense<0.000000e+00> : vector<16x416xf32>
    %243 = tpu.matmul %242, %240, %cst_115 {dimension_numbers = #tpu.dot_dimension_numbers<[1], [0], [0], [1], [0, 0, 1, 1], [], []>} : vector<16x6xf32>, vector<6x416xf32>, vector<16x416xf32> -> vector<16x416xf32>
    %244 = arith.addf %238, %243 : vector<16x416xf32>
    %c0_116 = arith.constant 0 : index
    %c0_117 = arith.constant 0 : index
    %c64_118 = arith.constant 64 : index
    %245 = vector.load %arg13[%c0_116, %c0_117, %c64_118] : memref<2x6x512xf32, #tpu.memory_space<vmem>>, vector<1x6x416xf32>
    %246 = vector.shape_cast %245 : vector<1x6x416xf32> to vector<6x416xf32>
    %c6_119 = arith.constant 6 : index
    %c0_120 = arith.constant 0 : index
    %c0_121 = arith.constant 0 : index
    %247 = vector.load %arg3[%c6_119, %c0_120, %c0_121] : memref<9x16x6xf32, #tpu.memory_space<vmem>>, vector<1x16x6xf32>
    %248 = vector.shape_cast %247 : vector<1x16x6xf32> to vector<16x6xf32>
    %cst_122 = arith.constant dense<0.000000e+00> : vector<16x416xf32>
    %249 = tpu.matmul %248, %246, %cst_122 {dimension_numbers = #tpu.dot_dimension_numbers<[1], [0], [0], [1], [0, 0, 1, 1], [], []>} : vector<16x6xf32>, vector<6x416xf32>, vector<16x416xf32> -> vector<16x416xf32>
    %250 = arith.addf %244, %249 : vector<16x416xf32>
    %c0_123 = arith.constant 0 : index
    %c0_124 = arith.constant 0 : index
    %c66_125 = arith.constant 66 : index
    %251 = vector.load %arg13[%c0_123, %c0_124, %c66_125] : memref<2x6x512xf32, #tpu.memory_space<vmem>>, vector<1x6x416xf32>
    %252 = vector.shape_cast %251 : vector<1x6x416xf32> to vector<6x416xf32>
    %c7_126 = arith.constant 7 : index
    %c0_127 = arith.constant 0 : index
    %c0_128 = arith.constant 0 : index
    %253 = vector.load %arg3[%c7_126, %c0_127, %c0_128] : memref<9x16x6xf32, #tpu.memory_space<vmem>>, vector<1x16x6xf32>
    %254 = vector.shape_cast %253 : vector<1x16x6xf32> to vector<16x6xf32>
    %cst_129 = arith.constant dense<0.000000e+00> : vector<16x416xf32>
    %255 = tpu.matmul %254, %252, %cst_129 {dimension_numbers = #tpu.dot_dimension_numbers<[1], [0], [0], [1], [0, 0, 1, 1], [], []>} : vector<16x6xf32>, vector<6x416xf32>, vector<16x416xf32> -> vector<16x416xf32>
    %256 = arith.addf %250, %255 : vector<16x416xf32>
    %c0_130 = arith.constant 0 : index
    %c0_131 = arith.constant 0 : index
    %c68 = arith.constant 68 : index
    %257 = vector.load %arg13[%c0_130, %c0_131, %c68] : memref<2x6x512xf32, #tpu.memory_space<vmem>>, vector<1x6x416xf32>
    %258 = vector.shape_cast %257 : vector<1x6x416xf32> to vector<6x416xf32>
    %c8_132 = arith.constant 8 : index
    %c0_133 = arith.constant 0 : index
    %c0_134 = arith.constant 0 : index
    %259 = vector.load %arg3[%c8_132, %c0_133, %c0_134] : memref<9x16x6xf32, #tpu.memory_space<vmem>>, vector<1x16x6xf32>
    %260 = vector.shape_cast %259 : vector<1x16x6xf32> to vector<16x6xf32>
    %cst_135 = arith.constant dense<0.000000e+00> : vector<16x416xf32>
    %261 = tpu.matmul %260, %258, %cst_135 {dimension_numbers = #tpu.dot_dimension_numbers<[1], [0], [0], [1], [0, 0, 1, 1], [], []>} : vector<16x6xf32>, vector<6x416xf32>, vector<16x416xf32> -> vector<16x416xf32>
    %262 = arith.addf %256, %261 : vector<16x416xf32>
    %c0_136 = arith.constant 0 : index
    %c0_137 = arith.constant 0 : index
    %263 = vector.load %arg4[%c0_136, %c0_137] : memref<16x1xf32, #tpu.memory_space<vmem>>, vector<16x1xf32>
    %264 = vector.broadcast %263 : vector<16x1xf32> to vector<16x416xf32>
    %265 = arith.addf %262, %264 : vector<16x416xf32>
    %cst_138 = arith.constant 0.000000e+00 : f32
    %266 = vector.broadcast %cst_138 : f32 to vector<16x416xf32>
    %267 = arith.maximumf %265, %266 : vector<16x416xf32>
    %268 = vector.extract_strided_slice %267 {offsets = [0, 0], sizes = [16, 26], strides = [1, 1]} : vector<16x416xf32> to vector<16x26xf32>
    %269 = vector.extract_strided_slice %267 {offsets = [0, 32], sizes = [16, 26], strides = [1, 1]} : vector<16x416xf32> to vector<16x26xf32>
    %270 = arith.maximumf %268, %269 : vector<16x26xf32>
    %271 = vector.extract_strided_slice %270 {offsets = [0, 0], sizes = [16, 24], strides = [1, 1]} : vector<16x26xf32> to vector<16x24xf32>
    %272 = vector.extract_strided_slice %270 {offsets = [0, 2], sizes = [16, 24], strides = [1, 1]} : vector<16x26xf32> to vector<16x24xf32>
    %273 = arith.maximumf %271, %272 : vector<16x24xf32>
    %c0_139 = arith.constant 0 : index
    %c0_140 = arith.constant 0 : index
    %c0_141 = arith.constant 0 : index
    %274 = vector.load %arg14[%c0_139, %c0_140, %c0_141] : memref<2x16x144xf32, #tpu.memory_space<vmem>>, vector<1x16x24xf32>
    %275 = vector.shape_cast %274 : vector<1x16x24xf32> to vector<16x24xf32>
    %276 = vector.shape_cast %273 : vector<16x24xf32> to vector<1x16x24xf32>
    tpu.vector_store %arg14[%c0_139, %c0_140, %c0_141], %276 {strides = array<i32>} : memref<2x16x144xf32, #tpu.memory_space<vmem>>, vector<1x16x24xf32>,
    %277 = vector.extract_strided_slice %267 {offsets = [0, 64], sizes = [16, 26], strides = [1, 1]} : vector<16x416xf32> to vector<16x26xf32>
    %278 = vector.extract_strided_slice %267 {offsets = [0, 96], sizes = [16, 26], strides = [1, 1]} : vector<16x416xf32> to vector<16x26xf32>
    %279 = arith.maximumf %277, %278 : vector<16x26xf32>
    %280 = vector.extract_strided_slice %279 {offsets = [0, 0], sizes = [16, 24], strides = [1, 1]} : vector<16x26xf32> to vector<16x24xf32>
    %281 = vector.extract_strided_slice %279 {offsets = [0, 2], sizes = [16, 24], strides = [1, 1]} : vector<16x26xf32> to vector<16x24xf32>
    %282 = arith.maximumf %280, %281 : vector<16x24xf32>
    %c0_142 = arith.constant 0 : index
    %c0_143 = arith.constant 0 : index
    %c24 = arith.constant 24 : index
    %283 = vector.load %arg14[%c0_142, %c0_143, %c24] : memref<2x16x144xf32, #tpu.memory_space<vmem>>, vector<1x16x24xf32>
    %284 = vector.shape_cast %283 : vector<1x16x24xf32> to vector<16x24xf32>
    %285 = vector.shape_cast %282 : vector<16x24xf32> to vector<1x16x24xf32>
    tpu.vector_store %arg14[%c0_142, %c0_143, %c24], %285 {strides = array<i32>} : memref<2x16x144xf32, #tpu.memory_space<vmem>>, vector<1x16x24xf32>,
    %286 = vector.extract_strided_slice %267 {offsets = [0, 128], sizes = [16, 26], strides = [1, 1]} : vector<16x416xf32> to vector<16x26xf32>
    %287 = vector.extract_strided_slice %267 {offsets = [0, 160], sizes = [16, 26], strides = [1, 1]} : vector<16x416xf32> to vector<16x26xf32>
    %288 = arith.maximumf %286, %287 : vector<16x26xf32>
    %289 = vector.extract_strided_slice %288 {offsets = [0, 0], sizes = [16, 24], strides = [1, 1]} : vector<16x26xf32> to vector<16x24xf32>
    %290 = vector.extract_strided_slice %288 {offsets = [0, 2], sizes = [16, 24], strides = [1, 1]} : vector<16x26xf32> to vector<16x24xf32>
    %291 = arith.maximumf %289, %290 : vector<16x24xf32>
    %c0_144 = arith.constant 0 : index
    %c0_145 = arith.constant 0 : index
    %c48 = arith.constant 48 : index
    %292 = vector.load %arg14[%c0_144, %c0_145, %c48] : memref<2x16x144xf32, #tpu.memory_space<vmem>>, vector<1x16x24xf32>
    %293 = vector.shape_cast %292 : vector<1x16x24xf32> to vector<16x24xf32>
    %294 = vector.shape_cast %291 : vector<16x24xf32> to vector<1x16x24xf32>
    tpu.vector_store %arg14[%c0_144, %c0_145, %c48], %294 {strides = array<i32>} : memref<2x16x144xf32, #tpu.memory_space<vmem>>, vector<1x16x24xf32>,
    %295 = vector.extract_strided_slice %267 {offsets = [0, 192], sizes = [16, 26], strides = [1, 1]} : vector<16x416xf32> to vector<16x26xf32>
    %296 = vector.extract_strided_slice %267 {offsets = [0, 224], sizes = [16, 26], strides = [1, 1]} : vector<16x416xf32> to vector<16x26xf32>
    %297 = arith.maximumf %295, %296 : vector<16x26xf32>
    %298 = vector.extract_strided_slice %297 {offsets = [0, 0], sizes = [16, 24], strides = [1, 1]} : vector<16x26xf32> to vector<16x24xf32>
    %299 = vector.extract_strided_slice %297 {offsets = [0, 2], sizes = [16, 24], strides = [1, 1]} : vector<16x26xf32> to vector<16x24xf32>
    %300 = arith.maximumf %298, %299 : vector<16x24xf32>
    %c0_146 = arith.constant 0 : index
    %c0_147 = arith.constant 0 : index
    %c72 = arith.constant 72 : index
    %301 = vector.load %arg14[%c0_146, %c0_147, %c72] : memref<2x16x144xf32, #tpu.memory_space<vmem>>, vector<1x16x24xf32>
    %302 = vector.shape_cast %301 : vector<1x16x24xf32> to vector<16x24xf32>
    %303 = vector.shape_cast %300 : vector<16x24xf32> to vector<1x16x24xf32>
    tpu.vector_store %arg14[%c0_146, %c0_147, %c72], %303 {strides = array<i32>} : memref<2x16x144xf32, #tpu.memory_space<vmem>>, vector<1x16x24xf32>,
    %304 = vector.extract_strided_slice %267 {offsets = [0, 256], sizes = [16, 26], strides = [1, 1]} : vector<16x416xf32> to vector<16x26xf32>
    %305 = vector.extract_strided_slice %267 {offsets = [0, 288], sizes = [16, 26], strides = [1, 1]} : vector<16x416xf32> to vector<16x26xf32>
    %306 = arith.maximumf %304, %305 : vector<16x26xf32>
    %307 = vector.extract_strided_slice %306 {offsets = [0, 0], sizes = [16, 24], strides = [1, 1]} : vector<16x26xf32> to vector<16x24xf32>
    %308 = vector.extract_strided_slice %306 {offsets = [0, 2], sizes = [16, 24], strides = [1, 1]} : vector<16x26xf32> to vector<16x24xf32>
    %309 = arith.maximumf %307, %308 : vector<16x24xf32>
    %c0_148 = arith.constant 0 : index
    %c0_149 = arith.constant 0 : index
    %c96_150 = arith.constant 96 : index
    %310 = vector.load %arg14[%c0_148, %c0_149, %c96_150] : memref<2x16x144xf32, #tpu.memory_space<vmem>>, vector<1x16x24xf32>
    %311 = vector.shape_cast %310 : vector<1x16x24xf32> to vector<16x24xf32>
    %312 = vector.shape_cast %309 : vector<16x24xf32> to vector<1x16x24xf32>
    tpu.vector_store %arg14[%c0_148, %c0_149, %c96_150], %312 {strides = array<i32>} : memref<2x16x144xf32, #tpu.memory_space<vmem>>, vector<1x16x24xf32>,
    %313 = vector.extract_strided_slice %267 {offsets = [0, 320], sizes = [16, 26], strides = [1, 1]} : vector<16x416xf32> to vector<16x26xf32>
    %314 = vector.extract_strided_slice %267 {offsets = [0, 352], sizes = [16, 26], strides = [1, 1]} : vector<16x416xf32> to vector<16x26xf32>
    %315 = arith.maximumf %313, %314 : vector<16x26xf32>
    %316 = vector.extract_strided_slice %315 {offsets = [0, 0], sizes = [16, 24], strides = [1, 1]} : vector<16x26xf32> to vector<16x24xf32>
    %317 = vector.extract_strided_slice %315 {offsets = [0, 2], sizes = [16, 24], strides = [1, 1]} : vector<16x26xf32> to vector<16x24xf32>
    %318 = arith.maximumf %316, %317 : vector<16x24xf32>
    %c0_151 = arith.constant 0 : index
    %c0_152 = arith.constant 0 : index
    %c120 = arith.constant 120 : index
    %319 = vector.load %arg14[%c0_151, %c0_152, %c120] : memref<2x16x144xf32, #tpu.memory_space<vmem>>, vector<1x16x24xf32>
    %320 = vector.shape_cast %319 : vector<1x16x24xf32> to vector<16x24xf32>
    %321 = vector.shape_cast %318 : vector<16x24xf32> to vector<1x16x24xf32>
    tpu.vector_store %arg14[%c0_151, %c0_152, %c120], %321 {strides = array<i32>} : memref<2x16x144xf32, #tpu.memory_space<vmem>>, vector<1x16x24xf32>,
    %c0_153 = arith.constant 0 : index
    %c0_154 = arith.constant 0 : index
    %c0_155 = arith.constant 0 : index
    %322 = vector.load %arg14[%c0_153, %c0_154, %c0_155] : memref<2x16x144xf32, #tpu.memory_space<vmem>>, vector<1x16x144xf32>
    %323 = vector.shape_cast %322 : vector<1x16x144xf32> to vector<16x144xf32>
    %c0_156 = arith.constant 0 : index
    %c0_157 = arith.constant 0 : index
    %324 = vector.load %arg5[%c0_156, %c0_157] : memref<144x36xf32, #tpu.memory_space<vmem>>, vector<144x36xf32>
    %cst_158 = arith.constant dense<0.000000e+00> : vector<16x36xf32>
    %325 = tpu.matmul %323, %324, %cst_158 {dimension_numbers = #tpu.dot_dimension_numbers<[1], [0], [0], [1], [0, 0, 1, 1], [], []>} : vector<16x144xf32>, vector<144x36xf32>, vector<16x36xf32> -> vector<16x36xf32>
    %c0_159 = arith.constant 0 : index
    %c0_160 = arith.constant 0 : index
    %326 = vector.load %arg7[%c0_159, %c0_160] : memref<1x120xf32, #tpu.memory_space<vmem>>, vector<1x120xf32>
    %327 = vector.extract_strided_slice %325 {offsets = [0, 0], sizes = [1, 36], strides = [1, 1]} : vector<16x36xf32> to vector<1x36xf32>
    %c0_161 = arith.constant 0 : index
    %c0_162 = arith.constant 0 : index
    %c0_163 = arith.constant 0 : index
    %328 = vector.load %arg6[%c0_161, %c0_162, %c0_163] : memref<16x36x120xf32, #tpu.memory_space<vmem>>, vector<1x36x120xf32>
    %329 = vector.shape_cast %328 : vector<1x36x120xf32> to vector<36x120xf32>
    %cst_164 = arith.constant dense<0.000000e+00> : vector<1x120xf32>
    %330 = tpu.matmul %327, %329, %cst_164 {dimension_numbers = #tpu.dot_dimension_numbers<[1], [0], [0], [1], [0, 0, 1, 1], [], []>} : vector<1x36xf32>, vector<36x120xf32>, vector<1x120xf32> -> vector<1x120xf32>
    %331 = arith.addf %326, %330 : vector<1x120xf32>
    %332 = vector.extract_strided_slice %325 {offsets = [1, 0], sizes = [1, 36], strides = [1, 1]} : vector<16x36xf32> to vector<1x36xf32>
    %c1_165 = arith.constant 1 : index
    %c0_166 = arith.constant 0 : index
    %c0_167 = arith.constant 0 : index
    %333 = vector.load %arg6[%c1_165, %c0_166, %c0_167] : memref<16x36x120xf32, #tpu.memory_space<vmem>>, vector<1x36x120xf32>
    %334 = vector.shape_cast %333 : vector<1x36x120xf32> to vector<36x120xf32>
    %cst_168 = arith.constant dense<0.000000e+00> : vector<1x120xf32>
    %335 = tpu.matmul %332, %334, %cst_168 {dimension_numbers = #tpu.dot_dimension_numbers<[1], [0], [0], [1], [0, 0, 1, 1], [], []>} : vector<1x36xf32>, vector<36x120xf32>, vector<1x120xf32> -> vector<1x120xf32>
    %336 = arith.addf %331, %335 : vector<1x120xf32>
    %337 = vector.extract_strided_slice %325 {offsets = [2, 0], sizes = [1, 36], strides = [1, 1]} : vector<16x36xf32> to vector<1x36xf32>
    %c2_169 = arith.constant 2 : index
    %c0_170 = arith.constant 0 : index
    %c0_171 = arith.constant 0 : index
    %338 = vector.load %arg6[%c2_169, %c0_170, %c0_171] : memref<16x36x120xf32, #tpu.memory_space<vmem>>, vector<1x36x120xf32>
    %339 = vector.shape_cast %338 : vector<1x36x120xf32> to vector<36x120xf32>
    %cst_172 = arith.constant dense<0.000000e+00> : vector<1x120xf32>
    %340 = tpu.matmul %337, %339, %cst_172 {dimension_numbers = #tpu.dot_dimension_numbers<[1], [0], [0], [1], [0, 0, 1, 1], [], []>} : vector<1x36xf32>, vector<36x120xf32>, vector<1x120xf32> -> vector<1x120xf32>
    %341 = arith.addf %336, %340 : vector<1x120xf32>
    %342 = vector.extract_strided_slice %325 {offsets = [3, 0], sizes = [1, 36], strides = [1, 1]} : vector<16x36xf32> to vector<1x36xf32>
    %c3_173 = arith.constant 3 : index
    %c0_174 = arith.constant 0 : index
    %c0_175 = arith.constant 0 : index
    %343 = vector.load %arg6[%c3_173, %c0_174, %c0_175] : memref<16x36x120xf32, #tpu.memory_space<vmem>>, vector<1x36x120xf32>
    %344 = vector.shape_cast %343 : vector<1x36x120xf32> to vector<36x120xf32>
    %cst_176 = arith.constant dense<0.000000e+00> : vector<1x120xf32>
    %345 = tpu.matmul %342, %344, %cst_176 {dimension_numbers = #tpu.dot_dimension_numbers<[1], [0], [0], [1], [0, 0, 1, 1], [], []>} : vector<1x36xf32>, vector<36x120xf32>, vector<1x120xf32> -> vector<1x120xf32>
    %346 = arith.addf %341, %345 : vector<1x120xf32>
    %347 = vector.extract_strided_slice %325 {offsets = [4, 0], sizes = [1, 36], strides = [1, 1]} : vector<16x36xf32> to vector<1x36xf32>
    %c4_177 = arith.constant 4 : index
    %c0_178 = arith.constant 0 : index
    %c0_179 = arith.constant 0 : index
    %348 = vector.load %arg6[%c4_177, %c0_178, %c0_179] : memref<16x36x120xf32, #tpu.memory_space<vmem>>, vector<1x36x120xf32>
    %349 = vector.shape_cast %348 : vector<1x36x120xf32> to vector<36x120xf32>
    %cst_180 = arith.constant dense<0.000000e+00> : vector<1x120xf32>
    %350 = tpu.matmul %347, %349, %cst_180 {dimension_numbers = #tpu.dot_dimension_numbers<[1], [0], [0], [1], [0, 0, 1, 1], [], []>} : vector<1x36xf32>, vector<36x120xf32>, vector<1x120xf32> -> vector<1x120xf32>
    %351 = arith.addf %346, %350 : vector<1x120xf32>
    %352 = vector.extract_strided_slice %325 {offsets = [5, 0], sizes = [1, 36], strides = [1, 1]} : vector<16x36xf32> to vector<1x36xf32>
    %c5_181 = arith.constant 5 : index
    %c0_182 = arith.constant 0 : index
    %c0_183 = arith.constant 0 : index
    %353 = vector.load %arg6[%c5_181, %c0_182, %c0_183] : memref<16x36x120xf32, #tpu.memory_space<vmem>>, vector<1x36x120xf32>
    %354 = vector.shape_cast %353 : vector<1x36x120xf32> to vector<36x120xf32>
    %cst_184 = arith.constant dense<0.000000e+00> : vector<1x120xf32>
    %355 = tpu.matmul %352, %354, %cst_184 {dimension_numbers = #tpu.dot_dimension_numbers<[1], [0], [0], [1], [0, 0, 1, 1], [], []>} : vector<1x36xf32>, vector<36x120xf32>, vector<1x120xf32> -> vector<1x120xf32>
    %356 = arith.addf %351, %355 : vector<1x120xf32>
    %357 = vector.extract_strided_slice %325 {offsets = [6, 0], sizes = [1, 36], strides = [1, 1]} : vector<16x36xf32> to vector<1x36xf32>
    %c6_185 = arith.constant 6 : index
    %c0_186 = arith.constant 0 : index
    %c0_187 = arith.constant 0 : index
    %358 = vector.load %arg6[%c6_185, %c0_186, %c0_187] : memref<16x36x120xf32, #tpu.memory_space<vmem>>, vector<1x36x120xf32>
    %359 = vector.shape_cast %358 : vector<1x36x120xf32> to vector<36x120xf32>
    %cst_188 = arith.constant dense<0.000000e+00> : vector<1x120xf32>
    %360 = tpu.matmul %357, %359, %cst_188 {dimension_numbers = #tpu.dot_dimension_numbers<[1], [0], [0], [1], [0, 0, 1, 1], [], []>} : vector<1x36xf32>, vector<36x120xf32>, vector<1x120xf32> -> vector<1x120xf32>
    %361 = arith.addf %356, %360 : vector<1x120xf32>
    %362 = vector.extract_strided_slice %325 {offsets = [7, 0], sizes = [1, 36], strides = [1, 1]} : vector<16x36xf32> to vector<1x36xf32>
    %c7_189 = arith.constant 7 : index
    %c0_190 = arith.constant 0 : index
    %c0_191 = arith.constant 0 : index
    %363 = vector.load %arg6[%c7_189, %c0_190, %c0_191] : memref<16x36x120xf32, #tpu.memory_space<vmem>>, vector<1x36x120xf32>
    %364 = vector.shape_cast %363 : vector<1x36x120xf32> to vector<36x120xf32>
    %cst_192 = arith.constant dense<0.000000e+00> : vector<1x120xf32>
    %365 = tpu.matmul %362, %364, %cst_192 {dimension_numbers = #tpu.dot_dimension_numbers<[1], [0], [0], [1], [0, 0, 1, 1], [], []>} : vector<1x36xf32>, vector<36x120xf32>, vector<1x120xf32> -> vector<1x120xf32>
    %366 = arith.addf %361, %365 : vector<1x120xf32>
    %367 = vector.extract_strided_slice %325 {offsets = [8, 0], sizes = [1, 36], strides = [1, 1]} : vector<16x36xf32> to vector<1x36xf32>
    %c8_193 = arith.constant 8 : index
    %c0_194 = arith.constant 0 : index
    %c0_195 = arith.constant 0 : index
    %368 = vector.load %arg6[%c8_193, %c0_194, %c0_195] : memref<16x36x120xf32, #tpu.memory_space<vmem>>, vector<1x36x120xf32>
    %369 = vector.shape_cast %368 : vector<1x36x120xf32> to vector<36x120xf32>
    %cst_196 = arith.constant dense<0.000000e+00> : vector<1x120xf32>
    %370 = tpu.matmul %367, %369, %cst_196 {dimension_numbers = #tpu.dot_dimension_numbers<[1], [0], [0], [1], [0, 0, 1, 1], [], []>} : vector<1x36xf32>, vector<36x120xf32>, vector<1x120xf32> -> vector<1x120xf32>
    %371 = arith.addf %366, %370 : vector<1x120xf32>
    %372 = vector.extract_strided_slice %325 {offsets = [9, 0], sizes = [1, 36], strides = [1, 1]} : vector<16x36xf32> to vector<1x36xf32>
    %c9 = arith.constant 9 : index
    %c0_197 = arith.constant 0 : index
    %c0_198 = arith.constant 0 : index
    %373 = vector.load %arg6[%c9, %c0_197, %c0_198] : memref<16x36x120xf32, #tpu.memory_space<vmem>>, vector<1x36x120xf32>
    %374 = vector.shape_cast %373 : vector<1x36x120xf32> to vector<36x120xf32>
    %cst_199 = arith.constant dense<0.000000e+00> : vector<1x120xf32>
    %375 = tpu.matmul %372, %374, %cst_199 {dimension_numbers = #tpu.dot_dimension_numbers<[1], [0], [0], [1], [0, 0, 1, 1], [], []>} : vector<1x36xf32>, vector<36x120xf32>, vector<1x120xf32> -> vector<1x120xf32>
    %376 = arith.addf %371, %375 : vector<1x120xf32>
    %377 = vector.extract_strided_slice %325 {offsets = [10, 0], sizes = [1, 36], strides = [1, 1]} : vector<16x36xf32> to vector<1x36xf32>
    %c10 = arith.constant 10 : index
    %c0_200 = arith.constant 0 : index
    %c0_201 = arith.constant 0 : index
    %378 = vector.load %arg6[%c10, %c0_200, %c0_201] : memref<16x36x120xf32, #tpu.memory_space<vmem>>, vector<1x36x120xf32>
    %379 = vector.shape_cast %378 : vector<1x36x120xf32> to vector<36x120xf32>
    %cst_202 = arith.constant dense<0.000000e+00> : vector<1x120xf32>
    %380 = tpu.matmul %377, %379, %cst_202 {dimension_numbers = #tpu.dot_dimension_numbers<[1], [0], [0], [1], [0, 0, 1, 1], [], []>} : vector<1x36xf32>, vector<36x120xf32>, vector<1x120xf32> -> vector<1x120xf32>
    %381 = arith.addf %376, %380 : vector<1x120xf32>
    %382 = vector.extract_strided_slice %325 {offsets = [11, 0], sizes = [1, 36], strides = [1, 1]} : vector<16x36xf32> to vector<1x36xf32>
    %c11 = arith.constant 11 : index
    %c0_203 = arith.constant 0 : index
    %c0_204 = arith.constant 0 : index
    %383 = vector.load %arg6[%c11, %c0_203, %c0_204] : memref<16x36x120xf32, #tpu.memory_space<vmem>>, vector<1x36x120xf32>
    %384 = vector.shape_cast %383 : vector<1x36x120xf32> to vector<36x120xf32>
    %cst_205 = arith.constant dense<0.000000e+00> : vector<1x120xf32>
    %385 = tpu.matmul %382, %384, %cst_205 {dimension_numbers = #tpu.dot_dimension_numbers<[1], [0], [0], [1], [0, 0, 1, 1], [], []>} : vector<1x36xf32>, vector<36x120xf32>, vector<1x120xf32> -> vector<1x120xf32>
    %386 = arith.addf %381, %385 : vector<1x120xf32>
    %387 = vector.extract_strided_slice %325 {offsets = [12, 0], sizes = [1, 36], strides = [1, 1]} : vector<16x36xf32> to vector<1x36xf32>
    %c12 = arith.constant 12 : index
    %c0_206 = arith.constant 0 : index
    %c0_207 = arith.constant 0 : index
    %388 = vector.load %arg6[%c12, %c0_206, %c0_207] : memref<16x36x120xf32, #tpu.memory_space<vmem>>, vector<1x36x120xf32>
    %389 = vector.shape_cast %388 : vector<1x36x120xf32> to vector<36x120xf32>
    %cst_208 = arith.constant dense<0.000000e+00> : vector<1x120xf32>
    %390 = tpu.matmul %387, %389, %cst_208 {dimension_numbers = #tpu.dot_dimension_numbers<[1], [0], [0], [1], [0, 0, 1, 1], [], []>} : vector<1x36xf32>, vector<36x120xf32>, vector<1x120xf32> -> vector<1x120xf32>
    %391 = arith.addf %386, %390 : vector<1x120xf32>
    %392 = vector.extract_strided_slice %325 {offsets = [13, 0], sizes = [1, 36], strides = [1, 1]} : vector<16x36xf32> to vector<1x36xf32>
    %c13 = arith.constant 13 : index
    %c0_209 = arith.constant 0 : index
    %c0_210 = arith.constant 0 : index
    %393 = vector.load %arg6[%c13, %c0_209, %c0_210] : memref<16x36x120xf32, #tpu.memory_space<vmem>>, vector<1x36x120xf32>
    %394 = vector.shape_cast %393 : vector<1x36x120xf32> to vector<36x120xf32>
    %cst_211 = arith.constant dense<0.000000e+00> : vector<1x120xf32>
    %395 = tpu.matmul %392, %394, %cst_211 {dimension_numbers = #tpu.dot_dimension_numbers<[1], [0], [0], [1], [0, 0, 1, 1], [], []>} : vector<1x36xf32>, vector<36x120xf32>, vector<1x120xf32> -> vector<1x120xf32>
    %396 = arith.addf %391, %395 : vector<1x120xf32>
    %397 = vector.extract_strided_slice %325 {offsets = [14, 0], sizes = [1, 36], strides = [1, 1]} : vector<16x36xf32> to vector<1x36xf32>
    %c14 = arith.constant 14 : index
    %c0_212 = arith.constant 0 : index
    %c0_213 = arith.constant 0 : index
    %398 = vector.load %arg6[%c14, %c0_212, %c0_213] : memref<16x36x120xf32, #tpu.memory_space<vmem>>, vector<1x36x120xf32>
    %399 = vector.shape_cast %398 : vector<1x36x120xf32> to vector<36x120xf32>
    %cst_214 = arith.constant dense<0.000000e+00> : vector<1x120xf32>
    %400 = tpu.matmul %397, %399, %cst_214 {dimension_numbers = #tpu.dot_dimension_numbers<[1], [0], [0], [1], [0, 0, 1, 1], [], []>} : vector<1x36xf32>, vector<36x120xf32>, vector<1x120xf32> -> vector<1x120xf32>
    %401 = arith.addf %396, %400 : vector<1x120xf32>
    %402 = vector.extract_strided_slice %325 {offsets = [15, 0], sizes = [1, 36], strides = [1, 1]} : vector<16x36xf32> to vector<1x36xf32>
    %c15 = arith.constant 15 : index
    %c0_215 = arith.constant 0 : index
    %c0_216 = arith.constant 0 : index
    %403 = vector.load %arg6[%c15, %c0_215, %c0_216] : memref<16x36x120xf32, #tpu.memory_space<vmem>>, vector<1x36x120xf32>
    %404 = vector.shape_cast %403 : vector<1x36x120xf32> to vector<36x120xf32>
    %cst_217 = arith.constant dense<0.000000e+00> : vector<1x120xf32>
    %405 = tpu.matmul %402, %404, %cst_217 {dimension_numbers = #tpu.dot_dimension_numbers<[1], [0], [0], [1], [0, 0, 1, 1], [], []>} : vector<1x36xf32>, vector<36x120xf32>, vector<1x120xf32> -> vector<1x120xf32>
    %406 = arith.addf %401, %405 : vector<1x120xf32>
    %cst_218 = arith.constant 0.000000e+00 : f32
    %407 = vector.broadcast %cst_218 : f32 to vector<1x120xf32>
    %408 = arith.maximumf %406, %407 : vector<1x120xf32>
    %c0_219 = arith.constant 0 : index
    %c0_220 = arith.constant 0 : index
    %409 = vector.load %arg8[%c0_219, %c0_220] : memref<120x84xf32, #tpu.memory_space<vmem>>, vector<120x84xf32>
    %cst_221 = arith.constant dense<0.000000e+00> : vector<1x84xf32>
    %410 = tpu.matmul %408, %409, %cst_221 {dimension_numbers = #tpu.dot_dimension_numbers<[1], [0], [0], [1], [0, 0, 1, 1], [], []>} : vector<1x120xf32>, vector<120x84xf32>, vector<1x84xf32> -> vector<1x84xf32>
    %c0_222 = arith.constant 0 : index
    %c0_223 = arith.constant 0 : index
    %411 = vector.load %arg9[%c0_222, %c0_223] : memref<1x84xf32, #tpu.memory_space<vmem>>, vector<1x84xf32>
    %412 = arith.addf %410, %411 : vector<1x84xf32>
    %cst_224 = arith.constant 0.000000e+00 : f32
    %413 = vector.broadcast %cst_224 : f32 to vector<1x84xf32>
    %414 = arith.maximumf %412, %413 : vector<1x84xf32>
    %c0_225 = arith.constant 0 : index
    %c0_226 = arith.constant 0 : index
    %415 = vector.load %arg10[%c0_225, %c0_226] : memref<84x10xf32, #tpu.memory_space<vmem>>, vector<84x10xf32>
    %cst_227 = arith.constant dense<0.000000e+00> : vector<1x10xf32>
    %416 = tpu.matmul %414, %415, %cst_227 {dimension_numbers = #tpu.dot_dimension_numbers<[1], [0], [0], [1], [0, 0, 1, 1], [], []>} : vector<1x84xf32>, vector<84x10xf32>, vector<1x10xf32> -> vector<1x10xf32>
    %c0_228 = arith.constant 0 : index
    %c0_229 = arith.constant 0 : index
    %417 = vector.load %arg11[%c0_228, %c0_229] : memref<1x10xf32, #tpu.memory_space<vmem>>, vector<1x10xf32>
    %418 = arith.addf %416, %417 : vector<1x10xf32>
    %c0_230 = arith.constant 0 : index
    %c0_231 = arith.constant 0 : index
    %419 = vector.load %arg12[%c0_230, %c0_231] : memref<2x10xf32, #tpu.memory_space<vmem>>, vector<1x10xf32>
    tpu.vector_store %arg12[%c0_230, %c0_231], %418 {strides = array<i32>} : memref<2x10xf32, #tpu.memory_space<vmem>>, vector<1x10xf32>,
    %cst_232 = arith.constant 0.000000e+00 : f32
    %420 = vector.broadcast %cst_232 : f32 to vector<6x960xf32>
    %c1_233 = arith.constant 1 : index
    %c0_234 = arith.constant 0 : index
    %421 = vector.load %arg0[%c1_233, %c0_234] : memref<2x1056xf32, #tpu.memory_space<vmem>>, vector<1x960xf32>
    %c0_235 = arith.constant 0 : index
    %c0_236 = arith.constant 0 : index
    %c0_237 = arith.constant 0 : index
    %422 = vector.load %arg1[%c0_235, %c0_236, %c0_237] : memref<9x6x1xf32, #tpu.memory_space<vmem>>, vector<1x6x1xf32>
    %423 = vector.shape_cast %422 : vector<1x6x1xf32> to vector<6x1xf32>
    %424 = vector.broadcast %423 : vector<6x1xf32> to vector<6x960xf32>
    %425 = vector.broadcast %421 : vector<1x960xf32> to vector<6x960xf32>
    %426 = arith.mulf %424, %425 : vector<6x960xf32>
    %427 = arith.addf %420, %426 : vector<6x960xf32>
    %c1_238 = arith.constant 1 : index
    %c1_239 = arith.constant 1 : index
    %428 = vector.load %arg0[%c1_238, %c1_239] : memref<2x1056xf32, #tpu.memory_space<vmem>>, vector<1x960xf32>
    %c1_240 = arith.constant 1 : index
    %c0_241 = arith.constant 0 : index
    %c0_242 = arith.constant 0 : index
    %429 = vector.load %arg1[%c1_240, %c0_241, %c0_242] : memref<9x6x1xf32, #tpu.memory_space<vmem>>, vector<1x6x1xf32>
    %430 = vector.shape_cast %429 : vector<1x6x1xf32> to vector<6x1xf32>
    %431 = vector.broadcast %430 : vector<6x1xf32> to vector<6x960xf32>
    %432 = vector.broadcast %428 : vector<1x960xf32> to vector<6x960xf32>
    %433 = arith.mulf %431, %432 : vector<6x960xf32>
    %434 = arith.addf %427, %433 : vector<6x960xf32>
    %c1_243 = arith.constant 1 : index
    %c2_244 = arith.constant 2 : index
    %435 = vector.load %arg0[%c1_243, %c2_244] : memref<2x1056xf32, #tpu.memory_space<vmem>>, vector<1x960xf32>
    %c2_245 = arith.constant 2 : index
    %c0_246 = arith.constant 0 : index
    %c0_247 = arith.constant 0 : index
    %436 = vector.load %arg1[%c2_245, %c0_246, %c0_247] : memref<9x6x1xf32, #tpu.memory_space<vmem>>, vector<1x6x1xf32>
    %437 = vector.shape_cast %436 : vector<1x6x1xf32> to vector<6x1xf32>
    %438 = vector.broadcast %437 : vector<6x1xf32> to vector<6x960xf32>
    %439 = vector.broadcast %435 : vector<1x960xf32> to vector<6x960xf32>
    %440 = arith.mulf %438, %439 : vector<6x960xf32>
    %441 = arith.addf %434, %440 : vector<6x960xf32>
    %c1_248 = arith.constant 1 : index
    %c32_249 = arith.constant 32 : index
    %442 = vector.load %arg0[%c1_248, %c32_249] : memref<2x1056xf32, #tpu.memory_space<vmem>>, vector<1x960xf32>
    %c3_250 = arith.constant 3 : index
    %c0_251 = arith.constant 0 : index
    %c0_252 = arith.constant 0 : index
    %443 = vector.load %arg1[%c3_250, %c0_251, %c0_252] : memref<9x6x1xf32, #tpu.memory_space<vmem>>, vector<1x6x1xf32>
    %444 = vector.shape_cast %443 : vector<1x6x1xf32> to vector<6x1xf32>
    %445 = vector.broadcast %444 : vector<6x1xf32> to vector<6x960xf32>
    %446 = vector.broadcast %442 : vector<1x960xf32> to vector<6x960xf32>
    %447 = arith.mulf %445, %446 : vector<6x960xf32>
    %448 = arith.addf %441, %447 : vector<6x960xf32>
    %c1_253 = arith.constant 1 : index
    %c33_254 = arith.constant 33 : index
    %449 = vector.load %arg0[%c1_253, %c33_254] : memref<2x1056xf32, #tpu.memory_space<vmem>>, vector<1x960xf32>
    %c4_255 = arith.constant 4 : index
    %c0_256 = arith.constant 0 : index
    %c0_257 = arith.constant 0 : index
    %450 = vector.load %arg1[%c4_255, %c0_256, %c0_257] : memref<9x6x1xf32, #tpu.memory_space<vmem>>, vector<1x6x1xf32>
    %451 = vector.shape_cast %450 : vector<1x6x1xf32> to vector<6x1xf32>
    %452 = vector.broadcast %451 : vector<6x1xf32> to vector<6x960xf32>
    %453 = vector.broadcast %449 : vector<1x960xf32> to vector<6x960xf32>
    %454 = arith.mulf %452, %453 : vector<6x960xf32>
    %455 = arith.addf %448, %454 : vector<6x960xf32>
    %c1_258 = arith.constant 1 : index
    %c34_259 = arith.constant 34 : index
    %456 = vector.load %arg0[%c1_258, %c34_259] : memref<2x1056xf32, #tpu.memory_space<vmem>>, vector<1x960xf32>
    %c5_260 = arith.constant 5 : index
    %c0_261 = arith.constant 0 : index
    %c0_262 = arith.constant 0 : index
    %457 = vector.load %arg1[%c5_260, %c0_261, %c0_262] : memref<9x6x1xf32, #tpu.memory_space<vmem>>, vector<1x6x1xf32>
    %458 = vector.shape_cast %457 : vector<1x6x1xf32> to vector<6x1xf32>
    %459 = vector.broadcast %458 : vector<6x1xf32> to vector<6x960xf32>
    %460 = vector.broadcast %456 : vector<1x960xf32> to vector<6x960xf32>
    %461 = arith.mulf %459, %460 : vector<6x960xf32>
    %462 = arith.addf %455, %461 : vector<6x960xf32>
    %c1_263 = arith.constant 1 : index
    %c64_264 = arith.constant 64 : index
    %463 = vector.load %arg0[%c1_263, %c64_264] : memref<2x1056xf32, #tpu.memory_space<vmem>>, vector<1x960xf32>
    %c6_265 = arith.constant 6 : index
    %c0_266 = arith.constant 0 : index
    %c0_267 = arith.constant 0 : index
    %464 = vector.load %arg1[%c6_265, %c0_266, %c0_267] : memref<9x6x1xf32, #tpu.memory_space<vmem>>, vector<1x6x1xf32>
    %465 = vector.shape_cast %464 : vector<1x6x1xf32> to vector<6x1xf32>
    %466 = vector.broadcast %465 : vector<6x1xf32> to vector<6x960xf32>
    %467 = vector.broadcast %463 : vector<1x960xf32> to vector<6x960xf32>
    %468 = arith.mulf %466, %467 : vector<6x960xf32>
    %469 = arith.addf %462, %468 : vector<6x960xf32>
    %c1_268 = arith.constant 1 : index
    %c65_269 = arith.constant 65 : index
    %470 = vector.load %arg0[%c1_268, %c65_269] : memref<2x1056xf32, #tpu.memory_space<vmem>>, vector<1x960xf32>
    %c7_270 = arith.constant 7 : index
    %c0_271 = arith.constant 0 : index
    %c0_272 = arith.constant 0 : index
    %471 = vector.load %arg1[%c7_270, %c0_271, %c0_272] : memref<9x6x1xf32, #tpu.memory_space<vmem>>, vector<1x6x1xf32>
    %472 = vector.shape_cast %471 : vector<1x6x1xf32> to vector<6x1xf32>
    %473 = vector.broadcast %472 : vector<6x1xf32> to vector<6x960xf32>
    %474 = vector.broadcast %470 : vector<1x960xf32> to vector<6x960xf32>
    %475 = arith.mulf %473, %474 : vector<6x960xf32>
    %476 = arith.addf %469, %475 : vector<6x960xf32>
    %c1_273 = arith.constant 1 : index
    %c66_274 = arith.constant 66 : index
    %477 = vector.load %arg0[%c1_273, %c66_274] : memref<2x1056xf32, #tpu.memory_space<vmem>>, vector<1x960xf32>
    %c8_275 = arith.constant 8 : index
    %c0_276 = arith.constant 0 : index
    %c0_277 = arith.constant 0 : index
    %478 = vector.load %arg1[%c8_275, %c0_276, %c0_277] : memref<9x6x1xf32, #tpu.memory_space<vmem>>, vector<1x6x1xf32>
    %479 = vector.shape_cast %478 : vector<1x6x1xf32> to vector<6x1xf32>
    %480 = vector.broadcast %479 : vector<6x1xf32> to vector<6x960xf32>
    %481 = vector.broadcast %477 : vector<1x960xf32> to vector<6x960xf32>
    %482 = arith.mulf %480, %481 : vector<6x960xf32>
    %483 = arith.addf %476, %482 : vector<6x960xf32>
    %c0_278 = arith.constant 0 : index
    %c0_279 = arith.constant 0 : index
    %484 = vector.load %arg2[%c0_278, %c0_279] : memref<6x1xf32, #tpu.memory_space<vmem>>, vector<6x1xf32>
    %485 = vector.broadcast %484 : vector<6x1xf32> to vector<6x960xf32>
    %486 = arith.addf %483, %485 : vector<6x960xf32>
    %cst_280 = arith.constant 0.000000e+00 : f32
    %487 = vector.broadcast %cst_280 : f32 to vector<6x960xf32>
    %488 = arith.maximumf %486, %487 : vector<6x960xf32>
    %489 = vector.extract_strided_slice %488 {offsets = [0, 0], sizes = [6, 31], strides = [1, 1]} : vector<6x960xf32> to vector<6x31xf32>
    %490 = vector.extract_strided_slice %488 {offsets = [0, 32], sizes = [6, 31], strides = [1, 1]} : vector<6x960xf32> to vector<6x31xf32>
    %491 = arith.maximumf %489, %490 : vector<6x31xf32>
    %492 = vector.extract_strided_slice %491 {offsets = [0, 0], sizes = [6, 30], strides = [1, 1]} : vector<6x31xf32> to vector<6x30xf32>
    %493 = vector.extract_strided_slice %491 {offsets = [0, 1], sizes = [6, 30], strides = [1, 1]} : vector<6x31xf32> to vector<6x30xf32>
    %494 = arith.maximumf %492, %493 : vector<6x30xf32>
    %c1_281 = arith.constant 1 : index
    %c0_282 = arith.constant 0 : index
    %c0_283 = arith.constant 0 : index
    %495 = vector.load %arg13[%c1_281, %c0_282, %c0_283] : memref<2x6x512xf32, #tpu.memory_space<vmem>>, vector<1x6x30xf32>
    %496 = vector.shape_cast %495 : vector<1x6x30xf32> to vector<6x30xf32>
    %497 = vector.shape_cast %494 : vector<6x30xf32> to vector<1x6x30xf32>
    tpu.vector_store %arg13[%c1_281, %c0_282, %c0_283], %497 {strides = array<i32>} : memref<2x6x512xf32, #tpu.memory_space<vmem>>, vector<1x6x30xf32>,
    %498 = vector.extract_strided_slice %488 {offsets = [0, 64], sizes = [6, 31], strides = [1, 1]} : vector<6x960xf32> to vector<6x31xf32>
    %499 = vector.extract_strided_slice %488 {offsets = [0, 96], sizes = [6, 31], strides = [1, 1]} : vector<6x960xf32> to vector<6x31xf32>
    %500 = arith.maximumf %498, %499 : vector<6x31xf32>
    %501 = vector.extract_strided_slice %500 {offsets = [0, 0], sizes = [6, 30], strides = [1, 1]} : vector<6x31xf32> to vector<6x30xf32>
    %502 = vector.extract_strided_slice %500 {offsets = [0, 1], sizes = [6, 30], strides = [1, 1]} : vector<6x31xf32> to vector<6x30xf32>
    %503 = arith.maximumf %501, %502 : vector<6x30xf32>
    %c1_284 = arith.constant 1 : index
    %c0_285 = arith.constant 0 : index
    %c32_286 = arith.constant 32 : index
    %504 = vector.load %arg13[%c1_284, %c0_285, %c32_286] : memref<2x6x512xf32, #tpu.memory_space<vmem>>, vector<1x6x30xf32>
    %505 = vector.shape_cast %504 : vector<1x6x30xf32> to vector<6x30xf32>
    %506 = vector.shape_cast %503 : vector<6x30xf32> to vector<1x6x30xf32>
    tpu.vector_store %arg13[%c1_284, %c0_285, %c32_286], %506 {strides = array<i32>} : memref<2x6x512xf32, #tpu.memory_space<vmem>>, vector<1x6x30xf32>,
    %507 = vector.extract_strided_slice %488 {offsets = [0, 128], sizes = [6, 31], strides = [1, 1]} : vector<6x960xf32> to vector<6x31xf32>
    %508 = vector.extract_strided_slice %488 {offsets = [0, 160], sizes = [6, 31], strides = [1, 1]} : vector<6x960xf32> to vector<6x31xf32>
    %509 = arith.maximumf %507, %508 : vector<6x31xf32>
    %510 = vector.extract_strided_slice %509 {offsets = [0, 0], sizes = [6, 30], strides = [1, 1]} : vector<6x31xf32> to vector<6x30xf32>
    %511 = vector.extract_strided_slice %509 {offsets = [0, 1], sizes = [6, 30], strides = [1, 1]} : vector<6x31xf32> to vector<6x30xf32>
    %512 = arith.maximumf %510, %511 : vector<6x30xf32>
    %c1_287 = arith.constant 1 : index
    %c0_288 = arith.constant 0 : index
    %c64_289 = arith.constant 64 : index
    %513 = vector.load %arg13[%c1_287, %c0_288, %c64_289] : memref<2x6x512xf32, #tpu.memory_space<vmem>>, vector<1x6x30xf32>
    %514 = vector.shape_cast %513 : vector<1x6x30xf32> to vector<6x30xf32>
    %515 = vector.shape_cast %512 : vector<6x30xf32> to vector<1x6x30xf32>
    tpu.vector_store %arg13[%c1_287, %c0_288, %c64_289], %515 {strides = array<i32>} : memref<2x6x512xf32, #tpu.memory_space<vmem>>, vector<1x6x30xf32>,
    %516 = vector.extract_strided_slice %488 {offsets = [0, 192], sizes = [6, 31], strides = [1, 1]} : vector<6x960xf32> to vector<6x31xf32>
    %517 = vector.extract_strided_slice %488 {offsets = [0, 224], sizes = [6, 31], strides = [1, 1]} : vector<6x960xf32> to vector<6x31xf32>
    %518 = arith.maximumf %516, %517 : vector<6x31xf32>
    %519 = vector.extract_strided_slice %518 {offsets = [0, 0], sizes = [6, 30], strides = [1, 1]} : vector<6x31xf32> to vector<6x30xf32>
    %520 = vector.extract_strided_slice %518 {offsets = [0, 1], sizes = [6, 30], strides = [1, 1]} : vector<6x31xf32> to vector<6x30xf32>
    %521 = arith.maximumf %519, %520 : vector<6x30xf32>
    %c1_290 = arith.constant 1 : index
    %c0_291 = arith.constant 0 : index
    %c96_292 = arith.constant 96 : index
    %522 = vector.load %arg13[%c1_290, %c0_291, %c96_292] : memref<2x6x512xf32, #tpu.memory_space<vmem>>, vector<1x6x30xf32>
    %523 = vector.shape_cast %522 : vector<1x6x30xf32> to vector<6x30xf32>
    %524 = vector.shape_cast %521 : vector<6x30xf32> to vector<1x6x30xf32>
    tpu.vector_store %arg13[%c1_290, %c0_291, %c96_292], %524 {strides = array<i32>} : memref<2x6x512xf32, #tpu.memory_space<vmem>>, vector<1x6x30xf32>,
    %525 = vector.extract_strided_slice %488 {offsets = [0, 256], sizes = [6, 31], strides = [1, 1]} : vector<6x960xf32> to vector<6x31xf32>
    %526 = vector.extract_strided_slice %488 {offsets = [0, 288], sizes = [6, 31], strides = [1, 1]} : vector<6x960xf32> to vector<6x31xf32>
    %527 = arith.maximumf %525, %526 : vector<6x31xf32>
    %528 = vector.extract_strided_slice %527 {offsets = [0, 0], sizes = [6, 30], strides = [1, 1]} : vector<6x31xf32> to vector<6x30xf32>
    %529 = vector.extract_strided_slice %527 {offsets = [0, 1], sizes = [6, 30], strides = [1, 1]} : vector<6x31xf32> to vector<6x30xf32>
    %530 = arith.maximumf %528, %529 : vector<6x30xf32>
    %c1_293 = arith.constant 1 : index
    %c0_294 = arith.constant 0 : index
    %c128_295 = arith.constant 128 : index
    %531 = vector.load %arg13[%c1_293, %c0_294, %c128_295] : memref<2x6x512xf32, #tpu.memory_space<vmem>>, vector<1x6x30xf32>
    %532 = vector.shape_cast %531 : vector<1x6x30xf32> to vector<6x30xf32>
    %533 = vector.shape_cast %530 : vector<6x30xf32> to vector<1x6x30xf32>
    tpu.vector_store %arg13[%c1_293, %c0_294, %c128_295], %533 {strides = array<i32>} : memref<2x6x512xf32, #tpu.memory_space<vmem>>, vector<1x6x30xf32>,
    %534 = vector.extract_strided_slice %488 {offsets = [0, 320], sizes = [6, 31], strides = [1, 1]} : vector<6x960xf32> to vector<6x31xf32>
    %535 = vector.extract_strided_slice %488 {offsets = [0, 352], sizes = [6, 31], strides = [1, 1]} : vector<6x960xf32> to vector<6x31xf32>
    %536 = arith.maximumf %534, %535 : vector<6x31xf32>
    %537 = vector.extract_strided_slice %536 {offsets = [0, 0], sizes = [6, 30], strides = [1, 1]} : vector<6x31xf32> to vector<6x30xf32>
    %538 = vector.extract_strided_slice %536 {offsets = [0, 1], sizes = [6, 30], strides = [1, 1]} : vector<6x31xf32> to vector<6x30xf32>
    %539 = arith.maximumf %537, %538 : vector<6x30xf32>
    %c1_296 = arith.constant 1 : index
    %c0_297 = arith.constant 0 : index
    %c160_298 = arith.constant 160 : index
    %540 = vector.load %arg13[%c1_296, %c0_297, %c160_298] : memref<2x6x512xf32, #tpu.memory_space<vmem>>, vector<1x6x30xf32>
    %541 = vector.shape_cast %540 : vector<1x6x30xf32> to vector<6x30xf32>
    %542 = vector.shape_cast %539 : vector<6x30xf32> to vector<1x6x30xf32>
    tpu.vector_store %arg13[%c1_296, %c0_297, %c160_298], %542 {strides = array<i32>} : memref<2x6x512xf32, #tpu.memory_space<vmem>>, vector<1x6x30xf32>,
    %543 = vector.extract_strided_slice %488 {offsets = [0, 384], sizes = [6, 31], strides = [1, 1]} : vector<6x960xf32> to vector<6x31xf32>
    %544 = vector.extract_strided_slice %488 {offsets = [0, 416], sizes = [6, 31], strides = [1, 1]} : vector<6x960xf32> to vector<6x31xf32>
    %545 = arith.maximumf %543, %544 : vector<6x31xf32>
    %546 = vector.extract_strided_slice %545 {offsets = [0, 0], sizes = [6, 30], strides = [1, 1]} : vector<6x31xf32> to vector<6x30xf32>
    %547 = vector.extract_strided_slice %545 {offsets = [0, 1], sizes = [6, 30], strides = [1, 1]} : vector<6x31xf32> to vector<6x30xf32>
    %548 = arith.maximumf %546, %547 : vector<6x30xf32>
    %c1_299 = arith.constant 1 : index
    %c0_300 = arith.constant 0 : index
    %c192_301 = arith.constant 192 : index
    %549 = vector.load %arg13[%c1_299, %c0_300, %c192_301] : memref<2x6x512xf32, #tpu.memory_space<vmem>>, vector<1x6x30xf32>
    %550 = vector.shape_cast %549 : vector<1x6x30xf32> to vector<6x30xf32>
    %551 = vector.shape_cast %548 : vector<6x30xf32> to vector<1x6x30xf32>
    tpu.vector_store %arg13[%c1_299, %c0_300, %c192_301], %551 {strides = array<i32>} : memref<2x6x512xf32, #tpu.memory_space<vmem>>, vector<1x6x30xf32>,
    %552 = vector.extract_strided_slice %488 {offsets = [0, 448], sizes = [6, 31], strides = [1, 1]} : vector<6x960xf32> to vector<6x31xf32>
    %553 = vector.extract_strided_slice %488 {offsets = [0, 480], sizes = [6, 31], strides = [1, 1]} : vector<6x960xf32> to vector<6x31xf32>
    %554 = arith.maximumf %552, %553 : vector<6x31xf32>
    %555 = vector.extract_strided_slice %554 {offsets = [0, 0], sizes = [6, 30], strides = [1, 1]} : vector<6x31xf32> to vector<6x30xf32>
    %556 = vector.extract_strided_slice %554 {offsets = [0, 1], sizes = [6, 30], strides = [1, 1]} : vector<6x31xf32> to vector<6x30xf32>
    %557 = arith.maximumf %555, %556 : vector<6x30xf32>
    %c1_302 = arith.constant 1 : index
    %c0_303 = arith.constant 0 : index
    %c224_304 = arith.constant 224 : index
    %558 = vector.load %arg13[%c1_302, %c0_303, %c224_304] : memref<2x6x512xf32, #tpu.memory_space<vmem>>, vector<1x6x30xf32>
    %559 = vector.shape_cast %558 : vector<1x6x30xf32> to vector<6x30xf32>
    %560 = vector.shape_cast %557 : vector<6x30xf32> to vector<1x6x30xf32>
    tpu.vector_store %arg13[%c1_302, %c0_303, %c224_304], %560 {strides = array<i32>} : memref<2x6x512xf32, #tpu.memory_space<vmem>>, vector<1x6x30xf32>,
    %561 = vector.extract_strided_slice %488 {offsets = [0, 512], sizes = [6, 31], strides = [1, 1]} : vector<6x960xf32> to vector<6x31xf32>
    %562 = vector.extract_strided_slice %488 {offsets = [0, 544], sizes = [6, 31], strides = [1, 1]} : vector<6x960xf32> to vector<6x31xf32>
    %563 = arith.maximumf %561, %562 : vector<6x31xf32>
    %564 = vector.extract_strided_slice %563 {offsets = [0, 0], sizes = [6, 30], strides = [1, 1]} : vector<6x31xf32> to vector<6x30xf32>
    %565 = vector.extract_strided_slice %563 {offsets = [0, 1], sizes = [6, 30], strides = [1, 1]} : vector<6x31xf32> to vector<6x30xf32>
    %566 = arith.maximumf %564, %565 : vector<6x30xf32>
    %c1_305 = arith.constant 1 : index
    %c0_306 = arith.constant 0 : index
    %c256_307 = arith.constant 256 : index
    %567 = vector.load %arg13[%c1_305, %c0_306, %c256_307] : memref<2x6x512xf32, #tpu.memory_space<vmem>>, vector<1x6x30xf32>
    %568 = vector.shape_cast %567 : vector<1x6x30xf32> to vector<6x30xf32>
    %569 = vector.shape_cast %566 : vector<6x30xf32> to vector<1x6x30xf32>
    tpu.vector_store %arg13[%c1_305, %c0_306, %c256_307], %569 {strides = array<i32>} : memref<2x6x512xf32, #tpu.memory_space<vmem>>, vector<1x6x30xf32>,
    %570 = vector.extract_strided_slice %488 {offsets = [0, 576], sizes = [6, 31], strides = [1, 1]} : vector<6x960xf32> to vector<6x31xf32>
    %571 = vector.extract_strided_slice %488 {offsets = [0, 608], sizes = [6, 31], strides = [1, 1]} : vector<6x960xf32> to vector<6x31xf32>
    %572 = arith.maximumf %570, %571 : vector<6x31xf32>
    %573 = vector.extract_strided_slice %572 {offsets = [0, 0], sizes = [6, 30], strides = [1, 1]} : vector<6x31xf32> to vector<6x30xf32>
    %574 = vector.extract_strided_slice %572 {offsets = [0, 1], sizes = [6, 30], strides = [1, 1]} : vector<6x31xf32> to vector<6x30xf32>
    %575 = arith.maximumf %573, %574 : vector<6x30xf32>
    %c1_308 = arith.constant 1 : index
    %c0_309 = arith.constant 0 : index
    %c288_310 = arith.constant 288 : index
    %576 = vector.load %arg13[%c1_308, %c0_309, %c288_310] : memref<2x6x512xf32, #tpu.memory_space<vmem>>, vector<1x6x30xf32>
    %577 = vector.shape_cast %576 : vector<1x6x30xf32> to vector<6x30xf32>
    %578 = vector.shape_cast %575 : vector<6x30xf32> to vector<1x6x30xf32>
    tpu.vector_store %arg13[%c1_308, %c0_309, %c288_310], %578 {strides = array<i32>} : memref<2x6x512xf32, #tpu.memory_space<vmem>>, vector<1x6x30xf32>,
    %579 = vector.extract_strided_slice %488 {offsets = [0, 640], sizes = [6, 31], strides = [1, 1]} : vector<6x960xf32> to vector<6x31xf32>
    %580 = vector.extract_strided_slice %488 {offsets = [0, 672], sizes = [6, 31], strides = [1, 1]} : vector<6x960xf32> to vector<6x31xf32>
    %581 = arith.maximumf %579, %580 : vector<6x31xf32>
    %582 = vector.extract_strided_slice %581 {offsets = [0, 0], sizes = [6, 30], strides = [1, 1]} : vector<6x31xf32> to vector<6x30xf32>
    %583 = vector.extract_strided_slice %581 {offsets = [0, 1], sizes = [6, 30], strides = [1, 1]} : vector<6x31xf32> to vector<6x30xf32>
    %584 = arith.maximumf %582, %583 : vector<6x30xf32>
    %c1_311 = arith.constant 1 : index
    %c0_312 = arith.constant 0 : index
    %c320_313 = arith.constant 320 : index
    %585 = vector.load %arg13[%c1_311, %c0_312, %c320_313] : memref<2x6x512xf32, #tpu.memory_space<vmem>>, vector<1x6x30xf32>
    %586 = vector.shape_cast %585 : vector<1x6x30xf32> to vector<6x30xf32>
    %587 = vector.shape_cast %584 : vector<6x30xf32> to vector<1x6x30xf32>
    tpu.vector_store %arg13[%c1_311, %c0_312, %c320_313], %587 {strides = array<i32>} : memref<2x6x512xf32, #tpu.memory_space<vmem>>, vector<1x6x30xf32>,
    %588 = vector.extract_strided_slice %488 {offsets = [0, 704], sizes = [6, 31], strides = [1, 1]} : vector<6x960xf32> to vector<6x31xf32>
    %589 = vector.extract_strided_slice %488 {offsets = [0, 736], sizes = [6, 31], strides = [1, 1]} : vector<6x960xf32> to vector<6x31xf32>
    %590 = arith.maximumf %588, %589 : vector<6x31xf32>
    %591 = vector.extract_strided_slice %590 {offsets = [0, 0], sizes = [6, 30], strides = [1, 1]} : vector<6x31xf32> to vector<6x30xf32>
    %592 = vector.extract_strided_slice %590 {offsets = [0, 1], sizes = [6, 30], strides = [1, 1]} : vector<6x31xf32> to vector<6x30xf32>
    %593 = arith.maximumf %591, %592 : vector<6x30xf32>
    %c1_314 = arith.constant 1 : index
    %c0_315 = arith.constant 0 : index
    %c352_316 = arith.constant 352 : index
    %594 = vector.load %arg13[%c1_314, %c0_315, %c352_316] : memref<2x6x512xf32, #tpu.memory_space<vmem>>, vector<1x6x30xf32>
    %595 = vector.shape_cast %594 : vector<1x6x30xf32> to vector<6x30xf32>
    %596 = vector.shape_cast %593 : vector<6x30xf32> to vector<1x6x30xf32>
    tpu.vector_store %arg13[%c1_314, %c0_315, %c352_316], %596 {strides = array<i32>} : memref<2x6x512xf32, #tpu.memory_space<vmem>>, vector<1x6x30xf32>,
    %597 = vector.extract_strided_slice %488 {offsets = [0, 768], sizes = [6, 31], strides = [1, 1]} : vector<6x960xf32> to vector<6x31xf32>
    %598 = vector.extract_strided_slice %488 {offsets = [0, 800], sizes = [6, 31], strides = [1, 1]} : vector<6x960xf32> to vector<6x31xf32>
    %599 = arith.maximumf %597, %598 : vector<6x31xf32>
    %600 = vector.extract_strided_slice %599 {offsets = [0, 0], sizes = [6, 30], strides = [1, 1]} : vector<6x31xf32> to vector<6x30xf32>
    %601 = vector.extract_strided_slice %599 {offsets = [0, 1], sizes = [6, 30], strides = [1, 1]} : vector<6x31xf32> to vector<6x30xf32>
    %602 = arith.maximumf %600, %601 : vector<6x30xf32>
    %c1_317 = arith.constant 1 : index
    %c0_318 = arith.constant 0 : index
    %c384_319 = arith.constant 384 : index
    %603 = vector.load %arg13[%c1_317, %c0_318, %c384_319] : memref<2x6x512xf32, #tpu.memory_space<vmem>>, vector<1x6x30xf32>
    %604 = vector.shape_cast %603 : vector<1x6x30xf32> to vector<6x30xf32>
    %605 = vector.shape_cast %602 : vector<6x30xf32> to vector<1x6x30xf32>
    tpu.vector_store %arg13[%c1_317, %c0_318, %c384_319], %605 {strides = array<i32>} : memref<2x6x512xf32, #tpu.memory_space<vmem>>, vector<1x6x30xf32>,
    %606 = vector.extract_strided_slice %488 {offsets = [0, 832], sizes = [6, 31], strides = [1, 1]} : vector<6x960xf32> to vector<6x31xf32>
    %607 = vector.extract_strided_slice %488 {offsets = [0, 864], sizes = [6, 31], strides = [1, 1]} : vector<6x960xf32> to vector<6x31xf32>
    %608 = arith.maximumf %606, %607 : vector<6x31xf32>
    %609 = vector.extract_strided_slice %608 {offsets = [0, 0], sizes = [6, 30], strides = [1, 1]} : vector<6x31xf32> to vector<6x30xf32>
    %610 = vector.extract_strided_slice %608 {offsets = [0, 1], sizes = [6, 30], strides = [1, 1]} : vector<6x31xf32> to vector<6x30xf32>
    %611 = arith.maximumf %609, %610 : vector<6x30xf32>
    %c1_320 = arith.constant 1 : index
    %c0_321 = arith.constant 0 : index
    %c416_322 = arith.constant 416 : index
    %612 = vector.load %arg13[%c1_320, %c0_321, %c416_322] : memref<2x6x512xf32, #tpu.memory_space<vmem>>, vector<1x6x30xf32>
    %613 = vector.shape_cast %612 : vector<1x6x30xf32> to vector<6x30xf32>
    %614 = vector.shape_cast %611 : vector<6x30xf32> to vector<1x6x30xf32>
    tpu.vector_store %arg13[%c1_320, %c0_321, %c416_322], %614 {strides = array<i32>} : memref<2x6x512xf32, #tpu.memory_space<vmem>>, vector<1x6x30xf32>,
    %615 = vector.extract_strided_slice %488 {offsets = [0, 896], sizes = [6, 31], strides = [1, 1]} : vector<6x960xf32> to vector<6x31xf32>
    %616 = vector.extract_strided_slice %488 {offsets = [0, 928], sizes = [6, 31], strides = [1, 1]} : vector<6x960xf32> to vector<6x31xf32>
    %617 = arith.maximumf %615, %616 : vector<6x31xf32>
    %618 = vector.extract_strided_slice %617 {offsets = [0, 0], sizes = [6, 30], strides = [1, 1]} : vector<6x31xf32> to vector<6x30xf32>
    %619 = vector.extract_strided_slice %617 {offsets = [0, 1], sizes = [6, 30], strides = [1, 1]} : vector<6x31xf32> to vector<6x30xf32>
    %620 = arith.maximumf %618, %619 : vector<6x30xf32>
    %c1_323 = arith.constant 1 : index
    %c0_324 = arith.constant 0 : index
    %c448_325 = arith.constant 448 : index
    %621 = vector.load %arg13[%c1_323, %c0_324, %c448_325] : memref<2x6x512xf32, #tpu.memory_space<vmem>>, vector<1x6x30xf32>
    %622 = vector.shape_cast %621 : vector<1x6x30xf32> to vector<6x30xf32>
    %623 = vector.shape_cast %620 : vector<6x30xf32> to vector<1x6x30xf32>
    tpu.vector_store %arg13[%c1_323, %c0_324, %c448_325], %623 {strides = array<i32>} : memref<2x6x512xf32, #tpu.memory_space<vmem>>, vector<1x6x30xf32>,
    %cst_326 = arith.constant 0.000000e+00 : f32
    %624 = vector.broadcast %cst_326 : f32 to vector<16x416xf32>
    %c1_327 = arith.constant 1 : index
    %c0_328 = arith.constant 0 : index
    %c0_329 = arith.constant 0 : index
    %625 = vector.load %arg13[%c1_327, %c0_328, %c0_329] : memref<2x6x512xf32, #tpu.memory_space<vmem>>, vector<1x6x416xf32>
    %626 = vector.shape_cast %625 : vector<1x6x416xf32> to vector<6x416xf32>
    %c0_330 = arith.constant 0 : index
    %c0_331 = arith.constant 0 : index
    %c0_332 = arith.constant 0 : index
    %627 = vector.load %arg3[%c0_330, %c0_331, %c0_332] : memref<9x16x6xf32, #tpu.memory_space<vmem>>, vector<1x16x6xf32>
    %628 = vector.shape_cast %627 : vector<1x16x6xf32> to vector<16x6xf32>
    %cst_333 = arith.constant dense<0.000000e+00> : vector<16x416xf32>
    %629 = tpu.matmul %628, %626, %cst_333 {dimension_numbers = #tpu.dot_dimension_numbers<[1], [0], [0], [1], [0, 0, 1, 1], [], []>} : vector<16x6xf32>, vector<6x416xf32>, vector<16x416xf32> -> vector<16x416xf32>
    %630 = arith.addf %624, %629 : vector<16x416xf32>
    %c1_334 = arith.constant 1 : index
    %c0_335 = arith.constant 0 : index
    %c2_336 = arith.constant 2 : index
    %631 = vector.load %arg13[%c1_334, %c0_335, %c2_336] : memref<2x6x512xf32, #tpu.memory_space<vmem>>, vector<1x6x416xf32>
    %632 = vector.shape_cast %631 : vector<1x6x416xf32> to vector<6x416xf32>
    %c1_337 = arith.constant 1 : index
    %c0_338 = arith.constant 0 : index
    %c0_339 = arith.constant 0 : index
    %633 = vector.load %arg3[%c1_337, %c0_338, %c0_339] : memref<9x16x6xf32, #tpu.memory_space<vmem>>, vector<1x16x6xf32>
    %634 = vector.shape_cast %633 : vector<1x16x6xf32> to vector<16x6xf32>
    %cst_340 = arith.constant dense<0.000000e+00> : vector<16x416xf32>
    %635 = tpu.matmul %634, %632, %cst_340 {dimension_numbers = #tpu.dot_dimension_numbers<[1], [0], [0], [1], [0, 0, 1, 1], [], []>} : vector<16x6xf32>, vector<6x416xf32>, vector<16x416xf32> -> vector<16x416xf32>
    %636 = arith.addf %630, %635 : vector<16x416xf32>
    %c1_341 = arith.constant 1 : index
    %c0_342 = arith.constant 0 : index
    %c4_343 = arith.constant 4 : index
    %637 = vector.load %arg13[%c1_341, %c0_342, %c4_343] : memref<2x6x512xf32, #tpu.memory_space<vmem>>, vector<1x6x416xf32>
    %638 = vector.shape_cast %637 : vector<1x6x416xf32> to vector<6x416xf32>
    %c2_344 = arith.constant 2 : index
    %c0_345 = arith.constant 0 : index
    %c0_346 = arith.constant 0 : index
    %639 = vector.load %arg3[%c2_344, %c0_345, %c0_346] : memref<9x16x6xf32, #tpu.memory_space<vmem>>, vector<1x16x6xf32>
    %640 = vector.shape_cast %639 : vector<1x16x6xf32> to vector<16x6xf32>
    %cst_347 = arith.constant dense<0.000000e+00> : vector<16x416xf32>
    %641 = tpu.matmul %640, %638, %cst_347 {dimension_numbers = #tpu.dot_dimension_numbers<[1], [0], [0], [1], [0, 0, 1, 1], [], []>} : vector<16x6xf32>, vector<6x416xf32>, vector<16x416xf32> -> vector<16x416xf32>
    %642 = arith.addf %636, %641 : vector<16x416xf32>
    %c1_348 = arith.constant 1 : index
    %c0_349 = arith.constant 0 : index
    %c32_350 = arith.constant 32 : index
    %643 = vector.load %arg13[%c1_348, %c0_349, %c32_350] : memref<2x6x512xf32, #tpu.memory_space<vmem>>, vector<1x6x416xf32>
    %644 = vector.shape_cast %643 : vector<1x6x416xf32> to vector<6x416xf32>
    %c3_351 = arith.constant 3 : index
    %c0_352 = arith.constant 0 : index
    %c0_353 = arith.constant 0 : index
    %645 = vector.load %arg3[%c3_351, %c0_352, %c0_353] : memref<9x16x6xf32, #tpu.memory_space<vmem>>, vector<1x16x6xf32>
    %646 = vector.shape_cast %645 : vector<1x16x6xf32> to vector<16x6xf32>
    %cst_354 = arith.constant dense<0.000000e+00> : vector<16x416xf32>
    %647 = tpu.matmul %646, %644, %cst_354 {dimension_numbers = #tpu.dot_dimension_numbers<[1], [0], [0], [1], [0, 0, 1, 1], [], []>} : vector<16x6xf32>, vector<6x416xf32>, vector<16x416xf32> -> vector<16x416xf32>
    %648 = arith.addf %642, %647 : vector<16x416xf32>
    %c1_355 = arith.constant 1 : index
    %c0_356 = arith.constant 0 : index
    %c34_357 = arith.constant 34 : index
    %649 = vector.load %arg13[%c1_355, %c0_356, %c34_357] : memref<2x6x512xf32, #tpu.memory_space<vmem>>, vector<1x6x416xf32>
    %650 = vector.shape_cast %649 : vector<1x6x416xf32> to vector<6x416xf32>
    %c4_358 = arith.constant 4 : index
    %c0_359 = arith.constant 0 : index
    %c0_360 = arith.constant 0 : index
    %651 = vector.load %arg3[%c4_358, %c0_359, %c0_360] : memref<9x16x6xf32, #tpu.memory_space<vmem>>, vector<1x16x6xf32>
    %652 = vector.shape_cast %651 : vector<1x16x6xf32> to vector<16x6xf32>
    %cst_361 = arith.constant dense<0.000000e+00> : vector<16x416xf32>
    %653 = tpu.matmul %652, %650, %cst_361 {dimension_numbers = #tpu.dot_dimension_numbers<[1], [0], [0], [1], [0, 0, 1, 1], [], []>} : vector<16x6xf32>, vector<6x416xf32>, vector<16x416xf32> -> vector<16x416xf32>
    %654 = arith.addf %648, %653 : vector<16x416xf32>
    %c1_362 = arith.constant 1 : index
    %c0_363 = arith.constant 0 : index
    %c36_364 = arith.constant 36 : index
    %655 = vector.load %arg13[%c1_362, %c0_363, %c36_364] : memref<2x6x512xf32, #tpu.memory_space<vmem>>, vector<1x6x416xf32>
    %656 = vector.shape_cast %655 : vector<1x6x416xf32> to vector<6x416xf32>
    %c5_365 = arith.constant 5 : index
    %c0_366 = arith.constant 0 : index
    %c0_367 = arith.constant 0 : index
    %657 = vector.load %arg3[%c5_365, %c0_366, %c0_367] : memref<9x16x6xf32, #tpu.memory_space<vmem>>, vector<1x16x6xf32>
    %658 = vector.shape_cast %657 : vector<1x16x6xf32> to vector<16x6xf32>
    %cst_368 = arith.constant dense<0.000000e+00> : vector<16x416xf32>
    %659 = tpu.matmul %658, %656, %cst_368 {dimension_numbers = #tpu.dot_dimension_numbers<[1], [0], [0], [1], [0, 0, 1, 1], [], []>} : vector<16x6xf32>, vector<6x416xf32>, vector<16x416xf32> -> vector<16x416xf32>
    %660 = arith.addf %654, %659 : vector<16x416xf32>
    %c1_369 = arith.constant 1 : index
    %c0_370 = arith.constant 0 : index
    %c64_371 = arith.constant 64 : index
    %661 = vector.load %arg13[%c1_369, %c0_370, %c64_371] : memref<2x6x512xf32, #tpu.memory_space<vmem>>, vector<1x6x416xf32>
    %662 = vector.shape_cast %661 : vector<1x6x416xf32> to vector<6x416xf32>
    %c6_372 = arith.constant 6 : index
    %c0_373 = arith.constant 0 : index
    %c0_374 = arith.constant 0 : index
    %663 = vector.load %arg3[%c6_372, %c0_373, %c0_374] : memref<9x16x6xf32, #tpu.memory_space<vmem>>, vector<1x16x6xf32>
    %664 = vector.shape_cast %663 : vector<1x16x6xf32> to vector<16x6xf32>
    %cst_375 = arith.constant dense<0.000000e+00> : vector<16x416xf32>
    %665 = tpu.matmul %664, %662, %cst_375 {dimension_numbers = #tpu.dot_dimension_numbers<[1], [0], [0], [1], [0, 0, 1, 1], [], []>} : vector<16x6xf32>, vector<6x416xf32>, vector<16x416xf32> -> vector<16x416xf32>
    %666 = arith.addf %660, %665 : vector<16x416xf32>
    %c1_376 = arith.constant 1 : index
    %c0_377 = arith.constant 0 : index
    %c66_378 = arith.constant 66 : index
    %667 = vector.load %arg13[%c1_376, %c0_377, %c66_378] : memref<2x6x512xf32, #tpu.memory_space<vmem>>, vector<1x6x416xf32>
    %668 = vector.shape_cast %667 : vector<1x6x416xf32> to vector<6x416xf32>
    %c7_379 = arith.constant 7 : index
    %c0_380 = arith.constant 0 : index
    %c0_381 = arith.constant 0 : index
    %669 = vector.load %arg3[%c7_379, %c0_380, %c0_381] : memref<9x16x6xf32, #tpu.memory_space<vmem>>, vector<1x16x6xf32>
    %670 = vector.shape_cast %669 : vector<1x16x6xf32> to vector<16x6xf32>
    %cst_382 = arith.constant dense<0.000000e+00> : vector<16x416xf32>
    %671 = tpu.matmul %670, %668, %cst_382 {dimension_numbers = #tpu.dot_dimension_numbers<[1], [0], [0], [1], [0, 0, 1, 1], [], []>} : vector<16x6xf32>, vector<6x416xf32>, vector<16x416xf32> -> vector<16x416xf32>
    %672 = arith.addf %666, %671 : vector<16x416xf32>
    %c1_383 = arith.constant 1 : index
    %c0_384 = arith.constant 0 : index
    %c68_385 = arith.constant 68 : index
    %673 = vector.load %arg13[%c1_383, %c0_384, %c68_385] : memref<2x6x512xf32, #tpu.memory_space<vmem>>, vector<1x6x416xf32>
    %674 = vector.shape_cast %673 : vector<1x6x416xf32> to vector<6x416xf32>
    %c8_386 = arith.constant 8 : index
    %c0_387 = arith.constant 0 : index
    %c0_388 = arith.constant 0 : index
    %675 = vector.load %arg3[%c8_386, %c0_387, %c0_388] : memref<9x16x6xf32, #tpu.memory_space<vmem>>, vector<1x16x6xf32>
    %676 = vector.shape_cast %675 : vector<1x16x6xf32> to vector<16x6xf32>
    %cst_389 = arith.constant dense<0.000000e+00> : vector<16x416xf32>
    %677 = tpu.matmul %676, %674, %cst_389 {dimension_numbers = #tpu.dot_dimension_numbers<[1], [0], [0], [1], [0, 0, 1, 1], [], []>} : vector<16x6xf32>, vector<6x416xf32>, vector<16x416xf32> -> vector<16x416xf32>
    %678 = arith.addf %672, %677 : vector<16x416xf32>
    %c0_390 = arith.constant 0 : index
    %c0_391 = arith.constant 0 : index
    %679 = vector.load %arg4[%c0_390, %c0_391] : memref<16x1xf32, #tpu.memory_space<vmem>>, vector<16x1xf32>
    %680 = vector.broadcast %679 : vector<16x1xf32> to vector<16x416xf32>
    %681 = arith.addf %678, %680 : vector<16x416xf32>
    %cst_392 = arith.constant 0.000000e+00 : f32
    %682 = vector.broadcast %cst_392 : f32 to vector<16x416xf32>
    %683 = arith.maximumf %681, %682 : vector<16x416xf32>
    %684 = vector.extract_strided_slice %683 {offsets = [0, 0], sizes = [16, 26], strides = [1, 1]} : vector<16x416xf32> to vector<16x26xf32>
    %685 = vector.extract_strided_slice %683 {offsets = [0, 32], sizes = [16, 26], strides = [1, 1]} : vector<16x416xf32> to vector<16x26xf32>
    %686 = arith.maximumf %684, %685 : vector<16x26xf32>
    %687 = vector.extract_strided_slice %686 {offsets = [0, 0], sizes = [16, 24], strides = [1, 1]} : vector<16x26xf32> to vector<16x24xf32>
    %688 = vector.extract_strided_slice %686 {offsets = [0, 2], sizes = [16, 24], strides = [1, 1]} : vector<16x26xf32> to vector<16x24xf32>
    %689 = arith.maximumf %687, %688 : vector<16x24xf32>
    %c1_393 = arith.constant 1 : index
    %c0_394 = arith.constant 0 : index
    %c0_395 = arith.constant 0 : index
    %690 = vector.load %arg14[%c1_393, %c0_394, %c0_395] : memref<2x16x144xf32, #tpu.memory_space<vmem>>, vector<1x16x24xf32>
    %691 = vector.shape_cast %690 : vector<1x16x24xf32> to vector<16x24xf32>
    %692 = vector.shape_cast %689 : vector<16x24xf32> to vector<1x16x24xf32>
    tpu.vector_store %arg14[%c1_393, %c0_394, %c0_395], %692 {strides = array<i32>} : memref<2x16x144xf32, #tpu.memory_space<vmem>>, vector<1x16x24xf32>,
    %693 = vector.extract_strided_slice %683 {offsets = [0, 64], sizes = [16, 26], strides = [1, 1]} : vector<16x416xf32> to vector<16x26xf32>
    %694 = vector.extract_strided_slice %683 {offsets = [0, 96], sizes = [16, 26], strides = [1, 1]} : vector<16x416xf32> to vector<16x26xf32>
    %695 = arith.maximumf %693, %694 : vector<16x26xf32>
    %696 = vector.extract_strided_slice %695 {offsets = [0, 0], sizes = [16, 24], strides = [1, 1]} : vector<16x26xf32> to vector<16x24xf32>
    %697 = vector.extract_strided_slice %695 {offsets = [0, 2], sizes = [16, 24], strides = [1, 1]} : vector<16x26xf32> to vector<16x24xf32>
    %698 = arith.maximumf %696, %697 : vector<16x24xf32>
    %c1_396 = arith.constant 1 : index
    %c0_397 = arith.constant 0 : index
    %c24_398 = arith.constant 24 : index
    %699 = vector.load %arg14[%c1_396, %c0_397, %c24_398] : memref<2x16x144xf32, #tpu.memory_space<vmem>>, vector<1x16x24xf32>
    %700 = vector.shape_cast %699 : vector<1x16x24xf32> to vector<16x24xf32>
    %701 = vector.shape_cast %698 : vector<16x24xf32> to vector<1x16x24xf32>
    tpu.vector_store %arg14[%c1_396, %c0_397, %c24_398], %701 {strides = array<i32>} : memref<2x16x144xf32, #tpu.memory_space<vmem>>, vector<1x16x24xf32>,
    %702 = vector.extract_strided_slice %683 {offsets = [0, 128], sizes = [16, 26], strides = [1, 1]} : vector<16x416xf32> to vector<16x26xf32>
    %703 = vector.extract_strided_slice %683 {offsets = [0, 160], sizes = [16, 26], strides = [1, 1]} : vector<16x416xf32> to vector<16x26xf32>
    %704 = arith.maximumf %702, %703 : vector<16x26xf32>
    %705 = vector.extract_strided_slice %704 {offsets = [0, 0], sizes = [16, 24], strides = [1, 1]} : vector<16x26xf32> to vector<16x24xf32>
    %706 = vector.extract_strided_slice %704 {offsets = [0, 2], sizes = [16, 24], strides = [1, 1]} : vector<16x26xf32> to vector<16x24xf32>
    %707 = arith.maximumf %705, %706 : vector<16x24xf32>
    %c1_399 = arith.constant 1 : index
    %c0_400 = arith.constant 0 : index
    %c48_401 = arith.constant 48 : index
    %708 = vector.load %arg14[%c1_399, %c0_400, %c48_401] : memref<2x16x144xf32, #tpu.memory_space<vmem>>, vector<1x16x24xf32>
    %709 = vector.shape_cast %708 : vector<1x16x24xf32> to vector<16x24xf32>
    %710 = vector.shape_cast %707 : vector<16x24xf32> to vector<1x16x24xf32>
    tpu.vector_store %arg14[%c1_399, %c0_400, %c48_401], %710 {strides = array<i32>} : memref<2x16x144xf32, #tpu.memory_space<vmem>>, vector<1x16x24xf32>,
    %711 = vector.extract_strided_slice %683 {offsets = [0, 192], sizes = [16, 26], strides = [1, 1]} : vector<16x416xf32> to vector<16x26xf32>
    %712 = vector.extract_strided_slice %683 {offsets = [0, 224], sizes = [16, 26], strides = [1, 1]} : vector<16x416xf32> to vector<16x26xf32>
    %713 = arith.maximumf %711, %712 : vector<16x26xf32>
    %714 = vector.extract_strided_slice %713 {offsets = [0, 0], sizes = [16, 24], strides = [1, 1]} : vector<16x26xf32> to vector<16x24xf32>
    %715 = vector.extract_strided_slice %713 {offsets = [0, 2], sizes = [16, 24], strides = [1, 1]} : vector<16x26xf32> to vector<16x24xf32>
    %716 = arith.maximumf %714, %715 : vector<16x24xf32>
    %c1_402 = arith.constant 1 : index
    %c0_403 = arith.constant 0 : index
    %c72_404 = arith.constant 72 : index
    %717 = vector.load %arg14[%c1_402, %c0_403, %c72_404] : memref<2x16x144xf32, #tpu.memory_space<vmem>>, vector<1x16x24xf32>
    %718 = vector.shape_cast %717 : vector<1x16x24xf32> to vector<16x24xf32>
    %719 = vector.shape_cast %716 : vector<16x24xf32> to vector<1x16x24xf32>
    tpu.vector_store %arg14[%c1_402, %c0_403, %c72_404], %719 {strides = array<i32>} : memref<2x16x144xf32, #tpu.memory_space<vmem>>, vector<1x16x24xf32>,
    %720 = vector.extract_strided_slice %683 {offsets = [0, 256], sizes = [16, 26], strides = [1, 1]} : vector<16x416xf32> to vector<16x26xf32>
    %721 = vector.extract_strided_slice %683 {offsets = [0, 288], sizes = [16, 26], strides = [1, 1]} : vector<16x416xf32> to vector<16x26xf32>
    %722 = arith.maximumf %720, %721 : vector<16x26xf32>
    %723 = vector.extract_strided_slice %722 {offsets = [0, 0], sizes = [16, 24], strides = [1, 1]} : vector<16x26xf32> to vector<16x24xf32>
    %724 = vector.extract_strided_slice %722 {offsets = [0, 2], sizes = [16, 24], strides = [1, 1]} : vector<16x26xf32> to vector<16x24xf32>
    %725 = arith.maximumf %723, %724 : vector<16x24xf32>
    %c1_405 = arith.constant 1 : index
    %c0_406 = arith.constant 0 : index
    %c96_407 = arith.constant 96 : index
    %726 = vector.load %arg14[%c1_405, %c0_406, %c96_407] : memref<2x16x144xf32, #tpu.memory_space<vmem>>, vector<1x16x24xf32>
    %727 = vector.shape_cast %726 : vector<1x16x24xf32> to vector<16x24xf32>
    %728 = vector.shape_cast %725 : vector<16x24xf32> to vector<1x16x24xf32>
    tpu.vector_store %arg14[%c1_405, %c0_406, %c96_407], %728 {strides = array<i32>} : memref<2x16x144xf32, #tpu.memory_space<vmem>>, vector<1x16x24xf32>,
    %729 = vector.extract_strided_slice %683 {offsets = [0, 320], sizes = [16, 26], strides = [1, 1]} : vector<16x416xf32> to vector<16x26xf32>
    %730 = vector.extract_strided_slice %683 {offsets = [0, 352], sizes = [16, 26], strides = [1, 1]} : vector<16x416xf32> to vector<16x26xf32>
    %731 = arith.maximumf %729, %730 : vector<16x26xf32>
    %732 = vector.extract_strided_slice %731 {offsets = [0, 0], sizes = [16, 24], strides = [1, 1]} : vector<16x26xf32> to vector<16x24xf32>
    %733 = vector.extract_strided_slice %731 {offsets = [0, 2], sizes = [16, 24], strides = [1, 1]} : vector<16x26xf32> to vector<16x24xf32>
    %734 = arith.maximumf %732, %733 : vector<16x24xf32>
    %c1_408 = arith.constant 1 : index
    %c0_409 = arith.constant 0 : index
    %c120_410 = arith.constant 120 : index
    %735 = vector.load %arg14[%c1_408, %c0_409, %c120_410] : memref<2x16x144xf32, #tpu.memory_space<vmem>>, vector<1x16x24xf32>
    %736 = vector.shape_cast %735 : vector<1x16x24xf32> to vector<16x24xf32>
    %737 = vector.shape_cast %734 : vector<16x24xf32> to vector<1x16x24xf32>
    tpu.vector_store %arg14[%c1_408, %c0_409, %c120_410], %737 {strides = array<i32>} : memref<2x16x144xf32, #tpu.memory_space<vmem>>, vector<1x16x24xf32>,
    %c1_411 = arith.constant 1 : index
    %c0_412 = arith.constant 0 : index
    %c0_413 = arith.constant 0 : index
    %738 = vector.load %arg14[%c1_411, %c0_412, %c0_413] : memref<2x16x144xf32, #tpu.memory_space<vmem>>, vector<1x16x144xf32>
    %739 = vector.shape_cast %738 : vector<1x16x144xf32> to vector<16x144xf32>
    %c0_414 = arith.constant 0 : index
    %c0_415 = arith.constant 0 : index
    %740 = vector.load %arg5[%c0_414, %c0_415] : memref<144x36xf32, #tpu.memory_space<vmem>>, vector<144x36xf32>
    %cst_416 = arith.constant dense<0.000000e+00> : vector<16x36xf32>
    %741 = tpu.matmul %739, %740, %cst_416 {dimension_numbers = #tpu.dot_dimension_numbers<[1], [0], [0], [1], [0, 0, 1, 1], [], []>} : vector<16x144xf32>, vector<144x36xf32>, vector<16x36xf32> -> vector<16x36xf32>
    %c0_417 = arith.constant 0 : index
    %c0_418 = arith.constant 0 : index
    %742 = vector.load %arg7[%c0_417, %c0_418] : memref<1x120xf32, #tpu.memory_space<vmem>>, vector<1x120xf32>
    %743 = vector.extract_strided_slice %741 {offsets = [0, 0], sizes = [1, 36], strides = [1, 1]} : vector<16x36xf32> to vector<1x36xf32>
    %c0_419 = arith.constant 0 : index
    %c0_420 = arith.constant 0 : index
    %c0_421 = arith.constant 0 : index
    %744 = vector.load %arg6[%c0_419, %c0_420, %c0_421] : memref<16x36x120xf32, #tpu.memory_space<vmem>>, vector<1x36x120xf32>
    %745 = vector.shape_cast %744 : vector<1x36x120xf32> to vector<36x120xf32>
    %cst_422 = arith.constant dense<0.000000e+00> : vector<1x120xf32>
    %746 = tpu.matmul %743, %745, %cst_422 {dimension_numbers = #tpu.dot_dimension_numbers<[1], [0], [0], [1], [0, 0, 1, 1], [], []>} : vector<1x36xf32>, vector<36x120xf32>, vector<1x120xf32> -> vector<1x120xf32>
    %747 = arith.addf %742, %746 : vector<1x120xf32>
    %748 = vector.extract_strided_slice %741 {offsets = [1, 0], sizes = [1, 36], strides = [1, 1]} : vector<16x36xf32> to vector<1x36xf32>
    %c1_423 = arith.constant 1 : index
    %c0_424 = arith.constant 0 : index
    %c0_425 = arith.constant 0 : index
    %749 = vector.load %arg6[%c1_423, %c0_424, %c0_425] : memref<16x36x120xf32, #tpu.memory_space<vmem>>, vector<1x36x120xf32>
    %750 = vector.shape_cast %749 : vector<1x36x120xf32> to vector<36x120xf32>
    %cst_426 = arith.constant dense<0.000000e+00> : vector<1x120xf32>
    %751 = tpu.matmul %748, %750, %cst_426 {dimension_numbers = #tpu.dot_dimension_numbers<[1], [0], [0], [1], [0, 0, 1, 1], [], []>} : vector<1x36xf32>, vector<36x120xf32>, vector<1x120xf32> -> vector<1x120xf32>
    %752 = arith.addf %747, %751 : vector<1x120xf32>
    %753 = vector.extract_strided_slice %741 {offsets = [2, 0], sizes = [1, 36], strides = [1, 1]} : vector<16x36xf32> to vector<1x36xf32>
    %c2_427 = arith.constant 2 : index
    %c0_428 = arith.constant 0 : index
    %c0_429 = arith.constant 0 : index
    %754 = vector.load %arg6[%c2_427, %c0_428, %c0_429] : memref<16x36x120xf32, #tpu.memory_space<vmem>>, vector<1x36x120xf32>
    %755 = vector.shape_cast %754 : vector<1x36x120xf32> to vector<36x120xf32>
    %cst_430 = arith.constant dense<0.000000e+00> : vector<1x120xf32>
    %756 = tpu.matmul %753, %755, %cst_430 {dimension_numbers = #tpu.dot_dimension_numbers<[1], [0], [0], [1], [0, 0, 1, 1], [], []>} : vector<1x36xf32>, vector<36x120xf32>, vector<1x120xf32> -> vector<1x120xf32>
    %757 = arith.addf %752, %756 : vector<1x120xf32>
    %758 = vector.extract_strided_slice %741 {offsets = [3, 0], sizes = [1, 36], strides = [1, 1]} : vector<16x36xf32> to vector<1x36xf32>
    %c3_431 = arith.constant 3 : index
    %c0_432 = arith.constant 0 : index
    %c0_433 = arith.constant 0 : index
    %759 = vector.load %arg6[%c3_431, %c0_432, %c0_433] : memref<16x36x120xf32, #tpu.memory_space<vmem>>, vector<1x36x120xf32>
    %760 = vector.shape_cast %759 : vector<1x36x120xf32> to vector<36x120xf32>
    %cst_434 = arith.constant dense<0.000000e+00> : vector<1x120xf32>
    %761 = tpu.matmul %758, %760, %cst_434 {dimension_numbers = #tpu.dot_dimension_numbers<[1], [0], [0], [1], [0, 0, 1, 1], [], []>} : vector<1x36xf32>, vector<36x120xf32>, vector<1x120xf32> -> vector<1x120xf32>
    %762 = arith.addf %757, %761 : vector<1x120xf32>
    %763 = vector.extract_strided_slice %741 {offsets = [4, 0], sizes = [1, 36], strides = [1, 1]} : vector<16x36xf32> to vector<1x36xf32>
    %c4_435 = arith.constant 4 : index
    %c0_436 = arith.constant 0 : index
    %c0_437 = arith.constant 0 : index
    %764 = vector.load %arg6[%c4_435, %c0_436, %c0_437] : memref<16x36x120xf32, #tpu.memory_space<vmem>>, vector<1x36x120xf32>
    %765 = vector.shape_cast %764 : vector<1x36x120xf32> to vector<36x120xf32>
    %cst_438 = arith.constant dense<0.000000e+00> : vector<1x120xf32>
    %766 = tpu.matmul %763, %765, %cst_438 {dimension_numbers = #tpu.dot_dimension_numbers<[1], [0], [0], [1], [0, 0, 1, 1], [], []>} : vector<1x36xf32>, vector<36x120xf32>, vector<1x120xf32> -> vector<1x120xf32>
    %767 = arith.addf %762, %766 : vector<1x120xf32>
    %768 = vector.extract_strided_slice %741 {offsets = [5, 0], sizes = [1, 36], strides = [1, 1]} : vector<16x36xf32> to vector<1x36xf32>
    %c5_439 = arith.constant 5 : index
    %c0_440 = arith.constant 0 : index
    %c0_441 = arith.constant 0 : index
    %769 = vector.load %arg6[%c5_439, %c0_440, %c0_441] : memref<16x36x120xf32, #tpu.memory_space<vmem>>, vector<1x36x120xf32>
    %770 = vector.shape_cast %769 : vector<1x36x120xf32> to vector<36x120xf32>
    %cst_442 = arith.constant dense<0.000000e+00> : vector<1x120xf32>
    %771 = tpu.matmul %768, %770, %cst_442 {dimension_numbers = #tpu.dot_dimension_numbers<[1], [0], [0], [1], [0, 0, 1, 1], [], []>} : vector<1x36xf32>, vector<36x120xf32>, vector<1x120xf32> -> vector<1x120xf32>
    %772 = arith.addf %767, %771 : vector<1x120xf32>
    %773 = vector.extract_strided_slice %741 {offsets = [6, 0], sizes = [1, 36], strides = [1, 1]} : vector<16x36xf32> to vector<1x36xf32>
    %c6_443 = arith.constant 6 : index
    %c0_444 = arith.constant 0 : index
    %c0_445 = arith.constant 0 : index
    %774 = vector.load %arg6[%c6_443, %c0_444, %c0_445] : memref<16x36x120xf32, #tpu.memory_space<vmem>>, vector<1x36x120xf32>
    %775 = vector.shape_cast %774 : vector<1x36x120xf32> to vector<36x120xf32>
    %cst_446 = arith.constant dense<0.000000e+00> : vector<1x120xf32>
    %776 = tpu.matmul %773, %775, %cst_446 {dimension_numbers = #tpu.dot_dimension_numbers<[1], [0], [0], [1], [0, 0, 1, 1], [], []>} : vector<1x36xf32>, vector<36x120xf32>, vector<1x120xf32> -> vector<1x120xf32>
    %777 = arith.addf %772, %776 : vector<1x120xf32>
    %778 = vector.extract_strided_slice %741 {offsets = [7, 0], sizes = [1, 36], strides = [1, 1]} : vector<16x36xf32> to vector<1x36xf32>
    %c7_447 = arith.constant 7 : index
    %c0_448 = arith.constant 0 : index
    %c0_449 = arith.constant 0 : index
    %779 = vector.load %arg6[%c7_447, %c0_448, %c0_449] : memref<16x36x120xf32, #tpu.memory_space<vmem>>, vector<1x36x120xf32>
    %780 = vector.shape_cast %779 : vector<1x36x120xf32> to vector<36x120xf32>
    %cst_450 = arith.constant dense<0.000000e+00> : vector<1x120xf32>
    %781 = tpu.matmul %778, %780, %cst_450 {dimension_numbers = #tpu.dot_dimension_numbers<[1], [0], [0], [1], [0, 0, 1, 1], [], []>} : vector<1x36xf32>, vector<36x120xf32>, vector<1x120xf32> -> vector<1x120xf32>
    %782 = arith.addf %777, %781 : vector<1x120xf32>
    %783 = vector.extract_strided_slice %741 {offsets = [8, 0], sizes = [1, 36], strides = [1, 1]} : vector<16x36xf32> to vector<1x36xf32>
    %c8_451 = arith.constant 8 : index
    %c0_452 = arith.constant 0 : index
    %c0_453 = arith.constant 0 : index
    %784 = vector.load %arg6[%c8_451, %c0_452, %c0_453] : memref<16x36x120xf32, #tpu.memory_space<vmem>>, vector<1x36x120xf32>
    %785 = vector.shape_cast %784 : vector<1x36x120xf32> to vector<36x120xf32>
    %cst_454 = arith.constant dense<0.000000e+00> : vector<1x120xf32>
    %786 = tpu.matmul %783, %785, %cst_454 {dimension_numbers = #tpu.dot_dimension_numbers<[1], [0], [0], [1], [0, 0, 1, 1], [], []>} : vector<1x36xf32>, vector<36x120xf32>, vector<1x120xf32> -> vector<1x120xf32>
    %787 = arith.addf %782, %786 : vector<1x120xf32>
    %788 = vector.extract_strided_slice %741 {offsets = [9, 0], sizes = [1, 36], strides = [1, 1]} : vector<16x36xf32> to vector<1x36xf32>
    %c9_455 = arith.constant 9 : index
    %c0_456 = arith.constant 0 : index
    %c0_457 = arith.constant 0 : index
    %789 = vector.load %arg6[%c9_455, %c0_456, %c0_457] : memref<16x36x120xf32, #tpu.memory_space<vmem>>, vector<1x36x120xf32>
    %790 = vector.shape_cast %789 : vector<1x36x120xf32> to vector<36x120xf32>
    %cst_458 = arith.constant dense<0.000000e+00> : vector<1x120xf32>
    %791 = tpu.matmul %788, %790, %cst_458 {dimension_numbers = #tpu.dot_dimension_numbers<[1], [0], [0], [1], [0, 0, 1, 1], [], []>} : vector<1x36xf32>, vector<36x120xf32>, vector<1x120xf32> -> vector<1x120xf32>
    %792 = arith.addf %787, %791 : vector<1x120xf32>
    %793 = vector.extract_strided_slice %741 {offsets = [10, 0], sizes = [1, 36], strides = [1, 1]} : vector<16x36xf32> to vector<1x36xf32>
    %c10_459 = arith.constant 10 : index
    %c0_460 = arith.constant 0 : index
    %c0_461 = arith.constant 0 : index
    %794 = vector.load %arg6[%c10_459, %c0_460, %c0_461] : memref<16x36x120xf32, #tpu.memory_space<vmem>>, vector<1x36x120xf32>
    %795 = vector.shape_cast %794 : vector<1x36x120xf32> to vector<36x120xf32>
    %cst_462 = arith.constant dense<0.000000e+00> : vector<1x120xf32>
    %796 = tpu.matmul %793, %795, %cst_462 {dimension_numbers = #tpu.dot_dimension_numbers<[1], [0], [0], [1], [0, 0, 1, 1], [], []>} : vector<1x36xf32>, vector<36x120xf32>, vector<1x120xf32> -> vector<1x120xf32>
    %797 = arith.addf %792, %796 : vector<1x120xf32>
    %798 = vector.extract_strided_slice %741 {offsets = [11, 0], sizes = [1, 36], strides = [1, 1]} : vector<16x36xf32> to vector<1x36xf32>
    %c11_463 = arith.constant 11 : index
    %c0_464 = arith.constant 0 : index
    %c0_465 = arith.constant 0 : index
    %799 = vector.load %arg6[%c11_463, %c0_464, %c0_465] : memref<16x36x120xf32, #tpu.memory_space<vmem>>, vector<1x36x120xf32>
    %800 = vector.shape_cast %799 : vector<1x36x120xf32> to vector<36x120xf32>
    %cst_466 = arith.constant dense<0.000000e+00> : vector<1x120xf32>
    %801 = tpu.matmul %798, %800, %cst_466 {dimension_numbers = #tpu.dot_dimension_numbers<[1], [0], [0], [1], [0, 0, 1, 1], [], []>} : vector<1x36xf32>, vector<36x120xf32>, vector<1x120xf32> -> vector<1x120xf32>
    %802 = arith.addf %797, %801 : vector<1x120xf32>
    %803 = vector.extract_strided_slice %741 {offsets = [12, 0], sizes = [1, 36], strides = [1, 1]} : vector<16x36xf32> to vector<1x36xf32>
    %c12_467 = arith.constant 12 : index
    %c0_468 = arith.constant 0 : index
    %c0_469 = arith.constant 0 : index
    %804 = vector.load %arg6[%c12_467, %c0_468, %c0_469] : memref<16x36x120xf32, #tpu.memory_space<vmem>>, vector<1x36x120xf32>
    %805 = vector.shape_cast %804 : vector<1x36x120xf32> to vector<36x120xf32>
    %cst_470 = arith.constant dense<0.000000e+00> : vector<1x120xf32>
    %806 = tpu.matmul %803, %805, %cst_470 {dimension_numbers = #tpu.dot_dimension_numbers<[1], [0], [0], [1], [0, 0, 1, 1], [], []>} : vector<1x36xf32>, vector<36x120xf32>, vector<1x120xf32> -> vector<1x120xf32>
    %807 = arith.addf %802, %806 : vector<1x120xf32>
    %808 = vector.extract_strided_slice %741 {offsets = [13, 0], sizes = [1, 36], strides = [1, 1]} : vector<16x36xf32> to vector<1x36xf32>
    %c13_471 = arith.constant 13 : index
    %c0_472 = arith.constant 0 : index
    %c0_473 = arith.constant 0 : index
    %809 = vector.load %arg6[%c13_471, %c0_472, %c0_473] : memref<16x36x120xf32, #tpu.memory_space<vmem>>, vector<1x36x120xf32>
    %810 = vector.shape_cast %809 : vector<1x36x120xf32> to vector<36x120xf32>
    %cst_474 = arith.constant dense<0.000000e+00> : vector<1x120xf32>
    %811 = tpu.matmul %808, %810, %cst_474 {dimension_numbers = #tpu.dot_dimension_numbers<[1], [0], [0], [1], [0, 0, 1, 1], [], []>} : vector<1x36xf32>, vector<36x120xf32>, vector<1x120xf32> -> vector<1x120xf32>
    %812 = arith.addf %807, %811 : vector<1x120xf32>
    %813 = vector.extract_strided_slice %741 {offsets = [14, 0], sizes = [1, 36], strides = [1, 1]} : vector<16x36xf32> to vector<1x36xf32>
    %c14_475 = arith.constant 14 : index
    %c0_476 = arith.constant 0 : index
    %c0_477 = arith.constant 0 : index
    %814 = vector.load %arg6[%c14_475, %c0_476, %c0_477] : memref<16x36x120xf32, #tpu.memory_space<vmem>>, vector<1x36x120xf32>
    %815 = vector.shape_cast %814 : vector<1x36x120xf32> to vector<36x120xf32>
    %cst_478 = arith.constant dense<0.000000e+00> : vector<1x120xf32>
    %816 = tpu.matmul %813, %815, %cst_478 {dimension_numbers = #tpu.dot_dimension_numbers<[1], [0], [0], [1], [0, 0, 1, 1], [], []>} : vector<1x36xf32>, vector<36x120xf32>, vector<1x120xf32> -> vector<1x120xf32>
    %817 = arith.addf %812, %816 : vector<1x120xf32>
    %818 = vector.extract_strided_slice %741 {offsets = [15, 0], sizes = [1, 36], strides = [1, 1]} : vector<16x36xf32> to vector<1x36xf32>
    %c15_479 = arith.constant 15 : index
    %c0_480 = arith.constant 0 : index
    %c0_481 = arith.constant 0 : index
    %819 = vector.load %arg6[%c15_479, %c0_480, %c0_481] : memref<16x36x120xf32, #tpu.memory_space<vmem>>, vector<1x36x120xf32>
    %820 = vector.shape_cast %819 : vector<1x36x120xf32> to vector<36x120xf32>
    %cst_482 = arith.constant dense<0.000000e+00> : vector<1x120xf32>
    %821 = tpu.matmul %818, %820, %cst_482 {dimension_numbers = #tpu.dot_dimension_numbers<[1], [0], [0], [1], [0, 0, 1, 1], [], []>} : vector<1x36xf32>, vector<36x120xf32>, vector<1x120xf32> -> vector<1x120xf32>
    %822 = arith.addf %817, %821 : vector<1x120xf32>
    %cst_483 = arith.constant 0.000000e+00 : f32
    %823 = vector.broadcast %cst_483 : f32 to vector<1x120xf32>
    %824 = arith.maximumf %822, %823 : vector<1x120xf32>
    %c0_484 = arith.constant 0 : index
    %c0_485 = arith.constant 0 : index
    %825 = vector.load %arg8[%c0_484, %c0_485] : memref<120x84xf32, #tpu.memory_space<vmem>>, vector<120x84xf32>
    %cst_486 = arith.constant dense<0.000000e+00> : vector<1x84xf32>
    %826 = tpu.matmul %824, %825, %cst_486 {dimension_numbers = #tpu.dot_dimension_numbers<[1], [0], [0], [1], [0, 0, 1, 1], [], []>} : vector<1x120xf32>, vector<120x84xf32>, vector<1x84xf32> -> vector<1x84xf32>
    %c0_487 = arith.constant 0 : index
    %c0_488 = arith.constant 0 : index
    %827 = vector.load %arg9[%c0_487, %c0_488] : memref<1x84xf32, #tpu.memory_space<vmem>>, vector<1x84xf32>
    %828 = arith.addf %826, %827 : vector<1x84xf32>
    %cst_489 = arith.constant 0.000000e+00 : f32
    %829 = vector.broadcast %cst_489 : f32 to vector<1x84xf32>
    %830 = arith.maximumf %828, %829 : vector<1x84xf32>
    %c0_490 = arith.constant 0 : index
    %c0_491 = arith.constant 0 : index
    %831 = vector.load %arg10[%c0_490, %c0_491] : memref<84x10xf32, #tpu.memory_space<vmem>>, vector<84x10xf32>
    %cst_492 = arith.constant dense<0.000000e+00> : vector<1x10xf32>
    %832 = tpu.matmul %830, %831, %cst_492 {dimension_numbers = #tpu.dot_dimension_numbers<[1], [0], [0], [1], [0, 0, 1, 1], [], []>} : vector<1x84xf32>, vector<84x10xf32>, vector<1x10xf32> -> vector<1x10xf32>
    %c0_493 = arith.constant 0 : index
    %c0_494 = arith.constant 0 : index
    %833 = vector.load %arg11[%c0_493, %c0_494] : memref<1x10xf32, #tpu.memory_space<vmem>>, vector<1x10xf32>
    %834 = arith.addf %832, %833 : vector<1x10xf32>
    %c1_495 = arith.constant 1 : index
    %c0_496 = arith.constant 0 : index
    %835 = vector.load %arg12[%c1_495, %c0_496] : memref<2x10xf32, #tpu.memory_space<vmem>>, vector<1x10xf32>
    tpu.vector_store %arg12[%c1_495, %c0_496], %834 {strides = array<i32>} : memref<2x10xf32, #tpu.memory_space<vmem>>, vector<1x10xf32>,
    return
  }
}

</mosaic_0001>

<llo_original>
// kernel: net_forward.1
$region0: #{net_forward.1}
  #allocation0 [shape = 'u32[]', space=smem, size = 0x4, offset = 0x4, fixed_abs, tag = 'smem constant byte address 0x4 - core index']
  #allocation1 [shape = 'u32[144,128]{1,0:T(1,128)}', space=vmem, size = 0x12000, scoped, tag = 'internal scratch']
  #allocation2 [shape = 'f32[2,6,512]{2,1,0:T(8,128)}', space=vmem, size = 0x8000, scoped, tag = 'scratch operand']
  #allocation3 [shape = 'f32[2,16,144]{2,1,0:T(8,128)}', space=vmem, size = 0x8000, scoped, tag = 'scratch operand']
  %s0 = inlined_call_operand.vmem [shape: f32[2,1056], index: 0, kind: input, shape index: {}]
  %s1 = inlined_call_operand.vmem [shape: f32[9,6,1], index: 1, kind: input, shape index: {}]
  %s2 = inlined_call_operand.vmem [shape: f32[6,1], index: 2, kind: input, shape index: {}]
  %s3 = inlined_call_operand.vmem [shape: f32[9,16,6], index: 3, kind: input, shape index: {}]
  %s4 = inlined_call_operand.vmem [shape: f32[16,1], index: 4, kind: input, shape index: {}]
  %s5 = inlined_call_operand.vmem [shape: f32[144,36], index: 5, kind: input, shape index: {}]
  %s6 = inlined_call_operand.vmem [shape: f32[16,36,120], index: 6, kind: input, shape index: {}]
  %s7 = inlined_call_operand.vmem [shape: f32[1,120], index: 7, kind: input, shape index: {}]
  %s8 = inlined_call_operand.vmem [shape: f32[120,84], index: 8, kind: input, shape index: {}]
  %s9 = inlined_call_operand.vmem [shape: f32[1,84], index: 9, kind: input, shape index: {}]
  %s10 = inlined_call_operand.vmem [shape: f32[84,10], index: 10, kind: input, shape index: {}]
  %s11 = inlined_call_operand.vmem [shape: f32[1,10], index: 11, kind: input, shape index: {}]
  %s12 = inlined_call_operand.hbm [shape: f32[2,10], index: 12, kind: output, shape index: {}]
  %s13 = sld [smem:[#allocation0]]
  $region58: #{net_forward.1} parent=0
    _
  %s15 = ssub.s32 1, %s13
  %s16 = scalar_select 0, %s15, %s13
  $region1: #{net_forward.1} parent=0
    #allocation4 [shape = 'u8[1024]{0}', space=vmem, size = 0x400, scoped, tag = 'output window, operand 0, single buffered']
    #allocation5 [shape = 's32[1]{0}', space=sflag, size = 0x4, scoped, tag = 'scoped memory for net_forward.1']
    %17 = vsyncpa [#allocation5], 0
    // Predicated region
    $region2: #{net_forward.1} parent=1 // pred_check
      _
    $region3: #{net_forward.1} parent=1 // pred_check_branch
      %19 = sbr.rel (0) target = $region5
    $region4: #{net_forward.1} parent=1 // pred_region
      _
    $region5: #{net_forward.1} parent=1 // pred_fallthru
      _
    // Predicated region
    $region6: #{net_forward.1} parent=1 // pred_check
      _
    $region7: #{net_forward.1} parent=1 // pred_check_branch
      %21 = sbr.rel (0) target = $region9
    $region8: #{net_forward.1} parent=1 // pred_region
      _
    $region9: #{net_forward.1} parent=1 // pred_fallthru
      _
    // Predicated region
    $region10: #{net_forward.1} parent=1 // pred_check
      _
    $region11: #{net_forward.1} parent=1 // pred_check_branch
      %23 = sbr.rel (0) target = $region13
    $region12: #{net_forward.1} parent=1 // pred_region
      _
    $region13: #{net_forward.1} parent=1 // pred_fallthru
      _
    // Predicated region
    $region14: #{net_forward.1} parent=1 // pred_check
      _
    $region15: #{net_forward.1} parent=1 // pred_check_branch
      %25 = sbr.rel (0) target = $region17
    $region16: #{net_forward.1} parent=1 // pred_region
      _
    $region17: #{net_forward.1} parent=1 // pred_fallthru
      _
    // Predicated region
    $region18: #{net_forward.1} parent=1 // pred_check
      _
    $region19: #{net_forward.1} parent=1 // pred_check_branch
      %27 = sbr.rel (0) target = $region21
    $region20: #{net_forward.1} parent=1 // pred_region
      _
    $region21: #{net_forward.1} parent=1 // pred_fallthru
      _
    // Predicated region
    $region22: #{net_forward.1} parent=1 // pred_check
      _
    $region23: #{net_forward.1} parent=1 // pred_check_branch
      %29 = sbr.rel (0) target = $region25
    $region24: #{net_forward.1} parent=1 // pred_region
      _
    $region25: #{net_forward.1} parent=1 // pred_fallthru
      _
    // Predicated region
    $region26: #{net_forward.1} parent=1 // pred_check
      _
    $region27: #{net_forward.1} parent=1 // pred_check_branch
      %31 = sbr.rel (0) target = $region29
    $region28: #{net_forward.1} parent=1 // pred_region
      _
    $region29: #{net_forward.1} parent=1 // pred_fallthru
      _
    // Predicated region
    $region30: #{net_forward.1} parent=1 // pred_check
      _
    $region31: #{net_forward.1} parent=1 // pred_check_branch
      %33 = sbr.rel (0) target = $region33
    $region32: #{net_forward.1} parent=1 // pred_region
      _
    $region33: #{net_forward.1} parent=1 // pred_fallthru
      _
    // Predicated region
    $region34: #{net_forward.1} parent=1 // pred_check
      _
    $region35: #{net_forward.1} parent=1 // pred_check_branch
      %35 = sbr.rel (0) target = $region37
    $region36: #{net_forward.1} parent=1 // pred_region
      _
    $region37: #{net_forward.1} parent=1 // pred_fallthru
      _
    // Predicated region
    $region38: #{net_forward.1} parent=1 // pred_check
      _
    $region39: #{net_forward.1} parent=1 // pred_check_branch
      %37 = sbr.rel (0) target = $region41
    $region40: #{net_forward.1} parent=1 // pred_region
      _
    $region41: #{net_forward.1} parent=1 // pred_fallthru
      _
    // Predicated region
    $region42: #{net_forward.1} parent=1 // pred_check
      _
    $region43: #{net_forward.1} parent=1 // pred_check_branch
      %39 = sbr.rel (0) target = $region45
    $region44: #{net_forward.1} parent=1 // pred_region
      _
    $region45: #{net_forward.1} parent=1 // pred_fallthru
      _
    // Predicated region
    $region46: #{net_forward.1} parent=1 // pred_check
      _
    $region47: #{net_forward.1} parent=1 // pred_check_branch
      %41 = sbr.rel (0) target = $region49
    $region48: #{net_forward.1} parent=1 // pred_region
      _
    $region49: #{net_forward.1} parent=1 // pred_fallthru
      _
    %42 = vst [vmem:[#allocation2] sm:$0x3f] 0.0
    %43 = vst [vmem:[#allocation2 + $0x8] sm:$0x3f] 0.0
    %44 = vst [vmem:[#allocation2 + $0x10] sm:$0x3f] 0.0
    %45 = vst [vmem:[#allocation2 + $0x18] sm:$0x3f] 0.0
    %46 = vst [vmem:[#allocation2 + $0x20] sm:$0x3f] 0.0
    %47 = vst [vmem:[#allocation2 + $0x28] sm:$0x3f] 0.0
    %48 = vst [vmem:[#allocation2 + $0x30] sm:$0x3f] 0.0
    %49 = vst [vmem:[#allocation2 + $0x38] sm:$0x3f] 0.0
    %50 = vst [vmem:[#allocation3] sm:$0xff] 0.0
    %vm51 = vcmask 130048
    %52 = vst.msk [vmem:[#allocation3 + $0x8] sm:$0xff] %vm51, 0.0
    %53 = vst [vmem:[#allocation3 + $0x10] sm:$0xff] 0.0
    %54 = vst.msk [vmem:[#allocation3 + $0x18] sm:$0xff] %vm51, 0.0
    %55 = vst [vmem:[#allocation3 + $0x20] sm:$0xff] 0.0
    %56 = vst.msk [vmem:[#allocation3 + $0x28] sm:$0xff] %vm51, 0.0
    %57 = vst [vmem:[#allocation3 + $0x30] sm:$0xff] 0.0
    %58 = vst.msk [vmem:[#allocation3 + $0x38] sm:$0xff] %vm51, 0.0
    %v59 = vld [vmem:[%s0] ss:$2 sm:$0xff]
    %v60 = vld [vmem:[%s1] sm:$0x3f]
    %62 = vset.pattern.permute.xlu0 0
    %63 = vperm.xlu0 %62, %v60
    %v64 = vpop.permute.xlu0 %63
    %v67 = vlaneseq
    %v68 = vshrl.u32 %v67, 7
    %v69 = vsub.s32 0, %v68
    %v70 = vrot.slane %v59, %v69
    %v71 = vlaneseq
    %v72 = vshrl.u32 %v71, 7
    %v73 = vsub.s32 1, %v72
    %v74 = vrot.slane %v59, %v73
    %v75 = vlaneseq
    %v76 = vshrl.u32 %v75, 7
    %v77 = vsub.s32 2, %v76
    %v78 = vrot.slane %v59, %v77
    %v79 = vlaneseq
    %v80 = vshrl.u32 %v79, 7
    %v81 = vsub.s32 3, %v80
    %v82 = vrot.slane %v59, %v81
    %v83 = vlaneseq
    %v84 = vshrl.u32 %v83, 7
    %v85 = vsub.s32 4, %v84
    %v86 = vrot.slane %v59, %v85
    %v87 = vlaneseq
    %v88 = vshrl.u32 %v87, 7
    %v89 = vsub.s32 5, %v88
    %v90 = vrot.slane %v59, %v89
    %v91 = vlaneseq
    %v92 = vshrl.u32 %v91, 7
    %v93 = vsub.s32 6, %v92
    %v94 = vrot.slane %v59, %v93
    %v95 = vlaneseq
    %v96 = vshrl.u32 %v95, 7
    %v97 = vsub.s32 7, %v96
    %v98 = vrot.slane %v59, %v97
    %v107 = vmul.f32 %v64, %v70
    %v108 = vmul.f32 %v64, %v74
    %v109 = vmul.f32 %v64, %v78
    %v110 = vmul.f32 %v64, %v82
    %v111 = vmul.f32 %v64, %v86
    %v112 = vmul.f32 %v64, %v90
    %v113 = vmul.f32 %v64, %v94
    %v114 = vmul.f32 %v64, %v98
    %v115 = vadd.f32 %v107, 0.0
    %v116 = vadd.f32 %v108, 0.0
    %v117 = vadd.f32 %v109, 0.0
    %v118 = vadd.f32 %v110, 0.0
    %v119 = vadd.f32 %v111, 0.0
    %v120 = vadd.f32 %v112, 0.0
    %v121 = vadd.f32 %v113, 0.0
    %v122 = vadd.f32 %v114, 0.0
    %s123 = scalar_lea.vmem %s1, 8
    %v124 = vld [vmem:[%s123] sm:$0x3f]
    %126 = vset.pattern.permute.xlu0 0
    %127 = vperm.xlu0 %126, %v124
    %v128 = vpop.permute.xlu0 %127
    %v130 = vmul.f32 %v128, %v70
    %v131 = vmul.f32 %v128, %v74
    %v132 = vmul.f32 %v128, %v78
    %v133 = vmul.f32 %v128, %v82
    %v134 = vmul.f32 %v128, %v86
    %v135 = vmul.f32 %v128, %v90
    %v136 = vmul.f32 %v128, %v94
    %v137 = vmul.f32 %v128, %v98
    %146 = vrot.lane.b32.xlu0 %v130, 127
    %v147 = vpop.permute.xlu0 %146
    %148 = vrot.lane.b32.xlu0 %v131, 127
    %v149 = vpop.permute.xlu0 %148
    %150 = vrot.lane.b32.xlu0 %v132, 127
    %v151 = vpop.permute.xlu0 %150
    %152 = vrot.lane.b32.xlu0 %v133, 127
    %v153 = vpop.permute.xlu0 %152
    %154 = vrot.lane.b32.xlu0 %v134, 127
    %v155 = vpop.permute.xlu0 %154
    %156 = vrot.lane.b32.xlu0 %v135, 127
    %v157 = vpop.permute.xlu0 %156
    %158 = vrot.lane.b32.xlu0 %v136, 127
    %v159 = vpop.permute.xlu0 %158
    %160 = vrot.lane.b32.xlu0 %v137, 127
    %v161 = vpop.permute.xlu0 %160
    %vm162 = vcmask 1039360
    %v163 = vsel %vm162, %v147, %v149
    %v164 = vsel %vm162, %v149, %v151
    %v165 = vsel %vm162, %v151, %v153
    %v166 = vsel %vm162, %v153, %v155
    %v167 = vsel %vm162, %v155, %v157
    %v168 = vsel %vm162, %v157, %v159
    %v169 = vsel %vm162, %v159, %v161
    %v178 = vadd.f32 %v115, %v163
    %v179 = vadd.f32 %v116, %v164
    %v180 = vadd.f32 %v117, %v165
    %v181 = vadd.f32 %v118, %v166
    %v182 = vadd.f32 %v119, %v167
    %v183 = vadd.f32 %v120, %v168
    %v184 = vadd.f32 %v121, %v169
    %v185 = vadd.f32 %v122, %v161
    %s186 = scalar_lea.vmem %s1, 16
    %v187 = vld [vmem:[%s186] sm:$0x3f]
    %189 = vset.pattern.permute.xlu0 0
    %190 = vperm.xlu0 %189, %v187
    %v191 = vpop.permute.xlu0 %190
    %v193 = vmul.f32 %v191, %v70
    %v194 = vmul.f32 %v191, %v74
    %v195 = vmul.f32 %v191, %v78
    %v196 = vmul.f32 %v191, %v82
    %v197 = vmul.f32 %v191, %v86
    %v198 = vmul.f32 %v191, %v90
    %v199 = vmul.f32 %v191, %v94
    %v200 = vmul.f32 %v191, %v98
    %209 = vrot.lane.b32.xlu0 %v193, 126
    %v210 = vpop.permute.xlu0 %209
    %211 = vrot.lane.b32.xlu0 %v194, 126
    %v212 = vpop.permute.xlu0 %211
    %213 = vrot.lane.b32.xlu0 %v195, 126
    %v214 = vpop.permute.xlu0 %213
    %215 = vrot.lane.b32.xlu0 %v196, 126
    %v216 = vpop.permute.xlu0 %215
    %217 = vrot.lane.b32.xlu0 %v197, 126
    %v218 = vpop.permute.xlu0 %217
    %219 = vrot.lane.b32.xlu0 %v198, 126
    %v220 = vpop.permute.xlu0 %219
    %221 = vrot.lane.b32.xlu0 %v199, 126
    %v222 = vpop.permute.xlu0 %221
    %223 = vrot.lane.b32.xlu0 %v200, 126
    %v224 = vpop.permute.xlu0 %223
    %vm225 = vcmask 1031168
    %v226 = vsel %vm225, %v210, %v212
    %v227 = vsel %vm225, %v212, %v214
    %v228 = vsel %vm225, %v214, %v216
    %v229 = vsel %vm225, %v216, %v218
    %v230 = vsel %vm225, %v218, %v220
    %v231 = vsel %vm225, %v220, %v222
    %v232 = vsel %vm225, %v222, %v224
    %v241 = vadd.f32 %v178, %v226
    %v242 = vadd.f32 %v179, %v227
    %v243 = vadd.f32 %v180, %v228
    %v244 = vadd.f32 %v181, %v229
    %v245 = vadd.f32 %v182, %v230
    %v246 = vadd.f32 %v183, %v231
    %v247 = vadd.f32 %v184, %v232
    %v248 = vadd.f32 %v185, %v224
    %s249 = scalar_lea.vmem %s1, 24
    %v250 = vld [vmem:[%s249] sm:$0x3f]
    %252 = vset.pattern.permute.xlu0 0
    %253 = vperm.xlu0 %252, %v250
    %v254 = vpop.permute.xlu0 %253
    %v256 = vmul.f32 %v254, %v70
    %v257 = vmul.f32 %v254, %v74
    %v258 = vmul.f32 %v254, %v78
    %v259 = vmul.f32 %v254, %v82
    %v260 = vmul.f32 %v254, %v86
    %v261 = vmul.f32 %v254, %v90
    %v262 = vmul.f32 %v254, %v94
    %v263 = vmul.f32 %v254, %v98
    %272 = vrot.lane.b32.xlu0 %v256, 96
    %v273 = vpop.permute.xlu0 %272
    %274 = vrot.lane.b32.xlu0 %v257, 96
    %v275 = vpop.permute.xlu0 %274
    %276 = vrot.lane.b32.xlu0 %v258, 96
    %v277 = vpop.permute.xlu0 %276
    %278 = vrot.lane.b32.xlu0 %v259, 96
    %v279 = vpop.permute.xlu0 %278
    %280 = vrot.lane.b32.xlu0 %v260, 96
    %v281 = vpop.permute.xlu0 %280
    %282 = vrot.lane.b32.xlu0 %v261, 96
    %v283 = vpop.permute.xlu0 %282
    %284 = vrot.lane.b32.xlu0 %v262, 96
    %v285 = vpop.permute.xlu0 %284
    %286 = vrot.lane.b32.xlu0 %v263, 96
    %v287 = vpop.permute.xlu0 %286
    %vm288 = vcmask 785408
    %v289 = vsel %vm288, %v273, %v275
    %v290 = vsel %vm288, %v275, %v277
    %v291 = vsel %vm288, %v277, %v279
    %v292 = vsel %vm288, %v279, %v281
    %v293 = vsel %vm288, %v281, %v283
    %v294 = vsel %vm288, %v283, %v285
    %v295 = vsel %vm288, %v285, %v287
    %v304 = vadd.f32 %v241, %v289
    %v305 = vadd.f32 %v242, %v290
    %v306 = vadd.f32 %v243, %v291
    %v307 = vadd.f32 %v244, %v292
    %v308 = vadd.f32 %v245, %v293
    %v309 = vadd.f32 %v246, %v294
    %v310 = vadd.f32 %v247, %v295
    %v311 = vadd.f32 %v248, %v287
    %s312 = scalar_lea.vmem %s1, 32
    %v313 = vld [vmem:[%s312] sm:$0x3f]
    %315 = vset.pattern.permute.xlu0 0
    %316 = vperm.xlu0 %315, %v313
    %v317 = vpop.permute.xlu0 %316
    %v319 = vmul.f32 %v317, %v70
    %v320 = vmul.f32 %v317, %v74
    %v321 = vmul.f32 %v317, %v78
    %v322 = vmul.f32 %v317, %v82
    %v323 = vmul.f32 %v317, %v86
    %v324 = vmul.f32 %v317, %v90
    %v325 = vmul.f32 %v317, %v94
    %v326 = vmul.f32 %v317, %v98
    %335 = vrot.lane.b32.xlu0 %v319, 95
    %v336 = vpop.permute.xlu0 %335
    %337 = vrot.lane.b32.xlu0 %v320, 95
    %v338 = vpop.permute.xlu0 %337
    %339 = vrot.lane.b32.xlu0 %v321, 95
    %v340 = vpop.permute.xlu0 %339
    %341 = vrot.lane.b32.xlu0 %v322, 95
    %v342 = vpop.permute.xlu0 %341
    %343 = vrot.lane.b32.xlu0 %v323, 95
    %v344 = vpop.permute.xlu0 %343
    %345 = vrot.lane.b32.xlu0 %v324, 95
    %v346 = vpop.permute.xlu0 %345
    %347 = vrot.lane.b32.xlu0 %v325, 95
    %v348 = vpop.permute.xlu0 %347
    %349 = vrot.lane.b32.xlu0 %v326, 95
    %v350 = vpop.permute.xlu0 %349
    %vm351 = vcmask 777216
    %v352 = vsel %vm351, %v336, %v338
    %v353 = vsel %vm351, %v338, %v340
    %v354 = vsel %vm351, %v340, %v342
    %v355 = vsel %vm351, %v342, %v344
    %v356 = vsel %vm351, %v344, %v346
    %v357 = vsel %vm351, %v346, %v348
    %v358 = vsel %vm351, %v348, %v350
    %v367 = vadd.f32 %v304, %v352
    %v368 = vadd.f32 %v305, %v353
    %v369 = vadd.f32 %v306, %v354
    %v370 = vadd.f32 %v307, %v355
    %v371 = vadd.f32 %v308, %v356
    %v372 = vadd.f32 %v309, %v357
    %v373 = vadd.f32 %v310, %v358
    %v374 = vadd.f32 %v311, %v350
    %s375 = scalar_lea.vmem %s1, 40
    %v376 = vld [vmem:[%s375] sm:$0x3f]
    %378 = vset.pattern.permute.xlu0 0
    %379 = vperm.xlu0 %378, %v376
    %v380 = vpop.permute.xlu0 %379
    %v382 = vmul.f32 %v380, %v70
    %v383 = vmul.f32 %v380, %v74
    %v384 = vmul.f32 %v380, %v78
    %v385 = vmul.f32 %v380, %v82
    %v386 = vmul.f32 %v380, %v86
    %v387 = vmul.f32 %v380, %v90
    %v388 = vmul.f32 %v380, %v94
    %v389 = vmul.f32 %v380, %v98
    %398 = vrot.lane.b32.xlu0 %v382, 94
    %v399 = vpop.permute.xlu0 %398
    %400 = vrot.lane.b32.xlu0 %v383, 94
    %v401 = vpop.permute.xlu0 %400
    %402 = vrot.lane.b32.xlu0 %v384, 94
    %v403 = vpop.permute.xlu0 %402
    %404 = vrot.lane.b32.xlu0 %v385, 94
    %v405 = vpop.permute.xlu0 %404
    %406 = vrot.lane.b32.xlu0 %v386, 94
    %v407 = vpop.permute.xlu0 %406
    %408 = vrot.lane.b32.xlu0 %v387, 94
    %v409 = vpop.permute.xlu0 %408
    %410 = vrot.lane.b32.xlu0 %v388, 94
    %v411 = vpop.permute.xlu0 %410
    %412 = vrot.lane.b32.xlu0 %v389, 94
    %v413 = vpop.permute.xlu0 %412
    %vm414 = vcmask 769024
    %v415 = vsel %vm414, %v399, %v401
    %v416 = vsel %vm414, %v401, %v403
    %v417 = vsel %vm414, %v403, %v405
    %v418 = vsel %vm414, %v405, %v407
    %v419 = vsel %vm414, %v407, %v409
    %v420 = vsel %vm414, %v409, %v411
    %v421 = vsel %vm414, %v411, %v413
    %v430 = vadd.f32 %v367, %v415
    %v431 = vadd.f32 %v368, %v416
    %v432 = vadd.f32 %v369, %v417
    %v433 = vadd.f32 %v370, %v418
    %v434 = vadd.f32 %v371, %v419
    %v435 = vadd.f32 %v372, %v420
    %v436 = vadd.f32 %v373, %v421
    %v437 = vadd.f32 %v374, %v413
    %s438 = scalar_lea.vmem %s1, 48
    %v439 = vld [vmem:[%s438] sm:$0x3f]
    %441 = vset.pattern.permute.xlu0 0
    %442 = vperm.xlu0 %441, %v439
    %v443 = vpop.permute.xlu0 %442
    %v445 = vmul.f32 %v443, %v70
    %v446 = vmul.f32 %v443, %v74
    %v447 = vmul.f32 %v443, %v78
    %v448 = vmul.f32 %v443, %v82
    %v449 = vmul.f32 %v443, %v86
    %v450 = vmul.f32 %v443, %v90
    %v451 = vmul.f32 %v443, %v94
    %v452 = vmul.f32 %v443, %v98
    %461 = vrot.lane.b32.xlu0 %v445, 64
    %v462 = vpop.permute.xlu0 %461
    %463 = vrot.lane.b32.xlu0 %v446, 64
    %v464 = vpop.permute.xlu0 %463
    %465 = vrot.lane.b32.xlu0 %v447, 64
    %v466 = vpop.permute.xlu0 %465
    %467 = vrot.lane.b32.xlu0 %v448, 64
    %v468 = vpop.permute.xlu0 %467
    %469 = vrot.lane.b32.xlu0 %v449, 64
    %v470 = vpop.permute.xlu0 %469
    %471 = vrot.lane.b32.xlu0 %v450, 64
    %v472 = vpop.permute.xlu0 %471
    %473 = vrot.lane.b32.xlu0 %v451, 64
    %v474 = vpop.permute.xlu0 %473
    %475 = vrot.lane.b32.xlu0 %v452, 64
    %v476 = vpop.permute.xlu0 %475
    %vm477 = vcmask 523264
    %v478 = vsel %vm477, %v462, %v464
    %v479 = vsel %vm477, %v464, %v466
    %v480 = vsel %vm477, %v466, %v468
    %v481 = vsel %vm477, %v468, %v470
    %v482 = vsel %vm477, %v470, %v472
    %v483 = vsel %vm477, %v472, %v474
    %v484 = vsel %vm477, %v474, %v476
    %v493 = vadd.f32 %v430, %v478
    %v494 = vadd.f32 %v431, %v479
    %v495 = vadd.f32 %v432, %v480
    %v496 = vadd.f32 %v433, %v481
    %v497 = vadd.f32 %v434, %v482
    %v498 = vadd.f32 %v435, %v483
    %v499 = vadd.f32 %v436, %v484
    %v500 = vadd.f32 %v437, %v476
    %v501 = vld [vmem:[%s0] ss:$2 sm:$0xff]
    %s502 = scalar_lea.vmem %s0, 16
    %v503 = vld [vmem:[%s502] ss:$2 sm:$0x1]
    %s504 = scalar_lea.vmem %s1, 56
    %v505 = vld [vmem:[%s504] sm:$0x3f]
    %507 = vset.pattern.permute.xlu0 0
    %508 = vperm.xlu0 %507, %v505
    %v509 = vpop.permute.xlu0 %508
    %v513 = vlaneseq
    %v514 = vshrl.u32 %v513, 7
    %v515 = vsub.s32 0, %v514
    %v516 = vrot.slane %v501, %v515
    %v517 = vlaneseq
    %v518 = vshrl.u32 %v517, 7
    %v519 = vsub.s32 1, %v518
    %v520 = vrot.slane %v501, %v519
    %v521 = vlaneseq
    %v522 = vshrl.u32 %v521, 7
    %v523 = vsub.s32 2, %v522
    %v524 = vrot.slane %v501, %v523
    %v525 = vlaneseq
    %v526 = vshrl.u32 %v525, 7
    %v527 = vsub.s32 3, %v526
    %v528 = vrot.slane %v501, %v527
    %v529 = vlaneseq
    %v530 = vshrl.u32 %v529, 7
    %v531 = vsub.s32 4, %v530
    %v532 = vrot.slane %v501, %v531
    %v533 = vlaneseq
    %v534 = vshrl.u32 %v533, 7
    %v535 = vsub.s32 5, %v534
    %v536 = vrot.slane %v501, %v535
    %v537 = vlaneseq
    %v538 = vshrl.u32 %v537, 7
    %v539 = vsub.s32 6, %v538
    %v540 = vrot.slane %v501, %v539
    %v541 = vlaneseq
    %v542 = vshrl.u32 %v541, 7
    %v543 = vsub.s32 7, %v542
    %v544 = vrot.slane %v501, %v543
    %v545 = vlaneseq
    %v546 = vshrl.u32 %v545, 7
    %v547 = vsub.s32 0, %v546
    %v548 = vrot.slane %v503, %v547
    %v558 = vmul.f32 %v509, %v516
    %v559 = vmul.f32 %v509, %v520
    %v560 = vmul.f32 %v509, %v524
    %v561 = vmul.f32 %v509, %v528
    %v562 = vmul.f32 %v509, %v532
    %v563 = vmul.f32 %v509, %v536
    %v564 = vmul.f32 %v509, %v540
    %v565 = vmul.f32 %v509, %v544
    %v566 = vmul.f32 %v509, %v548
    %576 = vrot.lane.b32.xlu0 %v558, 63
    %v577 = vpop.permute.xlu0 %576
    %578 = vrot.lane.b32.xlu0 %v559, 63
    %v579 = vpop.permute.xlu0 %578
    %580 = vrot.lane.b32.xlu0 %v560, 63
    %v581 = vpop.permute.xlu0 %580
    %582 = vrot.lane.b32.xlu0 %v561, 63
    %v583 = vpop.permute.xlu0 %582
    %584 = vrot.lane.b32.xlu0 %v562, 63
    %v585 = vpop.permute.xlu0 %584
    %586 = vrot.lane.b32.xlu0 %v563, 63
    %v587 = vpop.permute.xlu0 %586
    %588 = vrot.lane.b32.xlu0 %v564, 63
    %v589 = vpop.permute.xlu0 %588
    %590 = vrot.lane.b32.xlu0 %v565, 63
    %v591 = vpop.permute.xlu0 %590
    %592 = vrot.lane.b32.xlu0 %v566, 63
    %v593 = vpop.permute.xlu0 %592
    %vm594 = vcmask 515072
    %v595 = vsel %vm594, %v577, %v579
    %v596 = vsel %vm594, %v579, %v581
    %v597 = vsel %vm594, %v581, %v583
    %v598 = vsel %vm594, %v583, %v585
    %v599 = vsel %vm594, %v585, %v587
    %v600 = vsel %vm594, %v587, %v589
    %v601 = vsel %vm594, %v589, %v591
    %v602 = vsel %vm594, %v591, %v593
    %v611 = vadd.f32 %v493, %v595
    %v612 = vadd.f32 %v494, %v596
    %v613 = vadd.f32 %v495, %v597
    %v614 = vadd.f32 %v496, %v598
    %v615 = vadd.f32 %v497, %v599
    %v616 = vadd.f32 %v498, %v600
    %v617 = vadd.f32 %v499, %v601
    %v618 = vadd.f32 %v500, %v602
    %s619 = scalar_lea.vmem %s1, 64
    %v620 = vld [vmem:[%s619] sm:$0x3f]
    %622 = vset.pattern.permute.xlu0 0
    %623 = vperm.xlu0 %622, %v620
    %v624 = vpop.permute.xlu0 %623
    %v626 = vmul.f32 %v624, %v516
    %v627 = vmul.f32 %v624, %v520
    %v628 = vmul.f32 %v624, %v524
    %v629 = vmul.f32 %v624, %v528
    %v630 = vmul.f32 %v624, %v532
    %v631 = vmul.f32 %v624, %v536
    %v632 = vmul.f32 %v624, %v540
    %v633 = vmul.f32 %v624, %v544
    %v634 = vmul.f32 %v624, %v548
    %644 = vrot.lane.b32.xlu0 %v626, 62
    %v645 = vpop.permute.xlu0 %644
    %646 = vrot.lane.b32.xlu0 %v627, 62
    %v647 = vpop.permute.xlu0 %646
    %648 = vrot.lane.b32.xlu0 %v628, 62
    %v649 = vpop.permute.xlu0 %648
    %650 = vrot.lane.b32.xlu0 %v629, 62
    %v651 = vpop.permute.xlu0 %650
    %652 = vrot.lane.b32.xlu0 %v630, 62
    %v653 = vpop.permute.xlu0 %652
    %654 = vrot.lane.b32.xlu0 %v631, 62
    %v655 = vpop.permute.xlu0 %654
    %656 = vrot.lane.b32.xlu0 %v632, 62
    %v657 = vpop.permute.xlu0 %656
    %658 = vrot.lane.b32.xlu0 %v633, 62
    %v659 = vpop.permute.xlu0 %658
    %660 = vrot.lane.b32.xlu0 %v634, 62
    %v661 = vpop.permute.xlu0 %660
    %vm662 = vcmask 506880
    %v663 = vsel %vm662, %v645, %v647
    %v664 = vsel %vm662, %v647, %v649
    %v665 = vsel %vm662, %v649, %v651
    %v666 = vsel %vm662, %v651, %v653
    %v667 = vsel %vm662, %v653, %v655
    %v668 = vsel %vm662, %v655, %v657
    %v669 = vsel %vm662, %v657, %v659
    %v670 = vsel %vm662, %v659, %v661
    %v679 = vadd.f32 %v611, %v663
    %v680 = vadd.f32 %v612, %v664
    %v681 = vadd.f32 %v613, %v665
    %v682 = vadd.f32 %v614, %v666
    %v683 = vadd.f32 %v615, %v667
    %v684 = vadd.f32 %v616, %v668
    %v685 = vadd.f32 %v617, %v669
    %v686 = vadd.f32 %v618, %v670
    %v687 = vld [vmem:[%s2] sm:$0x3f]
    %689 = vset.pattern.permute.xlu0 0
    %690 = vperm.xlu0 %689, %v687
    %v691 = vpop.permute.xlu0 %690
    %v693 = vadd.f32 %v679, %v691
    %v694 = vadd.f32 %v680, %v691
    %v695 = vadd.f32 %v681, %v691
    %v696 = vadd.f32 %v682, %v691
    %v697 = vadd.f32 %v683, %v691
    %v698 = vadd.f32 %v684, %v691
    %v699 = vadd.f32 %v685, %v691
    %v700 = vadd.f32 %v686, %v691
    %v701 = vmax.f32 %v693, 0.0
    %v702 = vmax.f32 %v694, 0.0
    %v703 = vmax.f32 %v695, 0.0
    %v704 = vmax.f32 %v696, 0.0
    %v705 = vmax.f32 %v697, 0.0
    %v706 = vmax.f32 %v698, 0.0
    %v707 = vmax.f32 %v699, 0.0
    %v708 = vmax.f32 %v700, 0.0
    %710 = vrot.lane.b32.xlu0 %v701, 96
    %v711 = vpop.permute.xlu0 %710
    %v713 = vmax.f32 %v701, %v711
    %715 = vrot.lane.b32.xlu0 %v713, 127
    %v716 = vpop.permute.xlu0 %715
    %v718 = vmax.f32 %v713, %v716
    %vm719 = vcmask 242688
    %720 = vst.msk [vmem:[#allocation2] sm:$0x3f] %vm719, %v718
    %722 = vrot.lane.b32.xlu0 %v718, 96
    %v723 = vpop.permute.xlu0 %722
    %vm725 = vcmask 505088
    %726 = vst.msk [vmem:[#allocation2] sm:$0x3f] %vm725, %v723
    %728 = vrot.lane.b32.xlu0 %v702, 96
    %v729 = vpop.permute.xlu0 %728
    %v731 = vmax.f32 %v702, %v729
    %733 = vrot.lane.b32.xlu0 %v731, 127
    %v734 = vpop.permute.xlu0 %733
    %v736 = vmax.f32 %v731, %v734
    %738 = vrot.lane.b32.xlu0 %v736, 64
    %v739 = vpop.permute.xlu0 %738
    %vm741 = vcmask 767488
    %742 = vst.msk [vmem:[#allocation2] sm:$0x3f] %vm741, %v739
    %743 = vrot.lane.b32.xlu0 %v736, 32
    %v744 = vpop.permute.xlu0 %743
    %vm746 = vcmask 1029888
    %747 = vst.msk [vmem:[#allocation2] sm:$0x3f] %vm746, %v744
    %749 = vrot.lane.b32.xlu0 %v703, 96
    %v750 = vpop.permute.xlu0 %749
    %v752 = vmax.f32 %v703, %v750
    %754 = vrot.lane.b32.xlu0 %v752, 127
    %v755 = vpop.permute.xlu0 %754
    %v757 = vmax.f32 %v752, %v755
    %758 = vst.msk [vmem:[#allocation2 + $0x8] sm:$0x3f] %vm719, %v757
    %760 = vrot.lane.b32.xlu0 %v757, 96
    %v761 = vpop.permute.xlu0 %760
    %763 = vst.msk [vmem:[#allocation2 + $0x8] sm:$0x3f] %vm725, %v761
    %765 = vrot.lane.b32.xlu0 %v704, 96
    %v766 = vpop.permute.xlu0 %765
    %v768 = vmax.f32 %v704, %v766
    %770 = vrot.lane.b32.xlu0 %v768, 127
    %v771 = vpop.permute.xlu0 %770
    %v773 = vmax.f32 %v768, %v771
    %775 = vrot.lane.b32.xlu0 %v773, 64
    %v776 = vpop.permute.xlu0 %775
    %778 = vst.msk [vmem:[#allocation2 + $0x8] sm:$0x3f] %vm741, %v776
    %779 = vrot.lane.b32.xlu0 %v773, 32
    %v780 = vpop.permute.xlu0 %779
    %782 = vst.msk [vmem:[#allocation2 + $0x8] sm:$0x3f] %vm746, %v780
    %784 = vrot.lane.b32.xlu0 %v705, 96
    %v785 = vpop.permute.xlu0 %784
    %v787 = vmax.f32 %v705, %v785
    %789 = vrot.lane.b32.xlu0 %v787, 127
    %v790 = vpop.permute.xlu0 %789
    %v792 = vmax.f32 %v787, %v790
    %793 = vst.msk [vmem:[#allocation2 + $0x10] sm:$0x3f] %vm719, %v792
    %795 = vrot.lane.b32.xlu0 %v792, 96
    %v796 = vpop.permute.xlu0 %795
    %798 = vst.msk [vmem:[#allocation2 + $0x10] sm:$0x3f] %vm725, %v796
    %800 = vrot.lane.b32.xlu0 %v706, 96
    %v801 = vpop.permute.xlu0 %800
    %v803 = vmax.f32 %v706, %v801
    %805 = vrot.lane.b32.xlu0 %v803, 127
    %v806 = vpop.permute.xlu0 %805
    %v808 = vmax.f32 %v803, %v806
    %810 = vrot.lane.b32.xlu0 %v808, 64
    %v811 = vpop.permute.xlu0 %810
    %813 = vst.msk [vmem:[#allocation2 + $0x10] sm:$0x3f] %vm741, %v811
    %814 = vrot.lane.b32.xlu0 %v808, 32
    %v815 = vpop.permute.xlu0 %814
    %817 = vst.msk [vmem:[#allocation2 + $0x10] sm:$0x3f] %vm746, %v815
    %819 = vrot.lane.b32.xlu0 %v707, 96
    %v820 = vpop.permute.xlu0 %819
    %v822 = vmax.f32 %v707, %v820
    %824 = vrot.lane.b32.xlu0 %v822, 127
    %v825 = vpop.permute.xlu0 %824
    %v827 = vmax.f32 %v822, %v825
    %828 = vst.msk [vmem:[#allocation2 + $0x18] sm:$0x3f] %vm719, %v827
    %830 = vrot.lane.b32.xlu0 %v827, 96
    %v831 = vpop.permute.xlu0 %830
    %833 = vst.msk [vmem:[#allocation2 + $0x18] sm:$0x3f] %vm725, %v831
    %835 = vrot.lane.b32.xlu0 %v708, 96
    %v836 = vpop.permute.xlu0 %835
    %v838 = vmax.f32 %v708, %v836
    %840 = vrot.lane.b32.xlu0 %v838, 127
    %v841 = vpop.permute.xlu0 %840
    %v843 = vmax.f32 %v838, %v841
    %845 = vrot.lane.b32.xlu0 %v843, 64
    %v846 = vpop.permute.xlu0 %845
    %848 = vst.msk [vmem:[#allocation2 + $0x18] sm:$0x3f] %vm741, %v846
    %v849 = vld [vmem:[#allocation2] sm:$0x3f]
    %v850 = vld [vmem:[#allocation2 + $0x8] sm:$0x3f]
    %v851 = vld [vmem:[#allocation2 + $0x10] sm:$0x3f]
    %v852 = vld [vmem:[#allocation2 + $0x18] sm:$0x3f]
    %v853 = vld [vmem:[%s3] sm:$0xff]
    %v854 = vld [vmem:[%s3 + $0x8] sm:$0xff]
    %s855 = scalar_lea.vmem %s3, 16
    %v856 = vld [vmem:[%s855] sm:$0xff]
    %v857 = vld [vmem:[%s855 + $0x8] sm:$0xff]
    %862 = vrot.lane.b32.xlu0 %v849, 126
    %v863 = vpop.permute.xlu0 %862
    %864 = vrot.lane.b32.xlu0 %v850, 126
    %v865 = vpop.permute.xlu0 %864
    %866 = vrot.lane.b32.xlu0 %v851, 126
    %v867 = vpop.permute.xlu0 %866
    %868 = vrot.lane.b32.xlu0 %v852, 126
    %v869 = vpop.permute.xlu0 %868
    %v870 = vsel %vm225, %v863, %v865
    %v871 = vsel %vm225, %v865, %v867
    %v872 = vsel %vm225, %v867, %v869
    %vm873 = vcmask 48128
    %v875 = vsel %vm873, %v856, 0
    %v878 = vsel %vm873, %v857, 0
    %vm880 = vcmask 1045504
    %v881 = vsel %vm880, %v870, 0
    %v883 = vsel %vm880, %v871, 0
    %v885 = vsel %vm880, %v872, 0
    %v887 = vsel %vm880, %v869, 0
    %889 = vmatprep.subr.mxu0 %v883
    %890 = vmatpush1.msra.mxu0 %v881
    %891 = vmatprep.subr.mxu0 0.0
    %892 = vmatpush1.msra.mxu0 0.0
    %893 = vmatprep.subr.mxu0 0.0
    %894 = vmatpush1.msra.mxu0 0.0
    %895 = vmatprep.subr.mxu0 0.0
    %896 = vmatpush1.msra.mxu0 0.0
    %897 = vmatprep.subr.mxu0 0.0
    %898 = vmatpush1.msra.mxu0 0.0
    %899 = vmatprep.subr.mxu0 0.0
    %900 = vmatpush1.msra.mxu0 0.0
    %901 = vmatprep.subr.mxu0 0.0
    %902 = vmatpush1.msra.mxu0 0.0
    %903 = vmatprep.subr.mxu0 0.0
    %904 = vmatpush1.msra.mxu0 0.0
    %905 = vmatprep.subr.mxu0 0.0
    %906 = vmatpush1.msra.mxu0 0.0
    %907 = vmatprep.subr.mxu0 0.0
    %908 = vmatpush1.msra.mxu0 0.0
    %909 = vmatprep.subr.mxu0 0.0
    %910 = vmatpush1.msra.mxu0 0.0
    %911 = vmatprep.subr.mxu0 0.0
    %912 = vmatpush1.msra.mxu0 0.0
    %913 = vmatprep.subr.mxu0 0.0
    %914 = vmatpush1.msra.mxu0 0.0
    %915 = vmatprep.subr.mxu0 0.0
    %916 = vmatpush1.msra.mxu0 0.0
    %917 = vmatprep.subr.mxu0 0.0
    %918 = vmatpush1.msra.mxu0 0.0
    %919 = vmatprep.subr.mxu0 0.0
    %920 = vmatpush1.msra.mxu0 0.0
    %921 = vmatprep.subr.mxu0 0.0
    %922 = vmatpush1.msra.mxu0 0.0
    %923 = vmatprep.subr.mxu0 0.0
    %924 = vmatpush1.msra.mxu0 0.0
    %925 = vmatprep.subr.mxu0 0.0
    %926 = vmatpush1.msra.mxu0 0.0
    %927 = vmatprep.subr.mxu0 0.0
    %928 = vmatpush1.msra.mxu0 0.0
    %929 = vmatprep.subr.mxu0 0.0
    %930 = vmatpush1.msra.mxu0 0.0
    %931 = vmatprep.subr.mxu0 0.0
    %932 = vmatpush1.msra.mxu0 0.0
    %933 = vmatprep.subr.mxu0 0.0
    %934 = vmatpush1.msra.mxu0 0.0
    %935 = vmatprep.subr.mxu0 0.0
    %936 = vmatpush1.msra.mxu0 0.0
    %937 = vmatprep.subr.mxu0 0.0
    %938 = vmatpush1.msra.mxu0 0.0
    %939 = vmatprep.subr.mxu0 0.0
    %940 = vmatpush1.msra.mxu0 0.0
    %941 = vmatprep.subr.mxu0 0.0
    %942 = vmatpush1.msra.mxu0 0.0
    %943 = vmatprep.subr.mxu0 0.0
    %944 = vmatpush1.msra.mxu0 0.0
    %945 = vmatprep.subr.mxu0 0.0
    %946 = vmatpush1.msra.mxu0 0.0
    %947 = vmatprep.subr.mxu0 0.0
    %948 = vmatpush1.msra.mxu0 0.0
    %949 = vmatprep.subr.mxu0 0.0
    %950 = vmatpush1.msra.mxu0 0.0
    %951 = vmatprep.subr.mxu0 0.0
    %952 = vmatpush1.msra.mxu0 0.0
    %953 = vmatprep.mubr.f32.mxu0 0.0
    %954 = vmatmul.mubr.f32.gmra.mrb[0].mxu0 %v875
    %v955 = vpop.f32.mrb[0].mxu0
    %v956 = vadd.f32 0.0, %v955
    %v957 = vpop.f32.mrb[0].mxu0
    %v958 = vadd.f32 0.0, %v957
    %959 = vmatprep.mubr.f32.mxu0 0.0
    %960 = vmatmul.mubr.f32.gmra.mrb[0].mxu0 %v878
    %v961 = vpop.f32.mrb[0].mxu0
    %v962 = vadd.f32 0.0, %v961
    %v963 = vpop.f32.mrb[0].mxu0
    %v964 = vadd.f32 0.0, %v963
    %965 = vdwg.mxu0
    %966 = vmatprep.subr.mxu0 %v887
    %967 = vmatpush1.msra.mxu0 %v885
    %968 = vmatprep.subr.mxu0 0.0
    %969 = vmatpush1.msra.mxu0 0.0
    %970 = vmatprep.subr.mxu0 0.0
    %971 = vmatpush1.msra.mxu0 0.0
    %972 = vmatprep.subr.mxu0 0.0
    %973 = vmatpush1.msra.mxu0 0.0
    %974 = vmatprep.subr.mxu0 0.0
    %975 = vmatpush1.msra.mxu0 0.0
    %976 = vmatprep.subr.mxu0 0.0
    %977 = vmatpush1.msra.mxu0 0.0
    %978 = vmatprep.subr.mxu0 0.0
    %979 = vmatpush1.msra.mxu0 0.0
    %980 = vmatprep.subr.mxu0 0.0
    %981 = vmatpush1.msra.mxu0 0.0
    %982 = vmatprep.subr.mxu0 0.0
    %983 = vmatpush1.msra.mxu0 0.0
    %984 = vmatprep.subr.mxu0 0.0
    %985 = vmatpush1.msra.mxu0 0.0
    %986 = vmatprep.subr.mxu0 0.0
    %987 = vmatpush1.msra.mxu0 0.0
    %988 = vmatprep.subr.mxu0 0.0
    %989 = vmatpush1.msra.mxu0 0.0
    %990 = vmatprep.subr.mxu0 0.0
    %991 = vmatpush1.msra.mxu0 0.0
    %992 = vmatprep.subr.mxu0 0.0
    %993 = vmatpush1.msra.mxu0 0.0
    %994 = vmatprep.subr.mxu0 0.0
    %995 = vmatpush1.msra.mxu0 0.0
    %996 = vmatprep.subr.mxu0 0.0
    %997 = vmatpush1.msra.mxu0 0.0
    %998 = vmatprep.subr.mxu0 0.0
    %999 = vmatpush1.msra.mxu0 0.0
    %1000 = vmatprep.subr.mxu0 0.0
    %1001 = vmatpush1.msra.mxu0 0.0
    %1002 = vmatprep.subr.mxu0 0.0
    %1003 = vmatpush1.msra.mxu0 0.0
    %1004 = vmatprep.subr.mxu0 0.0
    %1005 = vmatpush1.msra.mxu0 0.0
    %1006 = vmatprep.subr.mxu0 0.0
    %1007 = vmatpush1.msra.mxu0 0.0
    %1008 = vmatprep.subr.mxu0 0.0
    %1009 = vmatpush1.msra.mxu0 0.0
    %1010 = vmatprep.subr.mxu0 0.0
    %1011 = vmatpush1.msra.mxu0 0.0
    %1012 = vmatprep.subr.mxu0 0.0
    %1013 = vmatpush1.msra.mxu0 0.0
    %1014 = vmatprep.subr.mxu0 0.0
    %1015 = vmatpush1.msra.mxu0 0.0
    %1016 = vmatprep.subr.mxu0 0.0
    %1017 = vmatpush1.msra.mxu0 0.0
    %1018 = vmatprep.subr.mxu0 0.0
    %1019 = vmatpush1.msra.mxu0 0.0
    %1020 = vmatprep.subr.mxu0 0.0
    %1021 = vmatpush1.msra.mxu0 0.0
    %1022 = vmatprep.subr.mxu0 0.0
    %1023 = vmatpush1.msra.mxu0 0.0
    %1024 = vmatprep.subr.mxu0 0.0
    %1025 = vmatpush1.msra.mxu0 0.0
    %1026 = vmatprep.subr.mxu0 0.0
    %1027 = vmatpush1.msra.mxu0 0.0
    %1028 = vmatprep.subr.mxu0 0.0
    %1029 = vmatpush1.msra.mxu0 0.0
    %1030 = vmatprep.mubr.f32.mxu0 0.0
    %1031 = vmatmul.mubr.f32.gmra.mrb[0].mxu0 %v875
    %v1032 = vpop.f32.mrb[0].mxu0
    %v1033 = vadd.f32 0.0, %v1032
    %v1034 = vpop.f32.mrb[0].mxu0
    %1035 = vmatprep.mubr.f32.mxu0 0.0
    %1036 = vmatmul.mubr.f32.gmra.mrb[0].mxu0 %v878
    %v1037 = vpop.f32.mrb[0].mxu0
    %v1038 = vadd.f32 0.0, %v1037
    %v1039 = vpop.f32.mrb[0].mxu0
    %1040 = vdwg.mxu0
    %v1042 = vsel %vm873, %v853, 0
    %v1045 = vsel %vm873, %v854, 0
    %v1047 = vsel %vm880, %v849, 0
    %v1049 = vsel %vm880, %v850, 0
    %v1051 = vsel %vm880, %v851, 0
    %v1053 = vsel %vm880, %v852, 0
    %1055 = vmatprep.subr.mxu0 %v1049
    %1056 = vmatpush1.msra.mxu0 %v1047
    %1057 = vmatprep.subr.mxu0 0.0
    %1058 = vmatpush1.msra.mxu0 0.0
    %1059 = vmatprep.subr.mxu0 0.0
    %1060 = vmatpush1.msra.mxu0 0.0
    %1061 = vmatprep.subr.mxu0 0.0
    %1062 = vmatpush1.msra.mxu0 0.0
    %1063 = vmatprep.subr.mxu0 0.0
    %1064 = vmatpush1.msra.mxu0 0.0
    %1065 = vmatprep.subr.mxu0 0.0
    %1066 = vmatpush1.msra.mxu0 0.0
    %1067 = vmatprep.subr.mxu0 0.0
    %1068 = vmatpush1.msra.mxu0 0.0
    %1069 = vmatprep.subr.mxu0 0.0
    %1070 = vmatpush1.msra.mxu0 0.0
    %1071 = vmatprep.subr.mxu0 0.0
    %1072 = vmatpush1.msra.mxu0 0.0
    %1073 = vmatprep.subr.mxu0 0.0
    %1074 = vmatpush1.msra.mxu0 0.0
    %1075 = vmatprep.subr.mxu0 0.0
    %1076 = vmatpush1.msra.mxu0 0.0
    %1077 = vmatprep.subr.mxu0 0.0
    %1078 = vmatpush1.msra.mxu0 0.0
    %1079 = vmatprep.subr.mxu0 0.0
    %1080 = vmatpush1.msra.mxu0 0.0
    %1081 = vmatprep.subr.mxu0 0.0
    %1082 = vmatpush1.msra.mxu0 0.0
    %1083 = vmatprep.subr.mxu0 0.0
    %1084 = vmatpush1.msra.mxu0 0.0
    %1085 = vmatprep.subr.mxu0 0.0
    %1086 = vmatpush1.msra.mxu0 0.0
    %1087 = vmatprep.subr.mxu0 0.0
    %1088 = vmatpush1.msra.mxu0 0.0
    %1089 = vmatprep.subr.mxu0 0.0
    %1090 = vmatpush1.msra.mxu0 0.0
    %1091 = vmatprep.subr.mxu0 0.0
    %1092 = vmatpush1.msra.mxu0 0.0
    %1093 = vmatprep.subr.mxu0 0.0
    %1094 = vmatpush1.msra.mxu0 0.0
    %1095 = vmatprep.subr.mxu0 0.0
    %1096 = vmatpush1.msra.mxu0 0.0
    %1097 = vmatprep.subr.mxu0 0.0
    %1098 = vmatpush1.msra.mxu0 0.0
    %1099 = vmatprep.subr.mxu0 0.0
    %1100 = vmatpush1.msra.mxu0 0.0
    %1101 = vmatprep.subr.mxu0 0.0
    %1102 = vmatpush1.msra.mxu0 0.0
    %1103 = vmatprep.subr.mxu0 0.0
    %1104 = vmatpush1.msra.mxu0 0.0
    %1105 = vmatprep.subr.mxu0 0.0
    %1106 = vmatpush1.msra.mxu0 0.0
    %1107 = vmatprep.subr.mxu0 0.0
    %1108 = vmatpush1.msra.mxu0 0.0
    %1109 = vmatprep.subr.mxu0 0.0
    %1110 = vmatpush1.msra.mxu0 0.0
    %1111 = vmatprep.subr.mxu0 0.0
    %1112 = vmatpush1.msra.mxu0 0.0
    %1113 = vmatprep.subr.mxu0 0.0
    %1114 = vmatpush1.msra.mxu0 0.0
    %1115 = vmatprep.subr.mxu0 0.0
    %1116 = vmatpush1.msra.mxu0 0.0
    %1117 = vmatprep.subr.mxu0 0.0
    %1118 = vmatpush1.msra.mxu0 0.0
    %1119 = vmatprep.mubr.f32.mxu0 0.0
    %1120 = vmatmul.mubr.f32.gmra.mrb[0].mxu0 %v1042
    %v1121 = vpop.f32.mrb[0].mxu0
    %v1122 = vadd.f32 %v956, %v1121
    %v1123 = vpop.f32.mrb[0].mxu0
    %v1124 = vadd.f32 %v958, %v1123
    %1125 = vmatprep.mubr.f32.mxu0 0.0
    %1126 = vmatmul.mubr.f32.gmra.mrb[0].mxu0 %v1045
    %v1127 = vpop.f32.mrb[0].mxu0
    %v1128 = vadd.f32 %v962, %v1127
    %v1129 = vpop.f32.mrb[0].mxu0
    %v1130 = vadd.f32 %v964, %v1129
    %1131 = vdwg.mxu0
    %1132 = vmatprep.subr.mxu0 %v1053
    %1133 = vmatpush1.msra.mxu0 %v1051
    %1134 = vmatprep.subr.mxu0 0.0
    %1135 = vmatpush1.msra.mxu0 0.0
    %1136 = vmatprep.subr.mxu0 0.0
    %1137 = vmatpush1.msra.mxu0 0.0
    %1138 = vmatprep.subr.mxu0 0.0
    %1139 = vmatpush1.msra.mxu0 0.0
    %1140 = vmatprep.subr.mxu0 0.0
    %1141 = vmatpush1.msra.mxu0 0.0
    %1142 = vmatprep.subr.mxu0 0.0
    %1143 = vmatpush1.msra.mxu0 0.0
    %1144 = vmatprep.subr.mxu0 0.0
    %1145 = vmatpush1.msra.mxu0 0.0
    %1146 = vmatprep.subr.mxu0 0.0
    %1147 = vmatpush1.msra.mxu0 0.0
    %1148 = vmatprep.subr.mxu0 0.0
    %1149 = vmatpush1.msra.mxu0 0.0
    %1150 = vmatprep.subr.mxu0 0.0
    %1151 = vmatpush1.msra.mxu0 0.0
    %1152 = vmatprep.subr.mxu0 0.0
    %1153 = vmatpush1.msra.mxu0 0.0
    %1154 = vmatprep.subr.mxu0 0.0
    %1155 = vmatpush1.msra.mxu0 0.0
    %1156 = vmatprep.subr.mxu0 0.0
    %1157 = vmatpush1.msra.mxu0 0.0
    %1158 = vmatprep.subr.mxu0 0.0
    %1159 = vmatpush1.msra.mxu0 0.0
    %1160 = vmatprep.subr.mxu0 0.0
    %1161 = vmatpush1.msra.mxu0 0.0
    %1162 = vmatprep.subr.mxu0 0.0
    %1163 = vmatpush1.msra.mxu0 0.0
    %1164 = vmatprep.subr.mxu0 0.0
    %1165 = vmatpush1.msra.mxu0 0.0
    %1166 = vmatprep.subr.mxu0 0.0
    %1167 = vmatpush1.msra.mxu0 0.0
    %1168 = vmatprep.subr.mxu0 0.0
    %1169 = vmatpush1.msra.mxu0 0.0
    %1170 = vmatprep.subr.mxu0 0.0
    %1171 = vmatpush1.msra.mxu0 0.0
    %1172 = vmatprep.subr.mxu0 0.0
    %1173 = vmatpush1.msra.mxu0 0.0
    %1174 = vmatprep.subr.mxu0 0.0
    %1175 = vmatpush1.msra.mxu0 0.0
    %1176 = vmatprep.subr.mxu0 0.0
    %1177 = vmatpush1.msra.mxu0 0.0
    %1178 = vmatprep.subr.mxu0 0.0
    %1179 = vmatpush1.msra.mxu0 0.0
    %1180 = vmatprep.subr.mxu0 0.0
    %1181 = vmatpush1.msra.mxu0 0.0
    %1182 = vmatprep.subr.mxu0 0.0
    %1183 = vmatpush1.msra.mxu0 0.0
    %1184 = vmatprep.subr.mxu0 0.0
    %1185 = vmatpush1.msra.mxu0 0.0
    %1186 = vmatprep.subr.mxu0 0.0
    %1187 = vmatpush1.msra.mxu0 0.0
    %1188 = vmatprep.subr.mxu0 0.0
    %1189 = vmatpush1.msra.mxu0 0.0
    %1190 = vmatprep.subr.mxu0 0.0
    %1191 = vmatpush1.msra.mxu0 0.0
    %1192 = vmatprep.subr.mxu0 0.0
    %1193 = vmatpush1.msra.mxu0 0.0
    %1194 = vmatprep.subr.mxu0 0.0
    %1195 = vmatpush1.msra.mxu0 0.0
    %1196 = vmatprep.mubr.f32.mxu0 0.0
    %1197 = vmatmul.mubr.f32.gmra.mrb[0].mxu0 %v1042
    %v1198 = vpop.f32.mrb[0].mxu0
    %v1199 = vadd.f32 %v1033, %v1198
    %v1200 = vpop.f32.mrb[0].mxu0
    %1201 = vmatprep.mubr.f32.mxu0 0.0
    %1202 = vmatmul.mubr.f32.gmra.mrb[0].mxu0 %v1045
    %v1203 = vpop.f32.mrb[0].mxu0
    %v1204 = vadd.f32 %v1038, %v1203
    %v1205 = vpop.f32.mrb[0].mxu0
    %1206 = vdwg.mxu0
    %s1207 = scalar_lea.vmem %s3, 32
    %v1208 = vld [vmem:[%s1207] sm:$0xff]
    %v1209 = vld [vmem:[%s1207 + $0x8] sm:$0xff]
    %1210 = vrot.lane.b32.xlu0 %v849, 124
    %v1211 = vpop.permute.xlu0 %1210
    %1212 = vrot.lane.b32.xlu0 %v850, 124
    %v1213 = vpop.permute.xlu0 %1212
    %1214 = vrot.lane.b32.xlu0 %v851, 124
    %v1215 = vpop.permute.xlu0 %1214
    %1216 = vrot.lane.b32.xlu0 %v852, 124
    %v1217 = vpop.permute.xlu0 %1216
    %vm1218 = vcmask 1014784
    %v1219 = vsel %vm1218, %v1211, %v1213
    %v1220 = vsel %vm1218, %v1213, %v1215
    %v1221 = vsel %vm1218, %v1215, %v1217
    %v1223 = vsel %vm873, %v1208, 0
    %v1226 = vsel %vm873, %v1209, 0
    %v1228 = vsel %vm880, %v1219, 0
    %v1230 = vsel %vm880, %v1220, 0
    %v1232 = vsel %vm880, %v1221, 0
    %v1234 = vsel %vm880, %v1217, 0
    %1236 = vmatprep.subr.mxu0 %v1230
    %1237 = vmatpush1.msra.mxu0 %v1228
    %1238 = vmatprep.subr.mxu0 0.0
    %1239 = vmatpush1.msra.mxu0 0.0
    %1240 = vmatprep.subr.mxu0 0.0
    %1241 = vmatpush1.msra.mxu0 0.0
    %1242 = vmatprep.subr.mxu0 0.0
    %1243 = vmatpush1.msra.mxu0 0.0
    %1244 = vmatprep.subr.mxu0 0.0
    %1245 = vmatpush1.msra.mxu0 0.0
    %1246 = vmatprep.subr.mxu0 0.0
    %1247 = vmatpush1.msra.mxu0 0.0
    %1248 = vmatprep.subr.mxu0 0.0
    %1249 = vmatpush1.msra.mxu0 0.0
    %1250 = vmatprep.subr.mxu0 0.0
    %1251 = vmatpush1.msra.mxu0 0.0
    %1252 = vmatprep.subr.mxu0 0.0
    %1253 = vmatpush1.msra.mxu0 0.0
    %1254 = vmatprep.subr.mxu0 0.0
    %1255 = vmatpush1.msra.mxu0 0.0
    %1256 = vmatprep.subr.mxu0 0.0
    %1257 = vmatpush1.msra.mxu0 0.0
    %1258 = vmatprep.subr.mxu0 0.0
    %1259 = vmatpush1.msra.mxu0 0.0
    %1260 = vmatprep.subr.mxu0 0.0
    %1261 = vmatpush1.msra.mxu0 0.0
    %1262 = vmatprep.subr.mxu0 0.0
    %1263 = vmatpush1.msra.mxu0 0.0
    %1264 = vmatprep.subr.mxu0 0.0
    %1265 = vmatpush1.msra.mxu0 0.0
    %1266 = vmatprep.subr.mxu0 0.0
    %1267 = vmatpush1.msra.mxu0 0.0
    %1268 = vmatprep.subr.mxu0 0.0
    %1269 = vmatpush1.msra.mxu0 0.0
    %1270 = vmatprep.subr.mxu0 0.0
    %1271 = vmatpush1.msra.mxu0 0.0
    %1272 = vmatprep.subr.mxu0 0.0
    %1273 = vmatpush1.msra.mxu0 0.0
    %1274 = vmatprep.subr.mxu0 0.0
    %1275 = vmatpush1.msra.mxu0 0.0
    %1276 = vmatprep.subr.mxu0 0.0
    %1277 = vmatpush1.msra.mxu0 0.0
    %1278 = vmatprep.subr.mxu0 0.0
    %1279 = vmatpush1.msra.mxu0 0.0
    %1280 = vmatprep.subr.mxu0 0.0
    %1281 = vmatpush1.msra.mxu0 0.0
    %1282 = vmatprep.subr.mxu0 0.0
    %1283 = vmatpush1.msra.mxu0 0.0
    %1284 = vmatprep.subr.mxu0 0.0
    %1285 = vmatpush1.msra.mxu0 0.0
    %1286 = vmatprep.subr.mxu0 0.0
    %1287 = vmatpush1.msra.mxu0 0.0
    %1288 = vmatprep.subr.mxu0 0.0
    %1289 = vmatpush1.msra.mxu0 0.0
    %1290 = vmatprep.subr.mxu0 0.0
    %1291 = vmatpush1.msra.mxu0 0.0
    %1292 = vmatprep.subr.mxu0 0.0
    %1293 = vmatpush1.msra.mxu0 0.0
    %1294 = vmatprep.subr.mxu0 0.0
    %1295 = vmatpush1.msra.mxu0 0.0
    %1296 = vmatprep.subr.mxu0 0.0
    %1297 = vmatpush1.msra.mxu0 0.0
    %1298 = vmatprep.subr.mxu0 0.0
    %1299 = vmatpush1.msra.mxu0 0.0
    %1300 = vmatprep.mubr.f32.mxu0 0.0
    %1301 = vmatmul.mubr.f32.gmra.mrb[0].mxu0 %v1223
    %v1302 = vpop.f32.mrb[0].mxu0
    %v1303 = vadd.f32 0.0, %v1302
    %v1304 = vpop.f32.mrb[0].mxu0
    %v1305 = vadd.f32 0.0, %v1304
    %1306 = vmatprep.mubr.f32.mxu0 0.0
    %1307 = vmatmul.mubr.f32.gmra.mrb[0].mxu0 %v1226
    %v1308 = vpop.f32.mrb[0].mxu0
    %v1309 = vadd.f32 0.0, %v1308
    %v1310 = vpop.f32.mrb[0].mxu0
    %v1311 = vadd.f32 0.0, %v1310
    %1312 = vdwg.mxu0
    %1313 = vmatprep.subr.mxu0 %v1234
    %1314 = vmatpush1.msra.mxu0 %v1232
    %1315 = vmatprep.subr.mxu0 0.0
    %1316 = vmatpush1.msra.mxu0 0.0
    %1317 = vmatprep.subr.mxu0 0.0
    %1318 = vmatpush1.msra.mxu0 0.0
    %1319 = vmatprep.subr.mxu0 0.0
    %1320 = vmatpush1.msra.mxu0 0.0
    %1321 = vmatprep.subr.mxu0 0.0
    %1322 = vmatpush1.msra.mxu0 0.0
    %1323 = vmatprep.subr.mxu0 0.0
    %1324 = vmatpush1.msra.mxu0 0.0
    %1325 = vmatprep.subr.mxu0 0.0
    %1326 = vmatpush1.msra.mxu0 0.0
    %1327 = vmatprep.subr.mxu0 0.0
    %1328 = vmatpush1.msra.mxu0 0.0
    %1329 = vmatprep.subr.mxu0 0.0
    %1330 = vmatpush1.msra.mxu0 0.0
    %1331 = vmatprep.subr.mxu0 0.0
    %1332 = vmatpush1.msra.mxu0 0.0
    %1333 = vmatprep.subr.mxu0 0.0
    %1334 = vmatpush1.msra.mxu0 0.0
    %1335 = vmatprep.subr.mxu0 0.0
    %1336 = vmatpush1.msra.mxu0 0.0
    %1337 = vmatprep.subr.mxu0 0.0
    %1338 = vmatpush1.msra.mxu0 0.0
    %1339 = vmatprep.subr.mxu0 0.0
    %1340 = vmatpush1.msra.mxu0 0.0
    %1341 = vmatprep.subr.mxu0 0.0
    %1342 = vmatpush1.msra.mxu0 0.0
    %1343 = vmatprep.subr.mxu0 0.0
    %1344 = vmatpush1.msra.mxu0 0.0
    %1345 = vmatprep.subr.mxu0 0.0
    %1346 = vmatpush1.msra.mxu0 0.0
    %1347 = vmatprep.subr.mxu0 0.0
    %1348 = vmatpush1.msra.mxu0 0.0
    %1349 = vmatprep.subr.mxu0 0.0
    %1350 = vmatpush1.msra.mxu0 0.0
    %1351 = vmatprep.subr.mxu0 0.0
    %1352 = vmatpush1.msra.mxu0 0.0
    %1353 = vmatprep.subr.mxu0 0.0
    %1354 = vmatpush1.msra.mxu0 0.0
    %1355 = vmatprep.subr.mxu0 0.0
    %1356 = vmatpush1.msra.mxu0 0.0
    %1357 = vmatprep.subr.mxu0 0.0
    %1358 = vmatpush1.msra.mxu0 0.0
    %1359 = vmatprep.subr.mxu0 0.0
    %1360 = vmatpush1.msra.mxu0 0.0
    %1361 = vmatprep.subr.mxu0 0.0
    %1362 = vmatpush1.msra.mxu0 0.0
    %1363 = vmatprep.subr.mxu0 0.0
    %1364 = vmatpush1.msra.mxu0 0.0
    %1365 = vmatprep.subr.mxu0 0.0
    %1366 = vmatpush1.msra.mxu0 0.0
    %1367 = vmatprep.subr.mxu0 0.0
    %1368 = vmatpush1.msra.mxu0 0.0
    %1369 = vmatprep.subr.mxu0 0.0
    %1370 = vmatpush1.msra.mxu0 0.0
    %1371 = vmatprep.subr.mxu0 0.0
    %1372 = vmatpush1.msra.mxu0 0.0
    %1373 = vmatprep.subr.mxu0 0.0
    %1374 = vmatpush1.msra.mxu0 0.0
    %1375 = vmatprep.subr.mxu0 0.0
    %1376 = vmatpush1.msra.mxu0 0.0
    %1377 = vmatprep.mubr.f32.mxu0 0.0
    %1378 = vmatmul.mubr.f32.gmra.mrb[0].mxu0 %v1223
    %v1379 = vpop.f32.mrb[0].mxu0
    %v1380 = vadd.f32 0.0, %v1379
    %v1381 = vpop.f32.mrb[0].mxu0
    %1382 = vmatprep.mubr.f32.mxu0 0.0
    %1383 = vmatmul.mubr.f32.gmra.mrb[0].mxu0 %v1226
    %v1384 = vpop.f32.mrb[0].mxu0
    %v1385 = vadd.f32 0.0, %v1384
    %v1386 = vpop.f32.mrb[0].mxu0
    %1387 = vdwg.mxu0
    %v1388 = vadd.f32 %v1122, %v1303
    %v1389 = vadd.f32 %v1124, %v1305
    %v1390 = vadd.f32 %v1199, %v1380
    %v1391 = vadd.f32 %v1128, %v1309
    %v1392 = vadd.f32 %v1130, %v1311
    %v1393 = vadd.f32 %v1204, %v1385
    %s1394 = scalar_lea.vmem %s3, 48
    %v1395 = vld [vmem:[%s1394] sm:$0xff]
    %v1396 = vld [vmem:[%s1394 + $0x8] sm:$0xff]
    %1397 = vrot.lane.b32.xlu0 %v849, 96
    %v1398 = vpop.permute.xlu0 %1397
    %1399 = vrot.lane.b32.xlu0 %v850, 96
    %v1400 = vpop.permute.xlu0 %1399
    %1401 = vrot.lane.b32.xlu0 %v851, 96
    %v1402 = vpop.permute.xlu0 %1401
    %1403 = vrot.lane.b32.xlu0 %v852, 96
    %v1404 = vpop.permute.xlu0 %1403
    %v1405 = vsel %vm288, %v1398, %v1400
    %v1406 = vsel %vm288, %v1400, %v1402
    %v1407 = vsel %vm288, %v1402, %v1404
    %v1409 = vsel %vm873, %v1395, 0
    %v1412 = vsel %vm873, %v1396, 0
    %v1414 = vsel %vm880, %v1405, 0
    %v1416 = vsel %vm880, %v1406, 0
    %v1418 = vsel %vm880, %v1407, 0
    %v1420 = vsel %vm880, %v1404, 0
    %1422 = vmatprep.subr.mxu0 %v1416
    %1423 = vmatpush1.msra.mxu0 %v1414
    %1424 = vmatprep.subr.mxu0 0.0
    %1425 = vmatpush1.msra.mxu0 0.0
    %1426 = vmatprep.subr.mxu0 0.0
    %1427 = vmatpush1.msra.mxu0 0.0
    %1428 = vmatprep.subr.mxu0 0.0
    %1429 = vmatpush1.msra.mxu0 0.0
    %1430 = vmatprep.subr.mxu0 0.0
    %1431 = vmatpush1.msra.mxu0 0.0
    %1432 = vmatprep.subr.mxu0 0.0
    %1433 = vmatpush1.msra.mxu0 0.0
    %1434 = vmatprep.subr.mxu0 0.0
    %1435 = vmatpush1.msra.mxu0 0.0
    %1436 = vmatprep.subr.mxu0 0.0
    %1437 = vmatpush1.msra.mxu0 0.0
    %1438 = vmatprep.subr.mxu0 0.0
    %1439 = vmatpush1.msra.mxu0 0.0
    %1440 = vmatprep.subr.mxu0 0.0
    %1441 = vmatpush1.msra.mxu0 0.0
    %1442 = vmatprep.subr.mxu0 0.0
    %1443 = vmatpush1.msra.mxu0 0.0
    %1444 = vmatprep.subr.mxu0 0.0
    %1445 = vmatpush1.msra.mxu0 0.0
    %1446 = vmatprep.subr.mxu0 0.0
    %1447 = vmatpush1.msra.mxu0 0.0
    %1448 = vmatprep.subr.mxu0 0.0
    %1449 = vmatpush1.msra.mxu0 0.0
    %1450 = vmatprep.subr.mxu0 0.0
    %1451 = vmatpush1.msra.mxu0 0.0
    %1452 = vmatprep.subr.mxu0 0.0
    %1453 = vmatpush1.msra.mxu0 0.0
    %1454 = vmatprep.subr.mxu0 0.0
    %1455 = vmatpush1.msra.mxu0 0.0
    %1456 = vmatprep.subr.mxu0 0.0
    %1457 = vmatpush1.msra.mxu0 0.0
    %1458 = vmatprep.subr.mxu0 0.0
    %1459 = vmatpush1.msra.mxu0 0.0
    %1460 = vmatprep.subr.mxu0 0.0
    %1461 = vmatpush1.msra.mxu0 0.0
    %1462 = vmatprep.subr.mxu0 0.0
    %1463 = vmatpush1.msra.mxu0 0.0
    %1464 = vmatprep.subr.mxu0 0.0
    %1465 = vmatpush1.msra.mxu0 0.0
    %1466 = vmatprep.subr.mxu0 0.0
    %1467 = vmatpush1.msra.mxu0 0.0
    %1468 = vmatprep.subr.mxu0 0.0
    %1469 = vmatpush1.msra.mxu0 0.0
    %1470 = vmatprep.subr.mxu0 0.0
    %1471 = vmatpush1.msra.mxu0 0.0
    %1472 = vmatprep.subr.mxu0 0.0
    %1473 = vmatpush1.msra.mxu0 0.0
    %1474 = vmatprep.subr.mxu0 0.0
    %1475 = vmatpush1.msra.mxu0 0.0
    %1476 = vmatprep.subr.mxu0 0.0
    %1477 = vmatpush1.msra.mxu0 0.0
    %1478 = vmatprep.subr.mxu0 0.0
    %1479 = vmatpush1.msra.mxu0 0.0
    %1480 = vmatprep.subr.mxu0 0.0
    %1481 = vmatpush1.msra.mxu0 0.0
    %1482 = vmatprep.subr.mxu0 0.0
    %1483 = vmatpush1.msra.mxu0 0.0
    %1484 = vmatprep.subr.mxu0 0.0
    %1485 = vmatpush1.msra.mxu0 0.0
    %1486 = vmatprep.mubr.f32.mxu0 0.0
    %1487 = vmatmul.mubr.f32.gmra.mrb[0].mxu0 %v1409
    %v1488 = vpop.f32.mrb[0].mxu0
    %v1489 = vadd.f32 0.0, %v1488
    %v1490 = vpop.f32.mrb[0].mxu0
    %v1491 = vadd.f32 0.0, %v1490
    %1492 = vmatprep.mubr.f32.mxu0 0.0
    %1493 = vmatmul.mubr.f32.gmra.mrb[0].mxu0 %v1412
    %v1494 = vpop.f32.mrb[0].mxu0
    %v1495 = vadd.f32 0.0, %v1494
    %v1496 = vpop.f32.mrb[0].mxu0
    %v1497 = vadd.f32 0.0, %v1496
    %1498 = vdwg.mxu0
    %1499 = vmatprep.subr.mxu0 %v1420
    %1500 = vmatpush1.msra.mxu0 %v1418
    %1501 = vmatprep.subr.mxu0 0.0
    %1502 = vmatpush1.msra.mxu0 0.0
    %1503 = vmatprep.subr.mxu0 0.0
    %1504 = vmatpush1.msra.mxu0 0.0
    %1505 = vmatprep.subr.mxu0 0.0
    %1506 = vmatpush1.msra.mxu0 0.0
    %1507 = vmatprep.subr.mxu0 0.0
    %1508 = vmatpush1.msra.mxu0 0.0
    %1509 = vmatprep.subr.mxu0 0.0
    %1510 = vmatpush1.msra.mxu0 0.0
    %1511 = vmatprep.subr.mxu0 0.0
    %1512 = vmatpush1.msra.mxu0 0.0
    %1513 = vmatprep.subr.mxu0 0.0
    %1514 = vmatpush1.msra.mxu0 0.0
    %1515 = vmatprep.subr.mxu0 0.0
    %1516 = vmatpush1.msra.mxu0 0.0
    %1517 = vmatprep.subr.mxu0 0.0
    %1518 = vmatpush1.msra.mxu0 0.0
    %1519 = vmatprep.subr.mxu0 0.0
    %1520 = vmatpush1.msra.mxu0 0.0
    %1521 = vmatprep.subr.mxu0 0.0
    %1522 = vmatpush1.msra.mxu0 0.0
    %1523 = vmatprep.subr.mxu0 0.0
    %1524 = vmatpush1.msra.mxu0 0.0
    %1525 = vmatprep.subr.mxu0 0.0
    %1526 = vmatpush1.msra.mxu0 0.0
    %1527 = vmatprep.subr.mxu0 0.0
    %1528 = vmatpush1.msra.mxu0 0.0
    %1529 = vmatprep.subr.mxu0 0.0
    %1530 = vmatpush1.msra.mxu0 0.0
    %1531 = vmatprep.subr.mxu0 0.0
    %1532 = vmatpush1.msra.mxu0 0.0
    %1533 = vmatprep.subr.mxu0 0.0
    %1534 = vmatpush1.msra.mxu0 0.0
    %1535 = vmatprep.subr.mxu0 0.0
    %1536 = vmatpush1.msra.mxu0 0.0
    %1537 = vmatprep.subr.mxu0 0.0
    %1538 = vmatpush1.msra.mxu0 0.0
    %1539 = vmatprep.subr.mxu0 0.0
    %1540 = vmatpush1.msra.mxu0 0.0
    %1541 = vmatprep.subr.mxu0 0.0
    %1542 = vmatpush1.msra.mxu0 0.0
    %1543 = vmatprep.subr.mxu0 0.0
    %1544 = vmatpush1.msra.mxu0 0.0
    %1545 = vmatprep.subr.mxu0 0.0
    %1546 = vmatpush1.msra.mxu0 0.0
    %1547 = vmatprep.subr.mxu0 0.0
    %1548 = vmatpush1.msra.mxu0 0.0
    %1549 = vmatprep.subr.mxu0 0.0
    %1550 = vmatpush1.msra.mxu0 0.0
    %1551 = vmatprep.subr.mxu0 0.0
    %1552 = vmatpush1.msra.mxu0 0.0
    %1553 = vmatprep.subr.mxu0 0.0
    %1554 = vmatpush1.msra.mxu0 0.0
    %1555 = vmatprep.subr.mxu0 0.0
    %1556 = vmatpush1.msra.mxu0 0.0
    %1557 = vmatprep.subr.mxu0 0.0
    %1558 = vmatpush1.msra.mxu0 0.0
    %1559 = vmatprep.subr.mxu0 0.0
    %1560 = vmatpush1.msra.mxu0 0.0
    %1561 = vmatprep.subr.mxu0 0.0
    %1562 = vmatpush1.msra.mxu0 0.0
    %1563 = vmatprep.mubr.f32.mxu0 0.0
    %1564 = vmatmul.mubr.f32.gmra.mrb[0].mxu0 %v1409
    %v1565 = vpop.f32.mrb[0].mxu0
    %v1566 = vadd.f32 0.0, %v1565
    %v1567 = vpop.f32.mrb[0].mxu0
    %1568 = vmatprep.mubr.f32.mxu0 0.0
    %1569 = vmatmul.mubr.f32.gmra.mrb[0].mxu0 %v1412
    %v1570 = vpop.f32.mrb[0].mxu0
    %v1571 = vadd.f32 0.0, %v1570
    %v1572 = vpop.f32.mrb[0].mxu0
    %1573 = vdwg.mxu0
    %v1574 = vadd.f32 %v1388, %v1489
    %v1575 = vadd.f32 %v1389, %v1491
    %v1576 = vadd.f32 %v1390, %v1566
    %v1577 = vadd.f32 %v1391, %v1495
    %v1578 = vadd.f32 %v1392, %v1497
    %v1579 = vadd.f32 %v1393, %v1571
    %s1580 = scalar_lea.vmem %s3, 64
    %v1581 = vld [vmem:[%s1580] sm:$0xff]
    %v1582 = vld [vmem:[%s1580 + $0x8] sm:$0xff]
    %1583 = vrot.lane.b32.xlu0 %v849, 94
    %v1584 = vpop.permute.xlu0 %1583
    %1585 = vrot.lane.b32.xlu0 %v850, 94
    %v1586 = vpop.permute.xlu0 %1585
    %1587 = vrot.lane.b32.xlu0 %v851, 94
    %v1588 = vpop.permute.xlu0 %1587
    %1589 = vrot.lane.b32.xlu0 %v852, 94
    %v1590 = vpop.permute.xlu0 %1589
    %v1591 = vsel %vm414, %v1584, %v1586
    %v1592 = vsel %vm414, %v1586, %v1588
    %v1593 = vsel %vm414, %v1588, %v1590
    %v1595 = vsel %vm873, %v1581, 0
    %v1598 = vsel %vm873, %v1582, 0
    %v1600 = vsel %vm880, %v1591, 0
    %v1602 = vsel %vm880, %v1592, 0
    %v1604 = vsel %vm880, %v1593, 0
    %v1606 = vsel %vm880, %v1590, 0
    %1608 = vmatprep.subr.mxu0 %v1602
    %1609 = vmatpush1.msra.mxu0 %v1600
    %1610 = vmatprep.subr.mxu0 0.0
    %1611 = vmatpush1.msra.mxu0 0.0
    %1612 = vmatprep.subr.mxu0 0.0
    %1613 = vmatpush1.msra.mxu0 0.0
    %1614 = vmatprep.subr.mxu0 0.0
    %1615 = vmatpush1.msra.mxu0 0.0
    %1616 = vmatprep.subr.mxu0 0.0
    %1617 = vmatpush1.msra.mxu0 0.0
    %1618 = vmatprep.subr.mxu0 0.0
    %1619 = vmatpush1.msra.mxu0 0.0
    %1620 = vmatprep.subr.mxu0 0.0
    %1621 = vmatpush1.msra.mxu0 0.0
    %1622 = vmatprep.subr.mxu0 0.0
    %1623 = vmatpush1.msra.mxu0 0.0
    %1624 = vmatprep.subr.mxu0 0.0
    %1625 = vmatpush1.msra.mxu0 0.0
    %1626 = vmatprep.subr.mxu0 0.0
    %1627 = vmatpush1.msra.mxu0 0.0
    %1628 = vmatprep.subr.mxu0 0.0
    %1629 = vmatpush1.msra.mxu0 0.0
    %1630 = vmatprep.subr.mxu0 0.0
    %1631 = vmatpush1.msra.mxu0 0.0
    %1632 = vmatprep.subr.mxu0 0.0
    %1633 = vmatpush1.msra.mxu0 0.0
    %1634 = vmatprep.subr.mxu0 0.0
    %1635 = vmatpush1.msra.mxu0 0.0
    %1636 = vmatprep.subr.mxu0 0.0
    %1637 = vmatpush1.msra.mxu0 0.0
    %1638 = vmatprep.subr.mxu0 0.0
    %1639 = vmatpush1.msra.mxu0 0.0
    %1640 = vmatprep.subr.mxu0 0.0
    %1641 = vmatpush1.msra.mxu0 0.0
    %1642 = vmatprep.subr.mxu0 0.0
    %1643 = vmatpush1.msra.mxu0 0.0
    %1644 = vmatprep.subr.mxu0 0.0
    %1645 = vmatpush1.msra.mxu0 0.0
    %1646 = vmatprep.subr.mxu0 0.0
    %1647 = vmatpush1.msra.mxu0 0.0
    %1648 = vmatprep.subr.mxu0 0.0
    %1649 = vmatpush1.msra.mxu0 0.0
    %1650 = vmatprep.subr.mxu0 0.0
    %1651 = vmatpush1.msra.mxu0 0.0
    %1652 = vmatprep.subr.mxu0 0.0
    %1653 = vmatpush1.msra.mxu0 0.0
    %1654 = vmatprep.subr.mxu0 0.0
    %1655 = vmatpush1.msra.mxu0 0.0
    %1656 = vmatprep.subr.mxu0 0.0
    %1657 = vmatpush1.msra.mxu0 0.0
    %1658 = vmatprep.subr.mxu0 0.0
    %1659 = vmatpush1.msra.mxu0 0.0
    %1660 = vmatprep.subr.mxu0 0.0
    %1661 = vmatpush1.msra.mxu0 0.0
    %1662 = vmatprep.subr.mxu0 0.0
    %1663 = vmatpush1.msra.mxu0 0.0
    %1664 = vmatprep.subr.mxu0 0.0
    %1665 = vmatpush1.msra.mxu0 0.0
    %1666 = vmatprep.subr.mxu0 0.0
    %1667 = vmatpush1.msra.mxu0 0.0
    %1668 = vmatprep.subr.mxu0 0.0
    %1669 = vmatpush1.msra.mxu0 0.0
    %1670 = vmatprep.subr.mxu0 0.0
    %1671 = vmatpush1.msra.mxu0 0.0
    %1672 = vmatprep.mubr.f32.mxu0 0.0
    %1673 = vmatmul.mubr.f32.gmra.mrb[0].mxu0 %v1595
    %v1674 = vpop.f32.mrb[0].mxu0
    %v1675 = vadd.f32 0.0, %v1674
    %v1676 = vpop.f32.mrb[0].mxu0
    %v1677 = vadd.f32 0.0, %v1676
    %1678 = vmatprep.mubr.f32.mxu0 0.0
    %1679 = vmatmul.mubr.f32.gmra.mrb[0].mxu0 %v1598
    %v1680 = vpop.f32.mrb[0].mxu0
    %v1681 = vadd.f32 0.0, %v1680
    %v1682 = vpop.f32.mrb[0].mxu0
    %v1683 = vadd.f32 0.0, %v1682
    %1684 = vdwg.mxu0
    %1685 = vmatprep.subr.mxu0 %v1606
    %1686 = vmatpush1.msra.mxu0 %v1604
    %1687 = vmatprep.subr.mxu0 0.0
    %1688 = vmatpush1.msra.mxu0 0.0
    %1689 = vmatprep.subr.mxu0 0.0
    %1690 = vmatpush1.msra.mxu0 0.0
    %1691 = vmatprep.subr.mxu0 0.0
    %1692 = vmatpush1.msra.mxu0 0.0
    %1693 = vmatprep.subr.mxu0 0.0
    %1694 = vmatpush1.msra.mxu0 0.0
    %1695 = vmatprep.subr.mxu0 0.0
    %1696 = vmatpush1.msra.mxu0 0.0
    %1697 = vmatprep.subr.mxu0 0.0
    %1698 = vmatpush1.msra.mxu0 0.0
    %1699 = vmatprep.subr.mxu0 0.0
    %1700 = vmatpush1.msra.mxu0 0.0
    %1701 = vmatprep.subr.mxu0 0.0
    %1702 = vmatpush1.msra.mxu0 0.0
    %1703 = vmatprep.subr.mxu0 0.0
    %1704 = vmatpush1.msra.mxu0 0.0
    %1705 = vmatprep.subr.mxu0 0.0
    %1706 = vmatpush1.msra.mxu0 0.0
    %1707 = vmatprep.subr.mxu0 0.0
    %1708 = vmatpush1.msra.mxu0 0.0
    %1709 = vmatprep.subr.mxu0 0.0
    %1710 = vmatpush1.msra.mxu0 0.0
    %1711 = vmatprep.subr.mxu0 0.0
    %1712 = vmatpush1.msra.mxu0 0.0
    %1713 = vmatprep.subr.mxu0 0.0
    %1714 = vmatpush1.msra.mxu0 0.0
    %1715 = vmatprep.subr.mxu0 0.0
    %1716 = vmatpush1.msra.mxu0 0.0
    %1717 = vmatprep.subr.mxu0 0.0
    %1718 = vmatpush1.msra.mxu0 0.0
    %1719 = vmatprep.subr.mxu0 0.0
    %1720 = vmatpush1.msra.mxu0 0.0
    %1721 = vmatprep.subr.mxu0 0.0
    %1722 = vmatpush1.msra.mxu0 0.0
    %1723 = vmatprep.subr.mxu0 0.0
    %1724 = vmatpush1.msra.mxu0 0.0
    %1725 = vmatprep.subr.mxu0 0.0
    %1726 = vmatpush1.msra.mxu0 0.0
    %1727 = vmatprep.subr.mxu0 0.0
    %1728 = vmatpush1.msra.mxu0 0.0
    %1729 = vmatprep.subr.mxu0 0.0
    %1730 = vmatpush1.msra.mxu0 0.0
    %1731 = vmatprep.subr.mxu0 0.0
    %1732 = vmatpush1.msra.mxu0 0.0
    %1733 = vmatprep.subr.mxu0 0.0
    %1734 = vmatpush1.msra.mxu0 0.0
    %1735 = vmatprep.subr.mxu0 0.0
    %1736 = vmatpush1.msra.mxu0 0.0
    %1737 = vmatprep.subr.mxu0 0.0
    %1738 = vmatpush1.msra.mxu0 0.0
    %1739 = vmatprep.subr.mxu0 0.0
    %1740 = vmatpush1.msra.mxu0 0.0
    %1741 = vmatprep.subr.mxu0 0.0
    %1742 = vmatpush1.msra.mxu0 0.0
    %1743 = vmatprep.subr.mxu0 0.0
    %1744 = vmatpush1.msra.mxu0 0.0
    %1745 = vmatprep.subr.mxu0 0.0
    %1746 = vmatpush1.msra.mxu0 0.0
    %1747 = vmatprep.subr.mxu0 0.0
    %1748 = vmatpush1.msra.mxu0 0.0
    %1749 = vmatprep.mubr.f32.mxu0 0.0
    %1750 = vmatmul.mubr.f32.gmra.mrb[0].mxu0 %v1595
    %v1751 = vpop.f32.mrb[0].mxu0
    %v1752 = vadd.f32 0.0, %v1751
    %v1753 = vpop.f32.mrb[0].mxu0
    %1754 = vmatprep.mubr.f32.mxu0 0.0
    %1755 = vmatmul.mubr.f32.gmra.mrb[0].mxu0 %v1598
    %v1756 = vpop.f32.mrb[0].mxu0
    %v1757 = vadd.f32 0.0, %v1756
    %v1758 = vpop.f32.mrb[0].mxu0
    %1759 = vdwg.mxu0
    %v1760 = vadd.f32 %v1574, %v1675
    %v1761 = vadd.f32 %v1575, %v1677
    %v1762 = vadd.f32 %v1576, %v1752
    %v1763 = vadd.f32 %v1577, %v1681
    %v1764 = vadd.f32 %v1578, %v1683
    %v1765 = vadd.f32 %v1579, %v1757
    %s1766 = scalar_lea.vmem %s3, 80
    %v1767 = vld [vmem:[%s1766] sm:$0xff]
    %v1768 = vld [vmem:[%s1766 + $0x8] sm:$0xff]
    %1769 = vrot.lane.b32.xlu0 %v849, 92
    %v1770 = vpop.permute.xlu0 %1769
    %1771 = vrot.lane.b32.xlu0 %v850, 92
    %v1772 = vpop.permute.xlu0 %1771
    %1773 = vrot.lane.b32.xlu0 %v851, 92
    %v1774 = vpop.permute.xlu0 %1773
    %1775 = vrot.lane.b32.xlu0 %v852, 92
    %v1776 = vpop.permute.xlu0 %1775
    %vm1777 = vcmask 752640
    %v1778 = vsel %vm1777, %v1770, %v1772
    %v1779 = vsel %vm1777, %v1772, %v1774
    %v1780 = vsel %vm1777, %v1774, %v1776
    %v1782 = vsel %vm873, %v1767, 0
    %v1785 = vsel %vm873, %v1768, 0
    %v1787 = vsel %vm880, %v1778, 0
    %v1789 = vsel %vm880, %v1779, 0
    %v1791 = vsel %vm880, %v1780, 0
    %v1793 = vsel %vm880, %v1776, 0
    %1795 = vmatprep.subr.mxu0 %v1789
    %1796 = vmatpush1.msra.mxu0 %v1787
    %1797 = vmatprep.subr.mxu0 0.0
    %1798 = vmatpush1.msra.mxu0 0.0
    %1799 = vmatprep.subr.mxu0 0.0
    %1800 = vmatpush1.msra.mxu0 0.0
    %1801 = vmatprep.subr.mxu0 0.0
    %1802 = vmatpush1.msra.mxu0 0.0
    %1803 = vmatprep.subr.mxu0 0.0
    %1804 = vmatpush1.msra.mxu0 0.0
    %1805 = vmatprep.subr.mxu0 0.0
    %1806 = vmatpush1.msra.mxu0 0.0
    %1807 = vmatprep.subr.mxu0 0.0
    %1808 = vmatpush1.msra.mxu0 0.0
    %1809 = vmatprep.subr.mxu0 0.0
    %1810 = vmatpush1.msra.mxu0 0.0
    %1811 = vmatprep.subr.mxu0 0.0
    %1812 = vmatpush1.msra.mxu0 0.0
    %1813 = vmatprep.subr.mxu0 0.0
    %1814 = vmatpush1.msra.mxu0 0.0
    %1815 = vmatprep.subr.mxu0 0.0
    %1816 = vmatpush1.msra.mxu0 0.0
    %1817 = vmatprep.subr.mxu0 0.0
    %1818 = vmatpush1.msra.mxu0 0.0
    %1819 = vmatprep.subr.mxu0 0.0
    %1820 = vmatpush1.msra.mxu0 0.0
    %1821 = vmatprep.subr.mxu0 0.0
    %1822 = vmatpush1.msra.mxu0 0.0
    %1823 = vmatprep.subr.mxu0 0.0
    %1824 = vmatpush1.msra.mxu0 0.0
    %1825 = vmatprep.subr.mxu0 0.0
    %1826 = vmatpush1.msra.mxu0 0.0
    %1827 = vmatprep.subr.mxu0 0.0
    %1828 = vmatpush1.msra.mxu0 0.0
    %1829 = vmatprep.subr.mxu0 0.0
    %1830 = vmatpush1.msra.mxu0 0.0
    %1831 = vmatprep.subr.mxu0 0.0
    %1832 = vmatpush1.msra.mxu0 0.0
    %1833 = vmatprep.subr.mxu0 0.0
    %1834 = vmatpush1.msra.mxu0 0.0
    %1835 = vmatprep.subr.mxu0 0.0
    %1836 = vmatpush1.msra.mxu0 0.0
    %1837 = vmatprep.subr.mxu0 0.0
    %1838 = vmatpush1.msra.mxu0 0.0
    %1839 = vmatprep.subr.mxu0 0.0
    %1840 = vmatpush1.msra.mxu0 0.0
    %1841 = vmatprep.subr.mxu0 0.0
    %1842 = vmatpush1.msra.mxu0 0.0
    %1843 = vmatprep.subr.mxu0 0.0
    %1844 = vmatpush1.msra.mxu0 0.0
    %1845 = vmatprep.subr.mxu0 0.0
    %1846 = vmatpush1.msra.mxu0 0.0
    %1847 = vmatprep.subr.mxu0 0.0
    %1848 = vmatpush1.msra.mxu0 0.0
    %1849 = vmatprep.subr.mxu0 0.0
    %1850 = vmatpush1.msra.mxu0 0.0
    %1851 = vmatprep.subr.mxu0 0.0
    %1852 = vmatpush1.msra.mxu0 0.0
    %1853 = vmatprep.subr.mxu0 0.0
    %1854 = vmatpush1.msra.mxu0 0.0
    %1855 = vmatprep.subr.mxu0 0.0
    %1856 = vmatpush1.msra.mxu0 0.0
    %1857 = vmatprep.subr.mxu0 0.0
    %1858 = vmatpush1.msra.mxu0 0.0
    %1859 = vmatprep.mubr.f32.mxu0 0.0
    %1860 = vmatmul.mubr.f32.gmra.mrb[0].mxu0 %v1782
    %v1861 = vpop.f32.mrb[0].mxu0
    %v1862 = vadd.f32 0.0, %v1861
    %v1863 = vpop.f32.mrb[0].mxu0
    %v1864 = vadd.f32 0.0, %v1863
    %1865 = vmatprep.mubr.f32.mxu0 0.0
    %1866 = vmatmul.mubr.f32.gmra.mrb[0].mxu0 %v1785
    %v1867 = vpop.f32.mrb[0].mxu0
    %v1868 = vadd.f32 0.0, %v1867
    %v1869 = vpop.f32.mrb[0].mxu0
    %v1870 = vadd.f32 0.0, %v1869
    %1871 = vdwg.mxu0
    %1872 = vmatprep.subr.mxu0 %v1793
    %1873 = vmatpush1.msra.mxu0 %v1791
    %1874 = vmatprep.subr.mxu0 0.0
    %1875 = vmatpush1.msra.mxu0 0.0
    %1876 = vmatprep.subr.mxu0 0.0
    %1877 = vmatpush1.msra.mxu0 0.0
    %1878 = vmatprep.subr.mxu0 0.0
    %1879 = vmatpush1.msra.mxu0 0.0
    %1880 = vmatprep.subr.mxu0 0.0
    %1881 = vmatpush1.msra.mxu0 0.0
    %1882 = vmatprep.subr.mxu0 0.0
    %1883 = vmatpush1.msra.mxu0 0.0
    %1884 = vmatprep.subr.mxu0 0.0
    %1885 = vmatpush1.msra.mxu0 0.0
    %1886 = vmatprep.subr.mxu0 0.0
    %1887 = vmatpush1.msra.mxu0 0.0
    %1888 = vmatprep.subr.mxu0 0.0
    %1889 = vmatpush1.msra.mxu0 0.0
    %1890 = vmatprep.subr.mxu0 0.0
    %1891 = vmatpush1.msra.mxu0 0.0
    %1892 = vmatprep.subr.mxu0 0.0
    %1893 = vmatpush1.msra.mxu0 0.0
    %1894 = vmatprep.subr.mxu0 0.0
    %1895 = vmatpush1.msra.mxu0 0.0
    %1896 = vmatprep.subr.mxu0 0.0
    %1897 = vmatpush1.msra.mxu0 0.0
    %1898 = vmatprep.subr.mxu0 0.0
    %1899 = vmatpush1.msra.mxu0 0.0
    %1900 = vmatprep.subr.mxu0 0.0
    %1901 = vmatpush1.msra.mxu0 0.0
    %1902 = vmatprep.subr.mxu0 0.0
    %1903 = vmatpush1.msra.mxu0 0.0
    %1904 = vmatprep.subr.mxu0 0.0
    %1905 = vmatpush1.msra.mxu0 0.0
    %1906 = vmatprep.subr.mxu0 0.0
    %1907 = vmatpush1.msra.mxu0 0.0
    %1908 = vmatprep.subr.mxu0 0.0
    %1909 = vmatpush1.msra.mxu0 0.0
    %1910 = vmatprep.subr.mxu0 0.0
    %1911 = vmatpush1.msra.mxu0 0.0
    %1912 = vmatprep.subr.mxu0 0.0
    %1913 = vmatpush1.msra.mxu0 0.0
    %1914 = vmatprep.subr.mxu0 0.0
    %1915 = vmatpush1.msra.mxu0 0.0
    %1916 = vmatprep.subr.mxu0 0.0
    %1917 = vmatpush1.msra.mxu0 0.0
    %1918 = vmatprep.subr.mxu0 0.0
    %1919 = vmatpush1.msra.mxu0 0.0
    %1920 = vmatprep.subr.mxu0 0.0
    %1921 = vmatpush1.msra.mxu0 0.0
    %1922 = vmatprep.subr.mxu0 0.0
    %1923 = vmatpush1.msra.mxu0 0.0
    %1924 = vmatprep.subr.mxu0 0.0
    %1925 = vmatpush1.msra.mxu0 0.0
    %1926 = vmatprep.subr.mxu0 0.0
    %1927 = vmatpush1.msra.mxu0 0.0
    %1928 = vmatprep.subr.mxu0 0.0
    %1929 = vmatpush1.msra.mxu0 0.0
    %1930 = vmatprep.subr.mxu0 0.0
    %1931 = vmatpush1.msra.mxu0 0.0
    %1932 = vmatprep.subr.mxu0 0.0
    %1933 = vmatpush1.msra.mxu0 0.0
    %1934 = vmatprep.subr.mxu0 0.0
    %1935 = vmatpush1.msra.mxu0 0.0
    %1936 = vmatprep.mubr.f32.mxu0 0.0
    %1937 = vmatmul.mubr.f32.gmra.mrb[0].mxu0 %v1782
    %v1938 = vpop.f32.mrb[0].mxu0
    %v1939 = vadd.f32 0.0, %v1938
    %v1940 = vpop.f32.mrb[0].mxu0
    %1941 = vmatprep.mubr.f32.mxu0 0.0
    %1942 = vmatmul.mubr.f32.gmra.mrb[0].mxu0 %v1785
    %v1943 = vpop.f32.mrb[0].mxu0
    %v1944 = vadd.f32 0.0, %v1943
    %v1945 = vpop.f32.mrb[0].mxu0
    %1946 = vdwg.mxu0
    %v1947 = vadd.f32 %v1760, %v1862
    %v1948 = vadd.f32 %v1761, %v1864
    %v1949 = vadd.f32 %v1762, %v1939
    %v1950 = vadd.f32 %v1763, %v1868
    %v1951 = vadd.f32 %v1764, %v1870
    %v1952 = vadd.f32 %v1765, %v1944
    %s1953 = scalar_lea.vmem %s3, 96
    %v1954 = vld [vmem:[%s1953] sm:$0xff]
    %v1955 = vld [vmem:[%s1953 + $0x8] sm:$0xff]
    %1956 = vrot.lane.b32.xlu0 %v849, 64
    %v1957 = vpop.permute.xlu0 %1956
    %1958 = vrot.lane.b32.xlu0 %v850, 64
    %v1959 = vpop.permute.xlu0 %1958
    %1960 = vrot.lane.b32.xlu0 %v851, 64
    %v1961 = vpop.permute.xlu0 %1960
    %1962 = vrot.lane.b32.xlu0 %v852, 64
    %v1963 = vpop.permute.xlu0 %1962
    %v1964 = vsel %vm477, %v1957, %v1959
    %v1965 = vsel %vm477, %v1959, %v1961
    %v1966 = vsel %vm477, %v1961, %v1963
    %v1968 = vsel %vm873, %v1954, 0
    %v1971 = vsel %vm873, %v1955, 0
    %v1973 = vsel %vm880, %v1964, 0
    %v1975 = vsel %vm880, %v1965, 0
    %v1977 = vsel %vm880, %v1966, 0
    %v1979 = vsel %vm880, %v1963, 0
    %1981 = vmatprep.subr.mxu0 %v1975
    %1982 = vmatpush1.msra.mxu0 %v1973
    %1983 = vmatprep.subr.mxu0 0.0
    %1984 = vmatpush1.msra.mxu0 0.0
    %1985 = vmatprep.subr.mxu0 0.0
    %1986 = vmatpush1.msra.mxu0 0.0
    %1987 = vmatprep.subr.mxu0 0.0
    %1988 = vmatpush1.msra.mxu0 0.0
    %1989 = vmatprep.subr.mxu0 0.0
    %1990 = vmatpush1.msra.mxu0 0.0
    %1991 = vmatprep.subr.mxu0 0.0
    %1992 = vmatpush1.msra.mxu0 0.0
    %1993 = vmatprep.subr.mxu0 0.0
    %1994 = vmatpush1.msra.mxu0 0.0
    %1995 = vmatprep.subr.mxu0 0.0
    %1996 = vmatpush1.msra.mxu0 0.0
    %1997 = vmatprep.subr.mxu0 0.0
    %1998 = vmatpush1.msra.mxu0 0.0
    %1999 = vmatprep.subr.mxu0 0.0
    %2000 = vmatpush1.msra.mxu0 0.0
    %2001 = vmatprep.subr.mxu0 0.0
    %2002 = vmatpush1.msra.mxu0 0.0
    %2003 = vmatprep.subr.mxu0 0.0
    %2004 = vmatpush1.msra.mxu0 0.0
    %2005 = vmatprep.subr.mxu0 0.0
    %2006 = vmatpush1.msra.mxu0 0.0
    %2007 = vmatprep.subr.mxu0 0.0
    %2008 = vmatpush1.msra.mxu0 0.0
    %2009 = vmatprep.subr.mxu0 0.0
    %2010 = vmatpush1.msra.mxu0 0.0
    %2011 = vmatprep.subr.mxu0 0.0
    %2012 = vmatpush1.msra.mxu0 0.0
    %2013 = vmatprep.subr.mxu0 0.0
    %2014 = vmatpush1.msra.mxu0 0.0
    %2015 = vmatprep.subr.mxu0 0.0
    %2016 = vmatpush1.msra.mxu0 0.0
    %2017 = vmatprep.subr.mxu0 0.0
    %2018 = vmatpush1.msra.mxu0 0.0
    %2019 = vmatprep.subr.mxu0 0.0
    %2020 = vmatpush1.msra.mxu0 0.0
    %2021 = vmatprep.subr.mxu0 0.0
    %2022 = vmatpush1.msra.mxu0 0.0
    %2023 = vmatprep.subr.mxu0 0.0
    %2024 = vmatpush1.msra.mxu0 0.0
    %2025 = vmatprep.subr.mxu0 0.0
    %2026 = vmatpush1.msra.mxu0 0.0
    %2027 = vmatprep.subr.mxu0 0.0
    %2028 = vmatpush1.msra.mxu0 0.0
    %2029 = vmatprep.subr.mxu0 0.0
    %2030 = vmatpush1.msra.mxu0 0.0
    %2031 = vmatprep.subr.mxu0 0.0
    %2032 = vmatpush1.msra.mxu0 0.0
    %2033 = vmatprep.subr.mxu0 0.0
    %2034 = vmatpush1.msra.mxu0 0.0
    %2035 = vmatprep.subr.mxu0 0.0
    %2036 = vmatpush1.msra.mxu0 0.0
    %2037 = vmatprep.subr.mxu0 0.0
    %2038 = vmatpush1.msra.mxu0 0.0
    %2039 = vmatprep.subr.mxu0 0.0
    %2040 = vmatpush1.msra.mxu0 0.0
    %2041 = vmatprep.subr.mxu0 0.0
    %2042 = vmatpush1.msra.mxu0 0.0
    %2043 = vmatprep.subr.mxu0 0.0
    %2044 = vmatpush1.msra.mxu0 0.0
    %2045 = vmatprep.mubr.f32.mxu0 0.0
    %2046 = vmatmul.mubr.f32.gmra.mrb[0].mxu0 %v1968
    %v2047 = vpop.f32.mrb[0].mxu0
    %v2048 = vadd.f32 0.0, %v2047
    %v2049 = vpop.f32.mrb[0].mxu0
    %v2050 = vadd.f32 0.0, %v2049
    %2051 = vmatprep.mubr.f32.mxu0 0.0
    %2052 = vmatmul.mubr.f32.gmra.mrb[0].mxu0 %v1971
    %v2053 = vpop.f32.mrb[0].mxu0
    %v2054 = vadd.f32 0.0, %v2053
    %v2055 = vpop.f32.mrb[0].mxu0
    %v2056 = vadd.f32 0.0, %v2055
    %2057 = vdwg.mxu0
    %2058 = vmatprep.subr.mxu0 %v1979
    %2059 = vmatpush1.msra.mxu0 %v1977
    %2060 = vmatprep.subr.mxu0 0.0
    %2061 = vmatpush1.msra.mxu0 0.0
    %2062 = vmatprep.subr.mxu0 0.0
    %2063 = vmatpush1.msra.mxu0 0.0
    %2064 = vmatprep.subr.mxu0 0.0
    %2065 = vmatpush1.msra.mxu0 0.0
    %2066 = vmatprep.subr.mxu0 0.0
    %2067 = vmatpush1.msra.mxu0 0.0
    %2068 = vmatprep.subr.mxu0 0.0
    %2069 = vmatpush1.msra.mxu0 0.0
    %2070 = vmatprep.subr.mxu0 0.0
    %2071 = vmatpush1.msra.mxu0 0.0
    %2072 = vmatprep.subr.mxu0 0.0
    %2073 = vmatpush1.msra.mxu0 0.0
    %2074 = vmatprep.subr.mxu0 0.0
    %2075 = vmatpush1.msra.mxu0 0.0
    %2076 = vmatprep.subr.mxu0 0.0
    %2077 = vmatpush1.msra.mxu0 0.0
    %2078 = vmatprep.subr.mxu0 0.0
    %2079 = vmatpush1.msra.mxu0 0.0
    %2080 = vmatprep.subr.mxu0 0.0
    %2081 = vmatpush1.msra.mxu0 0.0
    %2082 = vmatprep.subr.mxu0 0.0
    %2083 = vmatpush1.msra.mxu0 0.0
    %2084 = vmatprep.subr.mxu0 0.0
    %2085 = vmatpush1.msra.mxu0 0.0
    %2086 = vmatprep.subr.mxu0 0.0
    %2087 = vmatpush1.msra.mxu0 0.0
    %2088 = vmatprep.subr.mxu0 0.0
    %2089 = vmatpush1.msra.mxu0 0.0
    %2090 = vmatprep.subr.mxu0 0.0
    %2091 = vmatpush1.msra.mxu0 0.0
    %2092 = vmatprep.subr.mxu0 0.0
    %2093 = vmatpush1.msra.mxu0 0.0
    %2094 = vmatprep.subr.mxu0 0.0
    %2095 = vmatpush1.msra.mxu0 0.0
    %2096 = vmatprep.subr.mxu0 0.0
    %2097 = vmatpush1.msra.mxu0 0.0
    %2098 = vmatprep.subr.mxu0 0.0
    %2099 = vmatpush1.msra.mxu0 0.0
    %2100 = vmatprep.subr.mxu0 0.0
    %2101 = vmatpush1.msra.mxu0 0.0
    %2102 = vmatprep.subr.mxu0 0.0
    %2103 = vmatpush1.msra.mxu0 0.0
    %2104 = vmatprep.subr.mxu0 0.0
    %2105 = vmatpush1.msra.mxu0 0.0
    %2106 = vmatprep.subr.mxu0 0.0
    %2107 = vmatpush1.msra.mxu0 0.0
    %2108 = vmatprep.subr.mxu0 0.0
    %2109 = vmatpush1.msra.mxu0 0.0
    %2110 = vmatprep.subr.mxu0 0.0
    %2111 = vmatpush1.msra.mxu0 0.0
    %2112 = vmatprep.subr.mxu0 0.0
    %2113 = vmatpush1.msra.mxu0 0.0
    %2114 = vmatprep.subr.mxu0 0.0
    %2115 = vmatpush1.msra.mxu0 0.0
    %2116 = vmatprep.subr.mxu0 0.0
    %2117 = vmatpush1.msra.mxu0 0.0
    %2118 = vmatprep.subr.mxu0 0.0
    %2119 = vmatpush1.msra.mxu0 0.0
    %2120 = vmatprep.subr.mxu0 0.0
    %2121 = vmatpush1.msra.mxu0 0.0
    %2122 = vmatprep.mubr.f32.mxu0 0.0
    %2123 = vmatmul.mubr.f32.gmra.mrb[0].mxu0 %v1968
    %v2124 = vpop.f32.mrb[0].mxu0
    %v2125 = vadd.f32 0.0, %v2124
    %v2126 = vpop.f32.mrb[0].mxu0
    %2127 = vmatprep.mubr.f32.mxu0 0.0
    %2128 = vmatmul.mubr.f32.gmra.mrb[0].mxu0 %v1971
    %v2129 = vpop.f32.mrb[0].mxu0
    %v2130 = vadd.f32 0.0, %v2129
    %v2131 = vpop.f32.mrb[0].mxu0
    %2132 = vdwg.mxu0
    %v2133 = vadd.f32 %v1947, %v2048
    %v2134 = vadd.f32 %v1948, %v2050
    %v2135 = vadd.f32 %v1949, %v2125
    %v2136 = vadd.f32 %v1950, %v2054
    %v2137 = vadd.f32 %v1951, %v2056
    %v2138 = vadd.f32 %v1952, %v2130
    %s2139 = scalar_lea.vmem %s3, 112
    %v2140 = vld [vmem:[%s2139] sm:$0xff]
    %v2141 = vld [vmem:[%s2139 + $0x8] sm:$0xff]
    %2142 = vrot.lane.b32.xlu0 %v849, 62
    %v2143 = vpop.permute.xlu0 %2142
    %2144 = vrot.lane.b32.xlu0 %v850, 62
    %v2145 = vpop.permute.xlu0 %2144
    %2146 = vrot.lane.b32.xlu0 %v851, 62
    %v2147 = vpop.permute.xlu0 %2146
    %2148 = vrot.lane.b32.xlu0 %v852, 62
    %v2149 = vpop.permute.xlu0 %2148
    %v2150 = vsel %vm662, %v2143, %v2145
    %v2151 = vsel %vm662, %v2145, %v2147
    %v2152 = vsel %vm662, %v2147, %v2149
    %v2154 = vsel %vm873, %v2140, 0
    %v2157 = vsel %vm873, %v2141, 0
    %v2159 = vsel %vm880, %v2150, 0
    %v2161 = vsel %vm880, %v2151, 0
    %v2163 = vsel %vm880, %v2152, 0
    %v2165 = vsel %vm880, %v2149, 0
    %2167 = vmatprep.subr.mxu0 %v2161
    %2168 = vmatpush1.msra.mxu0 %v2159
    %2169 = vmatprep.subr.mxu0 0.0
    %2170 = vmatpush1.msra.mxu0 0.0
    %2171 = vmatprep.subr.mxu0 0.0
    %2172 = vmatpush1.msra.mxu0 0.0
    %2173 = vmatprep.subr.mxu0 0.0
    %2174 = vmatpush1.msra.mxu0 0.0
    %2175 = vmatprep.subr.mxu0 0.0
    %2176 = vmatpush1.msra.mxu0 0.0
    %2177 = vmatprep.subr.mxu0 0.0
    %2178 = vmatpush1.msra.mxu0 0.0
    %2179 = vmatprep.subr.mxu0 0.0
    %2180 = vmatpush1.msra.mxu0 0.0
    %2181 = vmatprep.subr.mxu0 0.0
    %2182 = vmatpush1.msra.mxu0 0.0
    %2183 = vmatprep.subr.mxu0 0.0
    %2184 = vmatpush1.msra.mxu0 0.0
    %2185 = vmatprep.subr.mxu0 0.0
    %2186 = vmatpush1.msra.mxu0 0.0
    %2187 = vmatprep.subr.mxu0 0.0
    %2188 = vmatpush1.msra.mxu0 0.0
    %2189 = vmatprep.subr.mxu0 0.0
    %2190 = vmatpush1.msra.mxu0 0.0
    %2191 = vmatprep.subr.mxu0 0.0
    %2192 = vmatpush1.msra.mxu0 0.0
    %2193 = vmatprep.subr.mxu0 0.0
    %2194 = vmatpush1.msra.mxu0 0.0
    %2195 = vmatprep.subr.mxu0 0.0
    %2196 = vmatpush1.msra.mxu0 0.0
    %2197 = vmatprep.subr.mxu0 0.0
    %2198 = vmatpush1.msra.mxu0 0.0
    %2199 = vmatprep.subr.mxu0 0.0
    %2200 = vmatpush1.msra.mxu0 0.0
    %2201 = vmatprep.subr.mxu0 0.0
    %2202 = vmatpush1.msra.mxu0 0.0
    %2203 = vmatprep.subr.mxu0 0.0
    %2204 = vmatpush1.msra.mxu0 0.0
    %2205 = vmatprep.subr.mxu0 0.0
    %2206 = vmatpush1.msra.mxu0 0.0
    %2207 = vmatprep.subr.mxu0 0.0
    %2208 = vmatpush1.msra.mxu0 0.0
    %2209 = vmatprep.subr.mxu0 0.0
    %2210 = vmatpush1.msra.mxu0 0.0
    %2211 = vmatprep.subr.mxu0 0.0
    %2212 = vmatpush1.msra.mxu0 0.0
    %2213 = vmatprep.subr.mxu0 0.0
    %2214 = vmatpush1.msra.mxu0 0.0
    %2215 = vmatprep.subr.mxu0 0.0
    %2216 = vmatpush1.msra.mxu0 0.0
    %2217 = vmatprep.subr.mxu0 0.0
    %2218 = vmatpush1.msra.mxu0 0.0
    %2219 = vmatprep.subr.mxu0 0.0
    %2220 = vmatpush1.msra.mxu0 0.0
    %2221 = vmatprep.subr.mxu0 0.0
    %2222 = vmatpush1.msra.mxu0 0.0
    %2223 = vmatprep.subr.mxu0 0.0
    %2224 = vmatpush1.msra.mxu0 0.0
    %2225 = vmatprep.subr.mxu0 0.0
    %2226 = vmatpush1.msra.mxu0 0.0
    %2227 = vmatprep.subr.mxu0 0.0
    %2228 = vmatpush1.msra.mxu0 0.0
    %2229 = vmatprep.subr.mxu0 0.0
    %2230 = vmatpush1.msra.mxu0 0.0
    %2231 = vmatprep.mubr.f32.mxu0 0.0
    %2232 = vmatmul.mubr.f32.gmra.mrb[0].mxu0 %v2154
    %v2233 = vpop.f32.mrb[0].mxu0
    %v2234 = vadd.f32 0.0, %v2233
    %v2235 = vpop.f32.mrb[0].mxu0
    %v2236 = vadd.f32 0.0, %v2235
    %2237 = vmatprep.mubr.f32.mxu0 0.0
    %2238 = vmatmul.mubr.f32.gmra.mrb[0].mxu0 %v2157
    %v2239 = vpop.f32.mrb[0].mxu0
    %v2240 = vadd.f32 0.0, %v2239
    %v2241 = vpop.f32.mrb[0].mxu0
    %v2242 = vadd.f32 0.0, %v2241
    %2243 = vdwg.mxu0
    %2244 = vmatprep.subr.mxu0 %v2165
    %2245 = vmatpush1.msra.mxu0 %v2163
    %2246 = vmatprep.subr.mxu0 0.0
    %2247 = vmatpush1.msra.mxu0 0.0
    %2248 = vmatprep.subr.mxu0 0.0
    %2249 = vmatpush1.msra.mxu0 0.0
    %2250 = vmatprep.subr.mxu0 0.0
    %2251 = vmatpush1.msra.mxu0 0.0
    %2252 = vmatprep.subr.mxu0 0.0
    %2253 = vmatpush1.msra.mxu0 0.0
    %2254 = vmatprep.subr.mxu0 0.0
    %2255 = vmatpush1.msra.mxu0 0.0
    %2256 = vmatprep.subr.mxu0 0.0
    %2257 = vmatpush1.msra.mxu0 0.0
    %2258 = vmatprep.subr.mxu0 0.0
    %2259 = vmatpush1.msra.mxu0 0.0
    %2260 = vmatprep.subr.mxu0 0.0
    %2261 = vmatpush1.msra.mxu0 0.0
    %2262 = vmatprep.subr.mxu0 0.0
    %2263 = vmatpush1.msra.mxu0 0.0
    %2264 = vmatprep.subr.mxu0 0.0
    %2265 = vmatpush1.msra.mxu0 0.0
    %2266 = vmatprep.subr.mxu0 0.0
    %2267 = vmatpush1.msra.mxu0 0.0
    %2268 = vmatprep.subr.mxu0 0.0
    %2269 = vmatpush1.msra.mxu0 0.0
    %2270 = vmatprep.subr.mxu0 0.0
    %2271 = vmatpush1.msra.mxu0 0.0
    %2272 = vmatprep.subr.mxu0 0.0
    %2273 = vmatpush1.msra.mxu0 0.0
    %2274 = vmatprep.subr.mxu0 0.0
    %2275 = vmatpush1.msra.mxu0 0.0
    %2276 = vmatprep.subr.mxu0 0.0
    %2277 = vmatpush1.msra.mxu0 0.0
    %2278 = vmatprep.subr.mxu0 0.0
    %2279 = vmatpush1.msra.mxu0 0.0
    %2280 = vmatprep.subr.mxu0 0.0
    %2281 = vmatpush1.msra.mxu0 0.0
    %2282 = vmatprep.subr.mxu0 0.0
    %2283 = vmatpush1.msra.mxu0 0.0
    %2284 = vmatprep.subr.mxu0 0.0
    %2285 = vmatpush1.msra.mxu0 0.0
    %2286 = vmatprep.subr.mxu0 0.0
    %2287 = vmatpush1.msra.mxu0 0.0
    %2288 = vmatprep.subr.mxu0 0.0
    %2289 = vmatpush1.msra.mxu0 0.0
    %2290 = vmatprep.subr.mxu0 0.0
    %2291 = vmatpush1.msra.mxu0 0.0
    %2292 = vmatprep.subr.mxu0 0.0
    %2293 = vmatpush1.msra.mxu0 0.0
    %2294 = vmatprep.subr.mxu0 0.0
    %2295 = vmatpush1.msra.mxu0 0.0
    %2296 = vmatprep.subr.mxu0 0.0
    %2297 = vmatpush1.msra.mxu0 0.0
    %2298 = vmatprep.subr.mxu0 0.0
    %2299 = vmatpush1.msra.mxu0 0.0
    %2300 = vmatprep.subr.mxu0 0.0
    %2301 = vmatpush1.msra.mxu0 0.0
    %2302 = vmatprep.subr.mxu0 0.0
    %2303 = vmatpush1.msra.mxu0 0.0
    %2304 = vmatprep.subr.mxu0 0.0
    %2305 = vmatpush1.msra.mxu0 0.0
    %2306 = vmatprep.subr.mxu0 0.0
    %2307 = vmatpush1.msra.mxu0 0.0
    %2308 = vmatprep.mubr.f32.mxu0 0.0
    %2309 = vmatmul.mubr.f32.gmra.mrb[0].mxu0 %v2154
    %v2310 = vpop.f32.mrb[0].mxu0
    %v2311 = vadd.f32 0.0, %v2310
    %v2312 = vpop.f32.mrb[0].mxu0
    %2313 = vmatprep.mubr.f32.mxu0 0.0
    %2314 = vmatmul.mubr.f32.gmra.mrb[0].mxu0 %v2157
    %v2315 = vpop.f32.mrb[0].mxu0
    %v2316 = vadd.f32 0.0, %v2315
    %v2317 = vpop.f32.mrb[0].mxu0
    %2318 = vdwg.mxu0
    %v2319 = vadd.f32 %v2133, %v2234
    %v2320 = vadd.f32 %v2134, %v2236
    %v2321 = vadd.f32 %v2135, %v2311
    %v2322 = vadd.f32 %v2136, %v2240
    %v2323 = vadd.f32 %v2137, %v2242
    %v2324 = vadd.f32 %v2138, %v2316
    %s2325 = scalar_lea.vmem %s3, 128
    %v2326 = vld [vmem:[%s2325] sm:$0xff]
    %v2327 = vld [vmem:[%s2325 + $0x8] sm:$0xff]
    %2328 = vrot.lane.b32.xlu0 %v849, 60
    %v2329 = vpop.permute.xlu0 %2328
    %2330 = vrot.lane.b32.xlu0 %v850, 60
    %v2331 = vpop.permute.xlu0 %2330
    %2332 = vrot.lane.b32.xlu0 %v851, 60
    %v2333 = vpop.permute.xlu0 %2332
    %2334 = vrot.lane.b32.xlu0 %v852, 60
    %v2335 = vpop.permute.xlu0 %2334
    %vm2336 = vcmask 490496
    %v2337 = vsel %vm2336, %v2329, %v2331
    %v2338 = vsel %vm2336, %v2331, %v2333
    %v2339 = vsel %vm2336, %v2333, %v2335
    %v2341 = vsel %vm873, %v2326, 0
    %v2344 = vsel %vm873, %v2327, 0
    %v2346 = vsel %vm880, %v2337, 0
    %v2348 = vsel %vm880, %v2338, 0
    %v2350 = vsel %vm880, %v2339, 0
    %v2352 = vsel %vm880, %v2335, 0
    %2354 = vmatprep.subr.mxu0 %v2348
    %2355 = vmatpush1.msra.mxu0 %v2346
    %2356 = vmatprep.subr.mxu0 0.0
    %2357 = vmatpush1.msra.mxu0 0.0
    %2358 = vmatprep.subr.mxu0 0.0
    %2359 = vmatpush1.msra.mxu0 0.0
    %2360 = vmatprep.subr.mxu0 0.0
    %2361 = vmatpush1.msra.mxu0 0.0
    %2362 = vmatprep.subr.mxu0 0.0
    %2363 = vmatpush1.msra.mxu0 0.0
    %2364 = vmatprep.subr.mxu0 0.0
    %2365 = vmatpush1.msra.mxu0 0.0
    %2366 = vmatprep.subr.mxu0 0.0
    %2367 = vmatpush1.msra.mxu0 0.0
    %2368 = vmatprep.subr.mxu0 0.0
    %2369 = vmatpush1.msra.mxu0 0.0
    %2370 = vmatprep.subr.mxu0 0.0
    %2371 = vmatpush1.msra.mxu0 0.0
    %2372 = vmatprep.subr.mxu0 0.0
    %2373 = vmatpush1.msra.mxu0 0.0
    %2374 = vmatprep.subr.mxu0 0.0
    %2375 = vmatpush1.msra.mxu0 0.0
    %2376 = vmatprep.subr.mxu0 0.0
    %2377 = vmatpush1.msra.mxu0 0.0
    %2378 = vmatprep.subr.mxu0 0.0
    %2379 = vmatpush1.msra.mxu0 0.0
    %2380 = vmatprep.subr.mxu0 0.0
    %2381 = vmatpush1.msra.mxu0 0.0
    %2382 = vmatprep.subr.mxu0 0.0
    %2383 = vmatpush1.msra.mxu0 0.0
    %2384 = vmatprep.subr.mxu0 0.0
    %2385 = vmatpush1.msra.mxu0 0.0
    %2386 = vmatprep.subr.mxu0 0.0
    %2387 = vmatpush1.msra.mxu0 0.0
    %2388 = vmatprep.subr.mxu0 0.0
    %2389 = vmatpush1.msra.mxu0 0.0
    %2390 = vmatprep.subr.mxu0 0.0
    %2391 = vmatpush1.msra.mxu0 0.0
    %2392 = vmatprep.subr.mxu0 0.0
    %2393 = vmatpush1.msra.mxu0 0.0
    %2394 = vmatprep.subr.mxu0 0.0
    %2395 = vmatpush1.msra.mxu0 0.0
    %2396 = vmatprep.subr.mxu0 0.0
    %2397 = vmatpush1.msra.mxu0 0.0
    %2398 = vmatprep.subr.mxu0 0.0
    %2399 = vmatpush1.msra.mxu0 0.0
    %2400 = vmatprep.subr.mxu0 0.0
    %2401 = vmatpush1.msra.mxu0 0.0
    %2402 = vmatprep.subr.mxu0 0.0
    %2403 = vmatpush1.msra.mxu0 0.0
    %2404 = vmatprep.subr.mxu0 0.0
    %2405 = vmatpush1.msra.mxu0 0.0
    %2406 = vmatprep.subr.mxu0 0.0
    %2407 = vmatpush1.msra.mxu0 0.0
    %2408 = vmatprep.subr.mxu0 0.0
    %2409 = vmatpush1.msra.mxu0 0.0
    %2410 = vmatprep.subr.mxu0 0.0
    %2411 = vmatpush1.msra.mxu0 0.0
    %2412 = vmatprep.subr.mxu0 0.0
    %2413 = vmatpush1.msra.mxu0 0.0
    %2414 = vmatprep.subr.mxu0 0.0
    %2415 = vmatpush1.msra.mxu0 0.0
    %2416 = vmatprep.subr.mxu0 0.0
    %2417 = vmatpush1.msra.mxu0 0.0
    %2418 = vmatprep.mubr.f32.mxu0 0.0
    %2419 = vmatmul.mubr.f32.gmra.mrb[0].mxu0 %v2341
    %v2420 = vpop.f32.mrb[0].mxu0
    %v2421 = vadd.f32 0.0, %v2420
    %v2422 = vpop.f32.mrb[0].mxu0
    %v2423 = vadd.f32 0.0, %v2422
    %2424 = vmatprep.mubr.f32.mxu0 0.0
    %2425 = vmatmul.mubr.f32.gmra.mrb[0].mxu0 %v2344
    %v2426 = vpop.f32.mrb[0].mxu0
    %v2427 = vadd.f32 0.0, %v2426
    %v2428 = vpop.f32.mrb[0].mxu0
    %v2429 = vadd.f32 0.0, %v2428
    %2430 = vdwg.mxu0
    %2431 = vmatprep.subr.mxu0 %v2352
    %2432 = vmatpush1.msra.mxu0 %v2350
    %2433 = vmatprep.subr.mxu0 0.0
    %2434 = vmatpush1.msra.mxu0 0.0
    %2435 = vmatprep.subr.mxu0 0.0
    %2436 = vmatpush1.msra.mxu0 0.0
    %2437 = vmatprep.subr.mxu0 0.0
    %2438 = vmatpush1.msra.mxu0 0.0
    %2439 = vmatprep.subr.mxu0 0.0
    %2440 = vmatpush1.msra.mxu0 0.0
    %2441 = vmatprep.subr.mxu0 0.0
    %2442 = vmatpush1.msra.mxu0 0.0
    %2443 = vmatprep.subr.mxu0 0.0
    %2444 = vmatpush1.msra.mxu0 0.0
    %2445 = vmatprep.subr.mxu0 0.0
    %2446 = vmatpush1.msra.mxu0 0.0
    %2447 = vmatprep.subr.mxu0 0.0
    %2448 = vmatpush1.msra.mxu0 0.0
    %2449 = vmatprep.subr.mxu0 0.0
    %2450 = vmatpush1.msra.mxu0 0.0
    %2451 = vmatprep.subr.mxu0 0.0
    %2452 = vmatpush1.msra.mxu0 0.0
    %2453 = vmatprep.subr.mxu0 0.0
    %2454 = vmatpush1.msra.mxu0 0.0
    %2455 = vmatprep.subr.mxu0 0.0
    %2456 = vmatpush1.msra.mxu0 0.0
    %2457 = vmatprep.subr.mxu0 0.0
    %2458 = vmatpush1.msra.mxu0 0.0
    %2459 = vmatprep.subr.mxu0 0.0
    %2460 = vmatpush1.msra.mxu0 0.0
    %2461 = vmatprep.subr.mxu0 0.0
    %2462 = vmatpush1.msra.mxu0 0.0
    %2463 = vmatprep.subr.mxu0 0.0
    %2464 = vmatpush1.msra.mxu0 0.0
    %2465 = vmatprep.subr.mxu0 0.0
    %2466 = vmatpush1.msra.mxu0 0.0
    %2467 = vmatprep.subr.mxu0 0.0
    %2468 = vmatpush1.msra.mxu0 0.0
    %2469 = vmatprep.subr.mxu0 0.0
    %2470 = vmatpush1.msra.mxu0 0.0
    %2471 = vmatprep.subr.mxu0 0.0
    %2472 = vmatpush1.msra.mxu0 0.0
    %2473 = vmatprep.subr.mxu0 0.0
    %2474 = vmatpush1.msra.mxu0 0.0
    %2475 = vmatprep.subr.mxu0 0.0
    %2476 = vmatpush1.msra.mxu0 0.0
    %2477 = vmatprep.subr.mxu0 0.0
    %2478 = vmatpush1.msra.mxu0 0.0
    %2479 = vmatprep.subr.mxu0 0.0
    %2480 = vmatpush1.msra.mxu0 0.0
    %2481 = vmatprep.subr.mxu0 0.0
    %2482 = vmatpush1.msra.mxu0 0.0
    %2483 = vmatprep.subr.mxu0 0.0
    %2484 = vmatpush1.msra.mxu0 0.0
    %2485 = vmatprep.subr.mxu0 0.0
    %2486 = vmatpush1.msra.mxu0 0.0
    %2487 = vmatprep.subr.mxu0 0.0
    %2488 = vmatpush1.msra.mxu0 0.0
    %2489 = vmatprep.subr.mxu0 0.0
    %2490 = vmatpush1.msra.mxu0 0.0
    %2491 = vmatprep.subr.mxu0 0.0
    %2492 = vmatpush1.msra.mxu0 0.0
    %2493 = vmatprep.subr.mxu0 0.0
    %2494 = vmatpush1.msra.mxu0 0.0
    %2495 = vmatprep.mubr.f32.mxu0 0.0
    %2496 = vmatmul.mubr.f32.gmra.mrb[0].mxu0 %v2341
    %v2497 = vpop.f32.mrb[0].mxu0
    %v2498 = vadd.f32 0.0, %v2497
    %v2499 = vpop.f32.mrb[0].mxu0
    %2500 = vmatprep.mubr.f32.mxu0 0.0
    %2501 = vmatmul.mubr.f32.gmra.mrb[0].mxu0 %v2344
    %v2502 = vpop.f32.mrb[0].mxu0
    %v2503 = vadd.f32 0.0, %v2502
    %v2504 = vpop.f32.mrb[0].mxu0
    %2505 = vdwg.mxu0
    %v2506 = vadd.f32 %v2319, %v2421
    %v2507 = vadd.f32 %v2320, %v2423
    %v2508 = vadd.f32 %v2321, %v2498
    %v2509 = vadd.f32 %v2322, %v2427
    %v2510 = vadd.f32 %v2323, %v2429
    %v2511 = vadd.f32 %v2324, %v2503
    %v2512 = vld [vmem:[%s4] sm:$0xff]
    %v2513 = vld [vmem:[%s4 + $0x8] sm:$0xff]
    %2515 = vset.pattern.permute.xlu0 0
    %2516 = vperm.xlu0 %2515, %v2512
    %v2517 = vpop.permute.xlu0 %2516
    %2520 = vset.pattern.permute.xlu0 0
    %2521 = vperm.xlu0 %2520, %v2513
    %v2522 = vpop.permute.xlu0 %2521
    %v2524 = vadd.f32 %v2506, %v2517
    %v2525 = vadd.f32 %v2507, %v2517
    %v2526 = vadd.f32 %v2508, %v2517
    %v2527 = vadd.f32 %v2509, %v2522
    %v2528 = vadd.f32 %v2510, %v2522
    %v2529 = vadd.f32 %v2511, %v2522
    %v2530 = vmax.f32 %v2524, 0.0
    %v2531 = vmax.f32 %v2525, 0.0
    %v2532 = vmax.f32 %v2526, 0.0
    %v2533 = vmax.f32 %v2527, 0.0
    %v2534 = vmax.f32 %v2528, 0.0
    %v2535 = vmax.f32 %v2529, 0.0
    %2538 = vrot.lane.b32.xlu0 %v2530, 96
    %v2539 = vpop.permute.xlu0 %2538
    %2540 = vrot.lane.b32.xlu0 %v2533, 96
    %v2541 = vpop.permute.xlu0 %2540
    %v2544 = vmax.f32 %v2530, %v2539
    %v2545 = vmax.f32 %v2533, %v2541
    %2548 = vrot.lane.b32.xlu0 %v2544, 126
    %v2549 = vpop.permute.xlu0 %2548
    %2550 = vrot.lane.b32.xlu0 %v2545, 126
    %v2551 = vpop.permute.xlu0 %2550
    %v2554 = vmax.f32 %v2544, %v2549
    %v2555 = vmax.f32 %v2545, %v2551
    %vm2556 = vcmask 195584
    %2557 = vst.msk [vmem:[#allocation3] sm:$0xff] %vm2556, %v2554
    %2558 = vst.msk [vmem:[#allocation3 + $0x10] sm:$0xff] %vm2556, %v2555
    %2561 = vrot.lane.b32.xlu0 %v2554, 88
    %v2562 = vpop.permute.xlu0 %2561
    %2563 = vrot.lane.b32.xlu0 %v2555, 88
    %v2564 = vpop.permute.xlu0 %2563
    %vm2567 = vcmask 392384
    %2568 = vst.msk [vmem:[#allocation3] sm:$0xff] %vm2567, %v2562
    %2569 = vst.msk [vmem:[#allocation3 + $0x10] sm:$0xff] %vm2567, %v2564
    %2572 = vrot.lane.b32.xlu0 %v2531, 96
    %v2573 = vpop.permute.xlu0 %2572
    %2574 = vrot.lane.b32.xlu0 %v2534, 96
    %v2575 = vpop.permute.xlu0 %2574
    %v2578 = vmax.f32 %v2531, %v2573
    %v2579 = vmax.f32 %v2534, %v2575
    %2582 = vrot.lane.b32.xlu0 %v2578, 126
    %v2583 = vpop.permute.xlu0 %2582
    %2584 = vrot.lane.b32.xlu0 %v2579, 126
    %v2585 = vpop.permute.xlu0 %2584
    %v2588 = vmax.f32 %v2578, %v2583
    %v2589 = vmax.f32 %v2579, %v2585
    %2592 = vrot.lane.b32.xlu0 %v2588, 48
    %v2593 = vpop.permute.xlu0 %2592
    %2594 = vrot.lane.b32.xlu0 %v2589, 48
    %v2595 = vpop.permute.xlu0 %2594
    %vm2598 = vcmask 589184
    %2599 = vst.msk [vmem:[#allocation3] sm:$0xff] %vm2598, %v2593
    %2600 = vst.msk [vmem:[#allocation3 + $0x10] sm:$0xff] %vm2598, %v2595
    %2601 = vrot.lane.b32.xlu0 %v2588, 8
    %v2602 = vpop.permute.xlu0 %2601
    %2603 = vrot.lane.b32.xlu0 %v2589, 8
    %v2604 = vpop.permute.xlu0 %2603
    %vm2607 = vcmask 785984
    %2608 = vst.msk [vmem:[#allocation3] sm:$0xff] %vm2607, %v2602
    %2609 = vst.msk [vmem:[#allocation3 + $0x10] sm:$0xff] %vm2607, %v2604
    %2612 = vrot.lane.b32.xlu0 %v2532, 96
    %v2613 = vpop.permute.xlu0 %2612
    %2614 = vrot.lane.b32.xlu0 %v2535, 96
    %v2615 = vpop.permute.xlu0 %2614
    %v2618 = vmax.f32 %v2532, %v2613
    %v2619 = vmax.f32 %v2535, %v2615
    %2622 = vrot.lane.b32.xlu0 %v2618, 126
    %v2623 = vpop.permute.xlu0 %2622
    %2624 = vrot.lane.b32.xlu0 %v2619, 126
    %v2625 = vpop.permute.xlu0 %2624
    %v2628 = vmax.f32 %v2618, %v2623
    %v2629 = vmax.f32 %v2619, %v2625
    %2632 = vrot.lane.b32.xlu0 %v2628, 96
    %v2633 = vpop.permute.xlu0 %2632
    %2634 = vrot.lane.b32.xlu0 %v2629, 96
    %v2635 = vpop.permute.xlu0 %2634
    %vm2638 = vcmask 982784
    %2639 = vst.msk [vmem:[#allocation3] sm:$0xff] %vm2638, %v2633
    %2640 = vst.msk [vmem:[#allocation3 + $0x10] sm:$0xff] %vm2638, %v2635
    %2641 = vrot.lane.b32.xlu0 %v2628, 56
    %v2642 = vpop.permute.xlu0 %2641
    %2643 = vrot.lane.b32.xlu0 %v2629, 56
    %v2644 = vpop.permute.xlu0 %2643
    %vm2647 = vcmask 1048512
    %2648 = vst.msk [vmem:[#allocation3] sm:$0xff] %vm2647, %v2642
    %2649 = vst.msk [vmem:[#allocation3 + $0x8] sm:$0xff] %vm51, %v2642
    %2650 = vst.msk [vmem:[#allocation3 + $0x10] sm:$0xff] %vm2647, %v2644
    %2651 = vst.msk [vmem:[#allocation3 + $0x18] sm:$0xff] %vm51, %v2644
    %v2652 = vld [vmem:[#allocation3] sm:$0xff]
    %v2653 = vld [vmem:[#allocation3 + $0x8] sm:$0xff]
    %v2654 = vld [vmem:[#allocation3 + $0x10] sm:$0xff]
    %v2655 = vld [vmem:[#allocation3 + $0x18] sm:$0xff]
    %v2656 = vld [vmem:[%s5] sm:$0xff]
    %v2657 = vld [vmem:[%s5 + $0x8] sm:$0xff]
    %v2658 = vld [vmem:[%s5 + $0x10] sm:$0xff]
    %v2659 = vld [vmem:[%s5 + $0x18] sm:$0xff]
    %v2660 = vld [vmem:[%s5 + $0x20] sm:$0xff]
    %v2661 = vld [vmem:[%s5 + $0x28] sm:$0xff]
    %v2662 = vld [vmem:[%s5 + $0x30] sm:$0xff]
    %v2663 = vld [vmem:[%s5 + $0x38] sm:$0xff]
    %v2664 = vld [vmem:[%s5 + $0x40] sm:$0xff]
    %v2665 = vld [vmem:[%s5 + $0x48] sm:$0xff]
    %v2666 = vld [vmem:[%s5 + $0x50] sm:$0xff]
    %v2667 = vld [vmem:[%s5 + $0x58] sm:$0xff]
    %v2668 = vld [vmem:[%s5 + $0x60] sm:$0xff]
    %v2669 = vld [vmem:[%s5 + $0x68] sm:$0xff]
    %v2670 = vld [vmem:[%s5 + $0x70] sm:$0xff]
    %v2671 = vld [vmem:[%s5 + $0x78] sm:$0xff]
    %v2672 = vld [vmem:[%s5 + $0x80] sm:$0xff]
    %v2673 = vld [vmem:[%s5 + $0x88] sm:$0xff]
    %v2675 = vsel %vm51, %v2653, 0
    %v2678 = vsel %vm51, %v2655, 0
    %2680 = vmatprep.subr.mxu0 0.0
    %2681 = vmatpush1.msra.mxu0 %v2656
    %2682 = vmatprep.subr.mxu0 0.0
    %2683 = vmatpush1.msra.mxu0 %v2657
    %2684 = vmatprep.subr.mxu0 0.0
    %2685 = vmatpush1.msra.mxu0 %v2658
    %2686 = vmatprep.subr.mxu0 0.0
    %2687 = vmatpush1.msra.mxu0 %v2659
    %2688 = vmatprep.subr.mxu0 0.0
    %2689 = vmatpush1.msra.mxu0 %v2660
    %2690 = vmatprep.subr.mxu0 0.0
    %2691 = vmatpush1.msra.mxu0 %v2661
    %2692 = vmatprep.subr.mxu0 0.0
    %2693 = vmatpush1.msra.mxu0 %v2662
    %2694 = vmatprep.subr.mxu0 0.0
    %2695 = vmatpush1.msra.mxu0 %v2663
    %2696 = vmatprep.subr.mxu0 0.0
    %2697 = vmatpush1.msra.mxu0 %v2664
    %2698 = vmatprep.subr.mxu0 0.0
    %2699 = vmatpush1.msra.mxu0 %v2665
    %2700 = vmatprep.subr.mxu0 0.0
    %2701 = vmatpush1.msra.mxu0 %v2666
    %2702 = vmatprep.subr.mxu0 0.0
    %2703 = vmatpush1.msra.mxu0 %v2667
    %2704 = vmatprep.subr.mxu0 0.0
    %2705 = vmatpush1.msra.mxu0 %v2668
    %2706 = vmatprep.subr.mxu0 0.0
    %2707 = vmatpush1.msra.mxu0 %v2669
    %2708 = vmatprep.subr.mxu0 0.0
    %2709 = vmatpush1.msra.mxu0 %v2670
    %2710 = vmatprep.subr.mxu0 0.0
    %2711 = vmatpush1.msra.mxu0 %v2671
    %2712 = vmatprep.subr.mxu0 0.0
    %2713 = vmatpush1.msra.mxu0 %v2672
    %2714 = vmatprep.subr.mxu0 0.0
    %2715 = vmatpush1.msra.mxu0 %v2673
    %2716 = vmatprep.subr.mxu0 0.0
    %2717 = vmatpush1.msra.mxu0 0.0
    %2718 = vmatprep.subr.mxu0 0.0
    %2719 = vmatpush1.msra.mxu0 0.0
    %2720 = vmatprep.subr.mxu0 0.0
    %2721 = vmatpush1.msra.mxu0 0.0
    %2722 = vmatprep.subr.mxu0 0.0
    %2723 = vmatpush1.msra.mxu0 0.0
    %2724 = vmatprep.subr.mxu0 0.0
    %2725 = vmatpush1.msra.mxu0 0.0
    %2726 = vmatprep.subr.mxu0 0.0
    %2727 = vmatpush1.msra.mxu0 0.0
    %2728 = vmatprep.subr.mxu0 0.0
    %2729 = vmatpush1.msra.mxu0 0.0
    %2730 = vmatprep.subr.mxu0 0.0
    %2731 = vmatpush1.msra.mxu0 0.0
    %2732 = vmatprep.subr.mxu0 0.0
    %2733 = vmatpush1.msra.mxu0 0.0
    %2734 = vmatprep.subr.mxu0 0.0
    %2735 = vmatpush1.msra.mxu0 0.0
    %2736 = vmatprep.subr.mxu0 0.0
    %2737 = vmatpush1.msra.mxu0 0.0
    %2738 = vmatprep.subr.mxu0 0.0
    %2739 = vmatpush1.msra.mxu0 0.0
    %2740 = vmatprep.subr.mxu0 0.0
    %2741 = vmatpush1.msra.mxu0 0.0
    %2742 = vmatprep.subr.mxu0 0.0
    %2743 = vmatpush1.msra.mxu0 0.0
    %2744 = vmatprep.mubr.f32.mxu0 %v2675
    %2745 = vmatmul.mubr.f32.gmra.mrb[0].mxu0 %v2652
    %v2746 = vpop.f32.mrb[0].mxu0
    %v2747 = vadd.f32 0.0, %v2746
    %v2748 = vpop.f32.mrb[0].mxu0
    %2749 = vmatprep.mubr.f32.mxu0 %v2678
    %2750 = vmatmul.mubr.f32.gmra.mrb[0].mxu0 %v2654
    %v2751 = vpop.f32.mrb[0].mxu0
    %v2752 = vadd.f32 0.0, %v2751
    %v2753 = vpop.f32.mrb[0].mxu0
    %2754 = vdwg.mxu0
    %v2755 = vld [vmem:[%s7] sm:$0x1]
    %v2756 = vld [vmem:[%s6] sm:$0xff]
    %v2757 = vld [vmem:[%s6 + $0x8] sm:$0xff]
    %v2758 = vld [vmem:[%s6 + $0x10] sm:$0xff]
    %v2759 = vld [vmem:[%s6 + $0x18] sm:$0xff]
    %v2760 = vld [vmem:[%s6 + $0x20] sm:$0xf]
    %vm2761 = vcmask 293888
    %v2763 = vsel %vm2761, %v2747, 0
    %vm2765 = vcmask 1043456
    %v2767 = vsel %vm2765, %v2760, 0
    %2769 = vmatprep.subr.mxu0 0.0
    %2770 = vmatpush1.msra.mxu0 %v2756
    %2771 = vmatprep.subr.mxu0 0.0
    %2772 = vmatpush1.msra.mxu0 %v2757
    %2773 = vmatprep.subr.mxu0 0.0
    %2774 = vmatpush1.msra.mxu0 %v2758
    %2775 = vmatprep.subr.mxu0 0.0
    %2776 = vmatpush1.msra.mxu0 %v2759
    %2777 = vmatprep.subr.mxu0 0.0
    %2778 = vmatpush1.msra.mxu0 %v2767
    %2779 = vmatprep.subr.mxu0 0.0
    %2780 = vmatpush1.msra.mxu0 0.0
    %2781 = vmatprep.subr.mxu0 0.0
    %2782 = vmatpush1.msra.mxu0 0.0
    %2783 = vmatprep.subr.mxu0 0.0
    %2784 = vmatpush1.msra.mxu0 0.0
    %2785 = vmatprep.subr.mxu0 0.0
    %2786 = vmatpush1.msra.mxu0 0.0
    %2787 = vmatprep.subr.mxu0 0.0
    %2788 = vmatpush1.msra.mxu0 0.0
    %2789 = vmatprep.subr.mxu0 0.0
    %2790 = vmatpush1.msra.mxu0 0.0
    %2791 = vmatprep.subr.mxu0 0.0
    %2792 = vmatpush1.msra.mxu0 0.0
    %2793 = vmatprep.subr.mxu0 0.0
    %2794 = vmatpush1.msra.mxu0 0.0
    %2795 = vmatprep.subr.mxu0 0.0
    %2796 = vmatpush1.msra.mxu0 0.0
    %2797 = vmatprep.subr.mxu0 0.0
    %2798 = vmatpush1.msra.mxu0 0.0
    %2799 = vmatprep.subr.mxu0 0.0
    %2800 = vmatpush1.msra.mxu0 0.0
    %2801 = vmatprep.subr.mxu0 0.0
    %2802 = vmatpush1.msra.mxu0 0.0
    %2803 = vmatprep.subr.mxu0 0.0
    %2804 = vmatpush1.msra.mxu0 0.0
    %2805 = vmatprep.subr.mxu0 0.0
    %2806 = vmatpush1.msra.mxu0 0.0
    %2807 = vmatprep.subr.mxu0 0.0
    %2808 = vmatpush1.msra.mxu0 0.0
    %2809 = vmatprep.subr.mxu0 0.0
    %2810 = vmatpush1.msra.mxu0 0.0
    %2811 = vmatprep.subr.mxu0 0.0
    %2812 = vmatpush1.msra.mxu0 0.0
    %2813 = vmatprep.subr.mxu0 0.0
    %2814 = vmatpush1.msra.mxu0 0.0
    %2815 = vmatprep.subr.mxu0 0.0
    %2816 = vmatpush1.msra.mxu0 0.0
    %2817 = vmatprep.subr.mxu0 0.0
    %2818 = vmatpush1.msra.mxu0 0.0
    %2819 = vmatprep.subr.mxu0 0.0
    %2820 = vmatpush1.msra.mxu0 0.0
    %2821 = vmatprep.subr.mxu0 0.0
    %2822 = vmatpush1.msra.mxu0 0.0
    %2823 = vmatprep.subr.mxu0 0.0
    %2824 = vmatpush1.msra.mxu0 0.0
    %2825 = vmatprep.subr.mxu0 0.0
    %2826 = vmatpush1.msra.mxu0 0.0
    %2827 = vmatprep.subr.mxu0 0.0
    %2828 = vmatpush1.msra.mxu0 0.0
    %2829 = vmatprep.subr.mxu0 0.0
    %2830 = vmatpush1.msra.mxu0 0.0
    %2831 = vmatprep.subr.mxu0 0.0
    %2832 = vmatpush1.msra.mxu0 0.0
    %2833 = vmatprep.mubr.f32.mxu0 0.0
    %2834 = vmatmul.mubr.f32.gmra.mrb[0].mxu0 %v2763
    %v2835 = vpop.f32.mrb[0].mxu0
    %v2836 = vadd.f32 0.0, %v2835
    %v2837 = vpop.f32.mrb[0].mxu0
    %2838 = vdwg.mxu0
    %v2839 = vadd.f32 %v2755, %v2836
    %s2840 = scalar_lea.vmem %s6, 40
    %v2841 = vld [vmem:[%s2840] sm:$0xff]
    %v2842 = vld [vmem:[%s2840 + $0x8] sm:$0xff]
    %v2843 = vld [vmem:[%s2840 + $0x10] sm:$0xff]
    %v2844 = vld [vmem:[%s2840 + $0x18] sm:$0xff]
    %v2845 = vld [vmem:[%s2840 + $0x20] sm:$0xf]
    %v2846 = vrot.slane %v2747, 1
    %v2847 = vsel %vm2761, %v2846, 0
    %v2850 = vsel %vm2765, %v2845, 0
    %2852 = vmatprep.subr.mxu0 0.0
    %2853 = vmatpush1.msra.mxu0 %v2841
    %2854 = vmatprep.subr.mxu0 0.0
    %2855 = vmatpush1.msra.mxu0 %v2842
    %2856 = vmatprep.subr.mxu0 0.0
    %2857 = vmatpush1.msra.mxu0 %v2843
    %2858 = vmatprep.subr.mxu0 0.0
    %2859 = vmatpush1.msra.mxu0 %v2844
    %2860 = vmatprep.subr.mxu0 0.0
    %2861 = vmatpush1.msra.mxu0 %v2850
    %2862 = vmatprep.subr.mxu0 0.0
    %2863 = vmatpush1.msra.mxu0 0.0
    %2864 = vmatprep.subr.mxu0 0.0
    %2865 = vmatpush1.msra.mxu0 0.0
    %2866 = vmatprep.subr.mxu0 0.0
    %2867 = vmatpush1.msra.mxu0 0.0
    %2868 = vmatprep.subr.mxu0 0.0
    %2869 = vmatpush1.msra.mxu0 0.0
    %2870 = vmatprep.subr.mxu0 0.0
    %2871 = vmatpush1.msra.mxu0 0.0
    %2872 = vmatprep.subr.mxu0 0.0
    %2873 = vmatpush1.msra.mxu0 0.0
    %2874 = vmatprep.subr.mxu0 0.0
    %2875 = vmatpush1.msra.mxu0 0.0
    %2876 = vmatprep.subr.mxu0 0.0
    %2877 = vmatpush1.msra.mxu0 0.0
    %2878 = vmatprep.subr.mxu0 0.0
    %2879 = vmatpush1.msra.mxu0 0.0
    %2880 = vmatprep.subr.mxu0 0.0
    %2881 = vmatpush1.msra.mxu0 0.0
    %2882 = vmatprep.subr.mxu0 0.0
    %2883 = vmatpush1.msra.mxu0 0.0
    %2884 = vmatprep.subr.mxu0 0.0
    %2885 = vmatpush1.msra.mxu0 0.0
    %2886 = vmatprep.subr.mxu0 0.0
    %2887 = vmatpush1.msra.mxu0 0.0
    %2888 = vmatprep.subr.mxu0 0.0
    %2889 = vmatpush1.msra.mxu0 0.0
    %2890 = vmatprep.subr.mxu0 0.0
    %2891 = vmatpush1.msra.mxu0 0.0
    %2892 = vmatprep.subr.mxu0 0.0
    %2893 = vmatpush1.msra.mxu0 0.0
    %2894 = vmatprep.subr.mxu0 0.0
    %2895 = vmatpush1.msra.mxu0 0.0
    %2896 = vmatprep.subr.mxu0 0.0
    %2897 = vmatpush1.msra.mxu0 0.0
    %2898 = vmatprep.subr.mxu0 0.0
    %2899 = vmatpush1.msra.mxu0 0.0
    %2900 = vmatprep.subr.mxu0 0.0
    %2901 = vmatpush1.msra.mxu0 0.0
    %2902 = vmatprep.subr.mxu0 0.0
    %2903 = vmatpush1.msra.mxu0 0.0
    %2904 = vmatprep.subr.mxu0 0.0
    %2905 = vmatpush1.msra.mxu0 0.0
    %2906 = vmatprep.subr.mxu0 0.0
    %2907 = vmatpush1.msra.mxu0 0.0
    %2908 = vmatprep.subr.mxu0 0.0
    %2909 = vmatpush1.msra.mxu0 0.0
    %2910 = vmatprep.subr.mxu0 0.0
    %2911 = vmatpush1.msra.mxu0 0.0
    %2912 = vmatprep.subr.mxu0 0.0
    %2913 = vmatpush1.msra.mxu0 0.0
    %2914 = vmatprep.subr.mxu0 0.0
    %2915 = vmatpush1.msra.mxu0 0.0
    %2916 = vmatprep.mubr.f32.mxu0 0.0
    %2917 = vmatmul.mubr.f32.gmra.mrb[0].mxu0 %v2847
    %v2918 = vpop.f32.mrb[0].mxu0
    %v2919 = vadd.f32 0.0, %v2918
    %v2920 = vpop.f32.mrb[0].mxu0
    %2921 = vdwg.mxu0
    %v2922 = vadd.f32 %v2839, %v2919
    %s2923 = scalar_lea.vmem %s6, 80
    %v2924 = vld [vmem:[%s2923] sm:$0xff]
    %v2925 = vld [vmem:[%s2923 + $0x8] sm:$0xff]
    %v2926 = vld [vmem:[%s2923 + $0x10] sm:$0xff]
    %v2927 = vld [vmem:[%s2923 + $0x18] sm:$0xff]
    %v2928 = vld [vmem:[%s2923 + $0x20] sm:$0xf]
    %v2929 = vrot.slane %v2747, 2
    %v2930 = vsel %vm2761, %v2929, 0
    %v2933 = vsel %vm2765, %v2928, 0
    %2935 = vmatprep.subr.mxu0 0.0
    %2936 = vmatpush1.msra.mxu0 %v2924
    %2937 = vmatprep.subr.mxu0 0.0
    %2938 = vmatpush1.msra.mxu0 %v2925
    %2939 = vmatprep.subr.mxu0 0.0
    %2940 = vmatpush1.msra.mxu0 %v2926
    %2941 = vmatprep.subr.mxu0 0.0
    %2942 = vmatpush1.msra.mxu0 %v2927
    %2943 = vmatprep.subr.mxu0 0.0
    %2944 = vmatpush1.msra.mxu0 %v2933
    %2945 = vmatprep.subr.mxu0 0.0
    %2946 = vmatpush1.msra.mxu0 0.0
    %2947 = vmatprep.subr.mxu0 0.0
    %2948 = vmatpush1.msra.mxu0 0.0
    %2949 = vmatprep.subr.mxu0 0.0
    %2950 = vmatpush1.msra.mxu0 0.0
    %2951 = vmatprep.subr.mxu0 0.0
    %2952 = vmatpush1.msra.mxu0 0.0
    %2953 = vmatprep.subr.mxu0 0.0
    %2954 = vmatpush1.msra.mxu0 0.0
    %2955 = vmatprep.subr.mxu0 0.0
    %2956 = vmatpush1.msra.mxu0 0.0
    %2957 = vmatprep.subr.mxu0 0.0
    %2958 = vmatpush1.msra.mxu0 0.0
    %2959 = vmatprep.subr.mxu0 0.0
    %2960 = vmatpush1.msra.mxu0 0.0
    %2961 = vmatprep.subr.mxu0 0.0
    %2962 = vmatpush1.msra.mxu0 0.0
    %2963 = vmatprep.subr.mxu0 0.0
    %2964 = vmatpush1.msra.mxu0 0.0
    %2965 = vmatprep.subr.mxu0 0.0
    %2966 = vmatpush1.msra.mxu0 0.0
    %2967 = vmatprep.subr.mxu0 0.0
    %2968 = vmatpush1.msra.mxu0 0.0
    %2969 = vmatprep.subr.mxu0 0.0
    %2970 = vmatpush1.msra.mxu0 0.0
    %2971 = vmatprep.subr.mxu0 0.0
    %2972 = vmatpush1.msra.mxu0 0.0
    %2973 = vmatprep.subr.mxu0 0.0
    %2974 = vmatpush1.msra.mxu0 0.0
    %2975 = vmatprep.subr.mxu0 0.0
    %2976 = vmatpush1.msra.mxu0 0.0
    %2977 = vmatprep.subr.mxu0 0.0
    %2978 = vmatpush1.msra.mxu0 0.0
    %2979 = vmatprep.subr.mxu0 0.0
    %2980 = vmatpush1.msra.mxu0 0.0
    %2981 = vmatprep.subr.mxu0 0.0
    %2982 = vmatpush1.msra.mxu0 0.0
    %2983 = vmatprep.subr.mxu0 0.0
    %2984 = vmatpush1.msra.mxu0 0.0
    %2985 = vmatprep.subr.mxu0 0.0
    %2986 = vmatpush1.msra.mxu0 0.0
    %2987 = vmatprep.subr.mxu0 0.0
    %2988 = vmatpush1.msra.mxu0 0.0
    %2989 = vmatprep.subr.mxu0 0.0
    %2990 = vmatpush1.msra.mxu0 0.0
    %2991 = vmatprep.subr.mxu0 0.0
    %2992 = vmatpush1.msra.mxu0 0.0
    %2993 = vmatprep.subr.mxu0 0.0
    %2994 = vmatpush1.msra.mxu0 0.0
    %2995 = vmatprep.subr.mxu0 0.0
    %2996 = vmatpush1.msra.mxu0 0.0
    %2997 = vmatprep.subr.mxu0 0.0
    %2998 = vmatpush1.msra.mxu0 0.0
    %2999 = vmatprep.mubr.f32.mxu0 0.0
    %3000 = vmatmul.mubr.f32.gmra.mrb[0].mxu0 %v2930
    %v3001 = vpop.f32.mrb[0].mxu0
    %v3002 = vadd.f32 0.0, %v3001
    %v3003 = vpop.f32.mrb[0].mxu0
    %3004 = vdwg.mxu0
    %v3005 = vadd.f32 %v2922, %v3002
    %s3006 = scalar_lea.vmem %s6, 120
    %v3007 = vld [vmem:[%s3006] sm:$0xff]
    %v3008 = vld [vmem:[%s3006 + $0x8] sm:$0xff]
    %v3009 = vld [vmem:[%s3006 + $0x10] sm:$0xff]
    %v3010 = vld [vmem:[%s3006 + $0x18] sm:$0xff]
    %v3011 = vld [vmem:[%s3006 + $0x20] sm:$0xf]
    %v3012 = vrot.slane %v2747, 3
    %v3013 = vsel %vm2761, %v3012, 0
    %v3016 = vsel %vm2765, %v3011, 0
    %3018 = vmatprep.subr.mxu0 0.0
    %3019 = vmatpush1.msra.mxu0 %v3007
    %3020 = vmatprep.subr.mxu0 0.0
    %3021 = vmatpush1.msra.mxu0 %v3008
    %3022 = vmatprep.subr.mxu0 0.0
    %3023 = vmatpush1.msra.mxu0 %v3009
    %3024 = vmatprep.subr.mxu0 0.0
    %3025 = vmatpush1.msra.mxu0 %v3010
    %3026 = vmatprep.subr.mxu0 0.0
    %3027 = vmatpush1.msra.mxu0 %v3016
    %3028 = vmatprep.subr.mxu0 0.0
    %3029 = vmatpush1.msra.mxu0 0.0
    %3030 = vmatprep.subr.mxu0 0.0
    %3031 = vmatpush1.msra.mxu0 0.0
    %3032 = vmatprep.subr.mxu0 0.0
    %3033 = vmatpush1.msra.mxu0 0.0
    %3034 = vmatprep.subr.mxu0 0.0
    %3035 = vmatpush1.msra.mxu0 0.0
    %3036 = vmatprep.subr.mxu0 0.0
    %3037 = vmatpush1.msra.mxu0 0.0
    %3038 = vmatprep.subr.mxu0 0.0
    %3039 = vmatpush1.msra.mxu0 0.0
    %3040 = vmatprep.subr.mxu0 0.0
    %3041 = vmatpush1.msra.mxu0 0.0
    %3042 = vmatprep.subr.mxu0 0.0
    %3043 = vmatpush1.msra.mxu0 0.0
    %3044 = vmatprep.subr.mxu0 0.0
    %3045 = vmatpush1.msra.mxu0 0.0
    %3046 = vmatprep.subr.mxu0 0.0
    %3047 = vmatpush1.msra.mxu0 0.0
    %3048 = vmatprep.subr.mxu0 0.0
    %3049 = vmatpush1.msra.mxu0 0.0
    %3050 = vmatprep.subr.mxu0 0.0
    %3051 = vmatpush1.msra.mxu0 0.0
    %3052 = vmatprep.subr.mxu0 0.0
    %3053 = vmatpush1.msra.mxu0 0.0
    %3054 = vmatprep.subr.mxu0 0.0
    %3055 = vmatpush1.msra.mxu0 0.0
    %3056 = vmatprep.subr.mxu0 0.0
    %3057 = vmatpush1.msra.mxu0 0.0
    %3058 = vmatprep.subr.mxu0 0.0
    %3059 = vmatpush1.msra.mxu0 0.0
    %3060 = vmatprep.subr.mxu0 0.0
    %3061 = vmatpush1.msra.mxu0 0.0
    %3062 = vmatprep.subr.mxu0 0.0
    %3063 = vmatpush1.msra.mxu0 0.0
    %3064 = vmatprep.subr.mxu0 0.0
    %3065 = vmatpush1.msra.mxu0 0.0
    %3066 = vmatprep.subr.mxu0 0.0
    %3067 = vmatpush1.msra.mxu0 0.0
    %3068 = vmatprep.subr.mxu0 0.0
    %3069 = vmatpush1.msra.mxu0 0.0
    %3070 = vmatprep.subr.mxu0 0.0
    %3071 = vmatpush1.msra.mxu0 0.0
    %3072 = vmatprep.subr.mxu0 0.0
    %3073 = vmatpush1.msra.mxu0 0.0
    %3074 = vmatprep.subr.mxu0 0.0
    %3075 = vmatpush1.msra.mxu0 0.0
    %3076 = vmatprep.subr.mxu0 0.0
    %3077 = vmatpush1.msra.mxu0 0.0
    %3078 = vmatprep.subr.mxu0 0.0
    %3079 = vmatpush1.msra.mxu0 0.0
    %3080 = vmatprep.subr.mxu0 0.0
    %3081 = vmatpush1.msra.mxu0 0.0
    %3082 = vmatprep.mubr.f32.mxu0 0.0
    %3083 = vmatmul.mubr.f32.gmra.mrb[0].mxu0 %v3013
    %v3084 = vpop.f32.mrb[0].mxu0
    %v3085 = vadd.f32 0.0, %v3084
    %v3086 = vpop.f32.mrb[0].mxu0
    %3087 = vdwg.mxu0
    %v3088 = vadd.f32 %v3005, %v3085
    %s3089 = scalar_lea.vmem %s6, 160
    %v3090 = vld [vmem:[%s3089] sm:$0xff]
    %v3091 = vld [vmem:[%s3089 + $0x8] sm:$0xff]
    %v3092 = vld [vmem:[%s3089 + $0x10] sm:$0xff]
    %v3093 = vld [vmem:[%s3089 + $0x18] sm:$0xff]
    %v3094 = vld [vmem:[%s3089 + $0x20] sm:$0xf]
    %v3095 = vrot.slane %v2747, 4
    %v3096 = vsel %vm2761, %v3095, 0
    %v3099 = vsel %vm2765, %v3094, 0
    %3101 = vmatprep.subr.mxu0 0.0
    %3102 = vmatpush1.msra.mxu0 %v3090
    %3103 = vmatprep.subr.mxu0 0.0
    %3104 = vmatpush1.msra.mxu0 %v3091
    %3105 = vmatprep.subr.mxu0 0.0
    %3106 = vmatpush1.msra.mxu0 %v3092
    %3107 = vmatprep.subr.mxu0 0.0
    %3108 = vmatpush1.msra.mxu0 %v3093
    %3109 = vmatprep.subr.mxu0 0.0
    %3110 = vmatpush1.msra.mxu0 %v3099
    %3111 = vmatprep.subr.mxu0 0.0
    %3112 = vmatpush1.msra.mxu0 0.0
    %3113 = vmatprep.subr.mxu0 0.0
    %3114 = vmatpush1.msra.mxu0 0.0
    %3115 = vmatprep.subr.mxu0 0.0
    %3116 = vmatpush1.msra.mxu0 0.0
    %3117 = vmatprep.subr.mxu0 0.0
    %3118 = vmatpush1.msra.mxu0 0.0
    %3119 = vmatprep.subr.mxu0 0.0
    %3120 = vmatpush1.msra.mxu0 0.0
    %3121 = vmatprep.subr.mxu0 0.0
    %3122 = vmatpush1.msra.mxu0 0.0
    %3123 = vmatprep.subr.mxu0 0.0
    %3124 = vmatpush1.msra.mxu0 0.0
    %3125 = vmatprep.subr.mxu0 0.0
    %3126 = vmatpush1.msra.mxu0 0.0
    %3127 = vmatprep.subr.mxu0 0.0
    %3128 = vmatpush1.msra.mxu0 0.0
    %3129 = vmatprep.subr.mxu0 0.0
    %3130 = vmatpush1.msra.mxu0 0.0
    %3131 = vmatprep.subr.mxu0 0.0
    %3132 = vmatpush1.msra.mxu0 0.0
    %3133 = vmatprep.subr.mxu0 0.0
    %3134 = vmatpush1.msra.mxu0 0.0
    %3135 = vmatprep.subr.mxu0 0.0
    %3136 = vmatpush1.msra.mxu0 0.0
    %3137 = vmatprep.subr.mxu0 0.0
    %3138 = vmatpush1.msra.mxu0 0.0
    %3139 = vmatprep.subr.mxu0 0.0
    %3140 = vmatpush1.msra.mxu0 0.0
    %3141 = vmatprep.subr.mxu0 0.0
    %3142 = vmatpush1.msra.mxu0 0.0
    %3143 = vmatprep.subr.mxu0 0.0
    %3144 = vmatpush1.msra.mxu0 0.0
    %3145 = vmatprep.subr.mxu0 0.0
    %3146 = vmatpush1.msra.mxu0 0.0
    %3147 = vmatprep.subr.mxu0 0.0
    %3148 = vmatpush1.msra.mxu0 0.0
    %3149 = vmatprep.subr.mxu0 0.0
    %3150 = vmatpush1.msra.mxu0 0.0
    %3151 = vmatprep.subr.mxu0 0.0
    %3152 = vmatpush1.msra.mxu0 0.0
    %3153 = vmatprep.subr.mxu0 0.0
    %3154 = vmatpush1.msra.mxu0 0.0
    %3155 = vmatprep.subr.mxu0 0.0
    %3156 = vmatpush1.msra.mxu0 0.0
    %3157 = vmatprep.subr.mxu0 0.0
    %3158 = vmatpush1.msra.mxu0 0.0
    %3159 = vmatprep.subr.mxu0 0.0
    %3160 = vmatpush1.msra.mxu0 0.0
    %3161 = vmatprep.subr.mxu0 0.0
    %3162 = vmatpush1.msra.mxu0 0.0
    %3163 = vmatprep.subr.mxu0 0.0
    %3164 = vmatpush1.msra.mxu0 0.0
    %3165 = vmatprep.mubr.f32.mxu0 0.0
    %3166 = vmatmul.mubr.f32.gmra.mrb[0].mxu0 %v3096
    %v3167 = vpop.f32.mrb[0].mxu0
    %v3168 = vadd.f32 0.0, %v3167
    %v3169 = vpop.f32.mrb[0].mxu0
    %3170 = vdwg.mxu0
    %v3171 = vadd.f32 %v3088, %v3168
    %s3172 = scalar_lea.vmem %s6, 200
    %v3173 = vld [vmem:[%s3172] sm:$0xff]
    %v3174 = vld [vmem:[%s3172 + $0x8] sm:$0xff]
    %v3175 = vld [vmem:[%s3172 + $0x10] sm:$0xff]
    %v3176 = vld [vmem:[%s3172 + $0x18] sm:$0xff]
    %v3177 = vld [vmem:[%s3172 + $0x20] sm:$0xf]
    %v3178 = vrot.slane %v2747, 5
    %v3179 = vsel %vm2761, %v3178, 0
    %v3182 = vsel %vm2765, %v3177, 0
    %3184 = vmatprep.subr.mxu0 0.0
    %3185 = vmatpush1.msra.mxu0 %v3173
    %3186 = vmatprep.subr.mxu0 0.0
    %3187 = vmatpush1.msra.mxu0 %v3174
    %3188 = vmatprep.subr.mxu0 0.0
    %3189 = vmatpush1.msra.mxu0 %v3175
    %3190 = vmatprep.subr.mxu0 0.0
    %3191 = vmatpush1.msra.mxu0 %v3176
    %3192 = vmatprep.subr.mxu0 0.0
    %3193 = vmatpush1.msra.mxu0 %v3182
    %3194 = vmatprep.subr.mxu0 0.0
    %3195 = vmatpush1.msra.mxu0 0.0
    %3196 = vmatprep.subr.mxu0 0.0
    %3197 = vmatpush1.msra.mxu0 0.0
    %3198 = vmatprep.subr.mxu0 0.0
    %3199 = vmatpush1.msra.mxu0 0.0
    %3200 = vmatprep.subr.mxu0 0.0
    %3201 = vmatpush1.msra.mxu0 0.0
    %3202 = vmatprep.subr.mxu0 0.0
    %3203 = vmatpush1.msra.mxu0 0.0
    %3204 = vmatprep.subr.mxu0 0.0
    %3205 = vmatpush1.msra.mxu0 0.0
    %3206 = vmatprep.subr.mxu0 0.0
    %3207 = vmatpush1.msra.mxu0 0.0
    %3208 = vmatprep.subr.mxu0 0.0
    %3209 = vmatpush1.msra.mxu0 0.0
    %3210 = vmatprep.subr.mxu0 0.0
    %3211 = vmatpush1.msra.mxu0 0.0
    %3212 = vmatprep.subr.mxu0 0.0
    %3213 = vmatpush1.msra.mxu0 0.0
    %3214 = vmatprep.subr.mxu0 0.0
    %3215 = vmatpush1.msra.mxu0 0.0
    %3216 = vmatprep.subr.mxu0 0.0
    %3217 = vmatpush1.msra.mxu0 0.0
    %3218 = vmatprep.subr.mxu0 0.0
    %3219 = vmatpush1.msra.mxu0 0.0
    %3220 = vmatprep.subr.mxu0 0.0
    %3221 = vmatpush1.msra.mxu0 0.0
    %3222 = vmatprep.subr.mxu0 0.0
    %3223 = vmatpush1.msra.mxu0 0.0
    %3224 = vmatprep.subr.mxu0 0.0
    %3225 = vmatpush1.msra.mxu0 0.0
    %3226 = vmatprep.subr.mxu0 0.0
    %3227 = vmatpush1.msra.mxu0 0.0
    %3228 = vmatprep.subr.mxu0 0.0
    %3229 = vmatpush1.msra.mxu0 0.0
    %3230 = vmatprep.subr.mxu0 0.0
    %3231 = vmatpush1.msra.mxu0 0.0
    %3232 = vmatprep.subr.mxu0 0.0
    %3233 = vmatpush1.msra.mxu0 0.0
    %3234 = vmatprep.subr.mxu0 0.0
    %3235 = vmatpush1.msra.mxu0 0.0
    %3236 = vmatprep.subr.mxu0 0.0
    %3237 = vmatpush1.msra.mxu0 0.0
    %3238 = vmatprep.subr.mxu0 0.0
    %3239 = vmatpush1.msra.mxu0 0.0
    %3240 = vmatprep.subr.mxu0 0.0
    %3241 = vmatpush1.msra.mxu0 0.0
    %3242 = vmatprep.subr.mxu0 0.0
    %3243 = vmatpush1.msra.mxu0 0.0
    %3244 = vmatprep.subr.mxu0 0.0
    %3245 = vmatpush1.msra.mxu0 0.0
    %3246 = vmatprep.subr.mxu0 0.0
    %3247 = vmatpush1.msra.mxu0 0.0
    %3248 = vmatprep.mubr.f32.mxu0 0.0
    %3249 = vmatmul.mubr.f32.gmra.mrb[0].mxu0 %v3179
    %v3250 = vpop.f32.mrb[0].mxu0
    %v3251 = vadd.f32 0.0, %v3250
    %v3252 = vpop.f32.mrb[0].mxu0
    %3253 = vdwg.mxu0
    %v3254 = vadd.f32 %v3171, %v3251
    %s3255 = scalar_lea.vmem %s6, 240
    %v3256 = vld [vmem:[%s3255] sm:$0xff]
    %v3257 = vld [vmem:[%s3255 + $0x8] sm:$0xff]
    %v3258 = vld [vmem:[%s3255 + $0x10] sm:$0xff]
    %v3259 = vld [vmem:[%s3255 + $0x18] sm:$0xff]
    %v3260 = vld [vmem:[%s3255 + $0x20] sm:$0xf]
    %v3261 = vrot.slane %v2747, 6
    %v3262 = vsel %vm2761, %v3261, 0
    %v3265 = vsel %vm2765, %v3260, 0
    %3267 = vmatprep.subr.mxu0 0.0
    %3268 = vmatpush1.msra.mxu0 %v3256
    %3269 = vmatprep.subr.mxu0 0.0
    %3270 = vmatpush1.msra.mxu0 %v3257
    %3271 = vmatprep.subr.mxu0 0.0
    %3272 = vmatpush1.msra.mxu0 %v3258
    %3273 = vmatprep.subr.mxu0 0.0
    %3274 = vmatpush1.msra.mxu0 %v3259
    %3275 = vmatprep.subr.mxu0 0.0
    %3276 = vmatpush1.msra.mxu0 %v3265
    %3277 = vmatprep.subr.mxu0 0.0
    %3278 = vmatpush1.msra.mxu0 0.0
    %3279 = vmatprep.subr.mxu0 0.0
    %3280 = vmatpush1.msra.mxu0 0.0
    %3281 = vmatprep.subr.mxu0 0.0
    %3282 = vmatpush1.msra.mxu0 0.0
    %3283 = vmatprep.subr.mxu0 0.0
    %3284 = vmatpush1.msra.mxu0 0.0
    %3285 = vmatprep.subr.mxu0 0.0
    %3286 = vmatpush1.msra.mxu0 0.0
    %3287 = vmatprep.subr.mxu0 0.0
    %3288 = vmatpush1.msra.mxu0 0.0
    %3289 = vmatprep.subr.mxu0 0.0
    %3290 = vmatpush1.msra.mxu0 0.0
    %3291 = vmatprep.subr.mxu0 0.0
    %3292 = vmatpush1.msra.mxu0 0.0
    %3293 = vmatprep.subr.mxu0 0.0
    %3294 = vmatpush1.msra.mxu0 0.0
    %3295 = vmatprep.subr.mxu0 0.0
    %3296 = vmatpush1.msra.mxu0 0.0
    %3297 = vmatprep.subr.mxu0 0.0
    %3298 = vmatpush1.msra.mxu0 0.0
    %3299 = vmatprep.subr.mxu0 0.0
    %3300 = vmatpush1.msra.mxu0 0.0
    %3301 = vmatprep.subr.mxu0 0.0
    %3302 = vmatpush1.msra.mxu0 0.0
    %3303 = vmatprep.subr.mxu0 0.0
    %3304 = vmatpush1.msra.mxu0 0.0
    %3305 = vmatprep.subr.mxu0 0.0
    %3306 = vmatpush1.msra.mxu0 0.0
    %3307 = vmatprep.subr.mxu0 0.0
    %3308 = vmatpush1.msra.mxu0 0.0
    %3309 = vmatprep.subr.mxu0 0.0
    %3310 = vmatpush1.msra.mxu0 0.0
    %3311 = vmatprep.subr.mxu0 0.0
    %3312 = vmatpush1.msra.mxu0 0.0
    %3313 = vmatprep.subr.mxu0 0.0
    %3314 = vmatpush1.msra.mxu0 0.0
    %3315 = vmatprep.subr.mxu0 0.0
    %3316 = vmatpush1.msra.mxu0 0.0
    %3317 = vmatprep.subr.mxu0 0.0
    %3318 = vmatpush1.msra.mxu0 0.0
    %3319 = vmatprep.subr.mxu0 0.0
    %3320 = vmatpush1.msra.mxu0 0.0
    %3321 = vmatprep.subr.mxu0 0.0
    %3322 = vmatpush1.msra.mxu0 0.0
    %3323 = vmatprep.subr.mxu0 0.0
    %3324 = vmatpush1.msra.mxu0 0.0
    %3325 = vmatprep.subr.mxu0 0.0
    %3326 = vmatpush1.msra.mxu0 0.0
    %3327 = vmatprep.subr.mxu0 0.0
    %3328 = vmatpush1.msra.mxu0 0.0
    %3329 = vmatprep.subr.mxu0 0.0
    %3330 = vmatpush1.msra.mxu0 0.0
    %3331 = vmatprep.mubr.f32.mxu0 0.0
    %3332 = vmatmul.mubr.f32.gmra.mrb[0].mxu0 %v3262
    %v3333 = vpop.f32.mrb[0].mxu0
    %v3334 = vadd.f32 0.0, %v3333
    %v3335 = vpop.f32.mrb[0].mxu0
    %3336 = vdwg.mxu0
    %v3337 = vadd.f32 %v3254, %v3334
    %s3338 = scalar_lea.vmem %s6, 280
    %v3339 = vld [vmem:[%s3338] sm:$0xff]
    %v3340 = vld [vmem:[%s3338 + $0x8] sm:$0xff]
    %v3341 = vld [vmem:[%s3338 + $0x10] sm:$0xff]
    %v3342 = vld [vmem:[%s3338 + $0x18] sm:$0xff]
    %v3343 = vld [vmem:[%s3338 + $0x20] sm:$0xf]
    %v3344 = vrot.slane %v2747, 7
    %v3345 = vsel %vm2761, %v3344, 0
    %v3348 = vsel %vm2765, %v3343, 0
    %3350 = vmatprep.subr.mxu0 0.0
    %3351 = vmatpush1.msra.mxu0 %v3339
    %3352 = vmatprep.subr.mxu0 0.0
    %3353 = vmatpush1.msra.mxu0 %v3340
    %3354 = vmatprep.subr.mxu0 0.0
    %3355 = vmatpush1.msra.mxu0 %v3341
    %3356 = vmatprep.subr.mxu0 0.0
    %3357 = vmatpush1.msra.mxu0 %v3342
    %3358 = vmatprep.subr.mxu0 0.0
    %3359 = vmatpush1.msra.mxu0 %v3348
    %3360 = vmatprep.subr.mxu0 0.0
    %3361 = vmatpush1.msra.mxu0 0.0
    %3362 = vmatprep.subr.mxu0 0.0
    %3363 = vmatpush1.msra.mxu0 0.0
    %3364 = vmatprep.subr.mxu0 0.0
    %3365 = vmatpush1.msra.mxu0 0.0
    %3366 = vmatprep.subr.mxu0 0.0
    %3367 = vmatpush1.msra.mxu0 0.0
    %3368 = vmatprep.subr.mxu0 0.0
    %3369 = vmatpush1.msra.mxu0 0.0
    %3370 = vmatprep.subr.mxu0 0.0
    %3371 = vmatpush1.msra.mxu0 0.0
    %3372 = vmatprep.subr.mxu0 0.0
    %3373 = vmatpush1.msra.mxu0 0.0
    %3374 = vmatprep.subr.mxu0 0.0
    %3375 = vmatpush1.msra.mxu0 0.0
    %3376 = vmatprep.subr.mxu0 0.0
    %3377 = vmatpush1.msra.mxu0 0.0
    %3378 = vmatprep.subr.mxu0 0.0
    %3379 = vmatpush1.msra.mxu0 0.0
    %3380 = vmatprep.subr.mxu0 0.0
    %3381 = vmatpush1.msra.mxu0 0.0
    %3382 = vmatprep.subr.mxu0 0.0
    %3383 = vmatpush1.msra.mxu0 0.0
    %3384 = vmatprep.subr.mxu0 0.0
    %3385 = vmatpush1.msra.mxu0 0.0
    %3386 = vmatprep.subr.mxu0 0.0
    %3387 = vmatpush1.msra.mxu0 0.0
    %3388 = vmatprep.subr.mxu0 0.0
    %3389 = vmatpush1.msra.mxu0 0.0
    %3390 = vmatprep.subr.mxu0 0.0
    %3391 = vmatpush1.msra.mxu0 0.0
    %3392 = vmatprep.subr.mxu0 0.0
    %3393 = vmatpush1.msra.mxu0 0.0
    %3394 = vmatprep.subr.mxu0 0.0
    %3395 = vmatpush1.msra.mxu0 0.0
    %3396 = vmatprep.subr.mxu0 0.0
    %3397 = vmatpush1.msra.mxu0 0.0
    %3398 = vmatprep.subr.mxu0 0.0
    %3399 = vmatpush1.msra.mxu0 0.0
    %3400 = vmatprep.subr.mxu0 0.0
    %3401 = vmatpush1.msra.mxu0 0.0
    %3402 = vmatprep.subr.mxu0 0.0
    %3403 = vmatpush1.msra.mxu0 0.0
    %3404 = vmatprep.subr.mxu0 0.0
    %3405 = vmatpush1.msra.mxu0 0.0
    %3406 = vmatprep.subr.mxu0 0.0
    %3407 = vmatpush1.msra.mxu0 0.0
    %3408 = vmatprep.subr.mxu0 0.0
    %3409 = vmatpush1.msra.mxu0 0.0
    %3410 = vmatprep.subr.mxu0 0.0
    %3411 = vmatpush1.msra.mxu0 0.0
    %3412 = vmatprep.subr.mxu0 0.0
    %3413 = vmatpush1.msra.mxu0 0.0
    %3414 = vmatprep.mubr.f32.mxu0 0.0
    %3415 = vmatmul.mubr.f32.gmra.mrb[0].mxu0 %v3345
    %v3416 = vpop.f32.mrb[0].mxu0
    %v3417 = vadd.f32 0.0, %v3416
    %v3418 = vpop.f32.mrb[0].mxu0
    %3419 = vdwg.mxu0
    %v3420 = vadd.f32 %v3337, %v3417
    %s3421 = scalar_lea.vmem %s6, 320
    %v3422 = vld [vmem:[%s3421] sm:$0xff]
    %v3423 = vld [vmem:[%s3421 + $0x8] sm:$0xff]
    %v3424 = vld [vmem:[%s3421 + $0x10] sm:$0xff]
    %v3425 = vld [vmem:[%s3421 + $0x18] sm:$0xff]
    %v3426 = vld [vmem:[%s3421 + $0x20] sm:$0xf]
    %v3428 = vsel %vm2761, %v2752, 0
    %v3431 = vsel %vm2765, %v3426, 0
    %3433 = vmatprep.subr.mxu0 0.0
    %3434 = vmatpush1.msra.mxu0 %v3422
    %3435 = vmatprep.subr.mxu0 0.0
    %3436 = vmatpush1.msra.mxu0 %v3423
    %3437 = vmatprep.subr.mxu0 0.0
    %3438 = vmatpush1.msra.mxu0 %v3424
    %3439 = vmatprep.subr.mxu0 0.0
    %3440 = vmatpush1.msra.mxu0 %v3425
    %3441 = vmatprep.subr.mxu0 0.0
    %3442 = vmatpush1.msra.mxu0 %v3431
    %3443 = vmatprep.subr.mxu0 0.0
    %3444 = vmatpush1.msra.mxu0 0.0
    %3445 = vmatprep.subr.mxu0 0.0
    %3446 = vmatpush1.msra.mxu0 0.0
    %3447 = vmatprep.subr.mxu0 0.0
    %3448 = vmatpush1.msra.mxu0 0.0
    %3449 = vmatprep.subr.mxu0 0.0
    %3450 = vmatpush1.msra.mxu0 0.0
    %3451 = vmatprep.subr.mxu0 0.0
    %3452 = vmatpush1.msra.mxu0 0.0
    %3453 = vmatprep.subr.mxu0 0.0
    %3454 = vmatpush1.msra.mxu0 0.0
    %3455 = vmatprep.subr.mxu0 0.0
    %3456 = vmatpush1.msra.mxu0 0.0
    %3457 = vmatprep.subr.mxu0 0.0
    %3458 = vmatpush1.msra.mxu0 0.0
    %3459 = vmatprep.subr.mxu0 0.0
    %3460 = vmatpush1.msra.mxu0 0.0
    %3461 = vmatprep.subr.mxu0 0.0
    %3462 = vmatpush1.msra.mxu0 0.0
    %3463 = vmatprep.subr.mxu0 0.0
    %3464 = vmatpush1.msra.mxu0 0.0
    %3465 = vmatprep.subr.mxu0 0.0
    %3466 = vmatpush1.msra.mxu0 0.0
    %3467 = vmatprep.subr.mxu0 0.0
    %3468 = vmatpush1.msra.mxu0 0.0
    %3469 = vmatprep.subr.mxu0 0.0
    %3470 = vmatpush1.msra.mxu0 0.0
    %3471 = vmatprep.subr.mxu0 0.0
    %3472 = vmatpush1.msra.mxu0 0.0
    %3473 = vmatprep.subr.mxu0 0.0
    %3474 = vmatpush1.msra.mxu0 0.0
    %3475 = vmatprep.subr.mxu0 0.0
    %3476 = vmatpush1.msra.mxu0 0.0
    %3477 = vmatprep.subr.mxu0 0.0
    %3478 = vmatpush1.msra.mxu0 0.0
    %3479 = vmatprep.subr.mxu0 0.0
    %3480 = vmatpush1.msra.mxu0 0.0
    %3481 = vmatprep.subr.mxu0 0.0
    %3482 = vmatpush1.msra.mxu0 0.0
    %3483 = vmatprep.subr.mxu0 0.0
    %3484 = vmatpush1.msra.mxu0 0.0
    %3485 = vmatprep.subr.mxu0 0.0
    %3486 = vmatpush1.msra.mxu0 0.0
    %3487 = vmatprep.subr.mxu0 0.0
    %3488 = vmatpush1.msra.mxu0 0.0
    %3489 = vmatprep.subr.mxu0 0.0
    %3490 = vmatpush1.msra.mxu0 0.0
    %3491 = vmatprep.subr.mxu0 0.0
    %3492 = vmatpush1.msra.mxu0 0.0
    %3493 = vmatprep.subr.mxu0 0.0
    %3494 = vmatpush1.msra.mxu0 0.0
    %3495 = vmatprep.subr.mxu0 0.0
    %3496 = vmatpush1.msra.mxu0 0.0
    %3497 = vmatprep.mubr.f32.mxu0 0.0
    %3498 = vmatmul.mubr.f32.gmra.mrb[0].mxu0 %v3428
    %v3499 = vpop.f32.mrb[0].mxu0
    %v3500 = vadd.f32 0.0, %v3499
    %v3501 = vpop.f32.mrb[0].mxu0
    %3502 = vdwg.mxu0
    %v3503 = vadd.f32 %v3420, %v3500
    %s3504 = scalar_lea.vmem %s6, 360
    %v3505 = vld [vmem:[%s3504] sm:$0xff]
    %v3506 = vld [vmem:[%s3504 + $0x8] sm:$0xff]
    %v3507 = vld [vmem:[%s3504 + $0x10] sm:$0xff]
    %v3508 = vld [vmem:[%s3504 + $0x18] sm:$0xff]
    %v3509 = vld [vmem:[%s3504 + $0x20] sm:$0xf]
    %v3510 = vrot.slane %v2752, 1
    %v3511 = vsel %vm2761, %v3510, 0
    %v3514 = vsel %vm2765, %v3509, 0
    %3516 = vmatprep.subr.mxu0 0.0
    %3517 = vmatpush1.msra.mxu0 %v3505
    %3518 = vmatprep.subr.mxu0 0.0
    %3519 = vmatpush1.msra.mxu0 %v3506
    %3520 = vmatprep.subr.mxu0 0.0
    %3521 = vmatpush1.msra.mxu0 %v3507
    %3522 = vmatprep.subr.mxu0 0.0
    %3523 = vmatpush1.msra.mxu0 %v3508
    %3524 = vmatprep.subr.mxu0 0.0
    %3525 = vmatpush1.msra.mxu0 %v3514
    %3526 = vmatprep.subr.mxu0 0.0
    %3527 = vmatpush1.msra.mxu0 0.0
    %3528 = vmatprep.subr.mxu0 0.0
    %3529 = vmatpush1.msra.mxu0 0.0
    %3530 = vmatprep.subr.mxu0 0.0
    %3531 = vmatpush1.msra.mxu0 0.0
    %3532 = vmatprep.subr.mxu0 0.0
    %3533 = vmatpush1.msra.mxu0 0.0
    %3534 = vmatprep.subr.mxu0 0.0
    %3535 = vmatpush1.msra.mxu0 0.0
    %3536 = vmatprep.subr.mxu0 0.0
    %3537 = vmatpush1.msra.mxu0 0.0
    %3538 = vmatprep.subr.mxu0 0.0
    %3539 = vmatpush1.msra.mxu0 0.0
    %3540 = vmatprep.subr.mxu0 0.0
    %3541 = vmatpush1.msra.mxu0 0.0
    %3542 = vmatprep.subr.mxu0 0.0
    %3543 = vmatpush1.msra.mxu0 0.0
    %3544 = vmatprep.subr.mxu0 0.0
    %3545 = vmatpush1.msra.mxu0 0.0
    %3546 = vmatprep.subr.mxu0 0.0
    %3547 = vmatpush1.msra.mxu0 0.0
    %3548 = vmatprep.subr.mxu0 0.0
    %3549 = vmatpush1.msra.mxu0 0.0
    %3550 = vmatprep.subr.mxu0 0.0
    %3551 = vmatpush1.msra.mxu0 0.0
    %3552 = vmatprep.subr.mxu0 0.0
    %3553 = vmatpush1.msra.mxu0 0.0
    %3554 = vmatprep.subr.mxu0 0.0
    %3555 = vmatpush1.msra.mxu0 0.0
    %3556 = vmatprep.subr.mxu0 0.0
    %3557 = vmatpush1.msra.mxu0 0.0
    %3558 = vmatprep.subr.mxu0 0.0
    %3559 = vmatpush1.msra.mxu0 0.0
    %3560 = vmatprep.subr.mxu0 0.0
    %3561 = vmatpush1.msra.mxu0 0.0
    %3562 = vmatprep.subr.mxu0 0.0
    %3563 = vmatpush1.msra.mxu0 0.0
    %3564 = vmatprep.subr.mxu0 0.0
    %3565 = vmatpush1.msra.mxu0 0.0
    %3566 = vmatprep.subr.mxu0 0.0
    %3567 = vmatpush1.msra.mxu0 0.0
    %3568 = vmatprep.subr.mxu0 0.0
    %3569 = vmatpush1.msra.mxu0 0.0
    %3570 = vmatprep.subr.mxu0 0.0
    %3571 = vmatpush1.msra.mxu0 0.0
    %3572 = vmatprep.subr.mxu0 0.0
    %3573 = vmatpush1.msra.mxu0 0.0
    %3574 = vmatprep.subr.mxu0 0.0
    %3575 = vmatpush1.msra.mxu0 0.0
    %3576 = vmatprep.subr.mxu0 0.0
    %3577 = vmatpush1.msra.mxu0 0.0
    %3578 = vmatprep.subr.mxu0 0.0
    %3579 = vmatpush1.msra.mxu0 0.0
    %3580 = vmatprep.mubr.f32.mxu0 0.0
    %3581 = vmatmul.mubr.f32.gmra.mrb[0].mxu0 %v3511
    %v3582 = vpop.f32.mrb[0].mxu0
    %v3583 = vadd.f32 0.0, %v3582
    %v3584 = vpop.f32.mrb[0].mxu0
    %3585 = vdwg.mxu0
    %v3586 = vadd.f32 %v3503, %v3583
    %s3587 = scalar_lea.vmem %s6, 400
    %v3588 = vld [vmem:[%s3587] sm:$0xff]
    %v3589 = vld [vmem:[%s3587 + $0x8] sm:$0xff]
    %v3590 = vld [vmem:[%s3587 + $0x10] sm:$0xff]
    %v3591 = vld [vmem:[%s3587 + $0x18] sm:$0xff]
    %v3592 = vld [vmem:[%s3587 + $0x20] sm:$0xf]
    %v3593 = vrot.slane %v2752, 2
    %v3594 = vsel %vm2761, %v3593, 0
    %v3597 = vsel %vm2765, %v3592, 0
    %3599 = vmatprep.subr.mxu0 0.0
    %3600 = vmatpush1.msra.mxu0 %v3588
    %3601 = vmatprep.subr.mxu0 0.0
    %3602 = vmatpush1.msra.mxu0 %v3589
    %3603 = vmatprep.subr.mxu0 0.0
    %3604 = vmatpush1.msra.mxu0 %v3590
    %3605 = vmatprep.subr.mxu0 0.0
    %3606 = vmatpush1.msra.mxu0 %v3591
    %3607 = vmatprep.subr.mxu0 0.0
    %3608 = vmatpush1.msra.mxu0 %v3597
    %3609 = vmatprep.subr.mxu0 0.0
    %3610 = vmatpush1.msra.mxu0 0.0
    %3611 = vmatprep.subr.mxu0 0.0
    %3612 = vmatpush1.msra.mxu0 0.0
    %3613 = vmatprep.subr.mxu0 0.0
    %3614 = vmatpush1.msra.mxu0 0.0
    %3615 = vmatprep.subr.mxu0 0.0
    %3616 = vmatpush1.msra.mxu0 0.0
    %3617 = vmatprep.subr.mxu0 0.0
    %3618 = vmatpush1.msra.mxu0 0.0
    %3619 = vmatprep.subr.mxu0 0.0
    %3620 = vmatpush1.msra.mxu0 0.0
    %3621 = vmatprep.subr.mxu0 0.0
    %3622 = vmatpush1.msra.mxu0 0.0
    %3623 = vmatprep.subr.mxu0 0.0
    %3624 = vmatpush1.msra.mxu0 0.0
    %3625 = vmatprep.subr.mxu0 0.0
    %3626 = vmatpush1.msra.mxu0 0.0
    %3627 = vmatprep.subr.mxu0 0.0
    %3628 = vmatpush1.msra.mxu0 0.0
    %3629 = vmatprep.subr.mxu0 0.0
    %3630 = vmatpush1.msra.mxu0 0.0
    %3631 = vmatprep.subr.mxu0 0.0
    %3632 = vmatpush1.msra.mxu0 0.0
    %3633 = vmatprep.subr.mxu0 0.0
    %3634 = vmatpush1.msra.mxu0 0.0
    %3635 = vmatprep.subr.mxu0 0.0
    %3636 = vmatpush1.msra.mxu0 0.0
    %3637 = vmatprep.subr.mxu0 0.0
    %3638 = vmatpush1.msra.mxu0 0.0
    %3639 = vmatprep.subr.mxu0 0.0
    %3640 = vmatpush1.msra.mxu0 0.0
    %3641 = vmatprep.subr.mxu0 0.0
    %3642 = vmatpush1.msra.mxu0 0.0
    %3643 = vmatprep.subr.mxu0 0.0
    %3644 = vmatpush1.msra.mxu0 0.0
    %3645 = vmatprep.subr.mxu0 0.0
    %3646 = vmatpush1.msra.mxu0 0.0
    %3647 = vmatprep.subr.mxu0 0.0
    %3648 = vmatpush1.msra.mxu0 0.0
    %3649 = vmatprep.subr.mxu0 0.0
    %3650 = vmatpush1.msra.mxu0 0.0
    %3651 = vmatprep.subr.mxu0 0.0
    %3652 = vmatpush1.msra.mxu0 0.0
    %3653 = vmatprep.subr.mxu0 0.0
    %3654 = vmatpush1.msra.mxu0 0.0
    %3655 = vmatprep.subr.mxu0 0.0
    %3656 = vmatpush1.msra.mxu0 0.0
    %3657 = vmatprep.subr.mxu0 0.0
    %3658 = vmatpush1.msra.mxu0 0.0
    %3659 = vmatprep.subr.mxu0 0.0
    %3660 = vmatpush1.msra.mxu0 0.0
    %3661 = vmatprep.subr.mxu0 0.0
    %3662 = vmatpush1.msra.mxu0 0.0
    %3663 = vmatprep.mubr.f32.mxu0 0.0
    %3664 = vmatmul.mubr.f32.gmra.mrb[0].mxu0 %v3594
    %v3665 = vpop.f32.mrb[0].mxu0
    %v3666 = vadd.f32 0.0, %v3665
    %v3667 = vpop.f32.mrb[0].mxu0
    %3668 = vdwg.mxu0
    %v3669 = vadd.f32 %v3586, %v3666
    %s3670 = scalar_lea.vmem %s6, 440
    %v3671 = vld [vmem:[%s3670] sm:$0xff]
    %v3672 = vld [vmem:[%s3670 + $0x8] sm:$0xff]
    %v3673 = vld [vmem:[%s3670 + $0x10] sm:$0xff]
    %v3674 = vld [vmem:[%s3670 + $0x18] sm:$0xff]
    %v3675 = vld [vmem:[%s3670 + $0x20] sm:$0xf]
    %v3676 = vrot.slane %v2752, 3
    %v3677 = vsel %vm2761, %v3676, 0
    %v3680 = vsel %vm2765, %v3675, 0
    %3682 = vmatprep.subr.mxu0 0.0
    %3683 = vmatpush1.msra.mxu0 %v3671
    %3684 = vmatprep.subr.mxu0 0.0
    %3685 = vmatpush1.msra.mxu0 %v3672
    %3686 = vmatprep.subr.mxu0 0.0
    %3687 = vmatpush1.msra.mxu0 %v3673
    %3688 = vmatprep.subr.mxu0 0.0
    %3689 = vmatpush1.msra.mxu0 %v3674
    %3690 = vmatprep.subr.mxu0 0.0
    %3691 = vmatpush1.msra.mxu0 %v3680
    %3692 = vmatprep.subr.mxu0 0.0
    %3693 = vmatpush1.msra.mxu0 0.0
    %3694 = vmatprep.subr.mxu0 0.0
    %3695 = vmatpush1.msra.mxu0 0.0
    %3696 = vmatprep.subr.mxu0 0.0
    %3697 = vmatpush1.msra.mxu0 0.0
    %3698 = vmatprep.subr.mxu0 0.0
    %3699 = vmatpush1.msra.mxu0 0.0
    %3700 = vmatprep.subr.mxu0 0.0
    %3701 = vmatpush1.msra.mxu0 0.0
    %3702 = vmatprep.subr.mxu0 0.0
    %3703 = vmatpush1.msra.mxu0 0.0
    %3704 = vmatprep.subr.mxu0 0.0
    %3705 = vmatpush1.msra.mxu0 0.0
    %3706 = vmatprep.subr.mxu0 0.0
    %3707 = vmatpush1.msra.mxu0 0.0
    %3708 = vmatprep.subr.mxu0 0.0
    %3709 = vmatpush1.msra.mxu0 0.0
    %3710 = vmatprep.subr.mxu0 0.0
    %3711 = vmatpush1.msra.mxu0 0.0
    %3712 = vmatprep.subr.mxu0 0.0
    %3713 = vmatpush1.msra.mxu0 0.0
    %3714 = vmatprep.subr.mxu0 0.0
    %3715 = vmatpush1.msra.mxu0 0.0
    %3716 = vmatprep.subr.mxu0 0.0
    %3717 = vmatpush1.msra.mxu0 0.0
    %3718 = vmatprep.subr.mxu0 0.0
    %3719 = vmatpush1.msra.mxu0 0.0
    %3720 = vmatprep.subr.mxu0 0.0
    %3721 = vmatpush1.msra.mxu0 0.0
    %3722 = vmatprep.subr.mxu0 0.0
    %3723 = vmatpush1.msra.mxu0 0.0
    %3724 = vmatprep.subr.mxu0 0.0
    %3725 = vmatpush1.msra.mxu0 0.0
    %3726 = vmatprep.subr.mxu0 0.0
    %3727 = vmatpush1.msra.mxu0 0.0
    %3728 = vmatprep.subr.mxu0 0.0
    %3729 = vmatpush1.msra.mxu0 0.0
    %3730 = vmatprep.subr.mxu0 0.0
    %3731 = vmatpush1.msra.mxu0 0.0
    %3732 = vmatprep.subr.mxu0 0.0
    %3733 = vmatpush1.msra.mxu0 0.0
    %3734 = vmatprep.subr.mxu0 0.0
    %3735 = vmatpush1.msra.mxu0 0.0
    %3736 = vmatprep.subr.mxu0 0.0
    %3737 = vmatpush1.msra.mxu0 0.0
    %3738 = vmatprep.subr.mxu0 0.0
    %3739 = vmatpush1.msra.mxu0 0.0
    %3740 = vmatprep.subr.mxu0 0.0
    %3741 = vmatpush1.msra.mxu0 0.0
    %3742 = vmatprep.subr.mxu0 0.0
    %3743 = vmatpush1.msra.mxu0 0.0
    %3744 = vmatprep.subr.mxu0 0.0
    %3745 = vmatpush1.msra.mxu0 0.0
    %3746 = vmatprep.mubr.f32.mxu0 0.0
    %3747 = vmatmul.mubr.f32.gmra.mrb[0].mxu0 %v3677
    %v3748 = vpop.f32.mrb[0].mxu0
    %v3749 = vadd.f32 0.0, %v3748
    %v3750 = vpop.f32.mrb[0].mxu0
    %3751 = vdwg.mxu0
    %v3752 = vadd.f32 %v3669, %v3749
    %s3753 = scalar_lea.vmem %s6, 480
    %v3754 = vld [vmem:[%s3753] sm:$0xff]
    %v3755 = vld [vmem:[%s3753 + $0x8] sm:$0xff]
    %v3756 = vld [vmem:[%s3753 + $0x10] sm:$0xff]
    %v3757 = vld [vmem:[%s3753 + $0x18] sm:$0xff]
    %v3758 = vld [vmem:[%s3753 + $0x20] sm:$0xf]
    %v3759 = vrot.slane %v2752, 4
    %v3760 = vsel %vm2761, %v3759, 0
    %v3763 = vsel %vm2765, %v3758, 0
    %3765 = vmatprep.subr.mxu0 0.0
    %3766 = vmatpush1.msra.mxu0 %v3754
    %3767 = vmatprep.subr.mxu0 0.0
    %3768 = vmatpush1.msra.mxu0 %v3755
    %3769 = vmatprep.subr.mxu0 0.0
    %3770 = vmatpush1.msra.mxu0 %v3756
    %3771 = vmatprep.subr.mxu0 0.0
    %3772 = vmatpush1.msra.mxu0 %v3757
    %3773 = vmatprep.subr.mxu0 0.0
    %3774 = vmatpush1.msra.mxu0 %v3763
    %3775 = vmatprep.subr.mxu0 0.0
    %3776 = vmatpush1.msra.mxu0 0.0
    %3777 = vmatprep.subr.mxu0 0.0
    %3778 = vmatpush1.msra.mxu0 0.0
    %3779 = vmatprep.subr.mxu0 0.0
    %3780 = vmatpush1.msra.mxu0 0.0
    %3781 = vmatprep.subr.mxu0 0.0
    %3782 = vmatpush1.msra.mxu0 0.0
    %3783 = vmatprep.subr.mxu0 0.0
    %3784 = vmatpush1.msra.mxu0 0.0
    %3785 = vmatprep.subr.mxu0 0.0
    %3786 = vmatpush1.msra.mxu0 0.0
    %3787 = vmatprep.subr.mxu0 0.0
    %3788 = vmatpush1.msra.mxu0 0.0
    %3789 = vmatprep.subr.mxu0 0.0
    %3790 = vmatpush1.msra.mxu0 0.0
    %3791 = vmatprep.subr.mxu0 0.0
    %3792 = vmatpush1.msra.mxu0 0.0
    %3793 = vmatprep.subr.mxu0 0.0
    %3794 = vmatpush1.msra.mxu0 0.0
    %3795 = vmatprep.subr.mxu0 0.0
    %3796 = vmatpush1.msra.mxu0 0.0
    %3797 = vmatprep.subr.mxu0 0.0
    %3798 = vmatpush1.msra.mxu0 0.0
    %3799 = vmatprep.subr.mxu0 0.0
    %3800 = vmatpush1.msra.mxu0 0.0
    %3801 = vmatprep.subr.mxu0 0.0
    %3802 = vmatpush1.msra.mxu0 0.0
    %3803 = vmatprep.subr.mxu0 0.0
    %3804 = vmatpush1.msra.mxu0 0.0
    %3805 = vmatprep.subr.mxu0 0.0
    %3806 = vmatpush1.msra.mxu0 0.0
    %3807 = vmatprep.subr.mxu0 0.0
    %3808 = vmatpush1.msra.mxu0 0.0
    %3809 = vmatprep.subr.mxu0 0.0
    %3810 = vmatpush1.msra.mxu0 0.0
    %3811 = vmatprep.subr.mxu0 0.0
    %3812 = vmatpush1.msra.mxu0 0.0
    %3813 = vmatprep.subr.mxu0 0.0
    %3814 = vmatpush1.msra.mxu0 0.0
    %3815 = vmatprep.subr.mxu0 0.0
    %3816 = vmatpush1.msra.mxu0 0.0
    %3817 = vmatprep.subr.mxu0 0.0
    %3818 = vmatpush1.msra.mxu0 0.0
    %3819 = vmatprep.subr.mxu0 0.0
    %3820 = vmatpush1.msra.mxu0 0.0
    %3821 = vmatprep.subr.mxu0 0.0
    %3822 = vmatpush1.msra.mxu0 0.0
    %3823 = vmatprep.subr.mxu0 0.0
    %3824 = vmatpush1.msra.mxu0 0.0
    %3825 = vmatprep.subr.mxu0 0.0
    %3826 = vmatpush1.msra.mxu0 0.0
    %3827 = vmatprep.subr.mxu0 0.0
    %3828 = vmatpush1.msra.mxu0 0.0
    %3829 = vmatprep.mubr.f32.mxu0 0.0
    %3830 = vmatmul.mubr.f32.gmra.mrb[0].mxu0 %v3760
    %v3831 = vpop.f32.mrb[0].mxu0
    %v3832 = vadd.f32 0.0, %v3831
    %v3833 = vpop.f32.mrb[0].mxu0
    %3834 = vdwg.mxu0
    %v3835 = vadd.f32 %v3752, %v3832
    %s3836 = scalar_lea.vmem %s6, 520
    %v3837 = vld [vmem:[%s3836] sm:$0xff]
    %v3838 = vld [vmem:[%s3836 + $0x8] sm:$0xff]
    %v3839 = vld [vmem:[%s3836 + $0x10] sm:$0xff]
    %v3840 = vld [vmem:[%s3836 + $0x18] sm:$0xff]
    %v3841 = vld [vmem:[%s3836 + $0x20] sm:$0xf]
    %v3842 = vrot.slane %v2752, 5
    %v3843 = vsel %vm2761, %v3842, 0
    %v3846 = vsel %vm2765, %v3841, 0
    %3848 = vmatprep.subr.mxu0 0.0
    %3849 = vmatpush1.msra.mxu0 %v3837
    %3850 = vmatprep.subr.mxu0 0.0
    %3851 = vmatpush1.msra.mxu0 %v3838
    %3852 = vmatprep.subr.mxu0 0.0
    %3853 = vmatpush1.msra.mxu0 %v3839
    %3854 = vmatprep.subr.mxu0 0.0
    %3855 = vmatpush1.msra.mxu0 %v3840
    %3856 = vmatprep.subr.mxu0 0.0
    %3857 = vmatpush1.msra.mxu0 %v3846
    %3858 = vmatprep.subr.mxu0 0.0
    %3859 = vmatpush1.msra.mxu0 0.0
    %3860 = vmatprep.subr.mxu0 0.0
    %3861 = vmatpush1.msra.mxu0 0.0
    %3862 = vmatprep.subr.mxu0 0.0
    %3863 = vmatpush1.msra.mxu0 0.0
    %3864 = vmatprep.subr.mxu0 0.0
    %3865 = vmatpush1.msra.mxu0 0.0
    %3866 = vmatprep.subr.mxu0 0.0
    %3867 = vmatpush1.msra.mxu0 0.0
    %3868 = vmatprep.subr.mxu0 0.0
    %3869 = vmatpush1.msra.mxu0 0.0
    %3870 = vmatprep.subr.mxu0 0.0
    %3871 = vmatpush1.msra.mxu0 0.0
    %3872 = vmatprep.subr.mxu0 0.0
    %3873 = vmatpush1.msra.mxu0 0.0
    %3874 = vmatprep.subr.mxu0 0.0
    %3875 = vmatpush1.msra.mxu0 0.0
    %3876 = vmatprep.subr.mxu0 0.0
    %3877 = vmatpush1.msra.mxu0 0.0
    %3878 = vmatprep.subr.mxu0 0.0
    %3879 = vmatpush1.msra.mxu0 0.0
    %3880 = vmatprep.subr.mxu0 0.0
    %3881 = vmatpush1.msra.mxu0 0.0
    %3882 = vmatprep.subr.mxu0 0.0
    %3883 = vmatpush1.msra.mxu0 0.0
    %3884 = vmatprep.subr.mxu0 0.0
    %3885 = vmatpush1.msra.mxu0 0.0
    %3886 = vmatprep.subr.mxu0 0.0
    %3887 = vmatpush1.msra.mxu0 0.0
    %3888 = vmatprep.subr.mxu0 0.0
    %3889 = vmatpush1.msra.mxu0 0.0
    %3890 = vmatprep.subr.mxu0 0.0
    %3891 = vmatpush1.msra.mxu0 0.0
    %3892 = vmatprep.subr.mxu0 0.0
    %3893 = vmatpush1.msra.mxu0 0.0
    %3894 = vmatprep.subr.mxu0 0.0
    %3895 = vmatpush1.msra.mxu0 0.0
    %3896 = vmatprep.subr.mxu0 0.0
    %3897 = vmatpush1.msra.mxu0 0.0
    %3898 = vmatprep.subr.mxu0 0.0
    %3899 = vmatpush1.msra.mxu0 0.0
    %3900 = vmatprep.subr.mxu0 0.0
    %3901 = vmatpush1.msra.mxu0 0.0
    %3902 = vmatprep.subr.mxu0 0.0
    %3903 = vmatpush1.msra.mxu0 0.0
    %3904 = vmatprep.subr.mxu0 0.0
    %3905 = vmatpush1.msra.mxu0 0.0
    %3906 = vmatprep.subr.mxu0 0.0
    %3907 = vmatpush1.msra.mxu0 0.0
    %3908 = vmatprep.subr.mxu0 0.0
    %3909 = vmatpush1.msra.mxu0 0.0
    %3910 = vmatprep.subr.mxu0 0.0
    %3911 = vmatpush1.msra.mxu0 0.0
    %3912 = vmatprep.mubr.f32.mxu0 0.0
    %3913 = vmatmul.mubr.f32.gmra.mrb[0].mxu0 %v3843
    %v3914 = vpop.f32.mrb[0].mxu0
    %v3915 = vadd.f32 0.0, %v3914
    %v3916 = vpop.f32.mrb[0].mxu0
    %3917 = vdwg.mxu0
    %v3918 = vadd.f32 %v3835, %v3915
    %s3919 = scalar_lea.vmem %s6, 560
    %v3920 = vld [vmem:[%s3919] sm:$0xff]
    %v3921 = vld [vmem:[%s3919 + $0x8] sm:$0xff]
    %v3922 = vld [vmem:[%s3919 + $0x10] sm:$0xff]
    %v3923 = vld [vmem:[%s3919 + $0x18] sm:$0xff]
    %v3924 = vld [vmem:[%s3919 + $0x20] sm:$0xf]
    %v3925 = vrot.slane %v2752, 6
    %v3926 = vsel %vm2761, %v3925, 0
    %v3929 = vsel %vm2765, %v3924, 0
    %3931 = vmatprep.subr.mxu0 0.0
    %3932 = vmatpush1.msra.mxu0 %v3920
    %3933 = vmatprep.subr.mxu0 0.0
    %3934 = vmatpush1.msra.mxu0 %v3921
    %3935 = vmatprep.subr.mxu0 0.0
    %3936 = vmatpush1.msra.mxu0 %v3922
    %3937 = vmatprep.subr.mxu0 0.0
    %3938 = vmatpush1.msra.mxu0 %v3923
    %3939 = vmatprep.subr.mxu0 0.0
    %3940 = vmatpush1.msra.mxu0 %v3929
    %3941 = vmatprep.subr.mxu0 0.0
    %3942 = vmatpush1.msra.mxu0 0.0
    %3943 = vmatprep.subr.mxu0 0.0
    %3944 = vmatpush1.msra.mxu0 0.0
    %3945 = vmatprep.subr.mxu0 0.0
    %3946 = vmatpush1.msra.mxu0 0.0
    %3947 = vmatprep.subr.mxu0 0.0
    %3948 = vmatpush1.msra.mxu0 0.0
    %3949 = vmatprep.subr.mxu0 0.0
    %3950 = vmatpush1.msra.mxu0 0.0
    %3951 = vmatprep.subr.mxu0 0.0
    %3952 = vmatpush1.msra.mxu0 0.0
    %3953 = vmatprep.subr.mxu0 0.0
    %3954 = vmatpush1.msra.mxu0 0.0
    %3955 = vmatprep.subr.mxu0 0.0
    %3956 = vmatpush1.msra.mxu0 0.0
    %3957 = vmatprep.subr.mxu0 0.0
    %3958 = vmatpush1.msra.mxu0 0.0
    %3959 = vmatprep.subr.mxu0 0.0
    %3960 = vmatpush1.msra.mxu0 0.0
    %3961 = vmatprep.subr.mxu0 0.0
    %3962 = vmatpush1.msra.mxu0 0.0
    %3963 = vmatprep.subr.mxu0 0.0
    %3964 = vmatpush1.msra.mxu0 0.0
    %3965 = vmatprep.subr.mxu0 0.0
    %3966 = vmatpush1.msra.mxu0 0.0
    %3967 = vmatprep.subr.mxu0 0.0
    %3968 = vmatpush1.msra.mxu0 0.0
    %3969 = vmatprep.subr.mxu0 0.0
    %3970 = vmatpush1.msra.mxu0 0.0
    %3971 = vmatprep.subr.mxu0 0.0
    %3972 = vmatpush1.msra.mxu0 0.0
    %3973 = vmatprep.subr.mxu0 0.0
    %3974 = vmatpush1.msra.mxu0 0.0
    %3975 = vmatprep.subr.mxu0 0.0
    %3976 = vmatpush1.msra.mxu0 0.0
    %3977 = vmatprep.subr.mxu0 0.0
    %3978 = vmatpush1.msra.mxu0 0.0
    %3979 = vmatprep.subr.mxu0 0.0
    %3980 = vmatpush1.msra.mxu0 0.0
    %3981 = vmatprep.subr.mxu0 0.0
    %3982 = vmatpush1.msra.mxu0 0.0
    %3983 = vmatprep.subr.mxu0 0.0
    %3984 = vmatpush1.msra.mxu0 0.0
    %3985 = vmatprep.subr.mxu0 0.0
    %3986 = vmatpush1.msra.mxu0 0.0
    %3987 = vmatprep.subr.mxu0 0.0
    %3988 = vmatpush1.msra.mxu0 0.0
    %3989 = vmatprep.subr.mxu0 0.0
    %3990 = vmatpush1.msra.mxu0 0.0
    %3991 = vmatprep.subr.mxu0 0.0
    %3992 = vmatpush1.msra.mxu0 0.0
    %3993 = vmatprep.subr.mxu0 0.0
    %3994 = vmatpush1.msra.mxu0 0.0
    %3995 = vmatprep.mubr.f32.mxu0 0.0
    %3996 = vmatmul.mubr.f32.gmra.mrb[0].mxu0 %v3926
    %v3997 = vpop.f32.mrb[0].mxu0
    %v3998 = vadd.f32 0.0, %v3997
    %v3999 = vpop.f32.mrb[0].mxu0
    %4000 = vdwg.mxu0
    %v4001 = vadd.f32 %v3918, %v3998
    %s4002 = scalar_lea.vmem %s6, 600
    %v4003 = vld [vmem:[%s4002] sm:$0xff]
    %v4004 = vld [vmem:[%s4002 + $0x8] sm:$0xff]
    %v4005 = vld [vmem:[%s4002 + $0x10] sm:$0xff]
    %v4006 = vld [vmem:[%s4002 + $0x18] sm:$0xff]
    %v4007 = vld [vmem:[%s4002 + $0x20] sm:$0xf]
    %v4008 = vrot.slane %v2752, 7
    %v4009 = vsel %vm2761, %v4008, 0
    %v4012 = vsel %vm2765, %v4007, 0
    %4014 = vmatprep.subr.mxu0 0.0
    %4015 = vmatpush1.msra.mxu0 %v4003
    %4016 = vmatprep.subr.mxu0 0.0
    %4017 = vmatpush1.msra.mxu0 %v4004
    %4018 = vmatprep.subr.mxu0 0.0
    %4019 = vmatpush1.msra.mxu0 %v4005
    %4020 = vmatprep.subr.mxu0 0.0
    %4021 = vmatpush1.msra.mxu0 %v4006
    %4022 = vmatprep.subr.mxu0 0.0
    %4023 = vmatpush1.msra.mxu0 %v4012
    %4024 = vmatprep.subr.mxu0 0.0
    %4025 = vmatpush1.msra.mxu0 0.0
    %4026 = vmatprep.subr.mxu0 0.0
    %4027 = vmatpush1.msra.mxu0 0.0
    %4028 = vmatprep.subr.mxu0 0.0
    %4029 = vmatpush1.msra.mxu0 0.0
    %4030 = vmatprep.subr.mxu0 0.0
    %4031 = vmatpush1.msra.mxu0 0.0
    %4032 = vmatprep.subr.mxu0 0.0
    %4033 = vmatpush1.msra.mxu0 0.0
    %4034 = vmatprep.subr.mxu0 0.0
    %4035 = vmatpush1.msra.mxu0 0.0
    %4036 = vmatprep.subr.mxu0 0.0
    %4037 = vmatpush1.msra.mxu0 0.0
    %4038 = vmatprep.subr.mxu0 0.0
    %4039 = vmatpush1.msra.mxu0 0.0
    %4040 = vmatprep.subr.mxu0 0.0
    %4041 = vmatpush1.msra.mxu0 0.0
    %4042 = vmatprep.subr.mxu0 0.0
    %4043 = vmatpush1.msra.mxu0 0.0
    %4044 = vmatprep.subr.mxu0 0.0
    %4045 = vmatpush1.msra.mxu0 0.0
    %4046 = vmatprep.subr.mxu0 0.0
    %4047 = vmatpush1.msra.mxu0 0.0
    %4048 = vmatprep.subr.mxu0 0.0
    %4049 = vmatpush1.msra.mxu0 0.0
    %4050 = vmatprep.subr.mxu0 0.0
    %4051 = vmatpush1.msra.mxu0 0.0
    %4052 = vmatprep.subr.mxu0 0.0
    %4053 = vmatpush1.msra.mxu0 0.0
    %4054 = vmatprep.subr.mxu0 0.0
    %4055 = vmatpush1.msra.mxu0 0.0
    %4056 = vmatprep.subr.mxu0 0.0
    %4057 = vmatpush1.msra.mxu0 0.0
    %4058 = vmatprep.subr.mxu0 0.0
    %4059 = vmatpush1.msra.mxu0 0.0
    %4060 = vmatprep.subr.mxu0 0.0
    %4061 = vmatpush1.msra.mxu0 0.0
    %4062 = vmatprep.subr.mxu0 0.0
    %4063 = vmatpush1.msra.mxu0 0.0
    %4064 = vmatprep.subr.mxu0 0.0
    %4065 = vmatpush1.msra.mxu0 0.0
    %4066 = vmatprep.subr.mxu0 0.0
    %4067 = vmatpush1.msra.mxu0 0.0
    %4068 = vmatprep.subr.mxu0 0.0
    %4069 = vmatpush1.msra.mxu0 0.0
    %4070 = vmatprep.subr.mxu0 0.0
    %4071 = vmatpush1.msra.mxu0 0.0
    %4072 = vmatprep.subr.mxu0 0.0
    %4073 = vmatpush1.msra.mxu0 0.0
    %4074 = vmatprep.subr.mxu0 0.0
    %4075 = vmatpush1.msra.mxu0 0.0
    %4076 = vmatprep.subr.mxu0 0.0
    %4077 = vmatpush1.msra.mxu0 0.0
    %4078 = vmatprep.mubr.f32.mxu0 0.0
    %4079 = vmatmul.mubr.f32.gmra.mrb[0].mxu0 %v4009
    %v4080 = vpop.f32.mrb[0].mxu0
    %v4081 = vadd.f32 0.0, %v4080
    %v4082 = vpop.f32.mrb[0].mxu0
    %4083 = vdwg.mxu0
    %v4084 = vadd.f32 %v4001, %v4081
    %v4085 = vmax.f32 %v4084, 0.0
    %v4086 = vld [vmem:[%s8] sm:$0xff]
    %v4087 = vld [vmem:[%s8 + $0x8] sm:$0xff]
    %v4088 = vld [vmem:[%s8 + $0x10] sm:$0xff]
    %v4089 = vld [vmem:[%s8 + $0x18] sm:$0xff]
    %v4090 = vld [vmem:[%s8 + $0x20] sm:$0xff]
    %v4091 = vld [vmem:[%s8 + $0x28] sm:$0xff]
    %v4092 = vld [vmem:[%s8 + $0x30] sm:$0xff]
    %v4093 = vld [vmem:[%s8 + $0x38] sm:$0xff]
    %v4094 = vld [vmem:[%s8 + $0x40] sm:$0xff]
    %v4095 = vld [vmem:[%s8 + $0x48] sm:$0xff]
    %v4096 = vld [vmem:[%s8 + $0x50] sm:$0xff]
    %v4097 = vld [vmem:[%s8 + $0x58] sm:$0xff]
    %v4098 = vld [vmem:[%s8 + $0x60] sm:$0xff]
    %v4099 = vld [vmem:[%s8 + $0x68] sm:$0xff]
    %v4100 = vld [vmem:[%s8 + $0x70] sm:$0xff]
    %v4101 = vld [vmem:[%s9] sm:$0x1]
    %vm4102 = vcmask 982016
    %v4104 = vsel %vm4102, %v4085, 0
    %4106 = vmatprep.subr.mxu0 0.0
    %4107 = vmatpush1.msra.mxu0 %v4086
    %4108 = vmatprep.subr.mxu0 0.0
    %4109 = vmatpush1.msra.mxu0 %v4087
    %4110 = vmatprep.subr.mxu0 0.0
    %4111 = vmatpush1.msra.mxu0 %v4088
    %4112 = vmatprep.subr.mxu0 0.0
    %4113 = vmatpush1.msra.mxu0 %v4089
    %4114 = vmatprep.subr.mxu0 0.0
    %4115 = vmatpush1.msra.mxu0 %v4090
    %4116 = vmatprep.subr.mxu0 0.0
    %4117 = vmatpush1.msra.mxu0 %v4091
    %4118 = vmatprep.subr.mxu0 0.0
    %4119 = vmatpush1.msra.mxu0 %v4092
    %4120 = vmatprep.subr.mxu0 0.0
    %4121 = vmatpush1.msra.mxu0 %v4093
    %4122 = vmatprep.subr.mxu0 0.0
    %4123 = vmatpush1.msra.mxu0 %v4094
    %4124 = vmatprep.subr.mxu0 0.0
    %4125 = vmatpush1.msra.mxu0 %v4095
    %4126 = vmatprep.subr.mxu0 0.0
    %4127 = vmatpush1.msra.mxu0 %v4096
    %4128 = vmatprep.subr.mxu0 0.0
    %4129 = vmatpush1.msra.mxu0 %v4097
    %4130 = vmatprep.subr.mxu0 0.0
    %4131 = vmatpush1.msra.mxu0 %v4098
    %4132 = vmatprep.subr.mxu0 0.0
    %4133 = vmatpush1.msra.mxu0 %v4099
    %4134 = vmatprep.subr.mxu0 0.0
    %4135 = vmatpush1.msra.mxu0 %v4100
    %4136 = vmatprep.subr.mxu0 0.0
    %4137 = vmatpush1.msra.mxu0 0.0
    %4138 = vmatprep.subr.mxu0 0.0
    %4139 = vmatpush1.msra.mxu0 0.0
    %4140 = vmatprep.subr.mxu0 0.0
    %4141 = vmatpush1.msra.mxu0 0.0
    %4142 = vmatprep.subr.mxu0 0.0
    %4143 = vmatpush1.msra.mxu0 0.0
    %4144 = vmatprep.subr.mxu0 0.0
    %4145 = vmatpush1.msra.mxu0 0.0
    %4146 = vmatprep.subr.mxu0 0.0
    %4147 = vmatpush1.msra.mxu0 0.0
    %4148 = vmatprep.subr.mxu0 0.0
    %4149 = vmatpush1.msra.mxu0 0.0
    %4150 = vmatprep.subr.mxu0 0.0
    %4151 = vmatpush1.msra.mxu0 0.0
    %4152 = vmatprep.subr.mxu0 0.0
    %4153 = vmatpush1.msra.mxu0 0.0
    %4154 = vmatprep.subr.mxu0 0.0
    %4155 = vmatpush1.msra.mxu0 0.0
    %4156 = vmatprep.subr.mxu0 0.0
    %4157 = vmatpush1.msra.mxu0 0.0
    %4158 = vmatprep.subr.mxu0 0.0
    %4159 = vmatpush1.msra.mxu0 0.0
    %4160 = vmatprep.subr.mxu0 0.0
    %4161 = vmatpush1.msra.mxu0 0.0
    %4162 = vmatprep.subr.mxu0 0.0
    %4163 = vmatpush1.msra.mxu0 0.0
    %4164 = vmatprep.subr.mxu0 0.0
    %4165 = vmatpush1.msra.mxu0 0.0
    %4166 = vmatprep.subr.mxu0 0.0
    %4167 = vmatpush1.msra.mxu0 0.0
    %4168 = vmatprep.subr.mxu0 0.0
    %4169 = vmatpush1.msra.mxu0 0.0
    %4170 = vmatprep.mubr.f32.mxu0 0.0
    %4171 = vmatmul.mubr.f32.gmra.mrb[0].mxu0 %v4104
    %v4172 = vpop.f32.mrb[0].mxu0
    %v4173 = vadd.f32 %v4101, %v4172
    %v4174 = vpop.f32.mrb[0].mxu0
    %4175 = vdwg.mxu0
    %v4176 = vmax.f32 %v4173, 0.0
    %v4177 = vld [vmem:[%s10] sm:$0xff]
    %v4178 = vld [vmem:[%s10 + $0x8] sm:$0xff]
    %v4179 = vld [vmem:[%s10 + $0x10] sm:$0xff]
    %v4180 = vld [vmem:[%s10 + $0x18] sm:$0xff]
    %v4181 = vld [vmem:[%s10 + $0x20] sm:$0xff]
    %v4182 = vld [vmem:[%s10 + $0x28] sm:$0xff]
    %v4183 = vld [vmem:[%s10 + $0x30] sm:$0xff]
    %v4184 = vld [vmem:[%s10 + $0x38] sm:$0xff]
    %v4185 = vld [vmem:[%s10 + $0x40] sm:$0xff]
    %v4186 = vld [vmem:[%s10 + $0x48] sm:$0xff]
    %v4187 = vld [vmem:[%s10 + $0x50] sm:$0xf]
    %v4188 = vld [vmem:[%s11] sm:$0x1]
    %vm4189 = vcmask 687104
    %v4191 = vsel %vm4189, %v4176, 0
    %v4194 = vsel %vm2765, %v4187, 0
    %4196 = vmatprep.subr.mxu0 0.0
    %4197 = vmatpush1.msra.mxu0 %v4177
    %4198 = vmatprep.subr.mxu0 0.0
    %4199 = vmatpush1.msra.mxu0 %v4178
    %4200 = vmatprep.subr.mxu0 0.0
    %4201 = vmatpush1.msra.mxu0 %v4179
    %4202 = vmatprep.subr.mxu0 0.0
    %4203 = vmatpush1.msra.mxu0 %v4180
    %4204 = vmatprep.subr.mxu0 0.0
    %4205 = vmatpush1.msra.mxu0 %v4181
    %4206 = vmatprep.subr.mxu0 0.0
    %4207 = vmatpush1.msra.mxu0 %v4182
    %4208 = vmatprep.subr.mxu0 0.0
    %4209 = vmatpush1.msra.mxu0 %v4183
    %4210 = vmatprep.subr.mxu0 0.0
    %4211 = vmatpush1.msra.mxu0 %v4184
    %4212 = vmatprep.subr.mxu0 0.0
    %4213 = vmatpush1.msra.mxu0 %v4185
    %4214 = vmatprep.subr.mxu0 0.0
    %4215 = vmatpush1.msra.mxu0 %v4186
    %4216 = vmatprep.subr.mxu0 0.0
    %4217 = vmatpush1.msra.mxu0 %v4194
    %4218 = vmatprep.subr.mxu0 0.0
    %4219 = vmatpush1.msra.mxu0 0.0
    %4220 = vmatprep.subr.mxu0 0.0
    %4221 = vmatpush1.msra.mxu0 0.0
    %4222 = vmatprep.subr.mxu0 0.0
    %4223 = vmatpush1.msra.mxu0 0.0
    %4224 = vmatprep.subr.mxu0 0.0
    %4225 = vmatpush1.msra.mxu0 0.0
    %4226 = vmatprep.subr.mxu0 0.0
    %4227 = vmatpush1.msra.mxu0 0.0
    %4228 = vmatprep.subr.mxu0 0.0
    %4229 = vmatpush1.msra.mxu0 0.0
    %4230 = vmatprep.subr.mxu0 0.0
    %4231 = vmatpush1.msra.mxu0 0.0
    %4232 = vmatprep.subr.mxu0 0.0
    %4233 = vmatpush1.msra.mxu0 0.0
    %4234 = vmatprep.subr.mxu0 0.0
    %4235 = vmatpush1.msra.mxu0 0.0
    %4236 = vmatprep.subr.mxu0 0.0
    %4237 = vmatpush1.msra.mxu0 0.0
    %4238 = vmatprep.subr.mxu0 0.0
    %4239 = vmatpush1.msra.mxu0 0.0
    %4240 = vmatprep.subr.mxu0 0.0
    %4241 = vmatpush1.msra.mxu0 0.0
    %4242 = vmatprep.subr.mxu0 0.0
    %4243 = vmatpush1.msra.mxu0 0.0
    %4244 = vmatprep.subr.mxu0 0.0
    %4245 = vmatpush1.msra.mxu0 0.0
    %4246 = vmatprep.subr.mxu0 0.0
    %4247 = vmatpush1.msra.mxu0 0.0
    %4248 = vmatprep.subr.mxu0 0.0
    %4249 = vmatpush1.msra.mxu0 0.0
    %4250 = vmatprep.subr.mxu0 0.0
    %4251 = vmatpush1.msra.mxu0 0.0
    %4252 = vmatprep.subr.mxu0 0.0
    %4253 = vmatpush1.msra.mxu0 0.0
    %4254 = vmatprep.subr.mxu0 0.0
    %4255 = vmatpush1.msra.mxu0 0.0
    %4256 = vmatprep.subr.mxu0 0.0
    %4257 = vmatpush1.msra.mxu0 0.0
    %4258 = vmatprep.subr.mxu0 0.0
    %4259 = vmatpush1.msra.mxu0 0.0
    %4260 = vmatprep.mubr.f32.mxu0 0.0
    %4261 = vmatmul.mubr.f32.gmra.mrb[0].mxu0 %v4191
    %v4262 = vpop.f32.mrb[0].mxu0
    %v4263 = vadd.f32 %v4188, %v4262
    %v4264 = vpop.f32.mrb[0].mxu0
    %4265 = vdwg.mxu0
    %vm4266 = vcmask 73728
    %4267 = vst.msk [vmem:[#allocation4] sm:$0x1] %vm4266, %v4263
    %s4268 = scalar_lea.vmem %s0, 1
    %v4269 = vld [vmem:[%s4268] ss:$2 sm:$0xff]
    %v4270 = vld [vmem:[%s1] sm:$0x3f]
    %4272 = vset.pattern.permute.xlu0 0
    %4273 = vperm.xlu0 %4272, %v4270
    %v4274 = vpop.permute.xlu0 %4273
    %v4277 = vlaneseq
    %v4278 = vshrl.u32 %v4277, 7
    %v4279 = vsub.s32 0, %v4278
    %v4280 = vrot.slane %v4269, %v4279
    %v4281 = vlaneseq
    %v4282 = vshrl.u32 %v4281, 7
    %v4283 = vsub.s32 1, %v4282
    %v4284 = vrot.slane %v4269, %v4283
    %v4285 = vlaneseq
    %v4286 = vshrl.u32 %v4285, 7
    %v4287 = vsub.s32 2, %v4286
    %v4288 = vrot.slane %v4269, %v4287
    %v4289 = vlaneseq
    %v4290 = vshrl.u32 %v4289, 7
    %v4291 = vsub.s32 3, %v4290
    %v4292 = vrot.slane %v4269, %v4291
    %v4293 = vlaneseq
    %v4294 = vshrl.u32 %v4293, 7
    %v4295 = vsub.s32 4, %v4294
    %v4296 = vrot.slane %v4269, %v4295
    %v4297 = vlaneseq
    %v4298 = vshrl.u32 %v4297, 7
    %v4299 = vsub.s32 5, %v4298
    %v4300 = vrot.slane %v4269, %v4299
    %v4301 = vlaneseq
    %v4302 = vshrl.u32 %v4301, 7
    %v4303 = vsub.s32 6, %v4302
    %v4304 = vrot.slane %v4269, %v4303
    %v4305 = vlaneseq
    %v4306 = vshrl.u32 %v4305, 7
    %v4307 = vsub.s32 7, %v4306
    %v4308 = vrot.slane %v4269, %v4307
    %v4317 = vmul.f32 %v4274, %v4280
    %v4318 = vmul.f32 %v4274, %v4284
    %v4319 = vmul.f32 %v4274, %v4288
    %v4320 = vmul.f32 %v4274, %v4292
    %v4321 = vmul.f32 %v4274, %v4296
    %v4322 = vmul.f32 %v4274, %v4300
    %v4323 = vmul.f32 %v4274, %v4304
    %v4324 = vmul.f32 %v4274, %v4308
    %v4325 = vadd.f32 %v4317, 0.0
    %v4326 = vadd.f32 %v4318, 0.0
    %v4327 = vadd.f32 %v4319, 0.0
    %v4328 = vadd.f32 %v4320, 0.0
    %v4329 = vadd.f32 %v4321, 0.0
    %v4330 = vadd.f32 %v4322, 0.0
    %v4331 = vadd.f32 %v4323, 0.0
    %v4332 = vadd.f32 %v4324, 0.0
    %v4333 = vld [vmem:[%s123] sm:$0x3f]
    %4335 = vset.pattern.permute.xlu0 0
    %4336 = vperm.xlu0 %4335, %v4333
    %v4337 = vpop.permute.xlu0 %4336
    %v4339 = vmul.f32 %v4337, %v4280
    %v4340 = vmul.f32 %v4337, %v4284
    %v4341 = vmul.f32 %v4337, %v4288
    %v4342 = vmul.f32 %v4337, %v4292
    %v4343 = vmul.f32 %v4337, %v4296
    %v4344 = vmul.f32 %v4337, %v4300
    %v4345 = vmul.f32 %v4337, %v4304
    %v4346 = vmul.f32 %v4337, %v4308
    %4355 = vrot.lane.b32.xlu0 %v4339, 127
    %v4356 = vpop.permute.xlu0 %4355
    %4357 = vrot.lane.b32.xlu0 %v4340, 127
    %v4358 = vpop.permute.xlu0 %4357
    %4359 = vrot.lane.b32.xlu0 %v4341, 127
    %v4360 = vpop.permute.xlu0 %4359
    %4361 = vrot.lane.b32.xlu0 %v4342, 127
    %v4362 = vpop.permute.xlu0 %4361
    %4363 = vrot.lane.b32.xlu0 %v4343, 127
    %v4364 = vpop.permute.xlu0 %4363
    %4365 = vrot.lane.b32.xlu0 %v4344, 127
    %v4366 = vpop.permute.xlu0 %4365
    %4367 = vrot.lane.b32.xlu0 %v4345, 127
    %v4368 = vpop.permute.xlu0 %4367
    %4369 = vrot.lane.b32.xlu0 %v4346, 127
    %v4370 = vpop.permute.xlu0 %4369
    %v4371 = vsel %vm162, %v4356, %v4358
    %v4372 = vsel %vm162, %v4358, %v4360
    %v4373 = vsel %vm162, %v4360, %v4362
    %v4374 = vsel %vm162, %v4362, %v4364
    %v4375 = vsel %vm162, %v4364, %v4366
    %v4376 = vsel %vm162, %v4366, %v4368
    %v4377 = vsel %vm162, %v4368, %v4370
    %v4386 = vadd.f32 %v4325, %v4371
    %v4387 = vadd.f32 %v4326, %v4372
    %v4388 = vadd.f32 %v4327, %v4373
    %v4389 = vadd.f32 %v4328, %v4374
    %v4390 = vadd.f32 %v4329, %v4375
    %v4391 = vadd.f32 %v4330, %v4376
    %v4392 = vadd.f32 %v4331, %v4377
    %v4393 = vadd.f32 %v4332, %v4370
    %v4394 = vld [vmem:[%s186] sm:$0x3f]
    %4396 = vset.pattern.permute.xlu0 0
    %4397 = vperm.xlu0 %4396, %v4394
    %v4398 = vpop.permute.xlu0 %4397
    %v4400 = vmul.f32 %v4398, %v4280
    %v4401 = vmul.f32 %v4398, %v4284
    %v4402 = vmul.f32 %v4398, %v4288
    %v4403 = vmul.f32 %v4398, %v4292
    %v4404 = vmul.f32 %v4398, %v4296
    %v4405 = vmul.f32 %v4398, %v4300
    %v4406 = vmul.f32 %v4398, %v4304
    %v4407 = vmul.f32 %v4398, %v4308
    %4416 = vrot.lane.b32.xlu0 %v4400, 126
    %v4417 = vpop.permute.xlu0 %4416
    %4418 = vrot.lane.b32.xlu0 %v4401, 126
    %v4419 = vpop.permute.xlu0 %4418
    %4420 = vrot.lane.b32.xlu0 %v4402, 126
    %v4421 = vpop.permute.xlu0 %4420
    %4422 = vrot.lane.b32.xlu0 %v4403, 126
    %v4423 = vpop.permute.xlu0 %4422
    %4424 = vrot.lane.b32.xlu0 %v4404, 126
    %v4425 = vpop.permute.xlu0 %4424
    %4426 = vrot.lane.b32.xlu0 %v4405, 126
    %v4427 = vpop.permute.xlu0 %4426
    %4428 = vrot.lane.b32.xlu0 %v4406, 126
    %v4429 = vpop.permute.xlu0 %4428
    %4430 = vrot.lane.b32.xlu0 %v4407, 126
    %v4431 = vpop.permute.xlu0 %4430
    %v4432 = vsel %vm225, %v4417, %v4419
    %v4433 = vsel %vm225, %v4419, %v4421
    %v4434 = vsel %vm225, %v4421, %v4423
    %v4435 = vsel %vm225, %v4423, %v4425
    %v4436 = vsel %vm225, %v4425, %v4427
    %v4437 = vsel %vm225, %v4427, %v4429
    %v4438 = vsel %vm225, %v4429, %v4431
    %v4447 = vadd.f32 %v4386, %v4432
    %v4448 = vadd.f32 %v4387, %v4433
    %v4449 = vadd.f32 %v4388, %v4434
    %v4450 = vadd.f32 %v4389, %v4435
    %v4451 = vadd.f32 %v4390, %v4436
    %v4452 = vadd.f32 %v4391, %v4437
    %v4453 = vadd.f32 %v4392, %v4438
    %v4454 = vadd.f32 %v4393, %v4431
    %v4455 = vld [vmem:[%s249] sm:$0x3f]
    %4457 = vset.pattern.permute.xlu0 0
    %4458 = vperm.xlu0 %4457, %v4455
    %v4459 = vpop.permute.xlu0 %4458
    %v4461 = vmul.f32 %v4459, %v4280
    %v4462 = vmul.f32 %v4459, %v4284
    %v4463 = vmul.f32 %v4459, %v4288
    %v4464 = vmul.f32 %v4459, %v4292
    %v4465 = vmul.f32 %v4459, %v4296
    %v4466 = vmul.f32 %v4459, %v4300
    %v4467 = vmul.f32 %v4459, %v4304
    %v4468 = vmul.f32 %v4459, %v4308
    %4477 = vrot.lane.b32.xlu0 %v4461, 96
    %v4478 = vpop.permute.xlu0 %4477
    %4479 = vrot.lane.b32.xlu0 %v4462, 96
    %v4480 = vpop.permute.xlu0 %4479
    %4481 = vrot.lane.b32.xlu0 %v4463, 96
    %v4482 = vpop.permute.xlu0 %4481
    %4483 = vrot.lane.b32.xlu0 %v4464, 96
    %v4484 = vpop.permute.xlu0 %4483
    %4485 = vrot.lane.b32.xlu0 %v4465, 96
    %v4486 = vpop.permute.xlu0 %4485
    %4487 = vrot.lane.b32.xlu0 %v4466, 96
    %v4488 = vpop.permute.xlu0 %4487
    %4489 = vrot.lane.b32.xlu0 %v4467, 96
    %v4490 = vpop.permute.xlu0 %4489
    %4491 = vrot.lane.b32.xlu0 %v4468, 96
    %v4492 = vpop.permute.xlu0 %4491
    %v4493 = vsel %vm288, %v4478, %v4480
    %v4494 = vsel %vm288, %v4480, %v4482
    %v4495 = vsel %vm288, %v4482, %v4484
    %v4496 = vsel %vm288, %v4484, %v4486
    %v4497 = vsel %vm288, %v4486, %v4488
    %v4498 = vsel %vm288, %v4488, %v4490
    %v4499 = vsel %vm288, %v4490, %v4492
    %v4508 = vadd.f32 %v4447, %v4493
    %v4509 = vadd.f32 %v4448, %v4494
    %v4510 = vadd.f32 %v4449, %v4495
    %v4511 = vadd.f32 %v4450, %v4496
    %v4512 = vadd.f32 %v4451, %v4497
    %v4513 = vadd.f32 %v4452, %v4498
    %v4514 = vadd.f32 %v4453, %v4499
    %v4515 = vadd.f32 %v4454, %v4492
    %v4516 = vld [vmem:[%s312] sm:$0x3f]
    %4518 = vset.pattern.permute.xlu0 0
    %4519 = vperm.xlu0 %4518, %v4516
    %v4520 = vpop.permute.xlu0 %4519
    %v4522 = vmul.f32 %v4520, %v4280
    %v4523 = vmul.f32 %v4520, %v4284
    %v4524 = vmul.f32 %v4520, %v4288
    %v4525 = vmul.f32 %v4520, %v4292
    %v4526 = vmul.f32 %v4520, %v4296
    %v4527 = vmul.f32 %v4520, %v4300
    %v4528 = vmul.f32 %v4520, %v4304
    %v4529 = vmul.f32 %v4520, %v4308
    %4538 = vrot.lane.b32.xlu0 %v4522, 95
    %v4539 = vpop.permute.xlu0 %4538
    %4540 = vrot.lane.b32.xlu0 %v4523, 95
    %v4541 = vpop.permute.xlu0 %4540
    %4542 = vrot.lane.b32.xlu0 %v4524, 95
    %v4543 = vpop.permute.xlu0 %4542
    %4544 = vrot.lane.b32.xlu0 %v4525, 95
    %v4545 = vpop.permute.xlu0 %4544
    %4546 = vrot.lane.b32.xlu0 %v4526, 95
    %v4547 = vpop.permute.xlu0 %4546
    %4548 = vrot.lane.b32.xlu0 %v4527, 95
    %v4549 = vpop.permute.xlu0 %4548
    %4550 = vrot.lane.b32.xlu0 %v4528, 95
    %v4551 = vpop.permute.xlu0 %4550
    %4552 = vrot.lane.b32.xlu0 %v4529, 95
    %v4553 = vpop.permute.xlu0 %4552
    %v4554 = vsel %vm351, %v4539, %v4541
    %v4555 = vsel %vm351, %v4541, %v4543
    %v4556 = vsel %vm351, %v4543, %v4545
    %v4557 = vsel %vm351, %v4545, %v4547
    %v4558 = vsel %vm351, %v4547, %v4549
    %v4559 = vsel %vm351, %v4549, %v4551
    %v4560 = vsel %vm351, %v4551, %v4553
    %v4569 = vadd.f32 %v4508, %v4554
    %v4570 = vadd.f32 %v4509, %v4555
    %v4571 = vadd.f32 %v4510, %v4556
    %v4572 = vadd.f32 %v4511, %v4557
    %v4573 = vadd.f32 %v4512, %v4558
    %v4574 = vadd.f32 %v4513, %v4559
    %v4575 = vadd.f32 %v4514, %v4560
    %v4576 = vadd.f32 %v4515, %v4553
    %v4577 = vld [vmem:[%s375] sm:$0x3f]
    %4579 = vset.pattern.permute.xlu0 0
    %4580 = vperm.xlu0 %4579, %v4577
    %v4581 = vpop.permute.xlu0 %4580
    %v4583 = vmul.f32 %v4581, %v4280
    %v4584 = vmul.f32 %v4581, %v4284
    %v4585 = vmul.f32 %v4581, %v4288
    %v4586 = vmul.f32 %v4581, %v4292
    %v4587 = vmul.f32 %v4581, %v4296
    %v4588 = vmul.f32 %v4581, %v4300
    %v4589 = vmul.f32 %v4581, %v4304
    %v4590 = vmul.f32 %v4581, %v4308
    %4599 = vrot.lane.b32.xlu0 %v4583, 94
    %v4600 = vpop.permute.xlu0 %4599
    %4601 = vrot.lane.b32.xlu0 %v4584, 94
    %v4602 = vpop.permute.xlu0 %4601
    %4603 = vrot.lane.b32.xlu0 %v4585, 94
    %v4604 = vpop.permute.xlu0 %4603
    %4605 = vrot.lane.b32.xlu0 %v4586, 94
    %v4606 = vpop.permute.xlu0 %4605
    %4607 = vrot.lane.b32.xlu0 %v4587, 94
    %v4608 = vpop.permute.xlu0 %4607
    %4609 = vrot.lane.b32.xlu0 %v4588, 94
    %v4610 = vpop.permute.xlu0 %4609
    %4611 = vrot.lane.b32.xlu0 %v4589, 94
    %v4612 = vpop.permute.xlu0 %4611
    %4613 = vrot.lane.b32.xlu0 %v4590, 94
    %v4614 = vpop.permute.xlu0 %4613
    %v4615 = vsel %vm414, %v4600, %v4602
    %v4616 = vsel %vm414, %v4602, %v4604
    %v4617 = vsel %vm414, %v4604, %v4606
    %v4618 = vsel %vm414, %v4606, %v4608
    %v4619 = vsel %vm414, %v4608, %v4610
    %v4620 = vsel %vm414, %v4610, %v4612
    %v4621 = vsel %vm414, %v4612, %v4614
    %v4630 = vadd.f32 %v4569, %v4615
    %v4631 = vadd.f32 %v4570, %v4616
    %v4632 = vadd.f32 %v4571, %v4617
    %v4633 = vadd.f32 %v4572, %v4618
    %v4634 = vadd.f32 %v4573, %v4619
    %v4635 = vadd.f32 %v4574, %v4620
    %v4636 = vadd.f32 %v4575, %v4621
    %v4637 = vadd.f32 %v4576, %v4614
    %v4638 = vld [vmem:[%s438] sm:$0x3f]
    %4640 = vset.pattern.permute.xlu0 0
    %4641 = vperm.xlu0 %4640, %v4638
    %v4642 = vpop.permute.xlu0 %4641
    %v4644 = vmul.f32 %v4642, %v4280
    %v4645 = vmul.f32 %v4642, %v4284
    %v4646 = vmul.f32 %v4642, %v4288
    %v4647 = vmul.f32 %v4642, %v4292
    %v4648 = vmul.f32 %v4642, %v4296
    %v4649 = vmul.f32 %v4642, %v4300
    %v4650 = vmul.f32 %v4642, %v4304
    %v4651 = vmul.f32 %v4642, %v4308
    %4660 = vrot.lane.b32.xlu0 %v4644, 64
    %v4661 = vpop.permute.xlu0 %4660
    %4662 = vrot.lane.b32.xlu0 %v4645, 64
    %v4663 = vpop.permute.xlu0 %4662
    %4664 = vrot.lane.b32.xlu0 %v4646, 64
    %v4665 = vpop.permute.xlu0 %4664
    %4666 = vrot.lane.b32.xlu0 %v4647, 64
    %v4667 = vpop.permute.xlu0 %4666
    %4668 = vrot.lane.b32.xlu0 %v4648, 64
    %v4669 = vpop.permute.xlu0 %4668
    %4670 = vrot.lane.b32.xlu0 %v4649, 64
    %v4671 = vpop.permute.xlu0 %4670
    %4672 = vrot.lane.b32.xlu0 %v4650, 64
    %v4673 = vpop.permute.xlu0 %4672
    %4674 = vrot.lane.b32.xlu0 %v4651, 64
    %v4675 = vpop.permute.xlu0 %4674
    %v4676 = vsel %vm477, %v4661, %v4663
    %v4677 = vsel %vm477, %v4663, %v4665
    %v4678 = vsel %vm477, %v4665, %v4667
    %v4679 = vsel %vm477, %v4667, %v4669
    %v4680 = vsel %vm477, %v4669, %v4671
    %v4681 = vsel %vm477, %v4671, %v4673
    %v4682 = vsel %vm477, %v4673, %v4675
    %v4691 = vadd.f32 %v4630, %v4676
    %v4692 = vadd.f32 %v4631, %v4677
    %v4693 = vadd.f32 %v4632, %v4678
    %v4694 = vadd.f32 %v4633, %v4679
    %v4695 = vadd.f32 %v4634, %v4680
    %v4696 = vadd.f32 %v4635, %v4681
    %v4697 = vadd.f32 %v4636, %v4682
    %v4698 = vadd.f32 %v4637, %v4675
    %v4699 = vld [vmem:[%s4268] ss:$2 sm:$0xff]
    %s4700 = scalar_lea.vmem %s0, 17
    %v4701 = vld [vmem:[%s4700] ss:$2 sm:$0x1]
    %v4702 = vld [vmem:[%s504] sm:$0x3f]
    %4704 = vset.pattern.permute.xlu0 0
    %4705 = vperm.xlu0 %4704, %v4702
    %v4706 = vpop.permute.xlu0 %4705
    %v4710 = vlaneseq
    %v4711 = vshrl.u32 %v4710, 7
    %v4712 = vsub.s32 0, %v4711
    %v4713 = vrot.slane %v4699, %v4712
    %v4714 = vlaneseq
    %v4715 = vshrl.u32 %v4714, 7
    %v4716 = vsub.s32 1, %v4715
    %v4717 = vrot.slane %v4699, %v4716
    %v4718 = vlaneseq
    %v4719 = vshrl.u32 %v4718, 7
    %v4720 = vsub.s32 2, %v4719
    %v4721 = vrot.slane %v4699, %v4720
    %v4722 = vlaneseq
    %v4723 = vshrl.u32 %v4722, 7
    %v4724 = vsub.s32 3, %v4723
    %v4725 = vrot.slane %v4699, %v4724
    %v4726 = vlaneseq
    %v4727 = vshrl.u32 %v4726, 7
    %v4728 = vsub.s32 4, %v4727
    %v4729 = vrot.slane %v4699, %v4728
    %v4730 = vlaneseq
    %v4731 = vshrl.u32 %v4730, 7
    %v4732 = vsub.s32 5, %v4731
    %v4733 = vrot.slane %v4699, %v4732
    %v4734 = vlaneseq
    %v4735 = vshrl.u32 %v4734, 7
    %v4736 = vsub.s32 6, %v4735
    %v4737 = vrot.slane %v4699, %v4736
    %v4738 = vlaneseq
    %v4739 = vshrl.u32 %v4738, 7
    %v4740 = vsub.s32 7, %v4739
    %v4741 = vrot.slane %v4699, %v4740
    %v4742 = vlaneseq
    %v4743 = vshrl.u32 %v4742, 7
    %v4744 = vsub.s32 0, %v4743
    %v4745 = vrot.slane %v4701, %v4744
    %v4755 = vmul.f32 %v4706, %v4713
    %v4756 = vmul.f32 %v4706, %v4717
    %v4757 = vmul.f32 %v4706, %v4721
    %v4758 = vmul.f32 %v4706, %v4725
    %v4759 = vmul.f32 %v4706, %v4729
    %v4760 = vmul.f32 %v4706, %v4733
    %v4761 = vmul.f32 %v4706, %v4737
    %v4762 = vmul.f32 %v4706, %v4741
    %v4763 = vmul.f32 %v4706, %v4745
    %4773 = vrot.lane.b32.xlu0 %v4755, 63
    %v4774 = vpop.permute.xlu0 %4773
    %4775 = vrot.lane.b32.xlu0 %v4756, 63
    %v4776 = vpop.permute.xlu0 %4775
    %4777 = vrot.lane.b32.xlu0 %v4757, 63
    %v4778 = vpop.permute.xlu0 %4777
    %4779 = vrot.lane.b32.xlu0 %v4758, 63
    %v4780 = vpop.permute.xlu0 %4779
    %4781 = vrot.lane.b32.xlu0 %v4759, 63
    %v4782 = vpop.permute.xlu0 %4781
    %4783 = vrot.lane.b32.xlu0 %v4760, 63
    %v4784 = vpop.permute.xlu0 %4783
    %4785 = vrot.lane.b32.xlu0 %v4761, 63
    %v4786 = vpop.permute.xlu0 %4785
    %4787 = vrot.lane.b32.xlu0 %v4762, 63
    %v4788 = vpop.permute.xlu0 %4787
    %4789 = vrot.lane.b32.xlu0 %v4763, 63
    %v4790 = vpop.permute.xlu0 %4789
    %v4791 = vsel %vm594, %v4774, %v4776
    %v4792 = vsel %vm594, %v4776, %v4778
    %v4793 = vsel %vm594, %v4778, %v4780
    %v4794 = vsel %vm594, %v4780, %v4782
    %v4795 = vsel %vm594, %v4782, %v4784
    %v4796 = vsel %vm594, %v4784, %v4786
    %v4797 = vsel %vm594, %v4786, %v4788
    %v4798 = vsel %vm594, %v4788, %v4790
    %v4807 = vadd.f32 %v4691, %v4791
    %v4808 = vadd.f32 %v4692, %v4792
    %v4809 = vadd.f32 %v4693, %v4793
    %v4810 = vadd.f32 %v4694, %v4794
    %v4811 = vadd.f32 %v4695, %v4795
    %v4812 = vadd.f32 %v4696, %v4796
    %v4813 = vadd.f32 %v4697, %v4797
    %v4814 = vadd.f32 %v4698, %v4798
    %v4815 = vld [vmem:[%s619] sm:$0x3f]
    %4817 = vset.pattern.permute.xlu0 0
    %4818 = vperm.xlu0 %4817, %v4815
    %v4819 = vpop.permute.xlu0 %4818
    %v4821 = vmul.f32 %v4819, %v4713
    %v4822 = vmul.f32 %v4819, %v4717
    %v4823 = vmul.f32 %v4819, %v4721
    %v4824 = vmul.f32 %v4819, %v4725
    %v4825 = vmul.f32 %v4819, %v4729
    %v4826 = vmul.f32 %v4819, %v4733
    %v4827 = vmul.f32 %v4819, %v4737
    %v4828 = vmul.f32 %v4819, %v4741
    %v4829 = vmul.f32 %v4819, %v4745
    %4839 = vrot.lane.b32.xlu0 %v4821, 62
    %v4840 = vpop.permute.xlu0 %4839
    %4841 = vrot.lane.b32.xlu0 %v4822, 62
    %v4842 = vpop.permute.xlu0 %4841
    %4843 = vrot.lane.b32.xlu0 %v4823, 62
    %v4844 = vpop.permute.xlu0 %4843
    %4845 = vrot.lane.b32.xlu0 %v4824, 62
    %v4846 = vpop.permute.xlu0 %4845
    %4847 = vrot.lane.b32.xlu0 %v4825, 62
    %v4848 = vpop.permute.xlu0 %4847
    %4849 = vrot.lane.b32.xlu0 %v4826, 62
    %v4850 = vpop.permute.xlu0 %4849
    %4851 = vrot.lane.b32.xlu0 %v4827, 62
    %v4852 = vpop.permute.xlu0 %4851
    %4853 = vrot.lane.b32.xlu0 %v4828, 62
    %v4854 = vpop.permute.xlu0 %4853
    %4855 = vrot.lane.b32.xlu0 %v4829, 62
    %v4856 = vpop.permute.xlu0 %4855
    %v4857 = vsel %vm662, %v4840, %v4842
    %v4858 = vsel %vm662, %v4842, %v4844
    %v4859 = vsel %vm662, %v4844, %v4846
    %v4860 = vsel %vm662, %v4846, %v4848
    %v4861 = vsel %vm662, %v4848, %v4850
    %v4862 = vsel %vm662, %v4850, %v4852
    %v4863 = vsel %vm662, %v4852, %v4854
    %v4864 = vsel %vm662, %v4854, %v4856
    %v4873 = vadd.f32 %v4807, %v4857
    %v4874 = vadd.f32 %v4808, %v4858
    %v4875 = vadd.f32 %v4809, %v4859
    %v4876 = vadd.f32 %v4810, %v4860
    %v4877 = vadd.f32 %v4811, %v4861
    %v4878 = vadd.f32 %v4812, %v4862
    %v4879 = vadd.f32 %v4813, %v4863
    %v4880 = vadd.f32 %v4814, %v4864
    %v4881 = vld [vmem:[%s2] sm:$0x3f]
    %4883 = vset.pattern.permute.xlu0 0
    %4884 = vperm.xlu0 %4883, %v4881
    %v4885 = vpop.permute.xlu0 %4884
    %v4887 = vadd.f32 %v4873, %v4885
    %v4888 = vadd.f32 %v4874, %v4885
    %v4889 = vadd.f32 %v4875, %v4885
    %v4890 = vadd.f32 %v4876, %v4885
    %v4891 = vadd.f32 %v4877, %v4885
    %v4892 = vadd.f32 %v4878, %v4885
    %v4893 = vadd.f32 %v4879, %v4885
    %v4894 = vadd.f32 %v4880, %v4885
    %v4895 = vmax.f32 %v4887, 0.0
    %v4896 = vmax.f32 %v4888, 0.0
    %v4897 = vmax.f32 %v4889, 0.0
    %v4898 = vmax.f32 %v4890, 0.0
    %v4899 = vmax.f32 %v4891, 0.0
    %v4900 = vmax.f32 %v4892, 0.0
    %v4901 = vmax.f32 %v4893, 0.0
    %v4902 = vmax.f32 %v4894, 0.0
    %4904 = vrot.lane.b32.xlu0 %v4895, 96
    %v4905 = vpop.permute.xlu0 %4904
    %v4907 = vmax.f32 %v4895, %v4905
    %4909 = vrot.lane.b32.xlu0 %v4907, 127
    %v4910 = vpop.permute.xlu0 %4909
    %v4912 = vmax.f32 %v4907, %v4910
    %s4913 = scalar_lea.vmem [#allocation2], 32
    %4914 = vst.msk [vmem:[%s4913] sm:$0x3f] %vm719, %v4912
    %4916 = vrot.lane.b32.xlu0 %v4912, 96
    %v4917 = vpop.permute.xlu0 %4916
    %4919 = vst.msk [vmem:[%s4913] sm:$0x3f] %vm725, %v4917
    %4921 = vrot.lane.b32.xlu0 %v4896, 96
    %v4922 = vpop.permute.xlu0 %4921
    %v4924 = vmax.f32 %v4896, %v4922
    %4926 = vrot.lane.b32.xlu0 %v4924, 127
    %v4927 = vpop.permute.xlu0 %4926
    %v4929 = vmax.f32 %v4924, %v4927
    %4931 = vrot.lane.b32.xlu0 %v4929, 64
    %v4932 = vpop.permute.xlu0 %4931
    %4934 = vst.msk [vmem:[%s4913] sm:$0x3f] %vm741, %v4932
    %4935 = vrot.lane.b32.xlu0 %v4929, 32
    %v4936 = vpop.permute.xlu0 %4935
    %4938 = vst.msk [vmem:[%s4913] sm:$0x3f] %vm746, %v4936
    %4940 = vrot.lane.b32.xlu0 %v4897, 96
    %v4941 = vpop.permute.xlu0 %4940
    %v4943 = vmax.f32 %v4897, %v4941
    %4945 = vrot.lane.b32.xlu0 %v4943, 127
    %v4946 = vpop.permute.xlu0 %4945
    %v4948 = vmax.f32 %v4943, %v4946
    %4949 = vst.msk [vmem:[%s4913 + $0x8] sm:$0x3f] %vm719, %v4948
    %4951 = vrot.lane.b32.xlu0 %v4948, 96
    %v4952 = vpop.permute.xlu0 %4951
    %4954 = vst.msk [vmem:[%s4913 + $0x8] sm:$0x3f] %vm725, %v4952
    %4956 = vrot.lane.b32.xlu0 %v4898, 96
    %v4957 = vpop.permute.xlu0 %4956
    %v4959 = vmax.f32 %v4898, %v4957
    %4961 = vrot.lane.b32.xlu0 %v4959, 127
    %v4962 = vpop.permute.xlu0 %4961
    %v4964 = vmax.f32 %v4959, %v4962
    %4966 = vrot.lane.b32.xlu0 %v4964, 64
    %v4967 = vpop.permute.xlu0 %4966
    %4969 = vst.msk [vmem:[%s4913 + $0x8] sm:$0x3f] %vm741, %v4967
    %4970 = vrot.lane.b32.xlu0 %v4964, 32
    %v4971 = vpop.permute.xlu0 %4970
    %4973 = vst.msk [vmem:[%s4913 + $0x8] sm:$0x3f] %vm746, %v4971
    %4975 = vrot.lane.b32.xlu0 %v4899, 96
    %v4976 = vpop.permute.xlu0 %4975
    %v4978 = vmax.f32 %v4899, %v4976
    %4980 = vrot.lane.b32.xlu0 %v4978, 127
    %v4981 = vpop.permute.xlu0 %4980
    %v4983 = vmax.f32 %v4978, %v4981
    %4984 = vst.msk [vmem:[%s4913 + $0x10] sm:$0x3f] %vm719, %v4983
    %4986 = vrot.lane.b32.xlu0 %v4983, 96
    %v4987 = vpop.permute.xlu0 %4986
    %4989 = vst.msk [vmem:[%s4913 + $0x10] sm:$0x3f] %vm725, %v4987
    %4991 = vrot.lane.b32.xlu0 %v4900, 96
    %v4992 = vpop.permute.xlu0 %4991
    %v4994 = vmax.f32 %v4900, %v4992
    %4996 = vrot.lane.b32.xlu0 %v4994, 127
    %v4997 = vpop.permute.xlu0 %4996
    %v4999 = vmax.f32 %v4994, %v4997
    %5001 = vrot.lane.b32.xlu0 %v4999, 64
    %v5002 = vpop.permute.xlu0 %5001
    %5004 = vst.msk [vmem:[%s4913 + $0x10] sm:$0x3f] %vm741, %v5002
    %5005 = vrot.lane.b32.xlu0 %v4999, 32
    %v5006 = vpop.permute.xlu0 %5005
    %5008 = vst.msk [vmem:[%s4913 + $0x10] sm:$0x3f] %vm746, %v5006
    %5010 = vrot.lane.b32.xlu0 %v4901, 96
    %v5011 = vpop.permute.xlu0 %5010
    %v5013 = vmax.f32 %v4901, %v5011
    %5015 = vrot.lane.b32.xlu0 %v5013, 127
    %v5016 = vpop.permute.xlu0 %5015
    %v5018 = vmax.f32 %v5013, %v5016
    %5019 = vst.msk [vmem:[%s4913 + $0x18] sm:$0x3f] %vm719, %v5018
    %5021 = vrot.lane.b32.xlu0 %v5018, 96
    %v5022 = vpop.permute.xlu0 %5021
    %5024 = vst.msk [vmem:[%s4913 + $0x18] sm:$0x3f] %vm725, %v5022
    %5026 = vrot.lane.b32.xlu0 %v4902, 96
    %v5027 = vpop.permute.xlu0 %5026
    %v5029 = vmax.f32 %v4902, %v5027
    %5031 = vrot.lane.b32.xlu0 %v5029, 127
    %v5032 = vpop.permute.xlu0 %5031
    %v5034 = vmax.f32 %v5029, %v5032
    %5036 = vrot.lane.b32.xlu0 %v5034, 64
    %v5037 = vpop.permute.xlu0 %5036
    %5039 = vst.msk [vmem:[%s4913 + $0x18] sm:$0x3f] %vm741, %v5037
    %v5040 = vld [vmem:[%s4913] sm:$0x3f]
    %v5041 = vld [vmem:[%s4913 + $0x8] sm:$0x3f]
    %v5042 = vld [vmem:[%s4913 + $0x10] sm:$0x3f]
    %v5043 = vld [vmem:[%s4913 + $0x18] sm:$0x3f]
    %v5044 = vld [vmem:[%s3] sm:$0xff]
    %v5045 = vld [vmem:[%s3 + $0x8] sm:$0xff]
    %v5046 = vld [vmem:[%s855] sm:$0xff]
    %v5047 = vld [vmem:[%s855 + $0x8] sm:$0xff]
    %5052 = vrot.lane.b32.xlu0 %v5040, 126
    %v5053 = vpop.permute.xlu0 %5052
    %5054 = vrot.lane.b32.xlu0 %v5041, 126
    %v5055 = vpop.permute.xlu0 %5054
    %5056 = vrot.lane.b32.xlu0 %v5042, 126
    %v5057 = vpop.permute.xlu0 %5056
    %5058 = vrot.lane.b32.xlu0 %v5043, 126
    %v5059 = vpop.permute.xlu0 %5058
    %v5060 = vsel %vm225, %v5053, %v5055
    %v5061 = vsel %vm225, %v5055, %v5057
    %v5062 = vsel %vm225, %v5057, %v5059
    %v5064 = vsel %vm873, %v5046, 0
    %v5067 = vsel %vm873, %v5047, 0
    %v5069 = vsel %vm880, %v5060, 0
    %v5071 = vsel %vm880, %v5061, 0
    %v5073 = vsel %vm880, %v5062, 0
    %v5075 = vsel %vm880, %v5059, 0
    %5077 = vmatprep.subr.mxu0 %v5071
    %5078 = vmatpush1.msra.mxu0 %v5069
    %5079 = vmatprep.subr.mxu0 0.0
    %5080 = vmatpush1.msra.mxu0 0.0
    %5081 = vmatprep.subr.mxu0 0.0
    %5082 = vmatpush1.msra.mxu0 0.0
    %5083 = vmatprep.subr.mxu0 0.0
    %5084 = vmatpush1.msra.mxu0 0.0
    %5085 = vmatprep.subr.mxu0 0.0
    %5086 = vmatpush1.msra.mxu0 0.0
    %5087 = vmatprep.subr.mxu0 0.0
    %5088 = vmatpush1.msra.mxu0 0.0
    %5089 = vmatprep.subr.mxu0 0.0
    %5090 = vmatpush1.msra.mxu0 0.0
    %5091 = vmatprep.subr.mxu0 0.0
    %5092 = vmatpush1.msra.mxu0 0.0
    %5093 = vmatprep.subr.mxu0 0.0
    %5094 = vmatpush1.msra.mxu0 0.0
    %5095 = vmatprep.subr.mxu0 0.0
    %5096 = vmatpush1.msra.mxu0 0.0
    %5097 = vmatprep.subr.mxu0 0.0
    %5098 = vmatpush1.msra.mxu0 0.0
    %5099 = vmatprep.subr.mxu0 0.0
    %5100 = vmatpush1.msra.mxu0 0.0
    %5101 = vmatprep.subr.mxu0 0.0
    %5102 = vmatpush1.msra.mxu0 0.0
    %5103 = vmatprep.subr.mxu0 0.0
    %5104 = vmatpush1.msra.mxu0 0.0
    %5105 = vmatprep.subr.mxu0 0.0
    %5106 = vmatpush1.msra.mxu0 0.0
    %5107 = vmatprep.subr.mxu0 0.0
    %5108 = vmatpush1.msra.mxu0 0.0
    %5109 = vmatprep.subr.mxu0 0.0
    %5110 = vmatpush1.msra.mxu0 0.0
    %5111 = vmatprep.subr.mxu0 0.0
    %5112 = vmatpush1.msra.mxu0 0.0
    %5113 = vmatprep.subr.mxu0 0.0
    %5114 = vmatpush1.msra.mxu0 0.0
    %5115 = vmatprep.subr.mxu0 0.0
    %5116 = vmatpush1.msra.mxu0 0.0
    %5117 = vmatprep.subr.mxu0 0.0
    %5118 = vmatpush1.msra.mxu0 0.0
    %5119 = vmatprep.subr.mxu0 0.0
    %5120 = vmatpush1.msra.mxu0 0.0
    %5121 = vmatprep.subr.mxu0 0.0
    %5122 = vmatpush1.msra.mxu0 0.0
    %5123 = vmatprep.subr.mxu0 0.0
    %5124 = vmatpush1.msra.mxu0 0.0
    %5125 = vmatprep.subr.mxu0 0.0
    %5126 = vmatpush1.msra.mxu0 0.0
    %5127 = vmatprep.subr.mxu0 0.0
    %5128 = vmatpush1.msra.mxu0 0.0
    %5129 = vmatprep.subr.mxu0 0.0
    %5130 = vmatpush1.msra.mxu0 0.0
    %5131 = vmatprep.subr.mxu0 0.0
    %5132 = vmatpush1.msra.mxu0 0.0
    %5133 = vmatprep.subr.mxu0 0.0
    %5134 = vmatpush1.msra.mxu0 0.0
    %5135 = vmatprep.subr.mxu0 0.0
    %5136 = vmatpush1.msra.mxu0 0.0
    %5137 = vmatprep.subr.mxu0 0.0
    %5138 = vmatpush1.msra.mxu0 0.0
    %5139 = vmatprep.subr.mxu0 0.0
    %5140 = vmatpush1.msra.mxu0 0.0
    %5141 = vmatprep.mubr.f32.mxu0 0.0
    %5142 = vmatmul.mubr.f32.gmra.mrb[0].mxu0 %v5064
    %v5143 = vpop.f32.mrb[0].mxu0
    %v5144 = vadd.f32 0.0, %v5143
    %v5145 = vpop.f32.mrb[0].mxu0
    %v5146 = vadd.f32 0.0, %v5145
    %5147 = vmatprep.mubr.f32.mxu0 0.0
    %5148 = vmatmul.mubr.f32.gmra.mrb[0].mxu0 %v5067
    %v5149 = vpop.f32.mrb[0].mxu0
    %v5150 = vadd.f32 0.0, %v5149
    %v5151 = vpop.f32.mrb[0].mxu0
    %v5152 = vadd.f32 0.0, %v5151
    %5153 = vdwg.mxu0
    %5154 = vmatprep.subr.mxu0 %v5075
    %5155 = vmatpush1.msra.mxu0 %v5073
    %5156 = vmatprep.subr.mxu0 0.0
    %5157 = vmatpush1.msra.mxu0 0.0
    %5158 = vmatprep.subr.mxu0 0.0
    %5159 = vmatpush1.msra.mxu0 0.0
    %5160 = vmatprep.subr.mxu0 0.0
    %5161 = vmatpush1.msra.mxu0 0.0
    %5162 = vmatprep.subr.mxu0 0.0
    %5163 = vmatpush1.msra.mxu0 0.0
    %5164 = vmatprep.subr.mxu0 0.0
    %5165 = vmatpush1.msra.mxu0 0.0
    %5166 = vmatprep.subr.mxu0 0.0
    %5167 = vmatpush1.msra.mxu0 0.0
    %5168 = vmatprep.subr.mxu0 0.0
    %5169 = vmatpush1.msra.mxu0 0.0
    %5170 = vmatprep.subr.mxu0 0.0
    %5171 = vmatpush1.msra.mxu0 0.0
    %5172 = vmatprep.subr.mxu0 0.0
    %5173 = vmatpush1.msra.mxu0 0.0
    %5174 = vmatprep.subr.mxu0 0.0
    %5175 = vmatpush1.msra.mxu0 0.0
    %5176 = vmatprep.subr.mxu0 0.0
    %5177 = vmatpush1.msra.mxu0 0.0
    %5178 = vmatprep.subr.mxu0 0.0
    %5179 = vmatpush1.msra.mxu0 0.0
    %5180 = vmatprep.subr.mxu0 0.0
    %5181 = vmatpush1.msra.mxu0 0.0
    %5182 = vmatprep.subr.mxu0 0.0
    %5183 = vmatpush1.msra.mxu0 0.0
    %5184 = vmatprep.subr.mxu0 0.0
    %5185 = vmatpush1.msra.mxu0 0.0
    %5186 = vmatprep.subr.mxu0 0.0
    %5187 = vmatpush1.msra.mxu0 0.0
    %5188 = vmatprep.subr.mxu0 0.0
    %5189 = vmatpush1.msra.mxu0 0.0
    %5190 = vmatprep.subr.mxu0 0.0
    %5191 = vmatpush1.msra.mxu0 0.0
    %5192 = vmatprep.subr.mxu0 0.0
    %5193 = vmatpush1.msra.mxu0 0.0
    %5194 = vmatprep.subr.mxu0 0.0
    %5195 = vmatpush1.msra.mxu0 0.0
    %5196 = vmatprep.subr.mxu0 0.0
    %5197 = vmatpush1.msra.mxu0 0.0
    %5198 = vmatprep.subr.mxu0 0.0
    %5199 = vmatpush1.msra.mxu0 0.0
    %5200 = vmatprep.subr.mxu0 0.0
    %5201 = vmatpush1.msra.mxu0 0.0
    %5202 = vmatprep.subr.mxu0 0.0
    %5203 = vmatpush1.msra.mxu0 0.0
    %5204 = vmatprep.subr.mxu0 0.0
    %5205 = vmatpush1.msra.mxu0 0.0
    %5206 = vmatprep.subr.mxu0 0.0
    %5207 = vmatpush1.msra.mxu0 0.0
    %5208 = vmatprep.subr.mxu0 0.0
    %5209 = vmatpush1.msra.mxu0 0.0
    %5210 = vmatprep.subr.mxu0 0.0
    %5211 = vmatpush1.msra.mxu0 0.0
    %5212 = vmatprep.subr.mxu0 0.0
    %5213 = vmatpush1.msra.mxu0 0.0
    %5214 = vmatprep.subr.mxu0 0.0
    %5215 = vmatpush1.msra.mxu0 0.0
    %5216 = vmatprep.subr.mxu0 0.0
    %5217 = vmatpush1.msra.mxu0 0.0
    %5218 = vmatprep.mubr.f32.mxu0 0.0
    %5219 = vmatmul.mubr.f32.gmra.mrb[0].mxu0 %v5064
    %v5220 = vpop.f32.mrb[0].mxu0
    %v5221 = vadd.f32 0.0, %v5220
    %v5222 = vpop.f32.mrb[0].mxu0
    %5223 = vmatprep.mubr.f32.mxu0 0.0
    %5224 = vmatmul.mubr.f32.gmra.mrb[0].mxu0 %v5067
    %v5225 = vpop.f32.mrb[0].mxu0
    %v5226 = vadd.f32 0.0, %v5225
    %v5227 = vpop.f32.mrb[0].mxu0
    %5228 = vdwg.mxu0
    %v5230 = vsel %vm873, %v5044, 0
    %v5233 = vsel %vm873, %v5045, 0
    %v5235 = vsel %vm880, %v5040, 0
    %v5237 = vsel %vm880, %v5041, 0
    %v5239 = vsel %vm880, %v5042, 0
    %v5241 = vsel %vm880, %v5043, 0
    %5243 = vmatprep.subr.mxu0 %v5237
    %5244 = vmatpush1.msra.mxu0 %v5235
    %5245 = vmatprep.subr.mxu0 0.0
    %5246 = vmatpush1.msra.mxu0 0.0
    %5247 = vmatprep.subr.mxu0 0.0
    %5248 = vmatpush1.msra.mxu0 0.0
    %5249 = vmatprep.subr.mxu0 0.0
    %5250 = vmatpush1.msra.mxu0 0.0
    %5251 = vmatprep.subr.mxu0 0.0
    %5252 = vmatpush1.msra.mxu0 0.0
    %5253 = vmatprep.subr.mxu0 0.0
    %5254 = vmatpush1.msra.mxu0 0.0
    %5255 = vmatprep.subr.mxu0 0.0
    %5256 = vmatpush1.msra.mxu0 0.0
    %5257 = vmatprep.subr.mxu0 0.0
    %5258 = vmatpush1.msra.mxu0 0.0
    %5259 = vmatprep.subr.mxu0 0.0
    %5260 = vmatpush1.msra.mxu0 0.0
    %5261 = vmatprep.subr.mxu0 0.0
    %5262 = vmatpush1.msra.mxu0 0.0
    %5263 = vmatprep.subr.mxu0 0.0
    %5264 = vmatpush1.msra.mxu0 0.0
    %5265 = vmatprep.subr.mxu0 0.0
    %5266 = vmatpush1.msra.mxu0 0.0
    %5267 = vmatprep.subr.mxu0 0.0
    %5268 = vmatpush1.msra.mxu0 0.0
    %5269 = vmatprep.subr.mxu0 0.0
    %5270 = vmatpush1.msra.mxu0 0.0
    %5271 = vmatprep.subr.mxu0 0.0
    %5272 = vmatpush1.msra.mxu0 0.0
    %5273 = vmatprep.subr.mxu0 0.0
    %5274 = vmatpush1.msra.mxu0 0.0
    %5275 = vmatprep.subr.mxu0 0.0
    %5276 = vmatpush1.msra.mxu0 0.0
    %5277 = vmatprep.subr.mxu0 0.0
    %5278 = vmatpush1.msra.mxu0 0.0
    %5279 = vmatprep.subr.mxu0 0.0
    %5280 = vmatpush1.msra.mxu0 0.0
    %5281 = vmatprep.subr.mxu0 0.0
    %5282 = vmatpush1.msra.mxu0 0.0
    %5283 = vmatprep.subr.mxu0 0.0
    %5284 = vmatpush1.msra.mxu0 0.0
    %5285 = vmatprep.subr.mxu0 0.0
    %5286 = vmatpush1.msra.mxu0 0.0
    %5287 = vmatprep.subr.mxu0 0.0
    %5288 = vmatpush1.msra.mxu0 0.0
    %5289 = vmatprep.subr.mxu0 0.0
    %5290 = vmatpush1.msra.mxu0 0.0
    %5291 = vmatprep.subr.mxu0 0.0
    %5292 = vmatpush1.msra.mxu0 0.0
    %5293 = vmatprep.subr.mxu0 0.0
    %5294 = vmatpush1.msra.mxu0 0.0
    %5295 = vmatprep.subr.mxu0 0.0
    %5296 = vmatpush1.msra.mxu0 0.0
    %5297 = vmatprep.subr.mxu0 0.0
    %5298 = vmatpush1.msra.mxu0 0.0
    %5299 = vmatprep.subr.mxu0 0.0
    %5300 = vmatpush1.msra.mxu0 0.0
    %5301 = vmatprep.subr.mxu0 0.0
    %5302 = vmatpush1.msra.mxu0 0.0
    %5303 = vmatprep.subr.mxu0 0.0
    %5304 = vmatpush1.msra.mxu0 0.0
    %5305 = vmatprep.subr.mxu0 0.0
    %5306 = vmatpush1.msra.mxu0 0.0
    %5307 = vmatprep.mubr.f32.mxu0 0.0
    %5308 = vmatmul.mubr.f32.gmra.mrb[0].mxu0 %v5230
    %v5309 = vpop.f32.mrb[0].mxu0
    %v5310 = vadd.f32 %v5144, %v5309
    %v5311 = vpop.f32.mrb[0].mxu0
    %v5312 = vadd.f32 %v5146, %v5311
    %5313 = vmatprep.mubr.f32.mxu0 0.0
    %5314 = vmatmul.mubr.f32.gmra.mrb[0].mxu0 %v5233
    %v5315 = vpop.f32.mrb[0].mxu0
    %v5316 = vadd.f32 %v5150, %v5315
    %v5317 = vpop.f32.mrb[0].mxu0
    %v5318 = vadd.f32 %v5152, %v5317
    %5319 = vdwg.mxu0
    %5320 = vmatprep.subr.mxu0 %v5241
    %5321 = vmatpush1.msra.mxu0 %v5239
    %5322 = vmatprep.subr.mxu0 0.0
    %5323 = vmatpush1.msra.mxu0 0.0
    %5324 = vmatprep.subr.mxu0 0.0
    %5325 = vmatpush1.msra.mxu0 0.0
    %5326 = vmatprep.subr.mxu0 0.0
    %5327 = vmatpush1.msra.mxu0 0.0
    %5328 = vmatprep.subr.mxu0 0.0
    %5329 = vmatpush1.msra.mxu0 0.0
    %5330 = vmatprep.subr.mxu0 0.0
    %5331 = vmatpush1.msra.mxu0 0.0
    %5332 = vmatprep.subr.mxu0 0.0
    %5333 = vmatpush1.msra.mxu0 0.0
    %5334 = vmatprep.subr.mxu0 0.0
    %5335 = vmatpush1.msra.mxu0 0.0
    %5336 = vmatprep.subr.mxu0 0.0
    %5337 = vmatpush1.msra.mxu0 0.0
    %5338 = vmatprep.subr.mxu0 0.0
    %5339 = vmatpush1.msra.mxu0 0.0
    %5340 = vmatprep.subr.mxu0 0.0
    %5341 = vmatpush1.msra.mxu0 0.0
    %5342 = vmatprep.subr.mxu0 0.0
    %5343 = vmatpush1.msra.mxu0 0.0
    %5344 = vmatprep.subr.mxu0 0.0
    %5345 = vmatpush1.msra.mxu0 0.0
    %5346 = vmatprep.subr.mxu0 0.0
    %5347 = vmatpush1.msra.mxu0 0.0
    %5348 = vmatprep.subr.mxu0 0.0
    %5349 = vmatpush1.msra.mxu0 0.0
    %5350 = vmatprep.subr.mxu0 0.0
    %5351 = vmatpush1.msra.mxu0 0.0
    %5352 = vmatprep.subr.mxu0 0.0
    %5353 = vmatpush1.msra.mxu0 0.0
    %5354 = vmatprep.subr.mxu0 0.0
    %5355 = vmatpush1.msra.mxu0 0.0
    %5356 = vmatprep.subr.mxu0 0.0
    %5357 = vmatpush1.msra.mxu0 0.0
    %5358 = vmatprep.subr.mxu0 0.0
    %5359 = vmatpush1.msra.mxu0 0.0
    %5360 = vmatprep.subr.mxu0 0.0
    %5361 = vmatpush1.msra.mxu0 0.0
    %5362 = vmatprep.subr.mxu0 0.0
    %5363 = vmatpush1.msra.mxu0 0.0
    %5364 = vmatprep.subr.mxu0 0.0
    %5365 = vmatpush1.msra.mxu0 0.0
    %5366 = vmatprep.subr.mxu0 0.0
    %5367 = vmatpush1.msra.mxu0 0.0
    %5368 = vmatprep.subr.mxu0 0.0
    %5369 = vmatpush1.msra.mxu0 0.0
    %5370 = vmatprep.subr.mxu0 0.0
    %5371 = vmatpush1.msra.mxu0 0.0
    %5372 = vmatprep.subr.mxu0 0.0
    %5373 = vmatpush1.msra.mxu0 0.0
    %5374 = vmatprep.subr.mxu0 0.0
    %5375 = vmatpush1.msra.mxu0 0.0
    %5376 = vmatprep.subr.mxu0 0.0
    %5377 = vmatpush1.msra.mxu0 0.0
    %5378 = vmatprep.subr.mxu0 0.0
    %5379 = vmatpush1.msra.mxu0 0.0
    %5380 = vmatprep.subr.mxu0 0.0
    %5381 = vmatpush1.msra.mxu0 0.0
    %5382 = vmatprep.subr.mxu0 0.0
    %5383 = vmatpush1.msra.mxu0 0.0
    %5384 = vmatprep.mubr.f32.mxu0 0.0
    %5385 = vmatmul.mubr.f32.gmra.mrb[0].mxu0 %v5230
    %v5386 = vpop.f32.mrb[0].mxu0
    %v5387 = vadd.f32 %v5221, %v5386
    %v5388 = vpop.f32.mrb[0].mxu0
    %5389 = vmatprep.mubr.f32.mxu0 0.0
    %5390 = vmatmul.mubr.f32.gmra.mrb[0].mxu0 %v5233
    %v5391 = vpop.f32.mrb[0].mxu0
    %v5392 = vadd.f32 %v5226, %v5391
    %v5393 = vpop.f32.mrb[0].mxu0
    %5394 = vdwg.mxu0
    %v5395 = vld [vmem:[%s1207] sm:$0xff]
    %v5396 = vld [vmem:[%s1207 + $0x8] sm:$0xff]
    %5397 = vrot.lane.b32.xlu0 %v5040, 124
    %v5398 = vpop.permute.xlu0 %5397
    %5399 = vrot.lane.b32.xlu0 %v5041, 124
    %v5400 = vpop.permute.xlu0 %5399
    %5401 = vrot.lane.b32.xlu0 %v5042, 124
    %v5402 = vpop.permute.xlu0 %5401
    %5403 = vrot.lane.b32.xlu0 %v5043, 124
    %v5404 = vpop.permute.xlu0 %5403
    %v5405 = vsel %vm1218, %v5398, %v5400
    %v5406 = vsel %vm1218, %v5400, %v5402
    %v5407 = vsel %vm1218, %v5402, %v5404
    %v5409 = vsel %vm873, %v5395, 0
    %v5412 = vsel %vm873, %v5396, 0
    %v5414 = vsel %vm880, %v5405, 0
    %v5416 = vsel %vm880, %v5406, 0
    %v5418 = vsel %vm880, %v5407, 0
    %v5420 = vsel %vm880, %v5404, 0
    %5422 = vmatprep.subr.mxu0 %v5416
    %5423 = vmatpush1.msra.mxu0 %v5414
    %5424 = vmatprep.subr.mxu0 0.0
    %5425 = vmatpush1.msra.mxu0 0.0
    %5426 = vmatprep.subr.mxu0 0.0
    %5427 = vmatpush1.msra.mxu0 0.0
    %5428 = vmatprep.subr.mxu0 0.0
    %5429 = vmatpush1.msra.mxu0 0.0
    %5430 = vmatprep.subr.mxu0 0.0
    %5431 = vmatpush1.msra.mxu0 0.0
    %5432 = vmatprep.subr.mxu0 0.0
    %5433 = vmatpush1.msra.mxu0 0.0
    %5434 = vmatprep.subr.mxu0 0.0
    %5435 = vmatpush1.msra.mxu0 0.0
    %5436 = vmatprep.subr.mxu0 0.0
    %5437 = vmatpush1.msra.mxu0 0.0
    %5438 = vmatprep.subr.mxu0 0.0
    %5439 = vmatpush1.msra.mxu0 0.0
    %5440 = vmatprep.subr.mxu0 0.0
    %5441 = vmatpush1.msra.mxu0 0.0
    %5442 = vmatprep.subr.mxu0 0.0
    %5443 = vmatpush1.msra.mxu0 0.0
    %5444 = vmatprep.subr.mxu0 0.0
    %5445 = vmatpush1.msra.mxu0 0.0
    %5446 = vmatprep.subr.mxu0 0.0
    %5447 = vmatpush1.msra.mxu0 0.0
    %5448 = vmatprep.subr.mxu0 0.0
    %5449 = vmatpush1.msra.mxu0 0.0
    %5450 = vmatprep.subr.mxu0 0.0
    %5451 = vmatpush1.msra.mxu0 0.0
    %5452 = vmatprep.subr.mxu0 0.0
    %5453 = vmatpush1.msra.mxu0 0.0
    %5454 = vmatprep.subr.mxu0 0.0
    %5455 = vmatpush1.msra.mxu0 0.0
    %5456 = vmatprep.subr.mxu0 0.0
    %5457 = vmatpush1.msra.mxu0 0.0
    %5458 = vmatprep.subr.mxu0 0.0
    %5459 = vmatpush1.msra.mxu0 0.0
    %5460 = vmatprep.subr.mxu0 0.0
    %5461 = vmatpush1.msra.mxu0 0.0
    %5462 = vmatprep.subr.mxu0 0.0
    %5463 = vmatpush1.msra.mxu0 0.0
    %5464 = vmatprep.subr.mxu0 0.0
    %5465 = vmatpush1.msra.mxu0 0.0
    %5466 = vmatprep.subr.mxu0 0.0
    %5467 = vmatpush1.msra.mxu0 0.0
    %5468 = vmatprep.subr.mxu0 0.0
    %5469 = vmatpush1.msra.mxu0 0.0
    %5470 = vmatprep.subr.mxu0 0.0
    %5471 = vmatpush1.msra.mxu0 0.0
    %5472 = vmatprep.subr.mxu0 0.0
    %5473 = vmatpush1.msra.mxu0 0.0
    %5474 = vmatprep.subr.mxu0 0.0
    %5475 = vmatpush1.msra.mxu0 0.0
    %5476 = vmatprep.subr.mxu0 0.0
    %5477 = vmatpush1.msra.mxu0 0.0
    %5478 = vmatprep.subr.mxu0 0.0
    %5479 = vmatpush1.msra.mxu0 0.0
    %5480 = vmatprep.subr.mxu0 0.0
    %5481 = vmatpush1.msra.mxu0 0.0
    %5482 = vmatprep.subr.mxu0 0.0
    %5483 = vmatpush1.msra.mxu0 0.0
    %5484 = vmatprep.subr.mxu0 0.0
    %5485 = vmatpush1.msra.mxu0 0.0
    %5486 = vmatprep.mubr.f32.mxu0 0.0
    %5487 = vmatmul.mubr.f32.gmra.mrb[0].mxu0 %v5409
    %v5488 = vpop.f32.mrb[0].mxu0
    %v5489 = vadd.f32 0.0, %v5488
    %v5490 = vpop.f32.mrb[0].mxu0
    %v5491 = vadd.f32 0.0, %v5490
    %5492 = vmatprep.mubr.f32.mxu0 0.0
    %5493 = vmatmul.mubr.f32.gmra.mrb[0].mxu0 %v5412
    %v5494 = vpop.f32.mrb[0].mxu0
    %v5495 = vadd.f32 0.0, %v5494
    %v5496 = vpop.f32.mrb[0].mxu0
    %v5497 = vadd.f32 0.0, %v5496
    %5498 = vdwg.mxu0
    %5499 = vmatprep.subr.mxu0 %v5420
    %5500 = vmatpush1.msra.mxu0 %v5418
    %5501 = vmatprep.subr.mxu0 0.0
    %5502 = vmatpush1.msra.mxu0 0.0
    %5503 = vmatprep.subr.mxu0 0.0
    %5504 = vmatpush1.msra.mxu0 0.0
    %5505 = vmatprep.subr.mxu0 0.0
    %5506 = vmatpush1.msra.mxu0 0.0
    %5507 = vmatprep.subr.mxu0 0.0
    %5508 = vmatpush1.msra.mxu0 0.0
    %5509 = vmatprep.subr.mxu0 0.0
    %5510 = vmatpush1.msra.mxu0 0.0
    %5511 = vmatprep.subr.mxu0 0.0
    %5512 = vmatpush1.msra.mxu0 0.0
    %5513 = vmatprep.subr.mxu0 0.0
    %5514 = vmatpush1.msra.mxu0 0.0
    %5515 = vmatprep.subr.mxu0 0.0
    %5516 = vmatpush1.msra.mxu0 0.0
    %5517 = vmatprep.subr.mxu0 0.0
    %5518 = vmatpush1.msra.mxu0 0.0
    %5519 = vmatprep.subr.mxu0 0.0
    %5520 = vmatpush1.msra.mxu0 0.0
    %5521 = vmatprep.subr.mxu0 0.0
    %5522 = vmatpush1.msra.mxu0 0.0
    %5523 = vmatprep.subr.mxu0 0.0
    %5524 = vmatpush1.msra.mxu0 0.0
    %5525 = vmatprep.subr.mxu0 0.0
    %5526 = vmatpush1.msra.mxu0 0.0
    %5527 = vmatprep.subr.mxu0 0.0
    %5528 = vmatpush1.msra.mxu0 0.0
    %5529 = vmatprep.subr.mxu0 0.0
    %5530 = vmatpush1.msra.mxu0 0.0
    %5531 = vmatprep.subr.mxu0 0.0
    %5532 = vmatpush1.msra.mxu0 0.0
    %5533 = vmatprep.subr.mxu0 0.0
    %5534 = vmatpush1.msra.mxu0 0.0
    %5535 = vmatprep.subr.mxu0 0.0
    %5536 = vmatpush1.msra.mxu0 0.0
    %5537 = vmatprep.subr.mxu0 0.0
    %5538 = vmatpush1.msra.mxu0 0.0
    %5539 = vmatprep.subr.mxu0 0.0
    %5540 = vmatpush1.msra.mxu0 0.0
    %5541 = vmatprep.subr.mxu0 0.0
    %5542 = vmatpush1.msra.mxu0 0.0
    %5543 = vmatprep.subr.mxu0 0.0
    %5544 = vmatpush1.msra.mxu0 0.0
    %5545 = vmatprep.subr.mxu0 0.0
    %5546 = vmatpush1.msra.mxu0 0.0
    %5547 = vmatprep.subr.mxu0 0.0
    %5548 = vmatpush1.msra.mxu0 0.0
    %5549 = vmatprep.subr.mxu0 0.0
    %5550 = vmatpush1.msra.mxu0 0.0
    %5551 = vmatprep.subr.mxu0 0.0
    %5552 = vmatpush1.msra.mxu0 0.0
    %5553 = vmatprep.subr.mxu0 0.0
    %5554 = vmatpush1.msra.mxu0 0.0
    %5555 = vmatprep.subr.mxu0 0.0
    %5556 = vmatpush1.msra.mxu0 0.0
    %5557 = vmatprep.subr.mxu0 0.0
    %5558 = vmatpush1.msra.mxu0 0.0
    %5559 = vmatprep.subr.mxu0 0.0
    %5560 = vmatpush1.msra.mxu0 0.0
    %5561 = vmatprep.subr.mxu0 0.0
    %5562 = vmatpush1.msra.mxu0 0.0
    %5563 = vmatprep.mubr.f32.mxu0 0.0
    %5564 = vmatmul.mubr.f32.gmra.mrb[0].mxu0 %v5409
    %v5565 = vpop.f32.mrb[0].mxu0
    %v5566 = vadd.f32 0.0, %v5565
    %v5567 = vpop.f32.mrb[0].mxu0
    %5568 = vmatprep.mubr.f32.mxu0 0.0
    %5569 = vmatmul.mubr.f32.gmra.mrb[0].mxu0 %v5412
    %v5570 = vpop.f32.mrb[0].mxu0
    %v5571 = vadd.f32 0.0, %v5570
    %v5572 = vpop.f32.mrb[0].mxu0
    %5573 = vdwg.mxu0
    %v5574 = vadd.f32 %v5310, %v5489
    %v5575 = vadd.f32 %v5312, %v5491
    %v5576 = vadd.f32 %v5387, %v5566
    %v5577 = vadd.f32 %v5316, %v5495
    %v5578 = vadd.f32 %v5318, %v5497
    %v5579 = vadd.f32 %v5392, %v5571
    %v5580 = vld [vmem:[%s1394] sm:$0xff]
    %v5581 = vld [vmem:[%s1394 + $0x8] sm:$0xff]
    %5582 = vrot.lane.b32.xlu0 %v5040, 96
    %v5583 = vpop.permute.xlu0 %5582
    %5584 = vrot.lane.b32.xlu0 %v5041, 96
    %v5585 = vpop.permute.xlu0 %5584
    %5586 = vrot.lane.b32.xlu0 %v5042, 96
    %v5587 = vpop.permute.xlu0 %5586
    %5588 = vrot.lane.b32.xlu0 %v5043, 96
    %v5589 = vpop.permute.xlu0 %5588
    %v5590 = vsel %vm288, %v5583, %v5585
    %v5591 = vsel %vm288, %v5585, %v5587
    %v5592 = vsel %vm288, %v5587, %v5589
    %v5594 = vsel %vm873, %v5580, 0
    %v5597 = vsel %vm873, %v5581, 0
    %v5599 = vsel %vm880, %v5590, 0
    %v5601 = vsel %vm880, %v5591, 0
    %v5603 = vsel %vm880, %v5592, 0
    %v5605 = vsel %vm880, %v5589, 0
    %5607 = vmatprep.subr.mxu0 %v5601
    %5608 = vmatpush1.msra.mxu0 %v5599
    %5609 = vmatprep.subr.mxu0 0.0
    %5610 = vmatpush1.msra.mxu0 0.0
    %5611 = vmatprep.subr.mxu0 0.0
    %5612 = vmatpush1.msra.mxu0 0.0
    %5613 = vmatprep.subr.mxu0 0.0
    %5614 = vmatpush1.msra.mxu0 0.0
    %5615 = vmatprep.subr.mxu0 0.0
    %5616 = vmatpush1.msra.mxu0 0.0
    %5617 = vmatprep.subr.mxu0 0.0
    %5618 = vmatpush1.msra.mxu0 0.0
    %5619 = vmatprep.subr.mxu0 0.0
    %5620 = vmatpush1.msra.mxu0 0.0
    %5621 = vmatprep.subr.mxu0 0.0
    %5622 = vmatpush1.msra.mxu0 0.0
    %5623 = vmatprep.subr.mxu0 0.0
    %5624 = vmatpush1.msra.mxu0 0.0
    %5625 = vmatprep.subr.mxu0 0.0
    %5626 = vmatpush1.msra.mxu0 0.0
    %5627 = vmatprep.subr.mxu0 0.0
    %5628 = vmatpush1.msra.mxu0 0.0
    %5629 = vmatprep.subr.mxu0 0.0
    %5630 = vmatpush1.msra.mxu0 0.0
    %5631 = vmatprep.subr.mxu0 0.0
    %5632 = vmatpush1.msra.mxu0 0.0
    %5633 = vmatprep.subr.mxu0 0.0
    %5634 = vmatpush1.msra.mxu0 0.0
    %5635 = vmatprep.subr.mxu0 0.0
    %5636 = vmatpush1.msra.mxu0 0.0
    %5637 = vmatprep.subr.mxu0 0.0
    %5638 = vmatpush1.msra.mxu0 0.0
    %5639 = vmatprep.subr.mxu0 0.0
    %5640 = vmatpush1.msra.mxu0 0.0
    %5641 = vmatprep.subr.mxu0 0.0
    %5642 = vmatpush1.msra.mxu0 0.0
    %5643 = vmatprep.subr.mxu0 0.0
    %5644 = vmatpush1.msra.mxu0 0.0
    %5645 = vmatprep.subr.mxu0 0.0
    %5646 = vmatpush1.msra.mxu0 0.0
    %5647 = vmatprep.subr.mxu0 0.0
    %5648 = vmatpush1.msra.mxu0 0.0
    %5649 = vmatprep.subr.mxu0 0.0
    %5650 = vmatpush1.msra.mxu0 0.0
    %5651 = vmatprep.subr.mxu0 0.0
    %5652 = vmatpush1.msra.mxu0 0.0
    %5653 = vmatprep.subr.mxu0 0.0
    %5654 = vmatpush1.msra.mxu0 0.0
    %5655 = vmatprep.subr.mxu0 0.0
    %5656 = vmatpush1.msra.mxu0 0.0
    %5657 = vmatprep.subr.mxu0 0.0
    %5658 = vmatpush1.msra.mxu0 0.0
    %5659 = vmatprep.subr.mxu0 0.0
    %5660 = vmatpush1.msra.mxu0 0.0
    %5661 = vmatprep.subr.mxu0 0.0
    %5662 = vmatpush1.msra.mxu0 0.0
    %5663 = vmatprep.subr.mxu0 0.0
    %5664 = vmatpush1.msra.mxu0 0.0
    %5665 = vmatprep.subr.mxu0 0.0
    %5666 = vmatpush1.msra.mxu0 0.0
    %5667 = vmatprep.subr.mxu0 0.0
    %5668 = vmatpush1.msra.mxu0 0.0
    %5669 = vmatprep.subr.mxu0 0.0
    %5670 = vmatpush1.msra.mxu0 0.0
    %5671 = vmatprep.mubr.f32.mxu0 0.0
    %5672 = vmatmul.mubr.f32.gmra.mrb[0].mxu0 %v5594
    %v5673 = vpop.f32.mrb[0].mxu0
    %v5674 = vadd.f32 0.0, %v5673
    %v5675 = vpop.f32.mrb[0].mxu0
    %v5676 = vadd.f32 0.0, %v5675
    %5677 = vmatprep.mubr.f32.mxu0 0.0
    %5678 = vmatmul.mubr.f32.gmra.mrb[0].mxu0 %v5597
    %v5679 = vpop.f32.mrb[0].mxu0
    %v5680 = vadd.f32 0.0, %v5679
    %v5681 = vpop.f32.mrb[0].mxu0
    %v5682 = vadd.f32 0.0, %v5681
    %5683 = vdwg.mxu0
    %5684 = vmatprep.subr.mxu0 %v5605
    %5685 = vmatpush1.msra.mxu0 %v5603
    %5686 = vmatprep.subr.mxu0 0.0
    %5687 = vmatpush1.msra.mxu0 0.0
    %5688 = vmatprep.subr.mxu0 0.0
    %5689 = vmatpush1.msra.mxu0 0.0
    %5690 = vmatprep.subr.mxu0 0.0
    %5691 = vmatpush1.msra.mxu0 0.0
    %5692 = vmatprep.subr.mxu0 0.0
    %5693 = vmatpush1.msra.mxu0 0.0
    %5694 = vmatprep.subr.mxu0 0.0
    %5695 = vmatpush1.msra.mxu0 0.0
    %5696 = vmatprep.subr.mxu0 0.0
    %5697 = vmatpush1.msra.mxu0 0.0
    %5698 = vmatprep.subr.mxu0 0.0
    %5699 = vmatpush1.msra.mxu0 0.0
    %5700 = vmatprep.subr.mxu0 0.0
    %5701 = vmatpush1.msra.mxu0 0.0
    %5702 = vmatprep.subr.mxu0 0.0
    %5703 = vmatpush1.msra.mxu0 0.0
    %5704 = vmatprep.subr.mxu0 0.0
    %5705 = vmatpush1.msra.mxu0 0.0
    %5706 = vmatprep.subr.mxu0 0.0
    %5707 = vmatpush1.msra.mxu0 0.0
    %5708 = vmatprep.subr.mxu0 0.0
    %5709 = vmatpush1.msra.mxu0 0.0
    %5710 = vmatprep.subr.mxu0 0.0
    %5711 = vmatpush1.msra.mxu0 0.0
    %5712 = vmatprep.subr.mxu0 0.0
    %5713 = vmatpush1.msra.mxu0 0.0
    %5714 = vmatprep.subr.mxu0 0.0
    %5715 = vmatpush1.msra.mxu0 0.0
    %5716 = vmatprep.subr.mxu0 0.0
    %5717 = vmatpush1.msra.mxu0 0.0
    %5718 = vmatprep.subr.mxu0 0.0
    %5719 = vmatpush1.msra.mxu0 0.0
    %5720 = vmatprep.subr.mxu0 0.0
    %5721 = vmatpush1.msra.mxu0 0.0
    %5722 = vmatprep.subr.mxu0 0.0
    %5723 = vmatpush1.msra.mxu0 0.0
    %5724 = vmatprep.subr.mxu0 0.0
    %5725 = vmatpush1.msra.mxu0 0.0
    %5726 = vmatprep.subr.mxu0 0.0
    %5727 = vmatpush1.msra.mxu0 0.0
    %5728 = vmatprep.subr.mxu0 0.0
    %5729 = vmatpush1.msra.mxu0 0.0
    %5730 = vmatprep.subr.mxu0 0.0
    %5731 = vmatpush1.msra.mxu0 0.0
    %5732 = vmatprep.subr.mxu0 0.0
    %5733 = vmatpush1.msra.mxu0 0.0
    %5734 = vmatprep.subr.mxu0 0.0
    %5735 = vmatpush1.msra.mxu0 0.0
    %5736 = vmatprep.subr.mxu0 0.0
    %5737 = vmatpush1.msra.mxu0 0.0
    %5738 = vmatprep.subr.mxu0 0.0
    %5739 = vmatpush1.msra.mxu0 0.0
    %5740 = vmatprep.subr.mxu0 0.0
    %5741 = vmatpush1.msra.mxu0 0.0
    %5742 = vmatprep.subr.mxu0 0.0
    %5743 = vmatpush1.msra.mxu0 0.0
    %5744 = vmatprep.subr.mxu0 0.0
    %5745 = vmatpush1.msra.mxu0 0.0
    %5746 = vmatprep.subr.mxu0 0.0
    %5747 = vmatpush1.msra.mxu0 0.0
    %5748 = vmatprep.mubr.f32.mxu0 0.0
    %5749 = vmatmul.mubr.f32.gmra.mrb[0].mxu0 %v5594
    %v5750 = vpop.f32.mrb[0].mxu0
    %v5751 = vadd.f32 0.0, %v5750
    %v5752 = vpop.f32.mrb[0].mxu0
    %5753 = vmatprep.mubr.f32.mxu0 0.0
    %5754 = vmatmul.mubr.f32.gmra.mrb[0].mxu0 %v5597
    %v5755 = vpop.f32.mrb[0].mxu0
    %v5756 = vadd.f32 0.0, %v5755
    %v5757 = vpop.f32.mrb[0].mxu0
    %5758 = vdwg.mxu0
    %v5759 = vadd.f32 %v5574, %v5674
    %v5760 = vadd.f32 %v5575, %v5676
    %v5761 = vadd.f32 %v5576, %v5751
    %v5762 = vadd.f32 %v5577, %v5680
    %v5763 = vadd.f32 %v5578, %v5682
    %v5764 = vadd.f32 %v5579, %v5756
    %v5765 = vld [vmem:[%s1580] sm:$0xff]
    %v5766 = vld [vmem:[%s1580 + $0x8] sm:$0xff]
    %5767 = vrot.lane.b32.xlu0 %v5040, 94
    %v5768 = vpop.permute.xlu0 %5767
    %5769 = vrot.lane.b32.xlu0 %v5041, 94
    %v5770 = vpop.permute.xlu0 %5769
    %5771 = vrot.lane.b32.xlu0 %v5042, 94
    %v5772 = vpop.permute.xlu0 %5771
    %5773 = vrot.lane.b32.xlu0 %v5043, 94
    %v5774 = vpop.permute.xlu0 %5773
    %v5775 = vsel %vm414, %v5768, %v5770
    %v5776 = vsel %vm414, %v5770, %v5772
    %v5777 = vsel %vm414, %v5772, %v5774
    %v5779 = vsel %vm873, %v5765, 0
    %v5782 = vsel %vm873, %v5766, 0
    %v5784 = vsel %vm880, %v5775, 0
    %v5786 = vsel %vm880, %v5776, 0
    %v5788 = vsel %vm880, %v5777, 0
    %v5790 = vsel %vm880, %v5774, 0
    %5792 = vmatprep.subr.mxu0 %v5786
    %5793 = vmatpush1.msra.mxu0 %v5784
    %5794 = vmatprep.subr.mxu0 0.0
    %5795 = vmatpush1.msra.mxu0 0.0
    %5796 = vmatprep.subr.mxu0 0.0
    %5797 = vmatpush1.msra.mxu0 0.0
    %5798 = vmatprep.subr.mxu0 0.0
    %5799 = vmatpush1.msra.mxu0 0.0
    %5800 = vmatprep.subr.mxu0 0.0
    %5801 = vmatpush1.msra.mxu0 0.0
    %5802 = vmatprep.subr.mxu0 0.0
    %5803 = vmatpush1.msra.mxu0 0.0
    %5804 = vmatprep.subr.mxu0 0.0
    %5805 = vmatpush1.msra.mxu0 0.0
    %5806 = vmatprep.subr.mxu0 0.0
    %5807 = vmatpush1.msra.mxu0 0.0
    %5808 = vmatprep.subr.mxu0 0.0
    %5809 = vmatpush1.msra.mxu0 0.0
    %5810 = vmatprep.subr.mxu0 0.0
    %5811 = vmatpush1.msra.mxu0 0.0
    %5812 = vmatprep.subr.mxu0 0.0
    %5813 = vmatpush1.msra.mxu0 0.0
    %5814 = vmatprep.subr.mxu0 0.0
    %5815 = vmatpush1.msra.mxu0 0.0
    %5816 = vmatprep.subr.mxu0 0.0
    %5817 = vmatpush1.msra.mxu0 0.0
    %5818 = vmatprep.subr.mxu0 0.0
    %5819 = vmatpush1.msra.mxu0 0.0
    %5820 = vmatprep.subr.mxu0 0.0
    %5821 = vmatpush1.msra.mxu0 0.0
    %5822 = vmatprep.subr.mxu0 0.0
    %5823 = vmatpush1.msra.mxu0 0.0
    %5824 = vmatprep.subr.mxu0 0.0
    %5825 = vmatpush1.msra.mxu0 0.0
    %5826 = vmatprep.subr.mxu0 0.0
    %5827 = vmatpush1.msra.mxu0 0.0
    %5828 = vmatprep.subr.mxu0 0.0
    %5829 = vmatpush1.msra.mxu0 0.0
    %5830 = vmatprep.subr.mxu0 0.0
    %5831 = vmatpush1.msra.mxu0 0.0
    %5832 = vmatprep.subr.mxu0 0.0
    %5833 = vmatpush1.msra.mxu0 0.0
    %5834 = vmatprep.subr.mxu0 0.0
    %5835 = vmatpush1.msra.mxu0 0.0
    %5836 = vmatprep.subr.mxu0 0.0
    %5837 = vmatpush1.msra.mxu0 0.0
    %5838 = vmatprep.subr.mxu0 0.0
    %5839 = vmatpush1.msra.mxu0 0.0
    %5840 = vmatprep.subr.mxu0 0.0
    %5841 = vmatpush1.msra.mxu0 0.0
    %5842 = vmatprep.subr.mxu0 0.0
    %5843 = vmatpush1.msra.mxu0 0.0
    %5844 = vmatprep.subr.mxu0 0.0
    %5845 = vmatpush1.msra.mxu0 0.0
    %5846 = vmatprep.subr.mxu0 0.0
    %5847 = vmatpush1.msra.mxu0 0.0
    %5848 = vmatprep.subr.mxu0 0.0
    %5849 = vmatpush1.msra.mxu0 0.0
    %5850 = vmatprep.subr.mxu0 0.0
    %5851 = vmatpush1.msra.mxu0 0.0
    %5852 = vmatprep.subr.mxu0 0.0
    %5853 = vmatpush1.msra.mxu0 0.0
    %5854 = vmatprep.subr.mxu0 0.0
    %5855 = vmatpush1.msra.mxu0 0.0
    %5856 = vmatprep.mubr.f32.mxu0 0.0
    %5857 = vmatmul.mubr.f32.gmra.mrb[0].mxu0 %v5779
    %v5858 = vpop.f32.mrb[0].mxu0
    %v5859 = vadd.f32 0.0, %v5858
    %v5860 = vpop.f32.mrb[0].mxu0
    %v5861 = vadd.f32 0.0, %v5860
    %5862 = vmatprep.mubr.f32.mxu0 0.0
    %5863 = vmatmul.mubr.f32.gmra.mrb[0].mxu0 %v5782
    %v5864 = vpop.f32.mrb[0].mxu0
    %v5865 = vadd.f32 0.0, %v5864
    %v5866 = vpop.f32.mrb[0].mxu0
    %v5867 = vadd.f32 0.0, %v5866
    %5868 = vdwg.mxu0
    %5869 = vmatprep.subr.mxu0 %v5790
    %5870 = vmatpush1.msra.mxu0 %v5788
    %5871 = vmatprep.subr.mxu0 0.0
    %5872 = vmatpush1.msra.mxu0 0.0
    %5873 = vmatprep.subr.mxu0 0.0
    %5874 = vmatpush1.msra.mxu0 0.0
    %5875 = vmatprep.subr.mxu0 0.0
    %5876 = vmatpush1.msra.mxu0 0.0
    %5877 = vmatprep.subr.mxu0 0.0
    %5878 = vmatpush1.msra.mxu0 0.0
    %5879 = vmatprep.subr.mxu0 0.0
    %5880 = vmatpush1.msra.mxu0 0.0
    %5881 = vmatprep.subr.mxu0 0.0
    %5882 = vmatpush1.msra.mxu0 0.0
    %5883 = vmatprep.subr.mxu0 0.0
    %5884 = vmatpush1.msra.mxu0 0.0
    %5885 = vmatprep.subr.mxu0 0.0
    %5886 = vmatpush1.msra.mxu0 0.0
    %5887 = vmatprep.subr.mxu0 0.0
    %5888 = vmatpush1.msra.mxu0 0.0
    %5889 = vmatprep.subr.mxu0 0.0
    %5890 = vmatpush1.msra.mxu0 0.0
    %5891 = vmatprep.subr.mxu0 0.0
    %5892 = vmatpush1.msra.mxu0 0.0
    %5893 = vmatprep.subr.mxu0 0.0
    %5894 = vmatpush1.msra.mxu0 0.0
    %5895 = vmatprep.subr.mxu0 0.0
    %5896 = vmatpush1.msra.mxu0 0.0
    %5897 = vmatprep.subr.mxu0 0.0
    %5898 = vmatpush1.msra.mxu0 0.0
    %5899 = vmatprep.subr.mxu0 0.0
    %5900 = vmatpush1.msra.mxu0 0.0
    %5901 = vmatprep.subr.mxu0 0.0
    %5902 = vmatpush1.msra.mxu0 0.0
    %5903 = vmatprep.subr.mxu0 0.0
    %5904 = vmatpush1.msra.mxu0 0.0
    %5905 = vmatprep.subr.mxu0 0.0
    %5906 = vmatpush1.msra.mxu0 0.0
    %5907 = vmatprep.subr.mxu0 0.0
    %5908 = vmatpush1.msra.mxu0 0.0
    %5909 = vmatprep.subr.mxu0 0.0
    %5910 = vmatpush1.msra.mxu0 0.0
    %5911 = vmatprep.subr.mxu0 0.0
    %5912 = vmatpush1.msra.mxu0 0.0
    %5913 = vmatprep.subr.mxu0 0.0
    %5914 = vmatpush1.msra.mxu0 0.0
    %5915 = vmatprep.subr.mxu0 0.0
    %5916 = vmatpush1.msra.mxu0 0.0
    %5917 = vmatprep.subr.mxu0 0.0
    %5918 = vmatpush1.msra.mxu0 0.0
    %5919 = vmatprep.subr.mxu0 0.0
    %5920 = vmatpush1.msra.mxu0 0.0
    %5921 = vmatprep.subr.mxu0 0.0
    %5922 = vmatpush1.msra.mxu0 0.0
    %5923 = vmatprep.subr.mxu0 0.0
    %5924 = vmatpush1.msra.mxu0 0.0
    %5925 = vmatprep.subr.mxu0 0.0
    %5926 = vmatpush1.msra.mxu0 0.0
    %5927 = vmatprep.subr.mxu0 0.0
    %5928 = vmatpush1.msra.mxu0 0.0
    %5929 = vmatprep.subr.mxu0 0.0
    %5930 = vmatpush1.msra.mxu0 0.0
    %5931 = vmatprep.subr.mxu0 0.0
    %5932 = vmatpush1.msra.mxu0 0.0
    %5933 = vmatprep.mubr.f32.mxu0 0.0
    %5934 = vmatmul.mubr.f32.gmra.mrb[0].mxu0 %v5779
    %v5935 = vpop.f32.mrb[0].mxu0
    %v5936 = vadd.f32 0.0, %v5935
    %v5937 = vpop.f32.mrb[0].mxu0
    %5938 = vmatprep.mubr.f32.mxu0 0.0
    %5939 = vmatmul.mubr.f32.gmra.mrb[0].mxu0 %v5782
    %v5940 = vpop.f32.mrb[0].mxu0
    %v5941 = vadd.f32 0.0, %v5940
    %v5942 = vpop.f32.mrb[0].mxu0
    %5943 = vdwg.mxu0
    %v5944 = vadd.f32 %v5759, %v5859
    %v5945 = vadd.f32 %v5760, %v5861
    %v5946 = vadd.f32 %v5761, %v5936
    %v5947 = vadd.f32 %v5762, %v5865
    %v5948 = vadd.f32 %v5763, %v5867
    %v5949 = vadd.f32 %v5764, %v5941
    %v5950 = vld [vmem:[%s1766] sm:$0xff]
    %v5951 = vld [vmem:[%s1766 + $0x8] sm:$0xff]
    %5952 = vrot.lane.b32.xlu0 %v5040, 92
    %v5953 = vpop.permute.xlu0 %5952
    %5954 = vrot.lane.b32.xlu0 %v5041, 92
    %v5955 = vpop.permute.xlu0 %5954
    %5956 = vrot.lane.b32.xlu0 %v5042, 92
    %v5957 = vpop.permute.xlu0 %5956
    %5958 = vrot.lane.b32.xlu0 %v5043, 92
    %v5959 = vpop.permute.xlu0 %5958
    %v5960 = vsel %vm1777, %v5953, %v5955
    %v5961 = vsel %vm1777, %v5955, %v5957
    %v5962 = vsel %vm1777, %v5957, %v5959
    %v5964 = vsel %vm873, %v5950, 0
    %v5967 = vsel %vm873, %v5951, 0
    %v5969 = vsel %vm880, %v5960, 0
    %v5971 = vsel %vm880, %v5961, 0
    %v5973 = vsel %vm880, %v5962, 0
    %v5975 = vsel %vm880, %v5959, 0
    %5977 = vmatprep.subr.mxu0 %v5971
    %5978 = vmatpush1.msra.mxu0 %v5969
    %5979 = vmatprep.subr.mxu0 0.0
    %5980 = vmatpush1.msra.mxu0 0.0
    %5981 = vmatprep.subr.mxu0 0.0
    %5982 = vmatpush1.msra.mxu0 0.0
    %5983 = vmatprep.subr.mxu0 0.0
    %5984 = vmatpush1.msra.mxu0 0.0
    %5985 = vmatprep.subr.mxu0 0.0
    %5986 = vmatpush1.msra.mxu0 0.0
    %5987 = vmatprep.subr.mxu0 0.0
    %5988 = vmatpush1.msra.mxu0 0.0
    %5989 = vmatprep.subr.mxu0 0.0
    %5990 = vmatpush1.msra.mxu0 0.0
    %5991 = vmatprep.subr.mxu0 0.0
    %5992 = vmatpush1.msra.mxu0 0.0
    %5993 = vmatprep.subr.mxu0 0.0
    %5994 = vmatpush1.msra.mxu0 0.0
    %5995 = vmatprep.subr.mxu0 0.0
    %5996 = vmatpush1.msra.mxu0 0.0
    %5997 = vmatprep.subr.mxu0 0.0
    %5998 = vmatpush1.msra.mxu0 0.0
    %5999 = vmatprep.subr.mxu0 0.0
    %6000 = vmatpush1.msra.mxu0 0.0
    %6001 = vmatprep.subr.mxu0 0.0
    %6002 = vmatpush1.msra.mxu0 0.0
    %6003 = vmatprep.subr.mxu0 0.0
    %6004 = vmatpush1.msra.mxu0 0.0
    %6005 = vmatprep.subr.mxu0 0.0
    %6006 = vmatpush1.msra.mxu0 0.0
    %6007 = vmatprep.subr.mxu0 0.0
    %6008 = vmatpush1.msra.mxu0 0.0
    %6009 = vmatprep.subr.mxu0 0.0
    %6010 = vmatpush1.msra.mxu0 0.0
    %6011 = vmatprep.subr.mxu0 0.0
    %6012 = vmatpush1.msra.mxu0 0.0
    %6013 = vmatprep.subr.mxu0 0.0
    %6014 = vmatpush1.msra.mxu0 0.0
    %6015 = vmatprep.subr.mxu0 0.0
    %6016 = vmatpush1.msra.mxu0 0.0
    %6017 = vmatprep.subr.mxu0 0.0
    %6018 = vmatpush1.msra.mxu0 0.0
    %6019 = vmatprep.subr.mxu0 0.0
    %6020 = vmatpush1.msra.mxu0 0.0
    %6021 = vmatprep.subr.mxu0 0.0
    %6022 = vmatpush1.msra.mxu0 0.0
    %6023 = vmatprep.subr.mxu0 0.0
    %6024 = vmatpush1.msra.mxu0 0.0
    %6025 = vmatprep.subr.mxu0 0.0
    %6026 = vmatpush1.msra.mxu0 0.0
    %6027 = vmatprep.subr.mxu0 0.0
    %6028 = vmatpush1.msra.mxu0 0.0
    %6029 = vmatprep.subr.mxu0 0.0
    %6030 = vmatpush1.msra.mxu0 0.0
    %6031 = vmatprep.subr.mxu0 0.0
    %6032 = vmatpush1.msra.mxu0 0.0
    %6033 = vmatprep.subr.mxu0 0.0
    %6034 = vmatpush1.msra.mxu0 0.0
    %6035 = vmatprep.subr.mxu0 0.0
    %6036 = vmatpush1.msra.mxu0 0.0
    %6037 = vmatprep.subr.mxu0 0.0
    %6038 = vmatpush1.msra.mxu0 0.0
    %6039 = vmatprep.subr.mxu0 0.0
    %6040 = vmatpush1.msra.mxu0 0.0
    %6041 = vmatprep.mubr.f32.mxu0 0.0
    %6042 = vmatmul.mubr.f32.gmra.mrb[0].mxu0 %v5964
    %v6043 = vpop.f32.mrb[0].mxu0
    %v6044 = vadd.f32 0.0, %v6043
    %v6045 = vpop.f32.mrb[0].mxu0
    %v6046 = vadd.f32 0.0, %v6045
    %6047 = vmatprep.mubr.f32.mxu0 0.0
    %6048 = vmatmul.mubr.f32.gmra.mrb[0].mxu0 %v5967
    %v6049 = vpop.f32.mrb[0].mxu0
    %v6050 = vadd.f32 0.0, %v6049
    %v6051 = vpop.f32.mrb[0].mxu0
    %v6052 = vadd.f32 0.0, %v6051
    %6053 = vdwg.mxu0
    %6054 = vmatprep.subr.mxu0 %v5975
    %6055 = vmatpush1.msra.mxu0 %v5973
    %6056 = vmatprep.subr.mxu0 0.0
    %6057 = vmatpush1.msra.mxu0 0.0
    %6058 = vmatprep.subr.mxu0 0.0
    %6059 = vmatpush1.msra.mxu0 0.0
    %6060 = vmatprep.subr.mxu0 0.0
    %6061 = vmatpush1.msra.mxu0 0.0
    %6062 = vmatprep.subr.mxu0 0.0
    %6063 = vmatpush1.msra.mxu0 0.0
    %6064 = vmatprep.subr.mxu0 0.0
    %6065 = vmatpush1.msra.mxu0 0.0
    %6066 = vmatprep.subr.mxu0 0.0
    %6067 = vmatpush1.msra.mxu0 0.0
    %6068 = vmatprep.subr.mxu0 0.0
    %6069 = vmatpush1.msra.mxu0 0.0
    %6070 = vmatprep.subr.mxu0 0.0
    %6071 = vmatpush1.msra.mxu0 0.0
    %6072 = vmatprep.subr.mxu0 0.0
    %6073 = vmatpush1.msra.mxu0 0.0
    %6074 = vmatprep.subr.mxu0 0.0
    %6075 = vmatpush1.msra.mxu0 0.0
    %6076 = vmatprep.subr.mxu0 0.0
    %6077 = vmatpush1.msra.mxu0 0.0
    %6078 = vmatprep.subr.mxu0 0.0
    %6079 = vmatpush1.msra.mxu0 0.0
    %6080 = vmatprep.subr.mxu0 0.0
    %6081 = vmatpush1.msra.mxu0 0.0
    %6082 = vmatprep.subr.mxu0 0.0
    %6083 = vmatpush1.msra.mxu0 0.0
    %6084 = vmatprep.subr.mxu0 0.0
    %6085 = vmatpush1.msra.mxu0 0.0
    %6086 = vmatprep.subr.mxu0 0.0
    %6087 = vmatpush1.msra.mxu0 0.0
    %6088 = vmatprep.subr.mxu0 0.0
    %6089 = vmatpush1.msra.mxu0 0.0
    %6090 = vmatprep.subr.mxu0 0.0
    %6091 = vmatpush1.msra.mxu0 0.0
    %6092 = vmatprep.subr.mxu0 0.0
    %6093 = vmatpush1.msra.mxu0 0.0
    %6094 = vmatprep.subr.mxu0 0.0
    %6095 = vmatpush1.msra.mxu0 0.0
    %6096 = vmatprep.subr.mxu0 0.0
    %6097 = vmatpush1.msra.mxu0 0.0
    %6098 = vmatprep.subr.mxu0 0.0
    %6099 = vmatpush1.msra.mxu0 0.0
    %6100 = vmatprep.subr.mxu0 0.0
    %6101 = vmatpush1.msra.mxu0 0.0
    %6102 = vmatprep.subr.mxu0 0.0
    %6103 = vmatpush1.msra.mxu0 0.0
    %6104 = vmatprep.subr.mxu0 0.0
    %6105 = vmatpush1.msra.mxu0 0.0
    %6106 = vmatprep.subr.mxu0 0.0
    %6107 = vmatpush1.msra.mxu0 0.0
    %6108 = vmatprep.subr.mxu0 0.0
    %6109 = vmatpush1.msra.mxu0 0.0
    %6110 = vmatprep.subr.mxu0 0.0
    %6111 = vmatpush1.msra.mxu0 0.0
    %6112 = vmatprep.subr.mxu0 0.0
    %6113 = vmatpush1.msra.mxu0 0.0
    %6114 = vmatprep.subr.mxu0 0.0
    %6115 = vmatpush1.msra.mxu0 0.0
    %6116 = vmatprep.subr.mxu0 0.0
    %6117 = vmatpush1.msra.mxu0 0.0
    %6118 = vmatprep.mubr.f32.mxu0 0.0
    %6119 = vmatmul.mubr.f32.gmra.mrb[0].mxu0 %v5964
    %v6120 = vpop.f32.mrb[0].mxu0
    %v6121 = vadd.f32 0.0, %v6120
    %v6122 = vpop.f32.mrb[0].mxu0
    %6123 = vmatprep.mubr.f32.mxu0 0.0
    %6124 = vmatmul.mubr.f32.gmra.mrb[0].mxu0 %v5967
    %v6125 = vpop.f32.mrb[0].mxu0
    %v6126 = vadd.f32 0.0, %v6125
    %v6127 = vpop.f32.mrb[0].mxu0
    %6128 = vdwg.mxu0
    %v6129 = vadd.f32 %v5944, %v6044
    %v6130 = vadd.f32 %v5945, %v6046
    %v6131 = vadd.f32 %v5946, %v6121
    %v6132 = vadd.f32 %v5947, %v6050
    %v6133 = vadd.f32 %v5948, %v6052
    %v6134 = vadd.f32 %v5949, %v6126
    %v6135 = vld [vmem:[%s1953] sm:$0xff]
    %v6136 = vld [vmem:[%s1953 + $0x8] sm:$0xff]
    %6137 = vrot.lane.b32.xlu0 %v5040, 64
    %v6138 = vpop.permute.xlu0 %6137
    %6139 = vrot.lane.b32.xlu0 %v5041, 64
    %v6140 = vpop.permute.xlu0 %6139
    %6141 = vrot.lane.b32.xlu0 %v5042, 64
    %v6142 = vpop.permute.xlu0 %6141
    %6143 = vrot.lane.b32.xlu0 %v5043, 64
    %v6144 = vpop.permute.xlu0 %6143
    %v6145 = vsel %vm477, %v6138, %v6140
    %v6146 = vsel %vm477, %v6140, %v6142
    %v6147 = vsel %vm477, %v6142, %v6144
    %v6149 = vsel %vm873, %v6135, 0
    %v6152 = vsel %vm873, %v6136, 0
    %v6154 = vsel %vm880, %v6145, 0
    %v6156 = vsel %vm880, %v6146, 0
    %v6158 = vsel %vm880, %v6147, 0
    %v6160 = vsel %vm880, %v6144, 0
    %6162 = vmatprep.subr.mxu0 %v6156
    %6163 = vmatpush1.msra.mxu0 %v6154
    %6164 = vmatprep.subr.mxu0 0.0
    %6165 = vmatpush1.msra.mxu0 0.0
    %6166 = vmatprep.subr.mxu0 0.0
    %6167 = vmatpush1.msra.mxu0 0.0
    %6168 = vmatprep.subr.mxu0 0.0
    %6169 = vmatpush1.msra.mxu0 0.0
    %6170 = vmatprep.subr.mxu0 0.0
    %6171 = vmatpush1.msra.mxu0 0.0
    %6172 = vmatprep.subr.mxu0 0.0
    %6173 = vmatpush1.msra.mxu0 0.0
    %6174 = vmatprep.subr.mxu0 0.0
    %6175 = vmatpush1.msra.mxu0 0.0
    %6176 = vmatprep.subr.mxu0 0.0
    %6177 = vmatpush1.msra.mxu0 0.0
    %6178 = vmatprep.subr.mxu0 0.0
    %6179 = vmatpush1.msra.mxu0 0.0
    %6180 = vmatprep.subr.mxu0 0.0
    %6181 = vmatpush1.msra.mxu0 0.0
    %6182 = vmatprep.subr.mxu0 0.0
    %6183 = vmatpush1.msra.mxu0 0.0
    %6184 = vmatprep.subr.mxu0 0.0
    %6185 = vmatpush1.msra.mxu0 0.0
    %6186 = vmatprep.subr.mxu0 0.0
    %6187 = vmatpush1.msra.mxu0 0.0
    %6188 = vmatprep.subr.mxu0 0.0
    %6189 = vmatpush1.msra.mxu0 0.0
    %6190 = vmatprep.subr.mxu0 0.0
    %6191 = vmatpush1.msra.mxu0 0.0
    %6192 = vmatprep.subr.mxu0 0.0
    %6193 = vmatpush1.msra.mxu0 0.0
    %6194 = vmatprep.subr.mxu0 0.0
    %6195 = vmatpush1.msra.mxu0 0.0
    %6196 = vmatprep.subr.mxu0 0.0
    %6197 = vmatpush1.msra.mxu0 0.0
    %6198 = vmatprep.subr.mxu0 0.0
    %6199 = vmatpush1.msra.mxu0 0.0
    %6200 = vmatprep.subr.mxu0 0.0
    %6201 = vmatpush1.msra.mxu0 0.0
    %6202 = vmatprep.subr.mxu0 0.0
    %6203 = vmatpush1.msra.mxu0 0.0
    %6204 = vmatprep.subr.mxu0 0.0
    %6205 = vmatpush1.msra.mxu0 0.0
    %6206 = vmatprep.subr.mxu0 0.0
    %6207 = vmatpush1.msra.mxu0 0.0
    %6208 = vmatprep.subr.mxu0 0.0
    %6209 = vmatpush1.msra.mxu0 0.0
    %6210 = vmatprep.subr.mxu0 0.0
    %6211 = vmatpush1.msra.mxu0 0.0
    %6212 = vmatprep.subr.mxu0 0.0
    %6213 = vmatpush1.msra.mxu0 0.0
    %6214 = vmatprep.subr.mxu0 0.0
    %6215 = vmatpush1.msra.mxu0 0.0
    %6216 = vmatprep.subr.mxu0 0.0
    %6217 = vmatpush1.msra.mxu0 0.0
    %6218 = vmatprep.subr.mxu0 0.0
    %6219 = vmatpush1.msra.mxu0 0.0
    %6220 = vmatprep.subr.mxu0 0.0
    %6221 = vmatpush1.msra.mxu0 0.0
    %6222 = vmatprep.subr.mxu0 0.0
    %6223 = vmatpush1.msra.mxu0 0.0
    %6224 = vmatprep.subr.mxu0 0.0
    %6225 = vmatpush1.msra.mxu0 0.0
    %6226 = vmatprep.mubr.f32.mxu0 0.0
    %6227 = vmatmul.mubr.f32.gmra.mrb[0].mxu0 %v6149
    %v6228 = vpop.f32.mrb[0].mxu0
    %v6229 = vadd.f32 0.0, %v6228
    %v6230 = vpop.f32.mrb[0].mxu0
    %v6231 = vadd.f32 0.0, %v6230
    %6232 = vmatprep.mubr.f32.mxu0 0.0
    %6233 = vmatmul.mubr.f32.gmra.mrb[0].mxu0 %v6152
    %v6234 = vpop.f32.mrb[0].mxu0
    %v6235 = vadd.f32 0.0, %v6234
    %v6236 = vpop.f32.mrb[0].mxu0
    %v6237 = vadd.f32 0.0, %v6236
    %6238 = vdwg.mxu0
    %6239 = vmatprep.subr.mxu0 %v6160
    %6240 = vmatpush1.msra.mxu0 %v6158
    %6241 = vmatprep.subr.mxu0 0.0
    %6242 = vmatpush1.msra.mxu0 0.0
    %6243 = vmatprep.subr.mxu0 0.0
    %6244 = vmatpush1.msra.mxu0 0.0
    %6245 = vmatprep.subr.mxu0 0.0
    %6246 = vmatpush1.msra.mxu0 0.0
    %6247 = vmatprep.subr.mxu0 0.0
    %6248 = vmatpush1.msra.mxu0 0.0
    %6249 = vmatprep.subr.mxu0 0.0
    %6250 = vmatpush1.msra.mxu0 0.0
    %6251 = vmatprep.subr.mxu0 0.0
    %6252 = vmatpush1.msra.mxu0 0.0
    %6253 = vmatprep.subr.mxu0 0.0
    %6254 = vmatpush1.msra.mxu0 0.0
    %6255 = vmatprep.subr.mxu0 0.0
    %6256 = vmatpush1.msra.mxu0 0.0
    %6257 = vmatprep.subr.mxu0 0.0
    %6258 = vmatpush1.msra.mxu0 0.0
    %6259 = vmatprep.subr.mxu0 0.0
    %6260 = vmatpush1.msra.mxu0 0.0
    %6261 = vmatprep.subr.mxu0 0.0
    %6262 = vmatpush1.msra.mxu0 0.0
    %6263 = vmatprep.subr.mxu0 0.0
    %6264 = vmatpush1.msra.mxu0 0.0
    %6265 = vmatprep.subr.mxu0 0.0
    %6266 = vmatpush1.msra.mxu0 0.0
    %6267 = vmatprep.subr.mxu0 0.0
    %6268 = vmatpush1.msra.mxu0 0.0
    %6269 = vmatprep.subr.mxu0 0.0
    %6270 = vmatpush1.msra.mxu0 0.0
    %6271 = vmatprep.subr.mxu0 0.0
    %6272 = vmatpush1.msra.mxu0 0.0
    %6273 = vmatprep.subr.mxu0 0.0
    %6274 = vmatpush1.msra.mxu0 0.0
    %6275 = vmatprep.subr.mxu0 0.0
    %6276 = vmatpush1.msra.mxu0 0.0
    %6277 = vmatprep.subr.mxu0 0.0
    %6278 = vmatpush1.msra.mxu0 0.0
    %6279 = vmatprep.subr.mxu0 0.0
    %6280 = vmatpush1.msra.mxu0 0.0
    %6281 = vmatprep.subr.mxu0 0.0
    %6282 = vmatpush1.msra.mxu0 0.0
    %6283 = vmatprep.subr.mxu0 0.0
    %6284 = vmatpush1.msra.mxu0 0.0
    %6285 = vmatprep.subr.mxu0 0.0
    %6286 = vmatpush1.msra.mxu0 0.0
    %6287 = vmatprep.subr.mxu0 0.0
    %6288 = vmatpush1.msra.mxu0 0.0
    %6289 = vmatprep.subr.mxu0 0.0
    %6290 = vmatpush1.msra.mxu0 0.0
    %6291 = vmatprep.subr.mxu0 0.0
    %6292 = vmatpush1.msra.mxu0 0.0
    %6293 = vmatprep.subr.mxu0 0.0
    %6294 = vmatpush1.msra.mxu0 0.0
    %6295 = vmatprep.subr.mxu0 0.0
    %6296 = vmatpush1.msra.mxu0 0.0
    %6297 = vmatprep.subr.mxu0 0.0
    %6298 = vmatpush1.msra.mxu0 0.0
    %6299 = vmatprep.subr.mxu0 0.0
    %6300 = vmatpush1.msra.mxu0 0.0
    %6301 = vmatprep.subr.mxu0 0.0
    %6302 = vmatpush1.msra.mxu0 0.0
    %6303 = vmatprep.mubr.f32.mxu0 0.0
    %6304 = vmatmul.mubr.f32.gmra.mrb[0].mxu0 %v6149
    %v6305 = vpop.f32.mrb[0].mxu0
    %v6306 = vadd.f32 0.0, %v6305
    %v6307 = vpop.f32.mrb[0].mxu0
    %6308 = vmatprep.mubr.f32.mxu0 0.0
    %6309 = vmatmul.mubr.f32.gmra.mrb[0].mxu0 %v6152
    %v6310 = vpop.f32.mrb[0].mxu0
    %v6311 = vadd.f32 0.0, %v6310
    %v6312 = vpop.f32.mrb[0].mxu0
    %6313 = vdwg.mxu0
    %v6314 = vadd.f32 %v6129, %v6229
    %v6315 = vadd.f32 %v6130, %v6231
    %v6316 = vadd.f32 %v6131, %v6306
    %v6317 = vadd.f32 %v6132, %v6235
    %v6318 = vadd.f32 %v6133, %v6237
    %v6319 = vadd.f32 %v6134, %v6311
    %v6320 = vld [vmem:[%s2139] sm:$0xff]
    %v6321 = vld [vmem:[%s2139 + $0x8] sm:$0xff]
    %6322 = vrot.lane.b32.xlu0 %v5040, 62
    %v6323 = vpop.permute.xlu0 %6322
    %6324 = vrot.lane.b32.xlu0 %v5041, 62
    %v6325 = vpop.permute.xlu0 %6324
    %6326 = vrot.lane.b32.xlu0 %v5042, 62
    %v6327 = vpop.permute.xlu0 %6326
    %6328 = vrot.lane.b32.xlu0 %v5043, 62
    %v6329 = vpop.permute.xlu0 %6328
    %v6330 = vsel %vm662, %v6323, %v6325
    %v6331 = vsel %vm662, %v6325, %v6327
    %v6332 = vsel %vm662, %v6327, %v6329
    %v6334 = vsel %vm873, %v6320, 0
    %v6337 = vsel %vm873, %v6321, 0
    %v6339 = vsel %vm880, %v6330, 0
    %v6341 = vsel %vm880, %v6331, 0
    %v6343 = vsel %vm880, %v6332, 0
    %v6345 = vsel %vm880, %v6329, 0
    %6347 = vmatprep.subr.mxu0 %v6341
    %6348 = vmatpush1.msra.mxu0 %v6339
    %6349 = vmatprep.subr.mxu0 0.0
    %6350 = vmatpush1.msra.mxu0 0.0
    %6351 = vmatprep.subr.mxu0 0.0
    %6352 = vmatpush1.msra.mxu0 0.0
    %6353 = vmatprep.subr.mxu0 0.0
    %6354 = vmatpush1.msra.mxu0 0.0
    %6355 = vmatprep.subr.mxu0 0.0
    %6356 = vmatpush1.msra.mxu0 0.0
    %6357 = vmatprep.subr.mxu0 0.0
    %6358 = vmatpush1.msra.mxu0 0.0
    %6359 = vmatprep.subr.mxu0 0.0
    %6360 = vmatpush1.msra.mxu0 0.0
    %6361 = vmatprep.subr.mxu0 0.0
    %6362 = vmatpush1.msra.mxu0 0.0
    %6363 = vmatprep.subr.mxu0 0.0
    %6364 = vmatpush1.msra.mxu0 0.0
    %6365 = vmatprep.subr.mxu0 0.0
    %6366 = vmatpush1.msra.mxu0 0.0
    %6367 = vmatprep.subr.mxu0 0.0
    %6368 = vmatpush1.msra.mxu0 0.0
    %6369 = vmatprep.subr.mxu0 0.0
    %6370 = vmatpush1.msra.mxu0 0.0
    %6371 = vmatprep.subr.mxu0 0.0
    %6372 = vmatpush1.msra.mxu0 0.0
    %6373 = vmatprep.subr.mxu0 0.0
    %6374 = vmatpush1.msra.mxu0 0.0
    %6375 = vmatprep.subr.mxu0 0.0
    %6376 = vmatpush1.msra.mxu0 0.0
    %6377 = vmatprep.subr.mxu0 0.0
    %6378 = vmatpush1.msra.mxu0 0.0
    %6379 = vmatprep.subr.mxu0 0.0
    %6380 = vmatpush1.msra.mxu0 0.0
    %6381 = vmatprep.subr.mxu0 0.0
    %6382 = vmatpush1.msra.mxu0 0.0
    %6383 = vmatprep.subr.mxu0 0.0
    %6384 = vmatpush1.msra.mxu0 0.0
    %6385 = vmatprep.subr.mxu0 0.0
    %6386 = vmatpush1.msra.mxu0 0.0
    %6387 = vmatprep.subr.mxu0 0.0
    %6388 = vmatpush1.msra.mxu0 0.0
    %6389 = vmatprep.subr.mxu0 0.0
    %6390 = vmatpush1.msra.mxu0 0.0
    %6391 = vmatprep.subr.mxu0 0.0
    %6392 = vmatpush1.msra.mxu0 0.0
    %6393 = vmatprep.subr.mxu0 0.0
    %6394 = vmatpush1.msra.mxu0 0.0
    %6395 = vmatprep.subr.mxu0 0.0
    %6396 = vmatpush1.msra.mxu0 0.0
    %6397 = vmatprep.subr.mxu0 0.0
    %6398 = vmatpush1.msra.mxu0 0.0
    %6399 = vmatprep.subr.mxu0 0.0
    %6400 = vmatpush1.msra.mxu0 0.0
    %6401 = vmatprep.subr.mxu0 0.0
    %6402 = vmatpush1.msra.mxu0 0.0
    %6403 = vmatprep.subr.mxu0 0.0
    %6404 = vmatpush1.msra.mxu0 0.0
    %6405 = vmatprep.subr.mxu0 0.0
    %6406 = vmatpush1.msra.mxu0 0.0
    %6407 = vmatprep.subr.mxu0 0.0
    %6408 = vmatpush1.msra.mxu0 0.0
    %6409 = vmatprep.subr.mxu0 0.0
    %6410 = vmatpush1.msra.mxu0 0.0
    %6411 = vmatprep.mubr.f32.mxu0 0.0
    %6412 = vmatmul.mubr.f32.gmra.mrb[0].mxu0 %v6334
    %v6413 = vpop.f32.mrb[0].mxu0
    %v6414 = vadd.f32 0.0, %v6413
    %v6415 = vpop.f32.mrb[0].mxu0
    %v6416 = vadd.f32 0.0, %v6415
    %6417 = vmatprep.mubr.f32.mxu0 0.0
    %6418 = vmatmul.mubr.f32.gmra.mrb[0].mxu0 %v6337
    %v6419 = vpop.f32.mrb[0].mxu0
    %v6420 = vadd.f32 0.0, %v6419
    %v6421 = vpop.f32.mrb[0].mxu0
    %v6422 = vadd.f32 0.0, %v6421
    %6423 = vdwg.mxu0
    %6424 = vmatprep.subr.mxu0 %v6345
    %6425 = vmatpush1.msra.mxu0 %v6343
    %6426 = vmatprep.subr.mxu0 0.0
    %6427 = vmatpush1.msra.mxu0 0.0
    %6428 = vmatprep.subr.mxu0 0.0
    %6429 = vmatpush1.msra.mxu0 0.0
    %6430 = vmatprep.subr.mxu0 0.0
    %6431 = vmatpush1.msra.mxu0 0.0
    %6432 = vmatprep.subr.mxu0 0.0
    %6433 = vmatpush1.msra.mxu0 0.0
    %6434 = vmatprep.subr.mxu0 0.0
    %6435 = vmatpush1.msra.mxu0 0.0
    %6436 = vmatprep.subr.mxu0 0.0
    %6437 = vmatpush1.msra.mxu0 0.0
    %6438 = vmatprep.subr.mxu0 0.0
    %6439 = vmatpush1.msra.mxu0 0.0
    %6440 = vmatprep.subr.mxu0 0.0
    %6441 = vmatpush1.msra.mxu0 0.0
    %6442 = vmatprep.subr.mxu0 0.0
    %6443 = vmatpush1.msra.mxu0 0.0
    %6444 = vmatprep.subr.mxu0 0.0
    %6445 = vmatpush1.msra.mxu0 0.0
    %6446 = vmatprep.subr.mxu0 0.0
    %6447 = vmatpush1.msra.mxu0 0.0
    %6448 = vmatprep.subr.mxu0 0.0
    %6449 = vmatpush1.msra.mxu0 0.0
    %6450 = vmatprep.subr.mxu0 0.0
    %6451 = vmatpush1.msra.mxu0 0.0
    %6452 = vmatprep.subr.mxu0 0.0
    %6453 = vmatpush1.msra.mxu0 0.0
    %6454 = vmatprep.subr.mxu0 0.0
    %6455 = vmatpush1.msra.mxu0 0.0
    %6456 = vmatprep.subr.mxu0 0.0
    %6457 = vmatpush1.msra.mxu0 0.0
    %6458 = vmatprep.subr.mxu0 0.0
    %6459 = vmatpush1.msra.mxu0 0.0
    %6460 = vmatprep.subr.mxu0 0.0
    %6461 = vmatpush1.msra.mxu0 0.0
    %6462 = vmatprep.subr.mxu0 0.0
    %6463 = vmatpush1.msra.mxu0 0.0
    %6464 = vmatprep.subr.mxu0 0.0
    %6465 = vmatpush1.msra.mxu0 0.0
    %6466 = vmatprep.subr.mxu0 0.0
    %6467 = vmatpush1.msra.mxu0 0.0
    %6468 = vmatprep.subr.mxu0 0.0
    %6469 = vmatpush1.msra.mxu0 0.0
    %6470 = vmatprep.subr.mxu0 0.0
    %6471 = vmatpush1.msra.mxu0 0.0
    %6472 = vmatprep.subr.mxu0 0.0
    %6473 = vmatpush1.msra.mxu0 0.0
    %6474 = vmatprep.subr.mxu0 0.0
    %6475 = vmatpush1.msra.mxu0 0.0
    %6476 = vmatprep.subr.mxu0 0.0
    %6477 = vmatpush1.msra.mxu0 0.0
    %6478 = vmatprep.subr.mxu0 0.0
    %6479 = vmatpush1.msra.mxu0 0.0
    %6480 = vmatprep.subr.mxu0 0.0
    %6481 = vmatpush1.msra.mxu0 0.0
    %6482 = vmatprep.subr.mxu0 0.0
    %6483 = vmatpush1.msra.mxu0 0.0
    %6484 = vmatprep.subr.mxu0 0.0
    %6485 = vmatpush1.msra.mxu0 0.0
    %6486 = vmatprep.subr.mxu0 0.0
    %6487 = vmatpush1.msra.mxu0 0.0
    %6488 = vmatprep.mubr.f32.mxu0 0.0
    %6489 = vmatmul.mubr.f32.gmra.mrb[0].mxu0 %v6334
    %v6490 = vpop.f32.mrb[0].mxu0
    %v6491 = vadd.f32 0.0, %v6490
    %v6492 = vpop.f32.mrb[0].mxu0
    %6493 = vmatprep.mubr.f32.mxu0 0.0
    %6494 = vmatmul.mubr.f32.gmra.mrb[0].mxu0 %v6337
    %v6495 = vpop.f32.mrb[0].mxu0
    %v6496 = vadd.f32 0.0, %v6495
    %v6497 = vpop.f32.mrb[0].mxu0
    %6498 = vdwg.mxu0
    %v6499 = vadd.f32 %v6314, %v6414
    %v6500 = vadd.f32 %v6315, %v6416
    %v6501 = vadd.f32 %v6316, %v6491
    %v6502 = vadd.f32 %v6317, %v6420
    %v6503 = vadd.f32 %v6318, %v6422
    %v6504 = vadd.f32 %v6319, %v6496
    %v6505 = vld [vmem:[%s2325] sm:$0xff]
    %v6506 = vld [vmem:[%s2325 + $0x8] sm:$0xff]
    %6507 = vrot.lane.b32.xlu0 %v5040, 60
    %v6508 = vpop.permute.xlu0 %6507
    %6509 = vrot.lane.b32.xlu0 %v5041, 60
    %v6510 = vpop.permute.xlu0 %6509
    %6511 = vrot.lane.b32.xlu0 %v5042, 60
    %v6512 = vpop.permute.xlu0 %6511
    %6513 = vrot.lane.b32.xlu0 %v5043, 60
    %v6514 = vpop.permute.xlu0 %6513
    %v6515 = vsel %vm2336, %v6508, %v6510
    %v6516 = vsel %vm2336, %v6510, %v6512
    %v6517 = vsel %vm2336, %v6512, %v6514
    %v6519 = vsel %vm873, %v6505, 0
    %v6522 = vsel %vm873, %v6506, 0
    %v6524 = vsel %vm880, %v6515, 0
    %v6526 = vsel %vm880, %v6516, 0
    %v6528 = vsel %vm880, %v6517, 0
    %v6530 = vsel %vm880, %v6514, 0
    %6532 = vmatprep.subr.mxu0 %v6526
    %6533 = vmatpush1.msra.mxu0 %v6524
    %6534 = vmatprep.subr.mxu0 0.0
    %6535 = vmatpush1.msra.mxu0 0.0
    %6536 = vmatprep.subr.mxu0 0.0
    %6537 = vmatpush1.msra.mxu0 0.0
    %6538 = vmatprep.subr.mxu0 0.0
    %6539 = vmatpush1.msra.mxu0 0.0
    %6540 = vmatprep.subr.mxu0 0.0
    %6541 = vmatpush1.msra.mxu0 0.0
    %6542 = vmatprep.subr.mxu0 0.0
    %6543 = vmatpush1.msra.mxu0 0.0
    %6544 = vmatprep.subr.mxu0 0.0
    %6545 = vmatpush1.msra.mxu0 0.0
    %6546 = vmatprep.subr.mxu0 0.0
    %6547 = vmatpush1.msra.mxu0 0.0
    %6548 = vmatprep.subr.mxu0 0.0
    %6549 = vmatpush1.msra.mxu0 0.0
    %6550 = vmatprep.subr.mxu0 0.0
    %6551 = vmatpush1.msra.mxu0 0.0
    %6552 = vmatprep.subr.mxu0 0.0
    %6553 = vmatpush1.msra.mxu0 0.0
    %6554 = vmatprep.subr.mxu0 0.0
    %6555 = vmatpush1.msra.mxu0 0.0
    %6556 = vmatprep.subr.mxu0 0.0
    %6557 = vmatpush1.msra.mxu0 0.0
    %6558 = vmatprep.subr.mxu0 0.0
    %6559 = vmatpush1.msra.mxu0 0.0
    %6560 = vmatprep.subr.mxu0 0.0
    %6561 = vmatpush1.msra.mxu0 0.0
    %6562 = vmatprep.subr.mxu0 0.0
    %6563 = vmatpush1.msra.mxu0 0.0
    %6564 = vmatprep.subr.mxu0 0.0
    %6565 = vmatpush1.msra.mxu0 0.0
    %6566 = vmatprep.subr.mxu0 0.0
    %6567 = vmatpush1.msra.mxu0 0.0
    %6568 = vmatprep.subr.mxu0 0.0
    %6569 = vmatpush1.msra.mxu0 0.0
    %6570 = vmatprep.subr.mxu0 0.0
    %6571 = vmatpush1.msra.mxu0 0.0
    %6572 = vmatprep.subr.mxu0 0.0
    %6573 = vmatpush1.msra.mxu0 0.0
    %6574 = vmatprep.subr.mxu0 0.0
    %6575 = vmatpush1.msra.mxu0 0.0
    %6576 = vmatprep.subr.mxu0 0.0
    %6577 = vmatpush1.msra.mxu0 0.0
    %6578 = vmatprep.subr.mxu0 0.0
    %6579 = vmatpush1.msra.mxu0 0.0
    %6580 = vmatprep.subr.mxu0 0.0
    %6581 = vmatpush1.msra.mxu0 0.0
    %6582 = vmatprep.subr.mxu0 0.0
    %6583 = vmatpush1.msra.mxu0 0.0
    %6584 = vmatprep.subr.mxu0 0.0
    %6585 = vmatpush1.msra.mxu0 0.0
    %6586 = vmatprep.subr.mxu0 0.0
    %6587 = vmatpush1.msra.mxu0 0.0
    %6588 = vmatprep.subr.mxu0 0.0
    %6589 = vmatpush1.msra.mxu0 0.0
    %6590 = vmatprep.subr.mxu0 0.0
    %6591 = vmatpush1.msra.mxu0 0.0
    %6592 = vmatprep.subr.mxu0 0.0
    %6593 = vmatpush1.msra.mxu0 0.0
    %6594 = vmatprep.subr.mxu0 0.0
    %6595 = vmatpush1.msra.mxu0 0.0
    %6596 = vmatprep.mubr.f32.mxu0 0.0
    %6597 = vmatmul.mubr.f32.gmra.mrb[0].mxu0 %v6519
    %v6598 = vpop.f32.mrb[0].mxu0
    %v6599 = vadd.f32 0.0, %v6598
    %v6600 = vpop.f32.mrb[0].mxu0
    %v6601 = vadd.f32 0.0, %v6600
    %6602 = vmatprep.mubr.f32.mxu0 0.0
    %6603 = vmatmul.mubr.f32.gmra.mrb[0].mxu0 %v6522
    %v6604 = vpop.f32.mrb[0].mxu0
    %v6605 = vadd.f32 0.0, %v6604
    %v6606 = vpop.f32.mrb[0].mxu0
    %v6607 = vadd.f32 0.0, %v6606
    %6608 = vdwg.mxu0
    %6609 = vmatprep.subr.mxu0 %v6530
    %6610 = vmatpush1.msra.mxu0 %v6528
    %6611 = vmatprep.subr.mxu0 0.0
    %6612 = vmatpush1.msra.mxu0 0.0
    %6613 = vmatprep.subr.mxu0 0.0
    %6614 = vmatpush1.msra.mxu0 0.0
    %6615 = vmatprep.subr.mxu0 0.0
    %6616 = vmatpush1.msra.mxu0 0.0
    %6617 = vmatprep.subr.mxu0 0.0
    %6618 = vmatpush1.msra.mxu0 0.0
    %6619 = vmatprep.subr.mxu0 0.0
    %6620 = vmatpush1.msra.mxu0 0.0
    %6621 = vmatprep.subr.mxu0 0.0
    %6622 = vmatpush1.msra.mxu0 0.0
    %6623 = vmatprep.subr.mxu0 0.0
    %6624 = vmatpush1.msra.mxu0 0.0
    %6625 = vmatprep.subr.mxu0 0.0
    %6626 = vmatpush1.msra.mxu0 0.0
    %6627 = vmatprep.subr.mxu0 0.0
    %6628 = vmatpush1.msra.mxu0 0.0
    %6629 = vmatprep.subr.mxu0 0.0
    %6630 = vmatpush1.msra.mxu0 0.0
    %6631 = vmatprep.subr.mxu0 0.0
    %6632 = vmatpush1.msra.mxu0 0.0
    %6633 = vmatprep.subr.mxu0 0.0
    %6634 = vmatpush1.msra.mxu0 0.0
    %6635 = vmatprep.subr.mxu0 0.0
    %6636 = vmatpush1.msra.mxu0 0.0
    %6637 = vmatprep.subr.mxu0 0.0
    %6638 = vmatpush1.msra.mxu0 0.0
    %6639 = vmatprep.subr.mxu0 0.0
    %6640 = vmatpush1.msra.mxu0 0.0
    %6641 = vmatprep.subr.mxu0 0.0
    %6642 = vmatpush1.msra.mxu0 0.0
    %6643 = vmatprep.subr.mxu0 0.0
    %6644 = vmatpush1.msra.mxu0 0.0
    %6645 = vmatprep.subr.mxu0 0.0
    %6646 = vmatpush1.msra.mxu0 0.0
    %6647 = vmatprep.subr.mxu0 0.0
    %6648 = vmatpush1.msra.mxu0 0.0
    %6649 = vmatprep.subr.mxu0 0.0
    %6650 = vmatpush1.msra.mxu0 0.0
    %6651 = vmatprep.subr.mxu0 0.0
    %6652 = vmatpush1.msra.mxu0 0.0
    %6653 = vmatprep.subr.mxu0 0.0
    %6654 = vmatpush1.msra.mxu0 0.0
    %6655 = vmatprep.subr.mxu0 0.0
    %6656 = vmatpush1.msra.mxu0 0.0
    %6657 = vmatprep.subr.mxu0 0.0
    %6658 = vmatpush1.msra.mxu0 0.0
    %6659 = vmatprep.subr.mxu0 0.0
    %6660 = vmatpush1.msra.mxu0 0.0
    %6661 = vmatprep.subr.mxu0 0.0
    %6662 = vmatpush1.msra.mxu0 0.0
    %6663 = vmatprep.subr.mxu0 0.0
    %6664 = vmatpush1.msra.mxu0 0.0
    %6665 = vmatprep.subr.mxu0 0.0
    %6666 = vmatpush1.msra.mxu0 0.0
    %6667 = vmatprep.subr.mxu0 0.0
    %6668 = vmatpush1.msra.mxu0 0.0
    %6669 = vmatprep.subr.mxu0 0.0
    %6670 = vmatpush1.msra.mxu0 0.0
    %6671 = vmatprep.subr.mxu0 0.0
    %6672 = vmatpush1.msra.mxu0 0.0
    %6673 = vmatprep.mubr.f32.mxu0 0.0
    %6674 = vmatmul.mubr.f32.gmra.mrb[0].mxu0 %v6519
    %v6675 = vpop.f32.mrb[0].mxu0
    %v6676 = vadd.f32 0.0, %v6675
    %v6677 = vpop.f32.mrb[0].mxu0
    %6678 = vmatprep.mubr.f32.mxu0 0.0
    %6679 = vmatmul.mubr.f32.gmra.mrb[0].mxu0 %v6522
    %v6680 = vpop.f32.mrb[0].mxu0
    %v6681 = vadd.f32 0.0, %v6680
    %v6682 = vpop.f32.mrb[0].mxu0
    %6683 = vdwg.mxu0
    %v6684 = vadd.f32 %v6499, %v6599
    %v6685 = vadd.f32 %v6500, %v6601
    %v6686 = vadd.f32 %v6501, %v6676
    %v6687 = vadd.f32 %v6502, %v6605
    %v6688 = vadd.f32 %v6503, %v6607
    %v6689 = vadd.f32 %v6504, %v6681
    %v6690 = vld [vmem:[%s4] sm:$0xff]
    %v6691 = vld [vmem:[%s4 + $0x8] sm:$0xff]
    %6693 = vset.pattern.permute.xlu0 0
    %6694 = vperm.xlu0 %6693, %v6690
    %v6695 = vpop.permute.xlu0 %6694
    %6698 = vset.pattern.permute.xlu0 0
    %6699 = vperm.xlu0 %6698, %v6691
    %v6700 = vpop.permute.xlu0 %6699
    %v6702 = vadd.f32 %v6684, %v6695
    %v6703 = vadd.f32 %v6685, %v6695
    %v6704 = vadd.f32 %v6686, %v6695
    %v6705 = vadd.f32 %v6687, %v6700
    %v6706 = vadd.f32 %v6688, %v6700
    %v6707 = vadd.f32 %v6689, %v6700
    %v6708 = vmax.f32 %v6702, 0.0
    %v6709 = vmax.f32 %v6703, 0.0
    %v6710 = vmax.f32 %v6704, 0.0
    %v6711 = vmax.f32 %v6705, 0.0
    %v6712 = vmax.f32 %v6706, 0.0
    %v6713 = vmax.f32 %v6707, 0.0
    %6716 = vrot.lane.b32.xlu0 %v6708, 96
    %v6717 = vpop.permute.xlu0 %6716
    %6718 = vrot.lane.b32.xlu0 %v6711, 96
    %v6719 = vpop.permute.xlu0 %6718
    %v6722 = vmax.f32 %v6708, %v6717
    %v6723 = vmax.f32 %v6711, %v6719
    %6726 = vrot.lane.b32.xlu0 %v6722, 126
    %v6727 = vpop.permute.xlu0 %6726
    %6728 = vrot.lane.b32.xlu0 %v6723, 126
    %v6729 = vpop.permute.xlu0 %6728
    %v6732 = vmax.f32 %v6722, %v6727
    %v6733 = vmax.f32 %v6723, %v6729
    %s6734 = scalar_lea.vmem [#allocation3], 32
    %6735 = vst.msk [vmem:[%s6734] sm:$0xff] %vm2556, %v6732
    %6736 = vst.msk [vmem:[%s6734 + $0x10] sm:$0xff] %vm2556, %v6733
    %6739 = vrot.lane.b32.xlu0 %v6732, 88
    %v6740 = vpop.permute.xlu0 %6739
    %6741 = vrot.lane.b32.xlu0 %v6733, 88
    %v6742 = vpop.permute.xlu0 %6741
    %6745 = vst.msk [vmem:[%s6734] sm:$0xff] %vm2567, %v6740
    %6746 = vst.msk [vmem:[%s6734 + $0x10] sm:$0xff] %vm2567, %v6742
    %6749 = vrot.lane.b32.xlu0 %v6709, 96
    %v6750 = vpop.permute.xlu0 %6749
    %6751 = vrot.lane.b32.xlu0 %v6712, 96
    %v6752 = vpop.permute.xlu0 %6751
    %v6755 = vmax.f32 %v6709, %v6750
    %v6756 = vmax.f32 %v6712, %v6752
    %6759 = vrot.lane.b32.xlu0 %v6755, 126
    %v6760 = vpop.permute.xlu0 %6759
    %6761 = vrot.lane.b32.xlu0 %v6756, 126
    %v6762 = vpop.permute.xlu0 %6761
    %v6765 = vmax.f32 %v6755, %v6760
    %v6766 = vmax.f32 %v6756, %v6762
    %6769 = vrot.lane.b32.xlu0 %v6765, 48
    %v6770 = vpop.permute.xlu0 %6769
    %6771 = vrot.lane.b32.xlu0 %v6766, 48
    %v6772 = vpop.permute.xlu0 %6771
    %6775 = vst.msk [vmem:[%s6734] sm:$0xff] %vm2598, %v6770
    %6776 = vst.msk [vmem:[%s6734 + $0x10] sm:$0xff] %vm2598, %v6772
    %6777 = vrot.lane.b32.xlu0 %v6765, 8
    %v6778 = vpop.permute.xlu0 %6777
    %6779 = vrot.lane.b32.xlu0 %v6766, 8
    %v6780 = vpop.permute.xlu0 %6779
    %6783 = vst.msk [vmem:[%s6734] sm:$0xff] %vm2607, %v6778
    %6784 = vst.msk [vmem:[%s6734 + $0x10] sm:$0xff] %vm2607, %v6780
    %6787 = vrot.lane.b32.xlu0 %v6710, 96
    %v6788 = vpop.permute.xlu0 %6787
    %6789 = vrot.lane.b32.xlu0 %v6713, 96
    %v6790 = vpop.permute.xlu0 %6789
    %v6793 = vmax.f32 %v6710, %v6788
    %v6794 = vmax.f32 %v6713, %v6790
    %6797 = vrot.lane.b32.xlu0 %v6793, 126
    %v6798 = vpop.permute.xlu0 %6797
    %6799 = vrot.lane.b32.xlu0 %v6794, 126
    %v6800 = vpop.permute.xlu0 %6799
    %v6803 = vmax.f32 %v6793, %v6798
    %v6804 = vmax.f32 %v6794, %v6800
    %6807 = vrot.lane.b32.xlu0 %v6803, 96
    %v6808 = vpop.permute.xlu0 %6807
    %6809 = vrot.lane.b32.xlu0 %v6804, 96
    %v6810 = vpop.permute.xlu0 %6809
    %6813 = vst.msk [vmem:[%s6734] sm:$0xff] %vm2638, %v6808
    %6814 = vst.msk [vmem:[%s6734 + $0x10] sm:$0xff] %vm2638, %v6810
    %6815 = vrot.lane.b32.xlu0 %v6803, 56
    %v6816 = vpop.permute.xlu0 %6815
    %6817 = vrot.lane.b32.xlu0 %v6804, 56
    %v6818 = vpop.permute.xlu0 %6817
    %6821 = vst.msk [vmem:[%s6734] sm:$0xff] %vm2647, %v6816
    %6822 = vst.msk [vmem:[%s6734 + $0x8] sm:$0xff] %vm51, %v6816
    %6823 = vst.msk [vmem:[%s6734 + $0x10] sm:$0xff] %vm2647, %v6818
    %6824 = vst.msk [vmem:[%s6734 + $0x18] sm:$0xff] %vm51, %v6818
    %v6825 = vld [vmem:[%s6734] sm:$0xff]
    %v6826 = vld [vmem:[%s6734 + $0x8] sm:$0xff]
    %v6827 = vld [vmem:[%s6734 + $0x10] sm:$0xff]
    %v6828 = vld [vmem:[%s6734 + $0x18] sm:$0xff]
    %v6829 = vld [vmem:[%s5] sm:$0xff]
    %v6830 = vld [vmem:[%s5 + $0x8] sm:$0xff]
    %v6831 = vld [vmem:[%s5 + $0x10] sm:$0xff]
    %v6832 = vld [vmem:[%s5 + $0x18] sm:$0xff]
    %v6833 = vld [vmem:[%s5 + $0x20] sm:$0xff]
    %v6834 = vld [vmem:[%s5 + $0x28] sm:$0xff]
    %v6835 = vld [vmem:[%s5 + $0x30] sm:$0xff]
    %v6836 = vld [vmem:[%s5 + $0x38] sm:$0xff]
    %v6837 = vld [vmem:[%s5 + $0x40] sm:$0xff]
    %v6838 = vld [vmem:[%s5 + $0x48] sm:$0xff]
    %v6839 = vld [vmem:[%s5 + $0x50] sm:$0xff]
    %v6840 = vld [vmem:[%s5 + $0x58] sm:$0xff]
    %v6841 = vld [vmem:[%s5 + $0x60] sm:$0xff]
    %v6842 = vld [vmem:[%s5 + $0x68] sm:$0xff]
    %v6843 = vld [vmem:[%s5 + $0x70] sm:$0xff]
    %v6844 = vld [vmem:[%s5 + $0x78] sm:$0xff]
    %v6845 = vld [vmem:[%s5 + $0x80] sm:$0xff]
    %v6846 = vld [vmem:[%s5 + $0x88] sm:$0xff]
    %v6848 = vsel %vm51, %v6826, 0
    %v6851 = vsel %vm51, %v6828, 0
    %6853 = vmatprep.subr.mxu0 0.0
    %6854 = vmatpush1.msra.mxu0 %v6829
    %6855 = vmatprep.subr.mxu0 0.0
    %6856 = vmatpush1.msra.mxu0 %v6830
    %6857 = vmatprep.subr.mxu0 0.0
    %6858 = vmatpush1.msra.mxu0 %v6831
    %6859 = vmatprep.subr.mxu0 0.0
    %6860 = vmatpush1.msra.mxu0 %v6832
    %6861 = vmatprep.subr.mxu0 0.0
    %6862 = vmatpush1.msra.mxu0 %v6833
    %6863 = vmatprep.subr.mxu0 0.0
    %6864 = vmatpush1.msra.mxu0 %v6834
    %6865 = vmatprep.subr.mxu0 0.0
    %6866 = vmatpush1.msra.mxu0 %v6835
    %6867 = vmatprep.subr.mxu0 0.0
    %6868 = vmatpush1.msra.mxu0 %v6836
    %6869 = vmatprep.subr.mxu0 0.0
    %6870 = vmatpush1.msra.mxu0 %v6837
    %6871 = vmatprep.subr.mxu0 0.0
    %6872 = vmatpush1.msra.mxu0 %v6838
    %6873 = vmatprep.subr.mxu0 0.0
    %6874 = vmatpush1.msra.mxu0 %v6839
    %6875 = vmatprep.subr.mxu0 0.0
    %6876 = vmatpush1.msra.mxu0 %v6840
    %6877 = vmatprep.subr.mxu0 0.0
    %6878 = vmatpush1.msra.mxu0 %v6841
    %6879 = vmatprep.subr.mxu0 0.0
    %6880 = vmatpush1.msra.mxu0 %v6842
    %6881 = vmatprep.subr.mxu0 0.0
    %6882 = vmatpush1.msra.mxu0 %v6843
    %6883 = vmatprep.subr.mxu0 0.0
    %6884 = vmatpush1.msra.mxu0 %v6844
    %6885 = vmatprep.subr.mxu0 0.0
    %6886 = vmatpush1.msra.mxu0 %v6845
    %6887 = vmatprep.subr.mxu0 0.0
    %6888 = vmatpush1.msra.mxu0 %v6846
    %6889 = vmatprep.subr.mxu0 0.0
    %6890 = vmatpush1.msra.mxu0 0.0
    %6891 = vmatprep.subr.mxu0 0.0
    %6892 = vmatpush1.msra.mxu0 0.0
    %6893 = vmatprep.subr.mxu0 0.0
    %6894 = vmatpush1.msra.mxu0 0.0
    %6895 = vmatprep.subr.mxu0 0.0
    %6896 = vmatpush1.msra.mxu0 0.0
    %6897 = vmatprep.subr.mxu0 0.0
    %6898 = vmatpush1.msra.mxu0 0.0
    %6899 = vmatprep.subr.mxu0 0.0
    %6900 = vmatpush1.msra.mxu0 0.0
    %6901 = vmatprep.subr.mxu0 0.0
    %6902 = vmatpush1.msra.mxu0 0.0
    %6903 = vmatprep.subr.mxu0 0.0
    %6904 = vmatpush1.msra.mxu0 0.0
    %6905 = vmatprep.subr.mxu0 0.0
    %6906 = vmatpush1.msra.mxu0 0.0
    %6907 = vmatprep.subr.mxu0 0.0
    %6908 = vmatpush1.msra.mxu0 0.0
    %6909 = vmatprep.subr.mxu0 0.0
    %6910 = vmatpush1.msra.mxu0 0.0
    %6911 = vmatprep.subr.mxu0 0.0
    %6912 = vmatpush1.msra.mxu0 0.0
    %6913 = vmatprep.subr.mxu0 0.0
    %6914 = vmatpush1.msra.mxu0 0.0
    %6915 = vmatprep.subr.mxu0 0.0
    %6916 = vmatpush1.msra.mxu0 0.0
    %6917 = vmatprep.mubr.f32.mxu0 %v6848
    %6918 = vmatmul.mubr.f32.gmra.mrb[0].mxu0 %v6825
    %v6919 = vpop.f32.mrb[0].mxu0
    %v6920 = vadd.f32 0.0, %v6919
    %v6921 = vpop.f32.mrb[0].mxu0
    %6922 = vmatprep.mubr.f32.mxu0 %v6851
    %6923 = vmatmul.mubr.f32.gmra.mrb[0].mxu0 %v6827
    %v6924 = vpop.f32.mrb[0].mxu0
    %v6925 = vadd.f32 0.0, %v6924
    %v6926 = vpop.f32.mrb[0].mxu0
    %6927 = vdwg.mxu0
    %v6928 = vld [vmem:[%s7] sm:$0x1]
    %v6929 = vld [vmem:[%s6] sm:$0xff]
    %v6930 = vld [vmem:[%s6 + $0x8] sm:$0xff]
    %v6931 = vld [vmem:[%s6 + $0x10] sm:$0xff]
    %v6932 = vld [vmem:[%s6 + $0x18] sm:$0xff]
    %v6933 = vld [vmem:[%s6 + $0x20] sm:$0xf]
    %v6935 = vsel %vm2761, %v6920, 0
    %v6938 = vsel %vm2765, %v6933, 0
    %6940 = vmatprep.subr.mxu0 0.0
    %6941 = vmatpush1.msra.mxu0 %v6929
    %6942 = vmatprep.subr.mxu0 0.0
    %6943 = vmatpush1.msra.mxu0 %v6930
    %6944 = vmatprep.subr.mxu0 0.0
    %6945 = vmatpush1.msra.mxu0 %v6931
    %6946 = vmatprep.subr.mxu0 0.0
    %6947 = vmatpush1.msra.mxu0 %v6932
    %6948 = vmatprep.subr.mxu0 0.0
    %6949 = vmatpush1.msra.mxu0 %v6938
    %6950 = vmatprep.subr.mxu0 0.0
    %6951 = vmatpush1.msra.mxu0 0.0
    %6952 = vmatprep.subr.mxu0 0.0
    %6953 = vmatpush1.msra.mxu0 0.0
    %6954 = vmatprep.subr.mxu0 0.0
    %6955 = vmatpush1.msra.mxu0 0.0
    %6956 = vmatprep.subr.mxu0 0.0
    %6957 = vmatpush1.msra.mxu0 0.0
    %6958 = vmatprep.subr.mxu0 0.0
    %6959 = vmatpush1.msra.mxu0 0.0
    %6960 = vmatprep.subr.mxu0 0.0
    %6961 = vmatpush1.msra.mxu0 0.0
    %6962 = vmatprep.subr.mxu0 0.0
    %6963 = vmatpush1.msra.mxu0 0.0
    %6964 = vmatprep.subr.mxu0 0.0
    %6965 = vmatpush1.msra.mxu0 0.0
    %6966 = vmatprep.subr.mxu0 0.0
    %6967 = vmatpush1.msra.mxu0 0.0
    %6968 = vmatprep.subr.mxu0 0.0
    %6969 = vmatpush1.msra.mxu0 0.0
    %6970 = vmatprep.subr.mxu0 0.0
    %6971 = vmatpush1.msra.mxu0 0.0
    %6972 = vmatprep.subr.mxu0 0.0
    %6973 = vmatpush1.msra.mxu0 0.0
    %6974 = vmatprep.subr.mxu0 0.0
    %6975 = vmatpush1.msra.mxu0 0.0
    %6976 = vmatprep.subr.mxu0 0.0
    %6977 = vmatpush1.msra.mxu0 0.0
    %6978 = vmatprep.subr.mxu0 0.0
    %6979 = vmatpush1.msra.mxu0 0.0
    %6980 = vmatprep.subr.mxu0 0.0
    %6981 = vmatpush1.msra.mxu0 0.0
    %6982 = vmatprep.subr.mxu0 0.0
    %6983 = vmatpush1.msra.mxu0 0.0
    %6984 = vmatprep.subr.mxu0 0.0
    %6985 = vmatpush1.msra.mxu0 0.0
    %6986 = vmatprep.subr.mxu0 0.0
    %6987 = vmatpush1.msra.mxu0 0.0
    %6988 = vmatprep.subr.mxu0 0.0
    %6989 = vmatpush1.msra.mxu0 0.0
    %6990 = vmatprep.subr.mxu0 0.0
    %6991 = vmatpush1.msra.mxu0 0.0
    %6992 = vmatprep.subr.mxu0 0.0
    %6993 = vmatpush1.msra.mxu0 0.0
    %6994 = vmatprep.subr.mxu0 0.0
    %6995 = vmatpush1.msra.mxu0 0.0
    %6996 = vmatprep.subr.mxu0 0.0
    %6997 = vmatpush1.msra.mxu0 0.0
    %6998 = vmatprep.subr.mxu0 0.0
    %6999 = vmatpush1.msra.mxu0 0.0
    %7000 = vmatprep.subr.mxu0 0.0
    %7001 = vmatpush1.msra.mxu0 0.0
    %7002 = vmatprep.subr.mxu0 0.0
    %7003 = vmatpush1.msra.mxu0 0.0
    %7004 = vmatprep.mubr.f32.mxu0 0.0
    %7005 = vmatmul.mubr.f32.gmra.mrb[0].mxu0 %v6935
    %v7006 = vpop.f32.mrb[0].mxu0
    %v7007 = vadd.f32 0.0, %v7006
    %v7008 = vpop.f32.mrb[0].mxu0
    %7009 = vdwg.mxu0
    %v7010 = vadd.f32 %v6928, %v7007
    %v7011 = vld [vmem:[%s2840] sm:$0xff]
    %v7012 = vld [vmem:[%s2840 + $0x8] sm:$0xff]
    %v7013 = vld [vmem:[%s2840 + $0x10] sm:$0xff]
    %v7014 = vld [vmem:[%s2840 + $0x18] sm:$0xff]
    %v7015 = vld [vmem:[%s2840 + $0x20] sm:$0xf]
    %v7016 = vrot.slane %v6920, 1
    %v7017 = vsel %vm2761, %v7016, 0
    %v7020 = vsel %vm2765, %v7015, 0
    %7022 = vmatprep.subr.mxu0 0.0
    %7023 = vmatpush1.msra.mxu0 %v7011
    %7024 = vmatprep.subr.mxu0 0.0
    %7025 = vmatpush1.msra.mxu0 %v7012
    %7026 = vmatprep.subr.mxu0 0.0
    %7027 = vmatpush1.msra.mxu0 %v7013
    %7028 = vmatprep.subr.mxu0 0.0
    %7029 = vmatpush1.msra.mxu0 %v7014
    %7030 = vmatprep.subr.mxu0 0.0
    %7031 = vmatpush1.msra.mxu0 %v7020
    %7032 = vmatprep.subr.mxu0 0.0
    %7033 = vmatpush1.msra.mxu0 0.0
    %7034 = vmatprep.subr.mxu0 0.0
    %7035 = vmatpush1.msra.mxu0 0.0
    %7036 = vmatprep.subr.mxu0 0.0
    %7037 = vmatpush1.msra.mxu0 0.0
    %7038 = vmatprep.subr.mxu0 0.0
    %7039 = vmatpush1.msra.mxu0 0.0
    %7040 = vmatprep.subr.mxu0 0.0
    %7041 = vmatpush1.msra.mxu0 0.0
    %7042 = vmatprep.subr.mxu0 0.0
    %7043 = vmatpush1.msra.mxu0 0.0
    %7044 = vmatprep.subr.mxu0 0.0
    %7045 = vmatpush1.msra.mxu0 0.0
    %7046 = vmatprep.subr.mxu0 0.0
    %7047 = vmatpush1.msra.mxu0 0.0
    %7048 = vmatprep.subr.mxu0 0.0
    %7049 = vmatpush1.msra.mxu0 0.0
    %7050 = vmatprep.subr.mxu0 0.0
    %7051 = vmatpush1.msra.mxu0 0.0
    %7052 = vmatprep.subr.mxu0 0.0
    %7053 = vmatpush1.msra.mxu0 0.0
    %7054 = vmatprep.subr.mxu0 0.0
    %7055 = vmatpush1.msra.mxu0 0.0
    %7056 = vmatprep.subr.mxu0 0.0
    %7057 = vmatpush1.msra.mxu0 0.0
    %7058 = vmatprep.subr.mxu0 0.0
    %7059 = vmatpush1.msra.mxu0 0.0
    %7060 = vmatprep.subr.mxu0 0.0
    %7061 = vmatpush1.msra.mxu0 0.0
    %7062 = vmatprep.subr.mxu0 0.0
    %7063 = vmatpush1.msra.mxu0 0.0
    %7064 = vmatprep.subr.mxu0 0.0
    %7065 = vmatpush1.msra.mxu0 0.0
    %7066 = vmatprep.subr.mxu0 0.0
    %7067 = vmatpush1.msra.mxu0 0.0
    %7068 = vmatprep.subr.mxu0 0.0
    %7069 = vmatpush1.msra.mxu0 0.0
    %7070 = vmatprep.subr.mxu0 0.0
    %7071 = vmatpush1.msra.mxu0 0.0
    %7072 = vmatprep.subr.mxu0 0.0
    %7073 = vmatpush1.msra.mxu0 0.0
    %7074 = vmatprep.subr.mxu0 0.0
    %7075 = vmatpush1.msra.mxu0 0.0
    %7076 = vmatprep.subr.mxu0 0.0
    %7077 = vmatpush1.msra.mxu0 0.0
    %7078 = vmatprep.subr.mxu0 0.0
    %7079 = vmatpush1.msra.mxu0 0.0
    %7080 = vmatprep.subr.mxu0 0.0
    %7081 = vmatpush1.msra.mxu0 0.0
    %7082 = vmatprep.subr.mxu0 0.0
    %7083 = vmatpush1.msra.mxu0 0.0
    %7084 = vmatprep.subr.mxu0 0.0
    %7085 = vmatpush1.msra.mxu0 0.0
    %7086 = vmatprep.mubr.f32.mxu0 0.0
    %7087 = vmatmul.mubr.f32.gmra.mrb[0].mxu0 %v7017
    %v7088 = vpop.f32.mrb[0].mxu0
    %v7089 = vadd.f32 0.0, %v7088
    %v7090 = vpop.f32.mrb[0].mxu0
    %7091 = vdwg.mxu0
    %v7092 = vadd.f32 %v7010, %v7089
    %v7093 = vld [vmem:[%s2923] sm:$0xff]
    %v7094 = vld [vmem:[%s2923 + $0x8] sm:$0xff]
    %v7095 = vld [vmem:[%s2923 + $0x10] sm:$0xff]
    %v7096 = vld [vmem:[%s2923 + $0x18] sm:$0xff]
    %v7097 = vld [vmem:[%s2923 + $0x20] sm:$0xf]
    %v7098 = vrot.slane %v6920, 2
    %v7099 = vsel %vm2761, %v7098, 0
    %v7102 = vsel %vm2765, %v7097, 0
    %7104 = vmatprep.subr.mxu0 0.0
    %7105 = vmatpush1.msra.mxu0 %v7093
    %7106 = vmatprep.subr.mxu0 0.0
    %7107 = vmatpush1.msra.mxu0 %v7094
    %7108 = vmatprep.subr.mxu0 0.0
    %7109 = vmatpush1.msra.mxu0 %v7095
    %7110 = vmatprep.subr.mxu0 0.0
    %7111 = vmatpush1.msra.mxu0 %v7096
    %7112 = vmatprep.subr.mxu0 0.0
    %7113 = vmatpush1.msra.mxu0 %v7102
    %7114 = vmatprep.subr.mxu0 0.0
    %7115 = vmatpush1.msra.mxu0 0.0
    %7116 = vmatprep.subr.mxu0 0.0
    %7117 = vmatpush1.msra.mxu0 0.0
    %7118 = vmatprep.subr.mxu0 0.0
    %7119 = vmatpush1.msra.mxu0 0.0
    %7120 = vmatprep.subr.mxu0 0.0
    %7121 = vmatpush1.msra.mxu0 0.0
    %7122 = vmatprep.subr.mxu0 0.0
    %7123 = vmatpush1.msra.mxu0 0.0
    %7124 = vmatprep.subr.mxu0 0.0
    %7125 = vmatpush1.msra.mxu0 0.0
    %7126 = vmatprep.subr.mxu0 0.0
    %7127 = vmatpush1.msra.mxu0 0.0
    %7128 = vmatprep.subr.mxu0 0.0
    %7129 = vmatpush1.msra.mxu0 0.0
    %7130 = vmatprep.subr.mxu0 0.0
    %7131 = vmatpush1.msra.mxu0 0.0
    %7132 = vmatprep.subr.mxu0 0.0
    %7133 = vmatpush1.msra.mxu0 0.0
    %7134 = vmatprep.subr.mxu0 0.0
    %7135 = vmatpush1.msra.mxu0 0.0
    %7136 = vmatprep.subr.mxu0 0.0
    %7137 = vmatpush1.msra.mxu0 0.0
    %7138 = vmatprep.subr.mxu0 0.0
    %7139 = vmatpush1.msra.mxu0 0.0
    %7140 = vmatprep.subr.mxu0 0.0
    %7141 = vmatpush1.msra.mxu0 0.0
    %7142 = vmatprep.subr.mxu0 0.0
    %7143 = vmatpush1.msra.mxu0 0.0
    %7144 = vmatprep.subr.mxu0 0.0
    %7145 = vmatpush1.msra.mxu0 0.0
    %7146 = vmatprep.subr.mxu0 0.0
    %7147 = vmatpush1.msra.mxu0 0.0
    %7148 = vmatprep.subr.mxu0 0.0
    %7149 = vmatpush1.msra.mxu0 0.0
    %7150 = vmatprep.subr.mxu0 0.0
    %7151 = vmatpush1.msra.mxu0 0.0
    %7152 = vmatprep.subr.mxu0 0.0
    %7153 = vmatpush1.msra.mxu0 0.0
    %7154 = vmatprep.subr.mxu0 0.0
    %7155 = vmatpush1.msra.mxu0 0.0
    %7156 = vmatprep.subr.mxu0 0.0
    %7157 = vmatpush1.msra.mxu0 0.0
    %7158 = vmatprep.subr.mxu0 0.0
    %7159 = vmatpush1.msra.mxu0 0.0
    %7160 = vmatprep.subr.mxu0 0.0
    %7161 = vmatpush1.msra.mxu0 0.0
    %7162 = vmatprep.subr.mxu0 0.0
    %7163 = vmatpush1.msra.mxu0 0.0
    %7164 = vmatprep.subr.mxu0 0.0
    %7165 = vmatpush1.msra.mxu0 0.0
    %7166 = vmatprep.subr.mxu0 0.0
    %7167 = vmatpush1.msra.mxu0 0.0
    %7168 = vmatprep.mubr.f32.mxu0 0.0
    %7169 = vmatmul.mubr.f32.gmra.mrb[0].mxu0 %v7099
    %v7170 = vpop.f32.mrb[0].mxu0
    %v7171 = vadd.f32 0.0, %v7170
    %v7172 = vpop.f32.mrb[0].mxu0
    %7173 = vdwg.mxu0
    %v7174 = vadd.f32 %v7092, %v7171
    %v7175 = vld [vmem:[%s3006] sm:$0xff]
    %v7176 = vld [vmem:[%s3006 + $0x8] sm:$0xff]
    %v7177 = vld [vmem:[%s3006 + $0x10] sm:$0xff]
    %v7178 = vld [vmem:[%s3006 + $0x18] sm:$0xff]
    %v7179 = vld [vmem:[%s3006 + $0x20] sm:$0xf]
    %v7180 = vrot.slane %v6920, 3
    %v7181 = vsel %vm2761, %v7180, 0
    %v7184 = vsel %vm2765, %v7179, 0
    %7186 = vmatprep.subr.mxu0 0.0
    %7187 = vmatpush1.msra.mxu0 %v7175
    %7188 = vmatprep.subr.mxu0 0.0
    %7189 = vmatpush1.msra.mxu0 %v7176
    %7190 = vmatprep.subr.mxu0 0.0
    %7191 = vmatpush1.msra.mxu0 %v7177
    %7192 = vmatprep.subr.mxu0 0.0
    %7193 = vmatpush1.msra.mxu0 %v7178
    %7194 = vmatprep.subr.mxu0 0.0
    %7195 = vmatpush1.msra.mxu0 %v7184
    %7196 = vmatprep.subr.mxu0 0.0
    %7197 = vmatpush1.msra.mxu0 0.0
    %7198 = vmatprep.subr.mxu0 0.0
    %7199 = vmatpush1.msra.mxu0 0.0
    %7200 = vmatprep.subr.mxu0 0.0
    %7201 = vmatpush1.msra.mxu0 0.0
    %7202 = vmatprep.subr.mxu0 0.0
    %7203 = vmatpush1.msra.mxu0 0.0
    %7204 = vmatprep.subr.mxu0 0.0
    %7205 = vmatpush1.msra.mxu0 0.0
    %7206 = vmatprep.subr.mxu0 0.0
    %7207 = vmatpush1.msra.mxu0 0.0
    %7208 = vmatprep.subr.mxu0 0.0
    %7209 = vmatpush1.msra.mxu0 0.0
    %7210 = vmatprep.subr.mxu0 0.0
    %7211 = vmatpush1.msra.mxu0 0.0
    %7212 = vmatprep.subr.mxu0 0.0
    %7213 = vmatpush1.msra.mxu0 0.0
    %7214 = vmatprep.subr.mxu0 0.0
    %7215 = vmatpush1.msra.mxu0 0.0
    %7216 = vmatprep.subr.mxu0 0.0
    %7217 = vmatpush1.msra.mxu0 0.0
    %7218 = vmatprep.subr.mxu0 0.0
    %7219 = vmatpush1.msra.mxu0 0.0
    %7220 = vmatprep.subr.mxu0 0.0
    %7221 = vmatpush1.msra.mxu0 0.0
    %7222 = vmatprep.subr.mxu0 0.0
    %7223 = vmatpush1.msra.mxu0 0.0
    %7224 = vmatprep.subr.mxu0 0.0
    %7225 = vmatpush1.msra.mxu0 0.0
    %7226 = vmatprep.subr.mxu0 0.0
    %7227 = vmatpush1.msra.mxu0 0.0
    %7228 = vmatprep.subr.mxu0 0.0
    %7229 = vmatpush1.msra.mxu0 0.0
    %7230 = vmatprep.subr.mxu0 0.0
    %7231 = vmatpush1.msra.mxu0 0.0
    %7232 = vmatprep.subr.mxu0 0.0
    %7233 = vmatpush1.msra.mxu0 0.0
    %7234 = vmatprep.subr.mxu0 0.0
    %7235 = vmatpush1.msra.mxu0 0.0
    %7236 = vmatprep.subr.mxu0 0.0
    %7237 = vmatpush1.msra.mxu0 0.0
    %7238 = vmatprep.subr.mxu0 0.0
    %7239 = vmatpush1.msra.mxu0 0.0
    %7240 = vmatprep.subr.mxu0 0.0
    %7241 = vmatpush1.msra.mxu0 0.0
    %7242 = vmatprep.subr.mxu0 0.0
    %7243 = vmatpush1.msra.mxu0 0.0
    %7244 = vmatprep.subr.mxu0 0.0
    %7245 = vmatpush1.msra.mxu0 0.0
    %7246 = vmatprep.subr.mxu0 0.0
    %7247 = vmatpush1.msra.mxu0 0.0
    %7248 = vmatprep.subr.mxu0 0.0
    %7249 = vmatpush1.msra.mxu0 0.0
    %7250 = vmatprep.mubr.f32.mxu0 0.0
    %7251 = vmatmul.mubr.f32.gmra.mrb[0].mxu0 %v7181
    %v7252 = vpop.f32.mrb[0].mxu0
    %v7253 = vadd.f32 0.0, %v7252
    %v7254 = vpop.f32.mrb[0].mxu0
    %7255 = vdwg.mxu0
    %v7256 = vadd.f32 %v7174, %v7253
    %v7257 = vld [vmem:[%s3089] sm:$0xff]
    %v7258 = vld [vmem:[%s3089 + $0x8] sm:$0xff]
    %v7259 = vld [vmem:[%s3089 + $0x10] sm:$0xff]
    %v7260 = vld [vmem:[%s3089 + $0x18] sm:$0xff]
    %v7261 = vld [vmem:[%s3089 + $0x20] sm:$0xf]
    %v7262 = vrot.slane %v6920, 4
    %v7263 = vsel %vm2761, %v7262, 0
    %v7266 = vsel %vm2765, %v7261, 0
    %7268 = vmatprep.subr.mxu0 0.0
    %7269 = vmatpush1.msra.mxu0 %v7257
    %7270 = vmatprep.subr.mxu0 0.0
    %7271 = vmatpush1.msra.mxu0 %v7258
    %7272 = vmatprep.subr.mxu0 0.0
    %7273 = vmatpush1.msra.mxu0 %v7259
    %7274 = vmatprep.subr.mxu0 0.0
    %7275 = vmatpush1.msra.mxu0 %v7260
    %7276 = vmatprep.subr.mxu0 0.0
    %7277 = vmatpush1.msra.mxu0 %v7266
    %7278 = vmatprep.subr.mxu0 0.0
    %7279 = vmatpush1.msra.mxu0 0.0
    %7280 = vmatprep.subr.mxu0 0.0
    %7281 = vmatpush1.msra.mxu0 0.0
    %7282 = vmatprep.subr.mxu0 0.0
    %7283 = vmatpush1.msra.mxu0 0.0
    %7284 = vmatprep.subr.mxu0 0.0
    %7285 = vmatpush1.msra.mxu0 0.0
    %7286 = vmatprep.subr.mxu0 0.0
    %7287 = vmatpush1.msra.mxu0 0.0
    %7288 = vmatprep.subr.mxu0 0.0
    %7289 = vmatpush1.msra.mxu0 0.0
    %7290 = vmatprep.subr.mxu0 0.0
    %7291 = vmatpush1.msra.mxu0 0.0
    %7292 = vmatprep.subr.mxu0 0.0
    %7293 = vmatpush1.msra.mxu0 0.0
    %7294 = vmatprep.subr.mxu0 0.0
    %7295 = vmatpush1.msra.mxu0 0.0
    %7296 = vmatprep.subr.mxu0 0.0
    %7297 = vmatpush1.msra.mxu0 0.0
    %7298 = vmatprep.subr.mxu0 0.0
    %7299 = vmatpush1.msra.mxu0 0.0
    %7300 = vmatprep.subr.mxu0 0.0
    %7301 = vmatpush1.msra.mxu0 0.0
    %7302 = vmatprep.subr.mxu0 0.0
    %7303 = vmatpush1.msra.mxu0 0.0
    %7304 = vmatprep.subr.mxu0 0.0
    %7305 = vmatpush1.msra.mxu0 0.0
    %7306 = vmatprep.subr.mxu0 0.0
    %7307 = vmatpush1.msra.mxu0 0.0
    %7308 = vmatprep.subr.mxu0 0.0
    %7309 = vmatpush1.msra.mxu0 0.0
    %7310 = vmatprep.subr.mxu0 0.0
    %7311 = vmatpush1.msra.mxu0 0.0
    %7312 = vmatprep.subr.mxu0 0.0
    %7313 = vmatpush1.msra.mxu0 0.0
    %7314 = vmatprep.subr.mxu0 0.0
    %7315 = vmatpush1.msra.mxu0 0.0
    %7316 = vmatprep.subr.mxu0 0.0
    %7317 = vmatpush1.msra.mxu0 0.0
    %7318 = vmatprep.subr.mxu0 0.0
    %7319 = vmatpush1.msra.mxu0 0.0
    %7320 = vmatprep.subr.mxu0 0.0
    %7321 = vmatpush1.msra.mxu0 0.0
    %7322 = vmatprep.subr.mxu0 0.0
    %7323 = vmatpush1.msra.mxu0 0.0
    %7324 = vmatprep.subr.mxu0 0.0
    %7325 = vmatpush1.msra.mxu0 0.0
    %7326 = vmatprep.subr.mxu0 0.0
    %7327 = vmatpush1.msra.mxu0 0.0
    %7328 = vmatprep.subr.mxu0 0.0
    %7329 = vmatpush1.msra.mxu0 0.0
    %7330 = vmatprep.subr.mxu0 0.0
    %7331 = vmatpush1.msra.mxu0 0.0
    %7332 = vmatprep.mubr.f32.mxu0 0.0
    %7333 = vmatmul.mubr.f32.gmra.mrb[0].mxu0 %v7263
    %v7334 = vpop.f32.mrb[0].mxu0
    %v7335 = vadd.f32 0.0, %v7334
    %v7336 = vpop.f32.mrb[0].mxu0
    %7337 = vdwg.mxu0
    %v7338 = vadd.f32 %v7256, %v7335
    %v7339 = vld [vmem:[%s3172] sm:$0xff]
    %v7340 = vld [vmem:[%s3172 + $0x8] sm:$0xff]
    %v7341 = vld [vmem:[%s3172 + $0x10] sm:$0xff]
    %v7342 = vld [vmem:[%s3172 + $0x18] sm:$0xff]
    %v7343 = vld [vmem:[%s3172 + $0x20] sm:$0xf]
    %v7344 = vrot.slane %v6920, 5
    %v7345 = vsel %vm2761, %v7344, 0
    %v7348 = vsel %vm2765, %v7343, 0
    %7350 = vmatprep.subr.mxu0 0.0
    %7351 = vmatpush1.msra.mxu0 %v7339
    %7352 = vmatprep.subr.mxu0 0.0
    %7353 = vmatpush1.msra.mxu0 %v7340
    %7354 = vmatprep.subr.mxu0 0.0
    %7355 = vmatpush1.msra.mxu0 %v7341
    %7356 = vmatprep.subr.mxu0 0.0
    %7357 = vmatpush1.msra.mxu0 %v7342
    %7358 = vmatprep.subr.mxu0 0.0
    %7359 = vmatpush1.msra.mxu0 %v7348
    %7360 = vmatprep.subr.mxu0 0.0
    %7361 = vmatpush1.msra.mxu0 0.0
    %7362 = vmatprep.subr.mxu0 0.0
    %7363 = vmatpush1.msra.mxu0 0.0
    %7364 = vmatprep.subr.mxu0 0.0
    %7365 = vmatpush1.msra.mxu0 0.0
    %7366 = vmatprep.subr.mxu0 0.0
    %7367 = vmatpush1.msra.mxu0 0.0
    %7368 = vmatprep.subr.mxu0 0.0
    %7369 = vmatpush1.msra.mxu0 0.0
    %7370 = vmatprep.subr.mxu0 0.0
    %7371 = vmatpush1.msra.mxu0 0.0
    %7372 = vmatprep.subr.mxu0 0.0
    %7373 = vmatpush1.msra.mxu0 0.0
    %7374 = vmatprep.subr.mxu0 0.0
    %7375 = vmatpush1.msra.mxu0 0.0
    %7376 = vmatprep.subr.mxu0 0.0
    %7377 = vmatpush1.msra.mxu0 0.0
    %7378 = vmatprep.subr.mxu0 0.0
    %7379 = vmatpush1.msra.mxu0 0.0
    %7380 = vmatprep.subr.mxu0 0.0
    %7381 = vmatpush1.msra.mxu0 0.0
    %7382 = vmatprep.subr.mxu0 0.0
    %7383 = vmatpush1.msra.mxu0 0.0
    %7384 = vmatprep.subr.mxu0 0.0
    %7385 = vmatpush1.msra.mxu0 0.0
    %7386 = vmatprep.subr.mxu0 0.0
    %7387 = vmatpush1.msra.mxu0 0.0
    %7388 = vmatprep.subr.mxu0 0.0
    %7389 = vmatpush1.msra.mxu0 0.0
    %7390 = vmatprep.subr.mxu0 0.0
    %7391 = vmatpush1.msra.mxu0 0.0
    %7392 = vmatprep.subr.mxu0 0.0
    %7393 = vmatpush1.msra.mxu0 0.0
    %7394 = vmatprep.subr.mxu0 0.0
    %7395 = vmatpush1.msra.mxu0 0.0
    %7396 = vmatprep.subr.mxu0 0.0
    %7397 = vmatpush1.msra.mxu0 0.0
    %7398 = vmatprep.subr.mxu0 0.0
    %7399 = vmatpush1.msra.mxu0 0.0
    %7400 = vmatprep.subr.mxu0 0.0
    %7401 = vmatpush1.msra.mxu0 0.0
    %7402 = vmatprep.subr.mxu0 0.0
    %7403 = vmatpush1.msra.mxu0 0.0
    %7404 = vmatprep.subr.mxu0 0.0
    %7405 = vmatpush1.msra.mxu0 0.0
    %7406 = vmatprep.subr.mxu0 0.0
    %7407 = vmatpush1.msra.mxu0 0.0
    %7408 = vmatprep.subr.mxu0 0.0
    %7409 = vmatpush1.msra.mxu0 0.0
    %7410 = vmatprep.subr.mxu0 0.0
    %7411 = vmatpush1.msra.mxu0 0.0
    %7412 = vmatprep.subr.mxu0 0.0
    %7413 = vmatpush1.msra.mxu0 0.0
    %7414 = vmatprep.mubr.f32.mxu0 0.0
    %7415 = vmatmul.mubr.f32.gmra.mrb[0].mxu0 %v7345
    %v7416 = vpop.f32.mrb[0].mxu0
    %v7417 = vadd.f32 0.0, %v7416
    %v7418 = vpop.f32.mrb[0].mxu0
    %7419 = vdwg.mxu0
    %v7420 = vadd.f32 %v7338, %v7417
    %v7421 = vld [vmem:[%s3255] sm:$0xff]
    %v7422 = vld [vmem:[%s3255 + $0x8] sm:$0xff]
    %v7423 = vld [vmem:[%s3255 + $0x10] sm:$0xff]
    %v7424 = vld [vmem:[%s3255 + $0x18] sm:$0xff]
    %v7425 = vld [vmem:[%s3255 + $0x20] sm:$0xf]
    %v7426 = vrot.slane %v6920, 6
    %v7427 = vsel %vm2761, %v7426, 0
    %v7430 = vsel %vm2765, %v7425, 0
    %7432 = vmatprep.subr.mxu0 0.0
    %7433 = vmatpush1.msra.mxu0 %v7421
    %7434 = vmatprep.subr.mxu0 0.0
    %7435 = vmatpush1.msra.mxu0 %v7422
    %7436 = vmatprep.subr.mxu0 0.0
    %7437 = vmatpush1.msra.mxu0 %v7423
    %7438 = vmatprep.subr.mxu0 0.0
    %7439 = vmatpush1.msra.mxu0 %v7424
    %7440 = vmatprep.subr.mxu0 0.0
    %7441 = vmatpush1.msra.mxu0 %v7430
    %7442 = vmatprep.subr.mxu0 0.0
    %7443 = vmatpush1.msra.mxu0 0.0
    %7444 = vmatprep.subr.mxu0 0.0
    %7445 = vmatpush1.msra.mxu0 0.0
    %7446 = vmatprep.subr.mxu0 0.0
    %7447 = vmatpush1.msra.mxu0 0.0
    %7448 = vmatprep.subr.mxu0 0.0
    %7449 = vmatpush1.msra.mxu0 0.0
    %7450 = vmatprep.subr.mxu0 0.0
    %7451 = vmatpush1.msra.mxu0 0.0
    %7452 = vmatprep.subr.mxu0 0.0
    %7453 = vmatpush1.msra.mxu0 0.0
    %7454 = vmatprep.subr.mxu0 0.0
    %7455 = vmatpush1.msra.mxu0 0.0
    %7456 = vmatprep.subr.mxu0 0.0
    %7457 = vmatpush1.msra.mxu0 0.0
    %7458 = vmatprep.subr.mxu0 0.0
    %7459 = vmatpush1.msra.mxu0 0.0
    %7460 = vmatprep.subr.mxu0 0.0
    %7461 = vmatpush1.msra.mxu0 0.0
    %7462 = vmatprep.subr.mxu0 0.0
    %7463 = vmatpush1.msra.mxu0 0.0
    %7464 = vmatprep.subr.mxu0 0.0
    %7465 = vmatpush1.msra.mxu0 0.0
    %7466 = vmatprep.subr.mxu0 0.0
    %7467 = vmatpush1.msra.mxu0 0.0
    %7468 = vmatprep.subr.mxu0 0.0
    %7469 = vmatpush1.msra.mxu0 0.0
    %7470 = vmatprep.subr.mxu0 0.0
    %7471 = vmatpush1.msra.mxu0 0.0
    %7472 = vmatprep.subr.mxu0 0.0
    %7473 = vmatpush1.msra.mxu0 0.0
    %7474 = vmatprep.subr.mxu0 0.0
    %7475 = vmatpush1.msra.mxu0 0.0
    %7476 = vmatprep.subr.mxu0 0.0
    %7477 = vmatpush1.msra.mxu0 0.0
    %7478 = vmatprep.subr.mxu0 0.0
    %7479 = vmatpush1.msra.mxu0 0.0
    %7480 = vmatprep.subr.mxu0 0.0
    %7481 = vmatpush1.msra.mxu0 0.0
    %7482 = vmatprep.subr.mxu0 0.0
    %7483 = vmatpush1.msra.mxu0 0.0
    %7484 = vmatprep.subr.mxu0 0.0
    %7485 = vmatpush1.msra.mxu0 0.0
    %7486 = vmatprep.subr.mxu0 0.0
    %7487 = vmatpush1.msra.mxu0 0.0
    %7488 = vmatprep.subr.mxu0 0.0
    %7489 = vmatpush1.msra.mxu0 0.0
    %7490 = vmatprep.subr.mxu0 0.0
    %7491 = vmatpush1.msra.mxu0 0.0
    %7492 = vmatprep.subr.mxu0 0.0
    %7493 = vmatpush1.msra.mxu0 0.0
    %7494 = vmatprep.subr.mxu0 0.0
    %7495 = vmatpush1.msra.mxu0 0.0
    %7496 = vmatprep.mubr.f32.mxu0 0.0
    %7497 = vmatmul.mubr.f32.gmra.mrb[0].mxu0 %v7427
    %v7498 = vpop.f32.mrb[0].mxu0
    %v7499 = vadd.f32 0.0, %v7498
    %v7500 = vpop.f32.mrb[0].mxu0
    %7501 = vdwg.mxu0
    %v7502 = vadd.f32 %v7420, %v7499
    %v7503 = vld [vmem:[%s3338] sm:$0xff]
    %v7504 = vld [vmem:[%s3338 + $0x8] sm:$0xff]
    %v7505 = vld [vmem:[%s3338 + $0x10] sm:$0xff]
    %v7506 = vld [vmem:[%s3338 + $0x18] sm:$0xff]
    %v7507 = vld [vmem:[%s3338 + $0x20] sm:$0xf]
    %v7508 = vrot.slane %v6920, 7
    %v7509 = vsel %vm2761, %v7508, 0
    %v7512 = vsel %vm2765, %v7507, 0
    %7514 = vmatprep.subr.mxu0 0.0
    %7515 = vmatpush1.msra.mxu0 %v7503
    %7516 = vmatprep.subr.mxu0 0.0
    %7517 = vmatpush1.msra.mxu0 %v7504
    %7518 = vmatprep.subr.mxu0 0.0
    %7519 = vmatpush1.msra.mxu0 %v7505
    %7520 = vmatprep.subr.mxu0 0.0
    %7521 = vmatpush1.msra.mxu0 %v7506
    %7522 = vmatprep.subr.mxu0 0.0
    %7523 = vmatpush1.msra.mxu0 %v7512
    %7524 = vmatprep.subr.mxu0 0.0
    %7525 = vmatpush1.msra.mxu0 0.0
    %7526 = vmatprep.subr.mxu0 0.0
    %7527 = vmatpush1.msra.mxu0 0.0
    %7528 = vmatprep.subr.mxu0 0.0
    %7529 = vmatpush1.msra.mxu0 0.0
    %7530 = vmatprep.subr.mxu0 0.0
    %7531 = vmatpush1.msra.mxu0 0.0
    %7532 = vmatprep.subr.mxu0 0.0
    %7533 = vmatpush1.msra.mxu0 0.0
    %7534 = vmatprep.subr.mxu0 0.0
    %7535 = vmatpush1.msra.mxu0 0.0
    %7536 = vmatprep.subr.mxu0 0.0
    %7537 = vmatpush1.msra.mxu0 0.0
    %7538 = vmatprep.subr.mxu0 0.0
    %7539 = vmatpush1.msra.mxu0 0.0
    %7540 = vmatprep.subr.mxu0 0.0
    %7541 = vmatpush1.msra.mxu0 0.0
    %7542 = vmatprep.subr.mxu0 0.0
    %7543 = vmatpush1.msra.mxu0 0.0
    %7544 = vmatprep.subr.mxu0 0.0
    %7545 = vmatpush1.msra.mxu0 0.0
    %7546 = vmatprep.subr.mxu0 0.0
    %7547 = vmatpush1.msra.mxu0 0.0
    %7548 = vmatprep.subr.mxu0 0.0
    %7549 = vmatpush1.msra.mxu0 0.0
    %7550 = vmatprep.subr.mxu0 0.0
    %7551 = vmatpush1.msra.mxu0 0.0
    %7552 = vmatprep.subr.mxu0 0.0
    %7553 = vmatpush1.msra.mxu0 0.0
    %7554 = vmatprep.subr.mxu0 0.0
    %7555 = vmatpush1.msra.mxu0 0.0
    %7556 = vmatprep.subr.mxu0 0.0
    %7557 = vmatpush1.msra.mxu0 0.0
    %7558 = vmatprep.subr.mxu0 0.0
    %7559 = vmatpush1.msra.mxu0 0.0
    %7560 = vmatprep.subr.mxu0 0.0
    %7561 = vmatpush1.msra.mxu0 0.0
    %7562 = vmatprep.subr.mxu0 0.0
    %7563 = vmatpush1.msra.mxu0 0.0
    %7564 = vmatprep.subr.mxu0 0.0
    %7565 = vmatpush1.msra.mxu0 0.0
    %7566 = vmatprep.subr.mxu0 0.0
    %7567 = vmatpush1.msra.mxu0 0.0
    %7568 = vmatprep.subr.mxu0 0.0
    %7569 = vmatpush1.msra.mxu0 0.0
    %7570 = vmatprep.subr.mxu0 0.0
    %7571 = vmatpush1.msra.mxu0 0.0
    %7572 = vmatprep.subr.mxu0 0.0
    %7573 = vmatpush1.msra.mxu0 0.0
    %7574 = vmatprep.subr.mxu0 0.0
    %7575 = vmatpush1.msra.mxu0 0.0
    %7576 = vmatprep.subr.mxu0 0.0
    %7577 = vmatpush1.msra.mxu0 0.0
    %7578 = vmatprep.mubr.f32.mxu0 0.0
    %7579 = vmatmul.mubr.f32.gmra.mrb[0].mxu0 %v7509
    %v7580 = vpop.f32.mrb[0].mxu0
    %v7581 = vadd.f32 0.0, %v7580
    %v7582 = vpop.f32.mrb[0].mxu0
    %7583 = vdwg.mxu0
    %v7584 = vadd.f32 %v7502, %v7581
    %v7585 = vld [vmem:[%s3421] sm:$0xff]
    %v7586 = vld [vmem:[%s3421 + $0x8] sm:$0xff]
    %v7587 = vld [vmem:[%s3421 + $0x10] sm:$0xff]
    %v7588 = vld [vmem:[%s3421 + $0x18] sm:$0xff]
    %v7589 = vld [vmem:[%s3421 + $0x20] sm:$0xf]
    %v7591 = vsel %vm2761, %v6925, 0
    %v7594 = vsel %vm2765, %v7589, 0
    %7596 = vmatprep.subr.mxu0 0.0
    %7597 = vmatpush1.msra.mxu0 %v7585
    %7598 = vmatprep.subr.mxu0 0.0
    %7599 = vmatpush1.msra.mxu0 %v7586
    %7600 = vmatprep.subr.mxu0 0.0
    %7601 = vmatpush1.msra.mxu0 %v7587
    %7602 = vmatprep.subr.mxu0 0.0
    %7603 = vmatpush1.msra.mxu0 %v7588
    %7604 = vmatprep.subr.mxu0 0.0
    %7605 = vmatpush1.msra.mxu0 %v7594
    %7606 = vmatprep.subr.mxu0 0.0
    %7607 = vmatpush1.msra.mxu0 0.0
    %7608 = vmatprep.subr.mxu0 0.0
    %7609 = vmatpush1.msra.mxu0 0.0
    %7610 = vmatprep.subr.mxu0 0.0
    %7611 = vmatpush1.msra.mxu0 0.0
    %7612 = vmatprep.subr.mxu0 0.0
    %7613 = vmatpush1.msra.mxu0 0.0
    %7614 = vmatprep.subr.mxu0 0.0
    %7615 = vmatpush1.msra.mxu0 0.0
    %7616 = vmatprep.subr.mxu0 0.0
    %7617 = vmatpush1.msra.mxu0 0.0
    %7618 = vmatprep.subr.mxu0 0.0
    %7619 = vmatpush1.msra.mxu0 0.0
    %7620 = vmatprep.subr.mxu0 0.0
    %7621 = vmatpush1.msra.mxu0 0.0
    %7622 = vmatprep.subr.mxu0 0.0
    %7623 = vmatpush1.msra.mxu0 0.0
    %7624 = vmatprep.subr.mxu0 0.0
    %7625 = vmatpush1.msra.mxu0 0.0
    %7626 = vmatprep.subr.mxu0 0.0
    %7627 = vmatpush1.msra.mxu0 0.0
    %7628 = vmatprep.subr.mxu0 0.0
    %7629 = vmatpush1.msra.mxu0 0.0
    %7630 = vmatprep.subr.mxu0 0.0
    %7631 = vmatpush1.msra.mxu0 0.0
    %7632 = vmatprep.subr.mxu0 0.0
    %7633 = vmatpush1.msra.mxu0 0.0
    %7634 = vmatprep.subr.mxu0 0.0
    %7635 = vmatpush1.msra.mxu0 0.0
    %7636 = vmatprep.subr.mxu0 0.0
    %7637 = vmatpush1.msra.mxu0 0.0
    %7638 = vmatprep.subr.mxu0 0.0
    %7639 = vmatpush1.msra.mxu0 0.0
    %7640 = vmatprep.subr.mxu0 0.0
    %7641 = vmatpush1.msra.mxu0 0.0
    %7642 = vmatprep.subr.mxu0 0.0
    %7643 = vmatpush1.msra.mxu0 0.0
    %7644 = vmatprep.subr.mxu0 0.0
    %7645 = vmatpush1.msra.mxu0 0.0
    %7646 = vmatprep.subr.mxu0 0.0
    %7647 = vmatpush1.msra.mxu0 0.0
    %7648 = vmatprep.subr.mxu0 0.0
    %7649 = vmatpush1.msra.mxu0 0.0
    %7650 = vmatprep.subr.mxu0 0.0
    %7651 = vmatpush1.msra.mxu0 0.0
    %7652 = vmatprep.subr.mxu0 0.0
    %7653 = vmatpush1.msra.mxu0 0.0
    %7654 = vmatprep.subr.mxu0 0.0
    %7655 = vmatpush1.msra.mxu0 0.0
    %7656 = vmatprep.subr.mxu0 0.0
    %7657 = vmatpush1.msra.mxu0 0.0
    %7658 = vmatprep.subr.mxu0 0.0
    %7659 = vmatpush1.msra.mxu0 0.0
    %7660 = vmatprep.mubr.f32.mxu0 0.0
    %7661 = vmatmul.mubr.f32.gmra.mrb[0].mxu0 %v7591
    %v7662 = vpop.f32.mrb[0].mxu0
    %v7663 = vadd.f32 0.0, %v7662
    %v7664 = vpop.f32.mrb[0].mxu0
    %7665 = vdwg.mxu0
    %v7666 = vadd.f32 %v7584, %v7663
    %v7667 = vld [vmem:[%s3504] sm:$0xff]
    %v7668 = vld [vmem:[%s3504 + $0x8] sm:$0xff]
    %v7669 = vld [vmem:[%s3504 + $0x10] sm:$0xff]
    %v7670 = vld [vmem:[%s3504 + $0x18] sm:$0xff]
    %v7671 = vld [vmem:[%s3504 + $0x20] sm:$0xf]
    %v7672 = vrot.slane %v6925, 1
    %v7673 = vsel %vm2761, %v7672, 0
    %v7676 = vsel %vm2765, %v7671, 0
    %7678 = vmatprep.subr.mxu0 0.0
    %7679 = vmatpush1.msra.mxu0 %v7667
    %7680 = vmatprep.subr.mxu0 0.0
    %7681 = vmatpush1.msra.mxu0 %v7668
    %7682 = vmatprep.subr.mxu0 0.0
    %7683 = vmatpush1.msra.mxu0 %v7669
    %7684 = vmatprep.subr.mxu0 0.0
    %7685 = vmatpush1.msra.mxu0 %v7670
    %7686 = vmatprep.subr.mxu0 0.0
    %7687 = vmatpush1.msra.mxu0 %v7676
    %7688 = vmatprep.subr.mxu0 0.0
    %7689 = vmatpush1.msra.mxu0 0.0
    %7690 = vmatprep.subr.mxu0 0.0
    %7691 = vmatpush1.msra.mxu0 0.0
    %7692 = vmatprep.subr.mxu0 0.0
    %7693 = vmatpush1.msra.mxu0 0.0
    %7694 = vmatprep.subr.mxu0 0.0
    %7695 = vmatpush1.msra.mxu0 0.0
    %7696 = vmatprep.subr.mxu0 0.0
    %7697 = vmatpush1.msra.mxu0 0.0
    %7698 = vmatprep.subr.mxu0 0.0
    %7699 = vmatpush1.msra.mxu0 0.0
    %7700 = vmatprep.subr.mxu0 0.0
    %7701 = vmatpush1.msra.mxu0 0.0
    %7702 = vmatprep.subr.mxu0 0.0
    %7703 = vmatpush1.msra.mxu0 0.0
    %7704 = vmatprep.subr.mxu0 0.0
    %7705 = vmatpush1.msra.mxu0 0.0
    %7706 = vmatprep.subr.mxu0 0.0
    %7707 = vmatpush1.msra.mxu0 0.0
    %7708 = vmatprep.subr.mxu0 0.0
    %7709 = vmatpush1.msra.mxu0 0.0
    %7710 = vmatprep.subr.mxu0 0.0
    %7711 = vmatpush1.msra.mxu0 0.0
    %7712 = vmatprep.subr.mxu0 0.0
    %7713 = vmatpush1.msra.mxu0 0.0
    %7714 = vmatprep.subr.mxu0 0.0
    %7715 = vmatpush1.msra.mxu0 0.0
    %7716 = vmatprep.subr.mxu0 0.0
    %7717 = vmatpush1.msra.mxu0 0.0
    %7718 = vmatprep.subr.mxu0 0.0
    %7719 = vmatpush1.msra.mxu0 0.0
    %7720 = vmatprep.subr.mxu0 0.0
    %7721 = vmatpush1.msra.mxu0 0.0
    %7722 = vmatprep.subr.mxu0 0.0
    %7723 = vmatpush1.msra.mxu0 0.0
    %7724 = vmatprep.subr.mxu0 0.0
    %7725 = vmatpush1.msra.mxu0 0.0
    %7726 = vmatprep.subr.mxu0 0.0
    %7727 = vmatpush1.msra.mxu0 0.0
    %7728 = vmatprep.subr.mxu0 0.0
    %7729 = vmatpush1.msra.mxu0 0.0
    %7730 = vmatprep.subr.mxu0 0.0
    %7731 = vmatpush1.msra.mxu0 0.0
    %7732 = vmatprep.subr.mxu0 0.0
    %7733 = vmatpush1.msra.mxu0 0.0
    %7734 = vmatprep.subr.mxu0 0.0
    %7735 = vmatpush1.msra.mxu0 0.0
    %7736 = vmatprep.subr.mxu0 0.0
    %7737 = vmatpush1.msra.mxu0 0.0
    %7738 = vmatprep.subr.mxu0 0.0
    %7739 = vmatpush1.msra.mxu0 0.0
    %7740 = vmatprep.subr.mxu0 0.0
    %7741 = vmatpush1.msra.mxu0 0.0
    %7742 = vmatprep.mubr.f32.mxu0 0.0
    %7743 = vmatmul.mubr.f32.gmra.mrb[0].mxu0 %v7673
    %v7744 = vpop.f32.mrb[0].mxu0
    %v7745 = vadd.f32 0.0, %v7744
    %v7746 = vpop.f32.mrb[0].mxu0
    %7747 = vdwg.mxu0
    %v7748 = vadd.f32 %v7666, %v7745
    %v7749 = vld [vmem:[%s3587] sm:$0xff]
    %v7750 = vld [vmem:[%s3587 + $0x8] sm:$0xff]
    %v7751 = vld [vmem:[%s3587 + $0x10] sm:$0xff]
    %v7752 = vld [vmem:[%s3587 + $0x18] sm:$0xff]
    %v7753 = vld [vmem:[%s3587 + $0x20] sm:$0xf]
    %v7754 = vrot.slane %v6925, 2
    %v7755 = vsel %vm2761, %v7754, 0
    %v7758 = vsel %vm2765, %v7753, 0
    %7760 = vmatprep.subr.mxu0 0.0
    %7761 = vmatpush1.msra.mxu0 %v7749
    %7762 = vmatprep.subr.mxu0 0.0
    %7763 = vmatpush1.msra.mxu0 %v7750
    %7764 = vmatprep.subr.mxu0 0.0
    %7765 = vmatpush1.msra.mxu0 %v7751
    %7766 = vmatprep.subr.mxu0 0.0
    %7767 = vmatpush1.msra.mxu0 %v7752
    %7768 = vmatprep.subr.mxu0 0.0
    %7769 = vmatpush1.msra.mxu0 %v7758
    %7770 = vmatprep.subr.mxu0 0.0
    %7771 = vmatpush1.msra.mxu0 0.0
    %7772 = vmatprep.subr.mxu0 0.0
    %7773 = vmatpush1.msra.mxu0 0.0
    %7774 = vmatprep.subr.mxu0 0.0
    %7775 = vmatpush1.msra.mxu0 0.0
    %7776 = vmatprep.subr.mxu0 0.0
    %7777 = vmatpush1.msra.mxu0 0.0
    %7778 = vmatprep.subr.mxu0 0.0
    %7779 = vmatpush1.msra.mxu0 0.0
    %7780 = vmatprep.subr.mxu0 0.0
    %7781 = vmatpush1.msra.mxu0 0.0
    %7782 = vmatprep.subr.mxu0 0.0
    %7783 = vmatpush1.msra.mxu0 0.0
    %7784 = vmatprep.subr.mxu0 0.0
    %7785 = vmatpush1.msra.mxu0 0.0
    %7786 = vmatprep.subr.mxu0 0.0
    %7787 = vmatpush1.msra.mxu0 0.0
    %7788 = vmatprep.subr.mxu0 0.0
    %7789 = vmatpush1.msra.mxu0 0.0
    %7790 = vmatprep.subr.mxu0 0.0
    %7791 = vmatpush1.msra.mxu0 0.0
    %7792 = vmatprep.subr.mxu0 0.0
    %7793 = vmatpush1.msra.mxu0 0.0
    %7794 = vmatprep.subr.mxu0 0.0
    %7795 = vmatpush1.msra.mxu0 0.0
    %7796 = vmatprep.subr.mxu0 0.0
    %7797 = vmatpush1.msra.mxu0 0.0
    %7798 = vmatprep.subr.mxu0 0.0
    %7799 = vmatpush1.msra.mxu0 0.0
    %7800 = vmatprep.subr.mxu0 0.0
    %7801 = vmatpush1.msra.mxu0 0.0
    %7802 = vmatprep.subr.mxu0 0.0
    %7803 = vmatpush1.msra.mxu0 0.0
    %7804 = vmatprep.subr.mxu0 0.0
    %7805 = vmatpush1.msra.mxu0 0.0
    %7806 = vmatprep.subr.mxu0 0.0
    %7807 = vmatpush1.msra.mxu0 0.0
    %7808 = vmatprep.subr.mxu0 0.0
    %7809 = vmatpush1.msra.mxu0 0.0
    %7810 = vmatprep.subr.mxu0 0.0
    %7811 = vmatpush1.msra.mxu0 0.0
    %7812 = vmatprep.subr.mxu0 0.0
    %7813 = vmatpush1.msra.mxu0 0.0
    %7814 = vmatprep.subr.mxu0 0.0
    %7815 = vmatpush1.msra.mxu0 0.0
    %7816 = vmatprep.subr.mxu0 0.0
    %7817 = vmatpush1.msra.mxu0 0.0
    %7818 = vmatprep.subr.mxu0 0.0
    %7819 = vmatpush1.msra.mxu0 0.0
    %7820 = vmatprep.subr.mxu0 0.0
    %7821 = vmatpush1.msra.mxu0 0.0
    %7822 = vmatprep.subr.mxu0 0.0
    %7823 = vmatpush1.msra.mxu0 0.0
    %7824 = vmatprep.mubr.f32.mxu0 0.0
    %7825 = vmatmul.mubr.f32.gmra.mrb[0].mxu0 %v7755
    %v7826 = vpop.f32.mrb[0].mxu0
    %v7827 = vadd.f32 0.0, %v7826
    %v7828 = vpop.f32.mrb[0].mxu0
    %7829 = vdwg.mxu0
    %v7830 = vadd.f32 %v7748, %v7827
    %v7831 = vld [vmem:[%s3670] sm:$0xff]
    %v7832 = vld [vmem:[%s3670 + $0x8] sm:$0xff]
    %v7833 = vld [vmem:[%s3670 + $0x10] sm:$0xff]
    %v7834 = vld [vmem:[%s3670 + $0x18] sm:$0xff]
    %v7835 = vld [vmem:[%s3670 + $0x20] sm:$0xf]
    %v7836 = vrot.slane %v6925, 3
    %v7837 = vsel %vm2761, %v7836, 0
    %v7840 = vsel %vm2765, %v7835, 0
    %7842 = vmatprep.subr.mxu0 0.0
    %7843 = vmatpush1.msra.mxu0 %v7831
    %7844 = vmatprep.subr.mxu0 0.0
    %7845 = vmatpush1.msra.mxu0 %v7832
    %7846 = vmatprep.subr.mxu0 0.0
    %7847 = vmatpush1.msra.mxu0 %v7833
    %7848 = vmatprep.subr.mxu0 0.0
    %7849 = vmatpush1.msra.mxu0 %v7834
    %7850 = vmatprep.subr.mxu0 0.0
    %7851 = vmatpush1.msra.mxu0 %v7840
    %7852 = vmatprep.subr.mxu0 0.0
    %7853 = vmatpush1.msra.mxu0 0.0
    %7854 = vmatprep.subr.mxu0 0.0
    %7855 = vmatpush1.msra.mxu0 0.0
    %7856 = vmatprep.subr.mxu0 0.0
    %7857 = vmatpush1.msra.mxu0 0.0
    %7858 = vmatprep.subr.mxu0 0.0
    %7859 = vmatpush1.msra.mxu0 0.0
    %7860 = vmatprep.subr.mxu0 0.0
    %7861 = vmatpush1.msra.mxu0 0.0
    %7862 = vmatprep.subr.mxu0 0.0
    %7863 = vmatpush1.msra.mxu0 0.0
    %7864 = vmatprep.subr.mxu0 0.0
    %7865 = vmatpush1.msra.mxu0 0.0
    %7866 = vmatprep.subr.mxu0 0.0
    %7867 = vmatpush1.msra.mxu0 0.0
    %7868 = vmatprep.subr.mxu0 0.0
    %7869 = vmatpush1.msra.mxu0 0.0
    %7870 = vmatprep.subr.mxu0 0.0
    %7871 = vmatpush1.msra.mxu0 0.0
    %7872 = vmatprep.subr.mxu0 0.0
    %7873 = vmatpush1.msra.mxu0 0.0
    %7874 = vmatprep.subr.mxu0 0.0
    %7875 = vmatpush1.msra.mxu0 0.0
    %7876 = vmatprep.subr.mxu0 0.0
    %7877 = vmatpush1.msra.mxu0 0.0
    %7878 = vmatprep.subr.mxu0 0.0
    %7879 = vmatpush1.msra.mxu0 0.0
    %7880 = vmatprep.subr.mxu0 0.0
    %7881 = vmatpush1.msra.mxu0 0.0
    %7882 = vmatprep.subr.mxu0 0.0
    %7883 = vmatpush1.msra.mxu0 0.0
    %7884 = vmatprep.subr.mxu0 0.0
    %7885 = vmatpush1.msra.mxu0 0.0
    %7886 = vmatprep.subr.mxu0 0.0
    %7887 = vmatpush1.msra.mxu0 0.0
    %7888 = vmatprep.subr.mxu0 0.0
    %7889 = vmatpush1.msra.mxu0 0.0
    %7890 = vmatprep.subr.mxu0 0.0
    %7891 = vmatpush1.msra.mxu0 0.0
    %7892 = vmatprep.subr.mxu0 0.0
    %7893 = vmatpush1.msra.mxu0 0.0
    %7894 = vmatprep.subr.mxu0 0.0
    %7895 = vmatpush1.msra.mxu0 0.0
    %7896 = vmatprep.subr.mxu0 0.0
    %7897 = vmatpush1.msra.mxu0 0.0
    %7898 = vmatprep.subr.mxu0 0.0
    %7899 = vmatpush1.msra.mxu0 0.0
    %7900 = vmatprep.subr.mxu0 0.0
    %7901 = vmatpush1.msra.mxu0 0.0
    %7902 = vmatprep.subr.mxu0 0.0
    %7903 = vmatpush1.msra.mxu0 0.0
    %7904 = vmatprep.subr.mxu0 0.0
    %7905 = vmatpush1.msra.mxu0 0.0
    %7906 = vmatprep.mubr.f32.mxu0 0.0
    %7907 = vmatmul.mubr.f32.gmra.mrb[0].mxu0 %v7837
    %v7908 = vpop.f32.mrb[0].mxu0
    %v7909 = vadd.f32 0.0, %v7908
    %v7910 = vpop.f32.mrb[0].mxu0
    %7911 = vdwg.mxu0
    %v7912 = vadd.f32 %v7830, %v7909
    %v7913 = vld [vmem:[%s3753] sm:$0xff]
    %v7914 = vld [vmem:[%s3753 + $0x8] sm:$0xff]
    %v7915 = vld [vmem:[%s3753 + $0x10] sm:$0xff]
    %v7916 = vld [vmem:[%s3753 + $0x18] sm:$0xff]
    %v7917 = vld [vmem:[%s3753 + $0x20] sm:$0xf]
    %v7918 = vrot.slane %v6925, 4
    %v7919 = vsel %vm2761, %v7918, 0
    %v7922 = vsel %vm2765, %v7917, 0
    %7924 = vmatprep.subr.mxu0 0.0
    %7925 = vmatpush1.msra.mxu0 %v7913
    %7926 = vmatprep.subr.mxu0 0.0
    %7927 = vmatpush1.msra.mxu0 %v7914
    %7928 = vmatprep.subr.mxu0 0.0
    %7929 = vmatpush1.msra.mxu0 %v7915
    %7930 = vmatprep.subr.mxu0 0.0
    %7931 = vmatpush1.msra.mxu0 %v7916
    %7932 = vmatprep.subr.mxu0 0.0
    %7933 = vmatpush1.msra.mxu0 %v7922
    %7934 = vmatprep.subr.mxu0 0.0
    %7935 = vmatpush1.msra.mxu0 0.0
    %7936 = vmatprep.subr.mxu0 0.0
    %7937 = vmatpush1.msra.mxu0 0.0
    %7938 = vmatprep.subr.mxu0 0.0
    %7939 = vmatpush1.msra.mxu0 0.0
    %7940 = vmatprep.subr.mxu0 0.0
    %7941 = vmatpush1.msra.mxu0 0.0
    %7942 = vmatprep.subr.mxu0 0.0
    %7943 = vmatpush1.msra.mxu0 0.0
    %7944 = vmatprep.subr.mxu0 0.0
    %7945 = vmatpush1.msra.mxu0 0.0
    %7946 = vmatprep.subr.mxu0 0.0
    %7947 = vmatpush1.msra.mxu0 0.0
    %7948 = vmatprep.subr.mxu0 0.0
    %7949 = vmatpush1.msra.mxu0 0.0
    %7950 = vmatprep.subr.mxu0 0.0
    %7951 = vmatpush1.msra.mxu0 0.0
    %7952 = vmatprep.subr.mxu0 0.0
    %7953 = vmatpush1.msra.mxu0 0.0
    %7954 = vmatprep.subr.mxu0 0.0
    %7955 = vmatpush1.msra.mxu0 0.0
    %7956 = vmatprep.subr.mxu0 0.0
    %7957 = vmatpush1.msra.mxu0 0.0
    %7958 = vmatprep.subr.mxu0 0.0
    %7959 = vmatpush1.msra.mxu0 0.0
    %7960 = vmatprep.subr.mxu0 0.0
    %7961 = vmatpush1.msra.mxu0 0.0
    %7962 = vmatprep.subr.mxu0 0.0
    %7963 = vmatpush1.msra.mxu0 0.0
    %7964 = vmatprep.subr.mxu0 0.0
    %7965 = vmatpush1.msra.mxu0 0.0
    %7966 = vmatprep.subr.mxu0 0.0
    %7967 = vmatpush1.msra.mxu0 0.0
    %7968 = vmatprep.subr.mxu0 0.0
    %7969 = vmatpush1.msra.mxu0 0.0
    %7970 = vmatprep.subr.mxu0 0.0
    %7971 = vmatpush1.msra.mxu0 0.0
    %7972 = vmatprep.subr.mxu0 0.0
    %7973 = vmatpush1.msra.mxu0 0.0
    %7974 = vmatprep.subr.mxu0 0.0
    %7975 = vmatpush1.msra.mxu0 0.0
    %7976 = vmatprep.subr.mxu0 0.0
    %7977 = vmatpush1.msra.mxu0 0.0
    %7978 = vmatprep.subr.mxu0 0.0
    %7979 = vmatpush1.msra.mxu0 0.0
    %7980 = vmatprep.subr.mxu0 0.0
    %7981 = vmatpush1.msra.mxu0 0.0
    %7982 = vmatprep.subr.mxu0 0.0
    %7983 = vmatpush1.msra.mxu0 0.0
    %7984 = vmatprep.subr.mxu0 0.0
    %7985 = vmatpush1.msra.mxu0 0.0
    %7986 = vmatprep.subr.mxu0 0.0
    %7987 = vmatpush1.msra.mxu0 0.0
    %7988 = vmatprep.mubr.f32.mxu0 0.0
    %7989 = vmatmul.mubr.f32.gmra.mrb[0].mxu0 %v7919
    %v7990 = vpop.f32.mrb[0].mxu0
    %v7991 = vadd.f32 0.0, %v7990
    %v7992 = vpop.f32.mrb[0].mxu0
    %7993 = vdwg.mxu0
    %v7994 = vadd.f32 %v7912, %v7991
    %v7995 = vld [vmem:[%s3836] sm:$0xff]
    %v7996 = vld [vmem:[%s3836 + $0x8] sm:$0xff]
    %v7997 = vld [vmem:[%s3836 + $0x10] sm:$0xff]
    %v7998 = vld [vmem:[%s3836 + $0x18] sm:$0xff]
    %v7999 = vld [vmem:[%s3836 + $0x20] sm:$0xf]
    %v8000 = vrot.slane %v6925, 5
    %v8001 = vsel %vm2761, %v8000, 0
    %v8004 = vsel %vm2765, %v7999, 0
    %8006 = vmatprep.subr.mxu0 0.0
    %8007 = vmatpush1.msra.mxu0 %v7995
    %8008 = vmatprep.subr.mxu0 0.0
    %8009 = vmatpush1.msra.mxu0 %v7996
    %8010 = vmatprep.subr.mxu0 0.0
    %8011 = vmatpush1.msra.mxu0 %v7997
    %8012 = vmatprep.subr.mxu0 0.0
    %8013 = vmatpush1.msra.mxu0 %v7998
    %8014 = vmatprep.subr.mxu0 0.0
    %8015 = vmatpush1.msra.mxu0 %v8004
    %8016 = vmatprep.subr.mxu0 0.0
    %8017 = vmatpush1.msra.mxu0 0.0
    %8018 = vmatprep.subr.mxu0 0.0
    %8019 = vmatpush1.msra.mxu0 0.0
    %8020 = vmatprep.subr.mxu0 0.0
    %8021 = vmatpush1.msra.mxu0 0.0
    %8022 = vmatprep.subr.mxu0 0.0
    %8023 = vmatpush1.msra.mxu0 0.0
    %8024 = vmatprep.subr.mxu0 0.0
    %8025 = vmatpush1.msra.mxu0 0.0
    %8026 = vmatprep.subr.mxu0 0.0
    %8027 = vmatpush1.msra.mxu0 0.0
    %8028 = vmatprep.subr.mxu0 0.0
    %8029 = vmatpush1.msra.mxu0 0.0
    %8030 = vmatprep.subr.mxu0 0.0
    %8031 = vmatpush1.msra.mxu0 0.0
    %8032 = vmatprep.subr.mxu0 0.0
    %8033 = vmatpush1.msra.mxu0 0.0
    %8034 = vmatprep.subr.mxu0 0.0
    %8035 = vmatpush1.msra.mxu0 0.0
    %8036 = vmatprep.subr.mxu0 0.0
    %8037 = vmatpush1.msra.mxu0 0.0
    %8038 = vmatprep.subr.mxu0 0.0
    %8039 = vmatpush1.msra.mxu0 0.0
    %8040 = vmatprep.subr.mxu0 0.0
    %8041 = vmatpush1.msra.mxu0 0.0
    %8042 = vmatprep.subr.mxu0 0.0
    %8043 = vmatpush1.msra.mxu0 0.0
    %8044 = vmatprep.subr.mxu0 0.0
    %8045 = vmatpush1.msra.mxu0 0.0
    %8046 = vmatprep.subr.mxu0 0.0
    %8047 = vmatpush1.msra.mxu0 0.0
    %8048 = vmatprep.subr.mxu0 0.0
    %8049 = vmatpush1.msra.mxu0 0.0
    %8050 = vmatprep.subr.mxu0 0.0
    %8051 = vmatpush1.msra.mxu0 0.0
    %8052 = vmatprep.subr.mxu0 0.0
    %8053 = vmatpush1.msra.mxu0 0.0
    %8054 = vmatprep.subr.mxu0 0.0
    %8055 = vmatpush1.msra.mxu0 0.0
    %8056 = vmatprep.subr.mxu0 0.0
    %8057 = vmatpush1.msra.mxu0 0.0
    %8058 = vmatprep.subr.mxu0 0.0
    %8059 = vmatpush1.msra.mxu0 0.0
    %8060 = vmatprep.subr.mxu0 0.0
    %8061 = vmatpush1.msra.mxu0 0.0
    %8062 = vmatprep.subr.mxu0 0.0
    %8063 = vmatpush1.msra.mxu0 0.0
    %8064 = vmatprep.subr.mxu0 0.0
    %8065 = vmatpush1.msra.mxu0 0.0
    %8066 = vmatprep.subr.mxu0 0.0
    %8067 = vmatpush1.msra.mxu0 0.0
    %8068 = vmatprep.subr.mxu0 0.0
    %8069 = vmatpush1.msra.mxu0 0.0
    %8070 = vmatprep.mubr.f32.mxu0 0.0
    %8071 = vmatmul.mubr.f32.gmra.mrb[0].mxu0 %v8001
    %v8072 = vpop.f32.mrb[0].mxu0
    %v8073 = vadd.f32 0.0, %v8072
    %v8074 = vpop.f32.mrb[0].mxu0
    %8075 = vdwg.mxu0
    %v8076 = vadd.f32 %v7994, %v8073
    %v8077 = vld [vmem:[%s3919] sm:$0xff]
    %v8078 = vld [vmem:[%s3919 + $0x8] sm:$0xff]
    %v8079 = vld [vmem:[%s3919 + $0x10] sm:$0xff]
    %v8080 = vld [vmem:[%s3919 + $0x18] sm:$0xff]
    %v8081 = vld [vmem:[%s3919 + $0x20] sm:$0xf]
    %v8082 = vrot.slane %v6925, 6
    %v8083 = vsel %vm2761, %v8082, 0
    %v8086 = vsel %vm2765, %v8081, 0
    %8088 = vmatprep.subr.mxu0 0.0
    %8089 = vmatpush1.msra.mxu0 %v8077
    %8090 = vmatprep.subr.mxu0 0.0
    %8091 = vmatpush1.msra.mxu0 %v8078
    %8092 = vmatprep.subr.mxu0 0.0
    %8093 = vmatpush1.msra.mxu0 %v8079
    %8094 = vmatprep.subr.mxu0 0.0
    %8095 = vmatpush1.msra.mxu0 %v8080
    %8096 = vmatprep.subr.mxu0 0.0
    %8097 = vmatpush1.msra.mxu0 %v8086
    %8098 = vmatprep.subr.mxu0 0.0
    %8099 = vmatpush1.msra.mxu0 0.0
    %8100 = vmatprep.subr.mxu0 0.0
    %8101 = vmatpush1.msra.mxu0 0.0
    %8102 = vmatprep.subr.mxu0 0.0
    %8103 = vmatpush1.msra.mxu0 0.0
    %8104 = vmatprep.subr.mxu0 0.0
    %8105 = vmatpush1.msra.mxu0 0.0
    %8106 = vmatprep.subr.mxu0 0.0
    %8107 = vmatpush1.msra.mxu0 0.0
    %8108 = vmatprep.subr.mxu0 0.0
    %8109 = vmatpush1.msra.mxu0 0.0
    %8110 = vmatprep.subr.mxu0 0.0
    %8111 = vmatpush1.msra.mxu0 0.0
    %8112 = vmatprep.subr.mxu0 0.0
    %8113 = vmatpush1.msra.mxu0 0.0
    %8114 = vmatprep.subr.mxu0 0.0
    %8115 = vmatpush1.msra.mxu0 0.0
    %8116 = vmatprep.subr.mxu0 0.0
    %8117 = vmatpush1.msra.mxu0 0.0
    %8118 = vmatprep.subr.mxu0 0.0
    %8119 = vmatpush1.msra.mxu0 0.0
    %8120 = vmatprep.subr.mxu0 0.0
    %8121 = vmatpush1.msra.mxu0 0.0
    %8122 = vmatprep.subr.mxu0 0.0
    %8123 = vmatpush1.msra.mxu0 0.0
    %8124 = vmatprep.subr.mxu0 0.0
    %8125 = vmatpush1.msra.mxu0 0.0
    %8126 = vmatprep.subr.mxu0 0.0
    %8127 = vmatpush1.msra.mxu0 0.0
    %8128 = vmatprep.subr.mxu0 0.0
    %8129 = vmatpush1.msra.mxu0 0.0
    %8130 = vmatprep.subr.mxu0 0.0
    %8131 = vmatpush1.msra.mxu0 0.0
    %8132 = vmatprep.subr.mxu0 0.0
    %8133 = vmatpush1.msra.mxu0 0.0
    %8134 = vmatprep.subr.mxu0 0.0
    %8135 = vmatpush1.msra.mxu0 0.0
    %8136 = vmatprep.subr.mxu0 0.0
    %8137 = vmatpush1.msra.mxu0 0.0
    %8138 = vmatprep.subr.mxu0 0.0
    %8139 = vmatpush1.msra.mxu0 0.0
    %8140 = vmatprep.subr.mxu0 0.0
    %8141 = vmatpush1.msra.mxu0 0.0
    %8142 = vmatprep.subr.mxu0 0.0
    %8143 = vmatpush1.msra.mxu0 0.0
    %8144 = vmatprep.subr.mxu0 0.0
    %8145 = vmatpush1.msra.mxu0 0.0
    %8146 = vmatprep.subr.mxu0 0.0
    %8147 = vmatpush1.msra.mxu0 0.0
    %8148 = vmatprep.subr.mxu0 0.0
    %8149 = vmatpush1.msra.mxu0 0.0
    %8150 = vmatprep.subr.mxu0 0.0
    %8151 = vmatpush1.msra.mxu0 0.0
    %8152 = vmatprep.mubr.f32.mxu0 0.0
    %8153 = vmatmul.mubr.f32.gmra.mrb[0].mxu0 %v8083
    %v8154 = vpop.f32.mrb[0].mxu0
    %v8155 = vadd.f32 0.0, %v8154
    %v8156 = vpop.f32.mrb[0].mxu0
    %8157 = vdwg.mxu0
    %v8158 = vadd.f32 %v8076, %v8155
    %v8159 = vld [vmem:[%s4002] sm:$0xff]
    %v8160 = vld [vmem:[%s4002 + $0x8] sm:$0xff]
    %v8161 = vld [vmem:[%s4002 + $0x10] sm:$0xff]
    %v8162 = vld [vmem:[%s4002 + $0x18] sm:$0xff]
    %v8163 = vld [vmem:[%s4002 + $0x20] sm:$0xf]
    %v8164 = vrot.slane %v6925, 7
    %v8165 = vsel %vm2761, %v8164, 0
    %v8168 = vsel %vm2765, %v8163, 0
    %8170 = vmatprep.subr.mxu0 0.0
    %8171 = vmatpush1.msra.mxu0 %v8159
    %8172 = vmatprep.subr.mxu0 0.0
    %8173 = vmatpush1.msra.mxu0 %v8160
    %8174 = vmatprep.subr.mxu0 0.0
    %8175 = vmatpush1.msra.mxu0 %v8161
    %8176 = vmatprep.subr.mxu0 0.0
    %8177 = vmatpush1.msra.mxu0 %v8162
    %8178 = vmatprep.subr.mxu0 0.0
    %8179 = vmatpush1.msra.mxu0 %v8168
    %8180 = vmatprep.subr.mxu0 0.0
    %8181 = vmatpush1.msra.mxu0 0.0
    %8182 = vmatprep.subr.mxu0 0.0
    %8183 = vmatpush1.msra.mxu0 0.0
    %8184 = vmatprep.subr.mxu0 0.0
    %8185 = vmatpush1.msra.mxu0 0.0
    %8186 = vmatprep.subr.mxu0 0.0
    %8187 = vmatpush1.msra.mxu0 0.0
    %8188 = vmatprep.subr.mxu0 0.0
    %8189 = vmatpush1.msra.mxu0 0.0
    %8190 = vmatprep.subr.mxu0 0.0
    %8191 = vmatpush1.msra.mxu0 0.0
    %8192 = vmatprep.subr.mxu0 0.0
    %8193 = vmatpush1.msra.mxu0 0.0
    %8194 = vmatprep.subr.mxu0 0.0
    %8195 = vmatpush1.msra.mxu0 0.0
    %8196 = vmatprep.subr.mxu0 0.0
    %8197 = vmatpush1.msra.mxu0 0.0
    %8198 = vmatprep.subr.mxu0 0.0
    %8199 = vmatpush1.msra.mxu0 0.0
    %8200 = vmatprep.subr.mxu0 0.0
    %8201 = vmatpush1.msra.mxu0 0.0
    %8202 = vmatprep.subr.mxu0 0.0
    %8203 = vmatpush1.msra.mxu0 0.0
    %8204 = vmatprep.subr.mxu0 0.0
    %8205 = vmatpush1.msra.mxu0 0.0
    %8206 = vmatprep.subr.mxu0 0.0
    %8207 = vmatpush1.msra.mxu0 0.0
    %8208 = vmatprep.subr.mxu0 0.0
    %8209 = vmatpush1.msra.mxu0 0.0
    %8210 = vmatprep.subr.mxu0 0.0
    %8211 = vmatpush1.msra.mxu0 0.0
    %8212 = vmatprep.subr.mxu0 0.0
    %8213 = vmatpush1.msra.mxu0 0.0
    %8214 = vmatprep.subr.mxu0 0.0
    %8215 = vmatpush1.msra.mxu0 0.0
    %8216 = vmatprep.subr.mxu0 0.0
    %8217 = vmatpush1.msra.mxu0 0.0
    %8218 = vmatprep.subr.mxu0 0.0
    %8219 = vmatpush1.msra.mxu0 0.0
    %8220 = vmatprep.subr.mxu0 0.0
    %8221 = vmatpush1.msra.mxu0 0.0
    %8222 = vmatprep.subr.mxu0 0.0
    %8223 = vmatpush1.msra.mxu0 0.0
    %8224 = vmatprep.subr.mxu0 0.0
    %8225 = vmatpush1.msra.mxu0 0.0
    %8226 = vmatprep.subr.mxu0 0.0
    %8227 = vmatpush1.msra.mxu0 0.0
    %8228 = vmatprep.subr.mxu0 0.0
    %8229 = vmatpush1.msra.mxu0 0.0
    %8230 = vmatprep.subr.mxu0 0.0
    %8231 = vmatpush1.msra.mxu0 0.0
    %8232 = vmatprep.subr.mxu0 0.0
    %8233 = vmatpush1.msra.mxu0 0.0
    %8234 = vmatprep.mubr.f32.mxu0 0.0
    %8235 = vmatmul.mubr.f32.gmra.mrb[0].mxu0 %v8165
    %v8236 = vpop.f32.mrb[0].mxu0
    %v8237 = vadd.f32 0.0, %v8236
    %v8238 = vpop.f32.mrb[0].mxu0
    %8239 = vdwg.mxu0
    %v8240 = vadd.f32 %v8158, %v8237
    %v8241 = vmax.f32 %v8240, 0.0
    %v8242 = vld [vmem:[%s8] sm:$0xff]
    %v8243 = vld [vmem:[%s8 + $0x8] sm:$0xff]
    %v8244 = vld [vmem:[%s8 + $0x10] sm:$0xff]
    %v8245 = vld [vmem:[%s8 + $0x18] sm:$0xff]
    %v8246 = vld [vmem:[%s8 + $0x20] sm:$0xff]
    %v8247 = vld [vmem:[%s8 + $0x28] sm:$0xff]
    %v8248 = vld [vmem:[%s8 + $0x30] sm:$0xff]
    %v8249 = vld [vmem:[%s8 + $0x38] sm:$0xff]
    %v8250 = vld [vmem:[%s8 + $0x40] sm:$0xff]
    %v8251 = vld [vmem:[%s8 + $0x48] sm:$0xff]
    %v8252 = vld [vmem:[%s8 + $0x50] sm:$0xff]
    %v8253 = vld [vmem:[%s8 + $0x58] sm:$0xff]
    %v8254 = vld [vmem:[%s8 + $0x60] sm:$0xff]
    %v8255 = vld [vmem:[%s8 + $0x68] sm:$0xff]
    %v8256 = vld [vmem:[%s8 + $0x70] sm:$0xff]
    %v8257 = vld [vmem:[%s9] sm:$0x1]
    %v8259 = vsel %vm4102, %v8241, 0
    %8261 = vmatprep.subr.mxu0 0.0
    %8262 = vmatpush1.msra.mxu0 %v8242
    %8263 = vmatprep.subr.mxu0 0.0
    %8264 = vmatpush1.msra.mxu0 %v8243
    %8265 = vmatprep.subr.mxu0 0.0
    %8266 = vmatpush1.msra.mxu0 %v8244
    %8267 = vmatprep.subr.mxu0 0.0
    %8268 = vmatpush1.msra.mxu0 %v8245
    %8269 = vmatprep.subr.mxu0 0.0
    %8270 = vmatpush1.msra.mxu0 %v8246
    %8271 = vmatprep.subr.mxu0 0.0
    %8272 = vmatpush1.msra.mxu0 %v8247
    %8273 = vmatprep.subr.mxu0 0.0
    %8274 = vmatpush1.msra.mxu0 %v8248
    %8275 = vmatprep.subr.mxu0 0.0
    %8276 = vmatpush1.msra.mxu0 %v8249
    %8277 = vmatprep.subr.mxu0 0.0
    %8278 = vmatpush1.msra.mxu0 %v8250
    %8279 = vmatprep.subr.mxu0 0.0
    %8280 = vmatpush1.msra.mxu0 %v8251
    %8281 = vmatprep.subr.mxu0 0.0
    %8282 = vmatpush1.msra.mxu0 %v8252
    %8283 = vmatprep.subr.mxu0 0.0
    %8284 = vmatpush1.msra.mxu0 %v8253
    %8285 = vmatprep.subr.mxu0 0.0
    %8286 = vmatpush1.msra.mxu0 %v8254
    %8287 = vmatprep.subr.mxu0 0.0
    %8288 = vmatpush1.msra.mxu0 %v8255
    %8289 = vmatprep.subr.mxu0 0.0
    %8290 = vmatpush1.msra.mxu0 %v8256
    %8291 = vmatprep.subr.mxu0 0.0
    %8292 = vmatpush1.msra.mxu0 0.0
    %8293 = vmatprep.subr.mxu0 0.0
    %8294 = vmatpush1.msra.mxu0 0.0
    %8295 = vmatprep.subr.mxu0 0.0
    %8296 = vmatpush1.msra.mxu0 0.0
    %8297 = vmatprep.subr.mxu0 0.0
    %8298 = vmatpush1.msra.mxu0 0.0
    %8299 = vmatprep.subr.mxu0 0.0
    %8300 = vmatpush1.msra.mxu0 0.0
    %8301 = vmatprep.subr.mxu0 0.0
    %8302 = vmatpush1.msra.mxu0 0.0
    %8303 = vmatprep.subr.mxu0 0.0
    %8304 = vmatpush1.msra.mxu0 0.0
    %8305 = vmatprep.subr.mxu0 0.0
    %8306 = vmatpush1.msra.mxu0 0.0
    %8307 = vmatprep.subr.mxu0 0.0
    %8308 = vmatpush1.msra.mxu0 0.0
    %8309 = vmatprep.subr.mxu0 0.0
    %8310 = vmatpush1.msra.mxu0 0.0
    %8311 = vmatprep.subr.mxu0 0.0
    %8312 = vmatpush1.msra.mxu0 0.0
    %8313 = vmatprep.subr.mxu0 0.0
    %8314 = vmatpush1.msra.mxu0 0.0
    %8315 = vmatprep.subr.mxu0 0.0
    %8316 = vmatpush1.msra.mxu0 0.0
    %8317 = vmatprep.subr.mxu0 0.0
    %8318 = vmatpush1.msra.mxu0 0.0
    %8319 = vmatprep.subr.mxu0 0.0
    %8320 = vmatpush1.msra.mxu0 0.0
    %8321 = vmatprep.subr.mxu0 0.0
    %8322 = vmatpush1.msra.mxu0 0.0
    %8323 = vmatprep.subr.mxu0 0.0
    %8324 = vmatpush1.msra.mxu0 0.0
    %8325 = vmatprep.mubr.f32.mxu0 0.0
    %8326 = vmatmul.mubr.f32.gmra.mrb[0].mxu0 %v8259
    %v8327 = vpop.f32.mrb[0].mxu0
    %v8328 = vadd.f32 %v8257, %v8327
    %v8329 = vpop.f32.mrb[0].mxu0
    %8330 = vdwg.mxu0
    %v8331 = vmax.f32 %v8328, 0.0
    %v8332 = vld [vmem:[%s10] sm:$0xff]
    %v8333 = vld [vmem:[%s10 + $0x8] sm:$0xff]
    %v8334 = vld [vmem:[%s10 + $0x10] sm:$0xff]
    %v8335 = vld [vmem:[%s10 + $0x18] sm:$0xff]
    %v8336 = vld [vmem:[%s10 + $0x20] sm:$0xff]
    %v8337 = vld [vmem:[%s10 + $0x28] sm:$0xff]
    %v8338 = vld [vmem:[%s10 + $0x30] sm:$0xff]
    %v8339 = vld [vmem:[%s10 + $0x38] sm:$0xff]
    %v8340 = vld [vmem:[%s10 + $0x40] sm:$0xff]
    %v8341 = vld [vmem:[%s10 + $0x48] sm:$0xff]
    %v8342 = vld [vmem:[%s10 + $0x50] sm:$0xf]
    %v8343 = vld [vmem:[%s11] sm:$0x1]
    %v8345 = vsel %vm4189, %v8331, 0
    %v8348 = vsel %vm2765, %v8342, 0
    %8350 = vmatprep.subr.mxu0 0.0
    %8351 = vmatpush1.msra.mxu0 %v8332
    %8352 = vmatprep.subr.mxu0 0.0
    %8353 = vmatpush1.msra.mxu0 %v8333
    %8354 = vmatprep.subr.mxu0 0.0
    %8355 = vmatpush1.msra.mxu0 %v8334
    %8356 = vmatprep.subr.mxu0 0.0
    %8357 = vmatpush1.msra.mxu0 %v8335
    %8358 = vmatprep.subr.mxu0 0.0
    %8359 = vmatpush1.msra.mxu0 %v8336
    %8360 = vmatprep.subr.mxu0 0.0
    %8361 = vmatpush1.msra.mxu0 %v8337
    %8362 = vmatprep.subr.mxu0 0.0
    %8363 = vmatpush1.msra.mxu0 %v8338
    %8364 = vmatprep.subr.mxu0 0.0
    %8365 = vmatpush1.msra.mxu0 %v8339
    %8366 = vmatprep.subr.mxu0 0.0
    %8367 = vmatpush1.msra.mxu0 %v8340
    %8368 = vmatprep.subr.mxu0 0.0
    %8369 = vmatpush1.msra.mxu0 %v8341
    %8370 = vmatprep.subr.mxu0 0.0
    %8371 = vmatpush1.msra.mxu0 %v8348
    %8372 = vmatprep.subr.mxu0 0.0
    %8373 = vmatpush1.msra.mxu0 0.0
    %8374 = vmatprep.subr.mxu0 0.0
    %8375 = vmatpush1.msra.mxu0 0.0
    %8376 = vmatprep.subr.mxu0 0.0
    %8377 = vmatpush1.msra.mxu0 0.0
    %8378 = vmatprep.subr.mxu0 0.0
    %8379 = vmatpush1.msra.mxu0 0.0
    %8380 = vmatprep.subr.mxu0 0.0
    %8381 = vmatpush1.msra.mxu0 0.0
    %8382 = vmatprep.subr.mxu0 0.0
    %8383 = vmatpush1.msra.mxu0 0.0
    %8384 = vmatprep.subr.mxu0 0.0
    %8385 = vmatpush1.msra.mxu0 0.0
    %8386 = vmatprep.subr.mxu0 0.0
    %8387 = vmatpush1.msra.mxu0 0.0
    %8388 = vmatprep.subr.mxu0 0.0
    %8389 = vmatpush1.msra.mxu0 0.0
    %8390 = vmatprep.subr.mxu0 0.0
    %8391 = vmatpush1.msra.mxu0 0.0
    %8392 = vmatprep.subr.mxu0 0.0
    %8393 = vmatpush1.msra.mxu0 0.0
    %8394 = vmatprep.subr.mxu0 0.0
    %8395 = vmatpush1.msra.mxu0 0.0
    %8396 = vmatprep.subr.mxu0 0.0
    %8397 = vmatpush1.msra.mxu0 0.0
    %8398 = vmatprep.subr.mxu0 0.0
    %8399 = vmatpush1.msra.mxu0 0.0
    %8400 = vmatprep.subr.mxu0 0.0
    %8401 = vmatpush1.msra.mxu0 0.0
    %8402 = vmatprep.subr.mxu0 0.0
    %8403 = vmatpush1.msra.mxu0 0.0
    %8404 = vmatprep.subr.mxu0 0.0
    %8405 = vmatpush1.msra.mxu0 0.0
    %8406 = vmatprep.subr.mxu0 0.0
    %8407 = vmatpush1.msra.mxu0 0.0
    %8408 = vmatprep.subr.mxu0 0.0
    %8409 = vmatpush1.msra.mxu0 0.0
    %8410 = vmatprep.subr.mxu0 0.0
    %8411 = vmatpush1.msra.mxu0 0.0
    %8412 = vmatprep.subr.mxu0 0.0
    %8413 = vmatpush1.msra.mxu0 0.0
    %8414 = vmatprep.mubr.f32.mxu0 0.0
    %8415 = vmatmul.mubr.f32.gmra.mrb[0].mxu0 %v8345
    %v8416 = vpop.f32.mrb[0].mxu0
    %v8417 = vadd.f32 %v8343, %v8416
    %v8418 = vpop.f32.mrb[0].mxu0
    %8419 = vdwg.mxu0
    %8420 = vst.msk [vmem:[#allocation4 + $0x1] sm:$0x1] %vm4266, %v8417
    // Predicated region
    $region50: #{net_forward.1} parent=1 // pred_check
      _
    $region51: #{net_forward.1} parent=1 // pred_check_branch
      %8422 = sbr.rel (0) target = $region53
    $region52: #{net_forward.1} parent=1 // pred_region
      %s8424 = ssub.s32 32, 32
      %8425 = vsyncadd [#allocation5], %s8424
      %s8427 = sshll.u32 [#allocation4], 4
      %s8428 = int_to_ptr.vmem [resolvable:$true] %s8427
      %8430 = dma.vmem_to_hbm [thread:$0]  %s8428, 32, %s12, [#allocation5]
    $region53: #{net_forward.1} parent=1 // pred_fallthru
      _
    // Predicated region
    $region54: #{net_forward.1} parent=1 // pred_check
      _
    $region55: #{net_forward.1} parent=1 // pred_check_branch
      %8432 = sbr.rel (0) target = $region57
    $region56: #{net_forward.1} parent=1 // pred_region
      %8433 = dma.done [#allocation5], 32
    $region57: #{net_forward.1} parent=1 // pred_fallthru
      _
    %8434 = vsyncpa [#allocation5], 1

</llo_original>
